<compile_context>
chip_gen: v6e
topology: v6e:2x2x1
jax: 0.10.0
libtpu: 0.0.40
codegen_flags: <defaults>
</compile_context>

<pallas_src>
import jax
import jax.numpy as jnp
from jax.experimental import pallas as pl
from jax.experimental.pallas import tpu as pltpu


NUM_CLASSES = 10  # stand-in for train_data_ch.chapter_count


# ----------------------------------------------------------------------------
# Fused conv3x3 (valid, stride 1) + bias + ReLU + vertical 2:1 max-pool kernel.
# ----------------------------------------------------------------------------
def _conv3x3_relu_rowpool_kernel(x_ref, w_ref, b_ref, o_ref):
    """x_ref: (H, Cin, W) bf16   one image in (H, C, W) layout
       w_ref: (9, Cout, Cin) bf16  tap-major weights, tap = 3*i + j
       b_ref: (Cout, 1) f32
       o_ref: (OH2, Cout, OW) bf16  rows pooled 2:1, columns not yet pooled."""
    oh2, cout, ow = o_ref.shape
    cin = x_ref.shape[1]

    def row_body(p, carry):
        r0 = 2 * p
        # 4 input rows feed the two conv rows (2p, 2p+1) that pool into row p.
        rows = [x_ref[r0 + k] for k in range(4)]          # each (Cin, W)

        def conv_row(r3):
            acc = jnp.zeros((cout, ow), jnp.float32)
            for i in range(3):
                for j in range(3):
                    xs = r3[i][:, j:j + ow]               # (Cin, OW)
                    wt = w_ref[3 * i + j]                 # (Cout, Cin)
                    if cin == 1:
                        # VPU broadcast-FMA; K=1 MXU matmul would waste the array.
                        acc = acc + wt.astype(jnp.float32) * xs.astype(jnp.float32)
                    else:
                        acc = acc + jnp.dot(
                            wt, xs, preferred_element_type=jnp.float32)
            return acc

        c0 = conv_row(rows[0:3])
        c1 = conv_row(rows[1:4])
        # relu(max(a,b) + bias) == maxpool(relu(conv + bias)) over the row pair.
        pooled = jnp.maximum(jnp.maximum(c0, c1) + b_ref[...], 0.0)
        o_ref[p] = pooled.astype(o_ref.dtype)
        return carry

    jax.lax.fori_loop(0, oh2, row_body, 0)


def conv3x3_relu_maxpool2(x_bhcw, w_oihw, b):
    """x: (B, H, Cin, W) bf16; w: (Cout, Cin, 3, 3); b: (Cout,)
       -> (B, OH//2, Cout, OW//2) bf16."""
    B, H, Cin, W = x_bhcw.shape
    Cout, Cin2, KH, KW = w_oihw.shape
    assert (Cin2, KH, KW) == (Cin, 3, 3), (w_oihw.shape, Cin)
    OH, OW = H - 2, W - 2
    OH2, OW2 = OH // 2, OW // 2

    w_taps = jnp.transpose(w_oihw, (2, 3, 0, 1)).reshape(9, Cout, Cin)
    w_taps = w_taps.astype(jnp.bfloat16)
    b2 = b.reshape(Cout, 1).astype(jnp.float32)

    y = pl.pallas_call(
        _conv3x3_relu_rowpool_kernel,
        out_shape=jax.ShapeDtypeStruct((B, OH2, Cout, OW), jnp.bfloat16),
        grid=(B,),
        in_specs=[
            pl.BlockSpec((None, H, Cin, W), lambda bb: (bb, 0, 0, 0)),
            pl.BlockSpec((9, Cout, Cin), lambda bb: (0, 0, 0)),
            pl.BlockSpec((Cout, 1), lambda bb: (0, 0)),
        ],
        out_specs=pl.BlockSpec((None, OH2, Cout, OW), lambda bb: (bb, 0, 0, 0)),
        compiler_params=pltpu.CompilerParams(
            dimension_semantics=("parallel",)),
    )(x_bhcw.astype(jnp.bfloat16), w_taps, b2)

    # TODO(synk): horizontal half of MaxPool2d(2) (compaction of every other
    # lane) is done as a tiny JAX reshape+max epilogue; in-kernel it would need
    # strided lane gathers.
    y = y[..., : OW2 * 2].reshape(B, OH2, Cout, OW2, 2)
    return jnp.max(y, axis=-1)


# ----------------------------------------------------------------------------
# Linear layer: K-tiled accumulating matmul + bias kernel.
# ----------------------------------------------------------------------------
def _linear_accum_kernel(x_ref, w_ref, b_ref, o_ref):
    @pl.when(pl.program_id(0) == 0)
    def _():
        o_ref[...] = jnp.broadcast_to(b_ref[...], o_ref.shape)

    o_ref[...] += jnp.dot(x_ref[...], w_ref[...],
                          preferred_element_type=jnp.float32)


def _pick_k_tile(K, cap=8192):
    best = 0
    d = 128
    while d <= min(K, cap):
        if K % d == 0:
            best = d
        d += 128
    if best:
        return best, K
    tk = 2048
    return tk, ((K + tk - 1) // tk) * tk


def linear(x, w, b):
    """x: (B, K), w: (K, N), b: (N,) -> (B, N) f32."""
    B, K = x.shape
    K2, N = w.shape
    assert K == K2, (K, K2)
    tk, K_pad = _pick_k_tile(K)
    if K_pad != K:
        x = jnp.pad(x, ((0, 0), (0, K_pad - K)))
        w = jnp.pad(w, ((0, K_pad - K), (0, 0)))
    b2 = b.reshape(1, N).astype(jnp.float32)

    return pl.pallas_call(
        _linear_accum_kernel,
        out_shape=jax.ShapeDtypeStruct((B, N), jnp.float32),
        grid=(K_pad // tk,),
        in_specs=[
            pl.BlockSpec((B, tk), lambda k: (0, k)),
            pl.BlockSpec((tk, N), lambda k: (k, 0)),
            pl.BlockSpec((1, N), lambda k: (0, 0)),
        ],
        out_specs=pl.BlockSpec((B, N), lambda k: (0, 0)),
        compiler_params=pltpu.CompilerParams(
            dimension_semantics=("arbitrary",)),
    )(x.astype(jnp.bfloat16), w.astype(jnp.bfloat16), b2)


# ----------------------------------------------------------------------------
# Parameters (deterministic, PyTorch-default-style uniform init).
# ----------------------------------------------------------------------------
def init_params(key):
    def uinit(k, shape, fan_in):
        bound = 1.0 / jnp.sqrt(jnp.float32(fan_in))
        return jax.random.uniform(k, shape, jnp.float32, -bound, bound)

    ks = jax.random.split(key, 8)
    return {
        "w1": uinit(ks[0], (16, 1, 3, 3), 1 * 9),
        "b1": uinit(ks[1], (16,), 1 * 9),
        "w2": uinit(ks[2], (32, 16, 3, 3), 16 * 9),
        "b2": uinit(ks[3], (32,), 16 * 9),
        "w3": uinit(ks[4], (64, 32, 3, 3), 32 * 9),
        "b3": uinit(ks[5], (64,), 32 * 9),
        # stored as (in_features, classes); rows in torch flatten order (c,h,w)
        "wl": uinit(ks[6], (20352, NUM_CLASSES), 20352),
        "bl": uinit(ks[7], (NUM_CLASSES,), 20352),
    }


# ----------------------------------------------------------------------------
# Forward pass (Chapter_CNN_Model.forward)
# ----------------------------------------------------------------------------
@jax.jit
def chapter_cnn_forward(x_nchw, params):
    # NCHW -> (B, H, C, W): W stays on the lane axis and the final flatten is
    # contiguous; with C=1 this input transpose is essentially free.
    x = jnp.transpose(x_nchw, (0, 2, 1, 3)).astype(jnp.bfloat16)

    x = conv3x3_relu_maxpool2(x, params["w1"], params["b1"])
    x = conv3x3_relu_maxpool2(x, params["w2"], params["b2"])
    x = conv3x3_relu_maxpool2(x, params["w3"], params["b3"])

    B, H, C, W = x.shape
    assert H * C * W == params["wl"].shape[0], (H, C, W)
    flat = x.reshape(B, H * C * W)                      # (h, c, w) order

    # Permute linear weight rows from torch's (c, h, w) flatten order to our
    # (h, c, w) order so no activation transpose is needed.
    wl = params["wl"].reshape(C, H, W, -1).transpose(1, 0, 2, 3)
    wl = wl.reshape(H * C * W, -1)
    return linear(flat, wl, params["bl"])


if __name__ == "__main__":
    key = jax.random.PRNGKey(0)
    kx, kp = jax.random.split(key)

    # Spatial size chosen so the flatten matches Linear(20352, classes):
    #   62 -> 60 -> 30 -> 28 -> 14 -> 12 -> 6
    #   438 -> 436 -> 218 -> 216 -> 108 -> 106 -> 53
    #   64 * 6 * 53 = 20352
    x = jax.random.normal(kx, (2, 1, 62, 438), jnp.float32)
    params = init_params(kp)

    logits = chapter_cnn_forward(x, params)
    logits = jax.block_until_ready(logits)

    assert logits.shape == (2, NUM_CLASSES), logits.shape
    assert logits.dtype == jnp.float32, logits.dtype
    print("KERNEL_OK")
</pallas_src>

<mosaic_0001>
module attributes {stable_mosaic.version = 11 : i64} {
  func.func @_conv3x3_relu_rowpool_kernel(%arg0: i32, %arg1: memref<1x62x1x438xbf16, #tpu.memory_space<vmem>>, %arg2: memref<9x16x1xbf16, #tpu.memory_space<vmem>>, %arg3: memref<16x1xf32, #tpu.memory_space<vmem>>, %arg4: memref<1x30x16x436xbf16, #tpu.memory_space<vmem>>) attributes {dimension_semantics = [#tpu.dimension_semantics<parallel>], iteration_bounds = array<i64: 2>, scalar_prefetch = 0 : i64, scratch_operands = 0 : i64, tpu.core_type = #tpu.core_type<tc>, window_params = [{transform_indices = @transform_0, window_bounds = array<i64: 1, 62, 1, 438>}, {pipeline_mode = #tpu.pipeline_mode<synchronous>, transform_indices = @transform_1, window_bounds = array<i64: 9, 16, 1>}, {pipeline_mode = #tpu.pipeline_mode<synchronous>, transform_indices = @transform_2, window_bounds = array<i64: 16, 1>}, {transform_indices = @transform_3, window_bounds = array<i64: 1, 30, 16, 436>}]} {
    %c0_i32 = arith.constant 0 : i32
    %c30_i32 = arith.constant 30 : i32
    %0 = arith.addi %c0_i32, %c30_i32 : i32
    %c1_i32 = arith.constant 1 : i32
    scf.for %arg5 = %c0_i32 to %0 step %c1_i32  : i32 {
      %c2_i32 = arith.constant 2 : i32
      %1 = arith.muli %c2_i32, %arg5 : i32
      %c0_i32_1 = arith.constant 0 : i32
      %2 = arith.addi %1, %c0_i32_1 : i32
      %c0 = arith.constant 0 : index
      %3 = arith.index_cast %2 : i32 to index
      %c0_2 = arith.constant 0 : index
      %c0_3 = arith.constant 0 : index
      %4 = vector.load %arg1[%c0, %3, %c0_2, %c0_3] : memref<1x62x1x438xbf16, #tpu.memory_space<vmem>>, vector<1x1x1x438xbf16>
      %5 = vector.shape_cast %4 : vector<1x1x1x438xbf16> to vector<1x438xbf16>
      %c1_i32_4 = arith.constant 1 : i32
      %6 = arith.addi %1, %c1_i32_4 : i32
      %c0_5 = arith.constant 0 : index
      %7 = arith.index_cast %6 : i32 to index
      %c0_6 = arith.constant 0 : index
      %c0_7 = arith.constant 0 : index
      %8 = vector.load %arg1[%c0_5, %7, %c0_6, %c0_7] : memref<1x62x1x438xbf16, #tpu.memory_space<vmem>>, vector<1x1x1x438xbf16>
      %9 = vector.shape_cast %8 : vector<1x1x1x438xbf16> to vector<1x438xbf16>
      %c2_i32_8 = arith.constant 2 : i32
      %10 = arith.addi %1, %c2_i32_8 : i32
      %c0_9 = arith.constant 0 : index
      %11 = arith.index_cast %10 : i32 to index
      %c0_10 = arith.constant 0 : index
      %c0_11 = arith.constant 0 : index
      %12 = vector.load %arg1[%c0_9, %11, %c0_10, %c0_11] : memref<1x62x1x438xbf16, #tpu.memory_space<vmem>>, vector<1x1x1x438xbf16>
      %13 = vector.shape_cast %12 : vector<1x1x1x438xbf16> to vector<1x438xbf16>
      %c3_i32 = arith.constant 3 : i32
      %14 = arith.addi %1, %c3_i32 : i32
      %c0_12 = arith.constant 0 : index
      %15 = arith.index_cast %14 : i32 to index
      %c0_13 = arith.constant 0 : index
      %c0_14 = arith.constant 0 : index
      %16 = vector.load %arg1[%c0_12, %15, %c0_13, %c0_14] : memref<1x62x1x438xbf16, #tpu.memory_space<vmem>>, vector<1x1x1x438xbf16>
      %17 = vector.shape_cast %16 : vector<1x1x1x438xbf16> to vector<1x438xbf16>
      %cst = arith.constant 0.000000e+00 : f32
      %18 = vector.broadcast %cst : f32 to vector<16x436xf32>
      %19 = vector.extract_strided_slice %5 {offsets = [0, 0], sizes = [1, 436], strides = [1, 1]} : vector<1x438xbf16> to vector<1x436xbf16>
      %c0_15 = arith.constant 0 : index
      %c0_16 = arith.constant 0 : index
      %c0_17 = arith.constant 0 : index
      %20 = vector.load %arg2[%c0_15, %c0_16, %c0_17] : memref<9x16x1xbf16, #tpu.memory_space<vmem>>, vector<1x16x1xbf16>
      %21 = vector.shape_cast %20 : vector<1x16x1xbf16> to vector<16x1xbf16>
      %22 = arith.extf %21 : vector<16x1xbf16> to vector<16x1xf32>
      %23 = arith.extf %19 : vector<1x436xbf16> to vector<1x436xf32>
      %24 = vector.broadcast %22 : vector<16x1xf32> to vector<16x436xf32>
      %25 = vector.broadcast %23 : vector<1x436xf32> to vector<16x436xf32>
      %26 = arith.mulf %24, %25 : vector<16x436xf32>
      %27 = arith.addf %18, %26 : vector<16x436xf32>
      %28 = vector.extract_strided_slice %5 {offsets = [0, 1], sizes = [1, 436], strides = [1, 1]} : vector<1x438xbf16> to vector<1x436xbf16>
      %c1 = arith.constant 1 : index
      %c0_18 = arith.constant 0 : index
      %c0_19 = arith.constant 0 : index
      %29 = vector.load %arg2[%c1, %c0_18, %c0_19] : memref<9x16x1xbf16, #tpu.memory_space<vmem>>, vector<1x16x1xbf16>
      %30 = vector.shape_cast %29 : vector<1x16x1xbf16> to vector<16x1xbf16>
      %31 = arith.extf %30 : vector<16x1xbf16> to vector<16x1xf32>
      %32 = arith.extf %28 : vector<1x436xbf16> to vector<1x436xf32>
      %33 = vector.broadcast %31 : vector<16x1xf32> to vector<16x436xf32>
      %34 = vector.broadcast %32 : vector<1x436xf32> to vector<16x436xf32>
      %35 = arith.mulf %33, %34 : vector<16x436xf32>
      %36 = arith.addf %27, %35 : vector<16x436xf32>
      %37 = vector.extract_strided_slice %5 {offsets = [0, 2], sizes = [1, 436], strides = [1, 1]} : vector<1x438xbf16> to vector<1x436xbf16>
      %c2 = arith.constant 2 : index
      %c0_20 = arith.constant 0 : index
      %c0_21 = arith.constant 0 : index
      %38 = vector.load %arg2[%c2, %c0_20, %c0_21] : memref<9x16x1xbf16, #tpu.memory_space<vmem>>, vector<1x16x1xbf16>
      %39 = vector.shape_cast %38 : vector<1x16x1xbf16> to vector<16x1xbf16>
      %40 = arith.extf %39 : vector<16x1xbf16> to vector<16x1xf32>
      %41 = arith.extf %37 : vector<1x436xbf16> to vector<1x436xf32>
      %42 = vector.broadcast %40 : vector<16x1xf32> to vector<16x436xf32>
      %43 = vector.broadcast %41 : vector<1x436xf32> to vector<16x436xf32>
      %44 = arith.mulf %42, %43 : vector<16x436xf32>
      %45 = arith.addf %36, %44 : vector<16x436xf32>
      %46 = vector.extract_strided_slice %9 {offsets = [0, 0], sizes = [1, 436], strides = [1, 1]} : vector<1x438xbf16> to vector<1x436xbf16>
      %c3 = arith.constant 3 : index
      %c0_22 = arith.constant 0 : index
      %c0_23 = arith.constant 0 : index
      %47 = vector.load %arg2[%c3, %c0_22, %c0_23] : memref<9x16x1xbf16, #tpu.memory_space<vmem>>, vector<1x16x1xbf16>
      %48 = vector.shape_cast %47 : vector<1x16x1xbf16> to vector<16x1xbf16>
      %49 = arith.extf %48 : vector<16x1xbf16> to vector<16x1xf32>
      %50 = arith.extf %46 : vector<1x436xbf16> to vector<1x436xf32>
      %51 = vector.broadcast %49 : vector<16x1xf32> to vector<16x436xf32>
      %52 = vector.broadcast %50 : vector<1x436xf32> to vector<16x436xf32>
      %53 = arith.mulf %51, %52 : vector<16x436xf32>
      %54 = arith.addf %45, %53 : vector<16x436xf32>
      %55 = vector.extract_strided_slice %9 {offsets = [0, 1], sizes = [1, 436], strides = [1, 1]} : vector<1x438xbf16> to vector<1x436xbf16>
      %c4 = arith.constant 4 : index
      %c0_24 = arith.constant 0 : index
      %c0_25 = arith.constant 0 : index
      %56 = vector.load %arg2[%c4, %c0_24, %c0_25] : memref<9x16x1xbf16, #tpu.memory_space<vmem>>, vector<1x16x1xbf16>
      %57 = vector.shape_cast %56 : vector<1x16x1xbf16> to vector<16x1xbf16>
      %58 = arith.extf %57 : vector<16x1xbf16> to vector<16x1xf32>
      %59 = arith.extf %55 : vector<1x436xbf16> to vector<1x436xf32>
      %60 = vector.broadcast %58 : vector<16x1xf32> to vector<16x436xf32>
      %61 = vector.broadcast %59 : vector<1x436xf32> to vector<16x436xf32>
      %62 = arith.mulf %60, %61 : vector<16x436xf32>
      %63 = arith.addf %54, %62 : vector<16x436xf32>
      %64 = vector.extract_strided_slice %9 {offsets = [0, 2], sizes = [1, 436], strides = [1, 1]} : vector<1x438xbf16> to vector<1x436xbf16>
      %c5 = arith.constant 5 : index
      %c0_26 = arith.constant 0 : index
      %c0_27 = arith.constant 0 : index
      %65 = vector.load %arg2[%c5, %c0_26, %c0_27] : memref<9x16x1xbf16, #tpu.memory_space<vmem>>, vector<1x16x1xbf16>
      %66 = vector.shape_cast %65 : vector<1x16x1xbf16> to vector<16x1xbf16>
      %67 = arith.extf %66 : vector<16x1xbf16> to vector<16x1xf32>
      %68 = arith.extf %64 : vector<1x436xbf16> to vector<1x436xf32>
      %69 = vector.broadcast %67 : vector<16x1xf32> to vector<16x436xf32>
      %70 = vector.broadcast %68 : vector<1x436xf32> to vector<16x436xf32>
      %71 = arith.mulf %69, %70 : vector<16x436xf32>
      %72 = arith.addf %63, %71 : vector<16x436xf32>
      %73 = vector.extract_strided_slice %13 {offsets = [0, 0], sizes = [1, 436], strides = [1, 1]} : vector<1x438xbf16> to vector<1x436xbf16>
      %c6 = arith.constant 6 : index
      %c0_28 = arith.constant 0 : index
      %c0_29 = arith.constant 0 : index
      %74 = vector.load %arg2[%c6, %c0_28, %c0_29] : memref<9x16x1xbf16, #tpu.memory_space<vmem>>, vector<1x16x1xbf16>
      %75 = vector.shape_cast %74 : vector<1x16x1xbf16> to vector<16x1xbf16>
      %76 = arith.extf %75 : vector<16x1xbf16> to vector<16x1xf32>
      %77 = arith.extf %73 : vector<1x436xbf16> to vector<1x436xf32>
      %78 = vector.broadcast %76 : vector<16x1xf32> to vector<16x436xf32>
      %79 = vector.broadcast %77 : vector<1x436xf32> to vector<16x436xf32>
      %80 = arith.mulf %78, %79 : vector<16x436xf32>
      %81 = arith.addf %72, %80 : vector<16x436xf32>
      %82 = vector.extract_strided_slice %13 {offsets = [0, 1], sizes = [1, 436], strides = [1, 1]} : vector<1x438xbf16> to vector<1x436xbf16>
      %c7 = arith.constant 7 : index
      %c0_30 = arith.constant 0 : index
      %c0_31 = arith.constant 0 : index
      %83 = vector.load %arg2[%c7, %c0_30, %c0_31] : memref<9x16x1xbf16, #tpu.memory_space<vmem>>, vector<1x16x1xbf16>
      %84 = vector.shape_cast %83 : vector<1x16x1xbf16> to vector<16x1xbf16>
      %85 = arith.extf %84 : vector<16x1xbf16> to vector<16x1xf32>
      %86 = arith.extf %82 : vector<1x436xbf16> to vector<1x436xf32>
      %87 = vector.broadcast %85 : vector<16x1xf32> to vector<16x436xf32>
      %88 = vector.broadcast %86 : vector<1x436xf32> to vector<16x436xf32>
      %89 = arith.mulf %87, %88 : vector<16x436xf32>
      %90 = arith.addf %81, %89 : vector<16x436xf32>
      %91 = vector.extract_strided_slice %13 {offsets = [0, 2], sizes = [1, 436], strides = [1, 1]} : vector<1x438xbf16> to vector<1x436xbf16>
      %c8 = arith.constant 8 : index
      %c0_32 = arith.constant 0 : index
      %c0_33 = arith.constant 0 : index
      %92 = vector.load %arg2[%c8, %c0_32, %c0_33] : memref<9x16x1xbf16, #tpu.memory_space<vmem>>, vector<1x16x1xbf16>
      %93 = vector.shape_cast %92 : vector<1x16x1xbf16> to vector<16x1xbf16>
      %94 = arith.extf %93 : vector<16x1xbf16> to vector<16x1xf32>
      %95 = arith.extf %91 : vector<1x436xbf16> to vector<1x436xf32>
      %96 = vector.broadcast %94 : vector<16x1xf32> to vector<16x436xf32>
      %97 = vector.broadcast %95 : vector<1x436xf32> to vector<16x436xf32>
      %98 = arith.mulf %96, %97 : vector<16x436xf32>
      %99 = arith.addf %90, %98 : vector<16x436xf32>
      %cst_34 = arith.constant 0.000000e+00 : f32
      %100 = vector.broadcast %cst_34 : f32 to vector<16x436xf32>
      %101 = vector.extract_strided_slice %9 {offsets = [0, 0], sizes = [1, 436], strides = [1, 1]} : vector<1x438xbf16> to vector<1x436xbf16>
      %c0_35 = arith.constant 0 : index
      %c0_36 = arith.constant 0 : index
      %c0_37 = arith.constant 0 : index
      %102 = vector.load %arg2[%c0_35, %c0_36, %c0_37] : memref<9x16x1xbf16, #tpu.memory_space<vmem>>, vector<1x16x1xbf16>
      %103 = vector.shape_cast %102 : vector<1x16x1xbf16> to vector<16x1xbf16>
      %104 = arith.extf %103 : vector<16x1xbf16> to vector<16x1xf32>
      %105 = arith.extf %101 : vector<1x436xbf16> to vector<1x436xf32>
      %106 = vector.broadcast %104 : vector<16x1xf32> to vector<16x436xf32>
      %107 = vector.broadcast %105 : vector<1x436xf32> to vector<16x436xf32>
      %108 = arith.mulf %106, %107 : vector<16x436xf32>
      %109 = arith.addf %100, %108 : vector<16x436xf32>
      %110 = vector.extract_strided_slice %9 {offsets = [0, 1], sizes = [1, 436], strides = [1, 1]} : vector<1x438xbf16> to vector<1x436xbf16>
      %c1_38 = arith.constant 1 : index
      %c0_39 = arith.constant 0 : index
      %c0_40 = arith.constant 0 : index
      %111 = vector.load %arg2[%c1_38, %c0_39, %c0_40] : memref<9x16x1xbf16, #tpu.memory_space<vmem>>, vector<1x16x1xbf16>
      %112 = vector.shape_cast %111 : vector<1x16x1xbf16> to vector<16x1xbf16>
      %113 = arith.extf %112 : vector<16x1xbf16> to vector<16x1xf32>
      %114 = arith.extf %110 : vector<1x436xbf16> to vector<1x436xf32>
      %115 = vector.broadcast %113 : vector<16x1xf32> to vector<16x436xf32>
      %116 = vector.broadcast %114 : vector<1x436xf32> to vector<16x436xf32>
      %117 = arith.mulf %115, %116 : vector<16x436xf32>
      %118 = arith.addf %109, %117 : vector<16x436xf32>
      %119 = vector.extract_strided_slice %9 {offsets = [0, 2], sizes = [1, 436], strides = [1, 1]} : vector<1x438xbf16> to vector<1x436xbf16>
      %c2_41 = arith.constant 2 : index
      %c0_42 = arith.constant 0 : index
      %c0_43 = arith.constant 0 : index
      %120 = vector.load %arg2[%c2_41, %c0_42, %c0_43] : memref<9x16x1xbf16, #tpu.memory_space<vmem>>, vector<1x16x1xbf16>
      %121 = vector.shape_cast %120 : vector<1x16x1xbf16> to vector<16x1xbf16>
      %122 = arith.extf %121 : vector<16x1xbf16> to vector<16x1xf32>
      %123 = arith.extf %119 : vector<1x436xbf16> to vector<1x436xf32>
      %124 = vector.broadcast %122 : vector<16x1xf32> to vector<16x436xf32>
      %125 = vector.broadcast %123 : vector<1x436xf32> to vector<16x436xf32>
      %126 = arith.mulf %124, %125 : vector<16x436xf32>
      %127 = arith.addf %118, %126 : vector<16x436xf32>
      %128 = vector.extract_strided_slice %13 {offsets = [0, 0], sizes = [1, 436], strides = [1, 1]} : vector<1x438xbf16> to vector<1x436xbf16>
      %c3_44 = arith.constant 3 : index
      %c0_45 = arith.constant 0 : index
      %c0_46 = arith.constant 0 : index
      %129 = vector.load %arg2[%c3_44, %c0_45, %c0_46] : memref<9x16x1xbf16, #tpu.memory_space<vmem>>, vector<1x16x1xbf16>
      %130 = vector.shape_cast %129 : vector<1x16x1xbf16> to vector<16x1xbf16>
      %131 = arith.extf %130 : vector<16x1xbf16> to vector<16x1xf32>
      %132 = arith.extf %128 : vector<1x436xbf16> to vector<1x436xf32>
      %133 = vector.broadcast %131 : vector<16x1xf32> to vector<16x436xf32>
      %134 = vector.broadcast %132 : vector<1x436xf32> to vector<16x436xf32>
      %135 = arith.mulf %133, %134 : vector<16x436xf32>
      %136 = arith.addf %127, %135 : vector<16x436xf32>
      %137 = vector.extract_strided_slice %13 {offsets = [0, 1], sizes = [1, 436], strides = [1, 1]} : vector<1x438xbf16> to vector<1x436xbf16>
      %c4_47 = arith.constant 4 : index
      %c0_48 = arith.constant 0 : index
      %c0_49 = arith.constant 0 : index
      %138 = vector.load %arg2[%c4_47, %c0_48, %c0_49] : memref<9x16x1xbf16, #tpu.memory_space<vmem>>, vector<1x16x1xbf16>
      %139 = vector.shape_cast %138 : vector<1x16x1xbf16> to vector<16x1xbf16>
      %140 = arith.extf %139 : vector<16x1xbf16> to vector<16x1xf32>
      %141 = arith.extf %137 : vector<1x436xbf16> to vector<1x436xf32>
      %142 = vector.broadcast %140 : vector<16x1xf32> to vector<16x436xf32>
      %143 = vector.broadcast %141 : vector<1x436xf32> to vector<16x436xf32>
      %144 = arith.mulf %142, %143 : vector<16x436xf32>
      %145 = arith.addf %136, %144 : vector<16x436xf32>
      %146 = vector.extract_strided_slice %13 {offsets = [0, 2], sizes = [1, 436], strides = [1, 1]} : vector<1x438xbf16> to vector<1x436xbf16>
      %c5_50 = arith.constant 5 : index
      %c0_51 = arith.constant 0 : index
      %c0_52 = arith.constant 0 : index
      %147 = vector.load %arg2[%c5_50, %c0_51, %c0_52] : memref<9x16x1xbf16, #tpu.memory_space<vmem>>, vector<1x16x1xbf16>
      %148 = vector.shape_cast %147 : vector<1x16x1xbf16> to vector<16x1xbf16>
      %149 = arith.extf %148 : vector<16x1xbf16> to vector<16x1xf32>
      %150 = arith.extf %146 : vector<1x436xbf16> to vector<1x436xf32>
      %151 = vector.broadcast %149 : vector<16x1xf32> to vector<16x436xf32>
      %152 = vector.broadcast %150 : vector<1x436xf32> to vector<16x436xf32>
      %153 = arith.mulf %151, %152 : vector<16x436xf32>
      %154 = arith.addf %145, %153 : vector<16x436xf32>
      %155 = vector.extract_strided_slice %17 {offsets = [0, 0], sizes = [1, 436], strides = [1, 1]} : vector<1x438xbf16> to vector<1x436xbf16>
      %c6_53 = arith.constant 6 : index
      %c0_54 = arith.constant 0 : index
      %c0_55 = arith.constant 0 : index
      %156 = vector.load %arg2[%c6_53, %c0_54, %c0_55] : memref<9x16x1xbf16, #tpu.memory_space<vmem>>, vector<1x16x1xbf16>
      %157 = vector.shape_cast %156 : vector<1x16x1xbf16> to vector<16x1xbf16>
      %158 = arith.extf %157 : vector<16x1xbf16> to vector<16x1xf32>
      %159 = arith.extf %155 : vector<1x436xbf16> to vector<1x436xf32>
      %160 = vector.broadcast %158 : vector<16x1xf32> to vector<16x436xf32>
      %161 = vector.broadcast %159 : vector<1x436xf32> to vector<16x436xf32>
      %162 = arith.mulf %160, %161 : vector<16x436xf32>
      %163 = arith.addf %154, %162 : vector<16x436xf32>
      %164 = vector.extract_strided_slice %17 {offsets = [0, 1], sizes = [1, 436], strides = [1, 1]} : vector<1x438xbf16> to vector<1x436xbf16>
      %c7_56 = arith.constant 7 : index
      %c0_57 = arith.constant 0 : index
      %c0_58 = arith.constant 0 : index
      %165 = vector.load %arg2[%c7_56, %c0_57, %c0_58] : memref<9x16x1xbf16, #tpu.memory_space<vmem>>, vector<1x16x1xbf16>
      %166 = vector.shape_cast %165 : vector<1x16x1xbf16> to vector<16x1xbf16>
      %167 = arith.extf %166 : vector<16x1xbf16> to vector<16x1xf32>
      %168 = arith.extf %164 : vector<1x436xbf16> to vector<1x436xf32>
      %169 = vector.broadcast %167 : vector<16x1xf32> to vector<16x436xf32>
      %170 = vector.broadcast %168 : vector<1x436xf32> to vector<16x436xf32>
      %171 = arith.mulf %169, %170 : vector<16x436xf32>
      %172 = arith.addf %163, %171 : vector<16x436xf32>
      %173 = vector.extract_strided_slice %17 {offsets = [0, 2], sizes = [1, 436], strides = [1, 1]} : vector<1x438xbf16> to vector<1x436xbf16>
      %c8_59 = arith.constant 8 : index
      %c0_60 = arith.constant 0 : index
      %c0_61 = arith.constant 0 : index
      %174 = vector.load %arg2[%c8_59, %c0_60, %c0_61] : memref<9x16x1xbf16, #tpu.memory_space<vmem>>, vector<1x16x1xbf16>
      %175 = vector.shape_cast %174 : vector<1x16x1xbf16> to vector<16x1xbf16>
      %176 = arith.extf %175 : vector<16x1xbf16> to vector<16x1xf32>
      %177 = arith.extf %173 : vector<1x436xbf16> to vector<1x436xf32>
      %178 = vector.broadcast %176 : vector<16x1xf32> to vector<16x436xf32>
      %179 = vector.broadcast %177 : vector<1x436xf32> to vector<16x436xf32>
      %180 = arith.mulf %178, %179 : vector<16x436xf32>
      %181 = arith.addf %172, %180 : vector<16x436xf32>
      %182 = arith.maximumf %99, %181 : vector<16x436xf32>
      %c0_62 = arith.constant 0 : index
      %c0_63 = arith.constant 0 : index
      %183 = vector.load %arg3[%c0_62, %c0_63] : memref<16x1xf32, #tpu.memory_space<vmem>>, vector<16x1xf32>
      %184 = vector.broadcast %183 : vector<16x1xf32> to vector<16x436xf32>
      %185 = arith.addf %182, %184 : vector<16x436xf32>
      %cst_64 = arith.constant 0.000000e+00 : f32
      %186 = vector.broadcast %cst_64 : f32 to vector<16x436xf32>
      %187 = arith.maximumf %185, %186 : vector<16x436xf32>
      %188 = arith.truncf %187 : vector<16x436xf32> to vector<16x436xbf16>
      %c0_65 = arith.constant 0 : index
      %189 = arith.index_cast %arg5 : i32 to index
      %c0_66 = arith.constant 0 : index
      %c0_67 = arith.constant 0 : index
      %190 = vector.load %arg4[%c0_65, %189, %c0_66, %c0_67] : memref<1x30x16x436xbf16, #tpu.memory_space<vmem>>, vector<1x1x16x436xbf16>
      %191 = vector.shape_cast %190 : vector<1x1x16x436xbf16> to vector<16x436xbf16>
      %192 = vector.shape_cast %188 : vector<16x436xbf16> to vector<1x1x16x436xbf16>
      tpu.vector_store %arg4[%c0_65, %189, %c0_66, %c0_67], %192 {strides = array<i32>} : memref<1x30x16x436xbf16, #tpu.memory_space<vmem>>, vector<1x1x16x436xbf16>,
    }
    %c30_i32_0 = arith.constant 30 : i32
    return
  }
  func.func @transform_0(%arg0: i32) -> (i32, i32, i32, i32) {
    %c0_i32 = arith.constant 0 : i32
    %c0_i32_0 = arith.constant 0 : i32
    %c0_i32_1 = arith.constant 0 : i32
    %c0_i32_2 = arith.constant 0 : i32
    return %arg0, %c0_i32, %c0_i32_0, %c0_i32_1 : i32, i32, i32, i32
  }
  func.func @transform_1(%arg0: i32) -> (i32, i32, i32) {
    %c0_i32 = arith.constant 0 : i32
    %c0_i32_0 = arith.constant 0 : i32
    %c0_i32_1 = arith.constant 0 : i32
    %c0_i32_2 = arith.constant 0 : i32
    return %c0_i32, %c0_i32_0, %c0_i32_1 : i32, i32, i32
  }
  func.func @transform_2(%arg0: i32) -> (i32, i32) {
    %c0_i32 = arith.constant 0 : i32
    %c0_i32_0 = arith.constant 0 : i32
    %c0_i32_1 = arith.constant 0 : i32
    return %c0_i32, %c0_i32_0 : i32, i32
  }
  func.func @transform_3(%arg0: i32) -> (i32, i32, i32, i32) {
    %c0_i32 = arith.constant 0 : i32
    %c0_i32_0 = arith.constant 0 : i32
    %c0_i32_1 = arith.constant 0 : i32
    %c0_i32_2 = arith.constant 0 : i32
    return %arg0, %c0_i32, %c0_i32_0, %c0_i32_1 : i32, i32, i32, i32
  }
}

module attributes {stable_mosaic.version = 11 : i64} {
  func.func @_conv3x3_relu_rowpool_kernel(%arg0: i32, %arg1: memref<1x30x16x218xbf16, #tpu.memory_space<vmem>>, %arg2: memref<9x32x16xbf16, #tpu.memory_space<vmem>>, %arg3: memref<32x1xf32, #tpu.memory_space<vmem>>, %arg4: memref<1x14x32x216xbf16, #tpu.memory_space<vmem>>) attributes {dimension_semantics = [#tpu.dimension_semantics<parallel>], iteration_bounds = array<i64: 2>, scalar_prefetch = 0 : i64, scratch_operands = 0 : i64, tpu.core_type = #tpu.core_type<tc>, window_params = [{transform_indices = @transform_0, window_bounds = array<i64: 1, 30, 16, 218>}, {pipeline_mode = #tpu.pipeline_mode<synchronous>, transform_indices = @transform_1, window_bounds = array<i64: 9, 32, 16>}, {pipeline_mode = #tpu.pipeline_mode<synchronous>, transform_indices = @transform_2, window_bounds = array<i64: 32, 1>}, {transform_indices = @transform_3, window_bounds = array<i64: 1, 14, 32, 216>}]} {
    %c0_i32 = arith.constant 0 : i32
    %c14_i32 = arith.constant 14 : i32
    %0 = arith.addi %c0_i32, %c14_i32 : i32
    %c1_i32 = arith.constant 1 : i32
    scf.for %arg5 = %c0_i32 to %0 step %c1_i32  : i32 {
      %c2_i32 = arith.constant 2 : i32
      %1 = arith.muli %c2_i32, %arg5 : i32
      %c0_i32_1 = arith.constant 0 : i32
      %2 = arith.addi %1, %c0_i32_1 : i32
      %c0 = arith.constant 0 : index
      %3 = arith.index_cast %2 : i32 to index
      %c0_2 = arith.constant 0 : index
      %c0_3 = arith.constant 0 : index
      %4 = vector.load %arg1[%c0, %3, %c0_2, %c0_3] : memref<1x30x16x218xbf16, #tpu.memory_space<vmem>>, vector<1x1x16x218xbf16>
      %5 = vector.shape_cast %4 : vector<1x1x16x218xbf16> to vector<16x218xbf16>
      %c1_i32_4 = arith.constant 1 : i32
      %6 = arith.addi %1, %c1_i32_4 : i32
      %c0_5 = arith.constant 0 : index
      %7 = arith.index_cast %6 : i32 to index
      %c0_6 = arith.constant 0 : index
      %c0_7 = arith.constant 0 : index
      %8 = vector.load %arg1[%c0_5, %7, %c0_6, %c0_7] : memref<1x30x16x218xbf16, #tpu.memory_space<vmem>>, vector<1x1x16x218xbf16>
      %9 = vector.shape_cast %8 : vector<1x1x16x218xbf16> to vector<16x218xbf16>
      %c2_i32_8 = arith.constant 2 : i32
      %10 = arith.addi %1, %c2_i32_8 : i32
      %c0_9 = arith.constant 0 : index
      %11 = arith.index_cast %10 : i32 to index
      %c0_10 = arith.constant 0 : index
      %c0_11 = arith.constant 0 : index
      %12 = vector.load %arg1[%c0_9, %11, %c0_10, %c0_11] : memref<1x30x16x218xbf16, #tpu.memory_space<vmem>>, vector<1x1x16x218xbf16>
      %13 = vector.shape_cast %12 : vector<1x1x16x218xbf16> to vector<16x218xbf16>
      %c3_i32 = arith.constant 3 : i32
      %14 = arith.addi %1, %c3_i32 : i32
      %c0_12 = arith.constant 0 : index
      %15 = arith.index_cast %14 : i32 to index
      %c0_13 = arith.constant 0 : index
      %c0_14 = arith.constant 0 : index
      %16 = vector.load %arg1[%c0_12, %15, %c0_13, %c0_14] : memref<1x30x16x218xbf16, #tpu.memory_space<vmem>>, vector<1x1x16x218xbf16>
      %17 = vector.shape_cast %16 : vector<1x1x16x218xbf16> to vector<16x218xbf16>
      %cst = arith.constant 0.000000e+00 : f32
      %18 = vector.broadcast %cst : f32 to vector<32x216xf32>
      %19 = vector.extract_strided_slice %5 {offsets = [0, 0], sizes = [16, 216], strides = [1, 1]} : vector<16x218xbf16> to vector<16x216xbf16>
      %c0_15 = arith.constant 0 : index
      %c0_16 = arith.constant 0 : index
      %c0_17 = arith.constant 0 : index
      %20 = vector.load %arg2[%c0_15, %c0_16, %c0_17] : memref<9x32x16xbf16, #tpu.memory_space<vmem>>, vector<1x32x16xbf16>
      %21 = vector.shape_cast %20 : vector<1x32x16xbf16> to vector<32x16xbf16>
      %cst_18 = arith.constant dense<0.000000e+00> : vector<32x216xf32>
      %22 = tpu.matmul %21, %19, %cst_18 {dimension_numbers = #tpu.dot_dimension_numbers<[1], [0], [0], [1], [0, 0, 1, 1], [], []>} : vector<32x16xbf16>, vector<16x216xbf16>, vector<32x216xf32> -> vector<32x216xf32>
      %23 = arith.addf %18, %22 : vector<32x216xf32>
      %24 = vector.extract_strided_slice %5 {offsets = [0, 1], sizes = [16, 216], strides = [1, 1]} : vector<16x218xbf16> to vector<16x216xbf16>
      %c1 = arith.constant 1 : index
      %c0_19 = arith.constant 0 : index
      %c0_20 = arith.constant 0 : index
      %25 = vector.load %arg2[%c1, %c0_19, %c0_20] : memref<9x32x16xbf16, #tpu.memory_space<vmem>>, vector<1x32x16xbf16>
      %26 = vector.shape_cast %25 : vector<1x32x16xbf16> to vector<32x16xbf16>
      %cst_21 = arith.constant dense<0.000000e+00> : vector<32x216xf32>
      %27 = tpu.matmul %26, %24, %cst_21 {dimension_numbers = #tpu.dot_dimension_numbers<[1], [0], [0], [1], [0, 0, 1, 1], [], []>} : vector<32x16xbf16>, vector<16x216xbf16>, vector<32x216xf32> -> vector<32x216xf32>
      %28 = arith.addf %23, %27 : vector<32x216xf32>
      %29 = vector.extract_strided_slice %5 {offsets = [0, 2], sizes = [16, 216], strides = [1, 1]} : vector<16x218xbf16> to vector<16x216xbf16>
      %c2 = arith.constant 2 : index
      %c0_22 = arith.constant 0 : index
      %c0_23 = arith.constant 0 : index
      %30 = vector.load %arg2[%c2, %c0_22, %c0_23] : memref<9x32x16xbf16, #tpu.memory_space<vmem>>, vector<1x32x16xbf16>
      %31 = vector.shape_cast %30 : vector<1x32x16xbf16> to vector<32x16xbf16>
      %cst_24 = arith.constant dense<0.000000e+00> : vector<32x216xf32>
      %32 = tpu.matmul %31, %29, %cst_24 {dimension_numbers = #tpu.dot_dimension_numbers<[1], [0], [0], [1], [0, 0, 1, 1], [], []>} : vector<32x16xbf16>, vector<16x216xbf16>, vector<32x216xf32> -> vector<32x216xf32>
      %33 = arith.addf %28, %32 : vector<32x216xf32>
      %34 = vector.extract_strided_slice %9 {offsets = [0, 0], sizes = [16, 216], strides = [1, 1]} : vector<16x218xbf16> to vector<16x216xbf16>
      %c3 = arith.constant 3 : index
      %c0_25 = arith.constant 0 : index
      %c0_26 = arith.constant 0 : index
      %35 = vector.load %arg2[%c3, %c0_25, %c0_26] : memref<9x32x16xbf16, #tpu.memory_space<vmem>>, vector<1x32x16xbf16>
      %36 = vector.shape_cast %35 : vector<1x32x16xbf16> to vector<32x16xbf16>
      %cst_27 = arith.constant dense<0.000000e+00> : vector<32x216xf32>
      %37 = tpu.matmul %36, %34, %cst_27 {dimension_numbers = #tpu.dot_dimension_numbers<[1], [0], [0], [1], [0, 0, 1, 1], [], []>} : vector<32x16xbf16>, vector<16x216xbf16>, vector<32x216xf32> -> vector<32x216xf32>
      %38 = arith.addf %33, %37 : vector<32x216xf32>
      %39 = vector.extract_strided_slice %9 {offsets = [0, 1], sizes = [16, 216], strides = [1, 1]} : vector<16x218xbf16> to vector<16x216xbf16>
      %c4 = arith.constant 4 : index
      %c0_28 = arith.constant 0 : index
      %c0_29 = arith.constant 0 : index
      %40 = vector.load %arg2[%c4, %c0_28, %c0_29] : memref<9x32x16xbf16, #tpu.memory_space<vmem>>, vector<1x32x16xbf16>
      %41 = vector.shape_cast %40 : vector<1x32x16xbf16> to vector<32x16xbf16>
      %cst_30 = arith.constant dense<0.000000e+00> : vector<32x216xf32>
      %42 = tpu.matmul %41, %39, %cst_30 {dimension_numbers = #tpu.dot_dimension_numbers<[1], [0], [0], [1], [0, 0, 1, 1], [], []>} : vector<32x16xbf16>, vector<16x216xbf16>, vector<32x216xf32> -> vector<32x216xf32>
      %43 = arith.addf %38, %42 : vector<32x216xf32>
      %44 = vector.extract_strided_slice %9 {offsets = [0, 2], sizes = [16, 216], strides = [1, 1]} : vector<16x218xbf16> to vector<16x216xbf16>
      %c5 = arith.constant 5 : index
      %c0_31 = arith.constant 0 : index
      %c0_32 = arith.constant 0 : index
      %45 = vector.load %arg2[%c5, %c0_31, %c0_32] : memref<9x32x16xbf16, #tpu.memory_space<vmem>>, vector<1x32x16xbf16>
      %46 = vector.shape_cast %45 : vector<1x32x16xbf16> to vector<32x16xbf16>
      %cst_33 = arith.constant dense<0.000000e+00> : vector<32x216xf32>
      %47 = tpu.matmul %46, %44, %cst_33 {dimension_numbers = #tpu.dot_dimension_numbers<[1], [0], [0], [1], [0, 0, 1, 1], [], []>} : vector<32x16xbf16>, vector<16x216xbf16>, vector<32x216xf32> -> vector<32x216xf32>
      %48 = arith.addf %43, %47 : vector<32x216xf32>
      %49 = vector.extract_strided_slice %13 {offsets = [0, 0], sizes = [16, 216], strides = [1, 1]} : vector<16x218xbf16> to vector<16x216xbf16>
      %c6 = arith.constant 6 : index
      %c0_34 = arith.constant 0 : index
      %c0_35 = arith.constant 0 : index
      %50 = vector.load %arg2[%c6, %c0_34, %c0_35] : memref<9x32x16xbf16, #tpu.memory_space<vmem>>, vector<1x32x16xbf16>
      %51 = vector.shape_cast %50 : vector<1x32x16xbf16> to vector<32x16xbf16>
      %cst_36 = arith.constant dense<0.000000e+00> : vector<32x216xf32>
      %52 = tpu.matmul %51, %49, %cst_36 {dimension_numbers = #tpu.dot_dimension_numbers<[1], [0], [0], [1], [0, 0, 1, 1], [], []>} : vector<32x16xbf16>, vector<16x216xbf16>, vector<32x216xf32> -> vector<32x216xf32>
      %53 = arith.addf %48, %52 : vector<32x216xf32>
      %54 = vector.extract_strided_slice %13 {offsets = [0, 1], sizes = [16, 216], strides = [1, 1]} : vector<16x218xbf16> to vector<16x216xbf16>
      %c7 = arith.constant 7 : index
      %c0_37 = arith.constant 0 : index
      %c0_38 = arith.constant 0 : index
      %55 = vector.load %arg2[%c7, %c0_37, %c0_38] : memref<9x32x16xbf16, #tpu.memory_space<vmem>>, vector<1x32x16xbf16>
      %56 = vector.shape_cast %55 : vector<1x32x16xbf16> to vector<32x16xbf16>
      %cst_39 = arith.constant dense<0.000000e+00> : vector<32x216xf32>
      %57 = tpu.matmul %56, %54, %cst_39 {dimension_numbers = #tpu.dot_dimension_numbers<[1], [0], [0], [1], [0, 0, 1, 1], [], []>} : vector<32x16xbf16>, vector<16x216xbf16>, vector<32x216xf32> -> vector<32x216xf32>
      %58 = arith.addf %53, %57 : vector<32x216xf32>
      %59 = vector.extract_strided_slice %13 {offsets = [0, 2], sizes = [16, 216], strides = [1, 1]} : vector<16x218xbf16> to vector<16x216xbf16>
      %c8 = arith.constant 8 : index
      %c0_40 = arith.constant 0 : index
      %c0_41 = arith.constant 0 : index
      %60 = vector.load %arg2[%c8, %c0_40, %c0_41] : memref<9x32x16xbf16, #tpu.memory_space<vmem>>, vector<1x32x16xbf16>
      %61 = vector.shape_cast %60 : vector<1x32x16xbf16> to vector<32x16xbf16>
      %cst_42 = arith.constant dense<0.000000e+00> : vector<32x216xf32>
      %62 = tpu.matmul %61, %59, %cst_42 {dimension_numbers = #tpu.dot_dimension_numbers<[1], [0], [0], [1], [0, 0, 1, 1], [], []>} : vector<32x16xbf16>, vector<16x216xbf16>, vector<32x216xf32> -> vector<32x216xf32>
      %63 = arith.addf %58, %62 : vector<32x216xf32>
      %cst_43 = arith.constant 0.000000e+00 : f32
      %64 = vector.broadcast %cst_43 : f32 to vector<32x216xf32>
      %65 = vector.extract_strided_slice %9 {offsets = [0, 0], sizes = [16, 216], strides = [1, 1]} : vector<16x218xbf16> to vector<16x216xbf16>
      %c0_44 = arith.constant 0 : index
      %c0_45 = arith.constant 0 : index
      %c0_46 = arith.constant 0 : index
      %66 = vector.load %arg2[%c0_44, %c0_45, %c0_46] : memref<9x32x16xbf16, #tpu.memory_space<vmem>>, vector<1x32x16xbf16>
      %67 = vector.shape_cast %66 : vector<1x32x16xbf16> to vector<32x16xbf16>
      %cst_47 = arith.constant dense<0.000000e+00> : vector<32x216xf32>
      %68 = tpu.matmul %67, %65, %cst_47 {dimension_numbers = #tpu.dot_dimension_numbers<[1], [0], [0], [1], [0, 0, 1, 1], [], []>} : vector<32x16xbf16>, vector<16x216xbf16>, vector<32x216xf32> -> vector<32x216xf32>
      %69 = arith.addf %64, %68 : vector<32x216xf32>
      %70 = vector.extract_strided_slice %9 {offsets = [0, 1], sizes = [16, 216], strides = [1, 1]} : vector<16x218xbf16> to vector<16x216xbf16>
      %c1_48 = arith.constant 1 : index
      %c0_49 = arith.constant 0 : index
      %c0_50 = arith.constant 0 : index
      %71 = vector.load %arg2[%c1_48, %c0_49, %c0_50] : memref<9x32x16xbf16, #tpu.memory_space<vmem>>, vector<1x32x16xbf16>
      %72 = vector.shape_cast %71 : vector<1x32x16xbf16> to vector<32x16xbf16>
      %cst_51 = arith.constant dense<0.000000e+00> : vector<32x216xf32>
      %73 = tpu.matmul %72, %70, %cst_51 {dimension_numbers = #tpu.dot_dimension_numbers<[1], [0], [0], [1], [0, 0, 1, 1], [], []>} : vector<32x16xbf16>, vector<16x216xbf16>, vector<32x216xf32> -> vector<32x216xf32>
      %74 = arith.addf %69, %73 : vector<32x216xf32>
      %75 = vector.extract_strided_slice %9 {offsets = [0, 2], sizes = [16, 216], strides = [1, 1]} : vector<16x218xbf16> to vector<16x216xbf16>
      %c2_52 = arith.constant 2 : index
      %c0_53 = arith.constant 0 : index
      %c0_54 = arith.constant 0 : index
      %76 = vector.load %arg2[%c2_52, %c0_53, %c0_54] : memref<9x32x16xbf16, #tpu.memory_space<vmem>>, vector<1x32x16xbf16>
      %77 = vector.shape_cast %76 : vector<1x32x16xbf16> to vector<32x16xbf16>
      %cst_55 = arith.constant dense<0.000000e+00> : vector<32x216xf32>
      %78 = tpu.matmul %77, %75, %cst_55 {dimension_numbers = #tpu.dot_dimension_numbers<[1], [0], [0], [1], [0, 0, 1, 1], [], []>} : vector<32x16xbf16>, vector<16x216xbf16>, vector<32x216xf32> -> vector<32x216xf32>
      %79 = arith.addf %74, %78 : vector<32x216xf32>
      %80 = vector.extract_strided_slice %13 {offsets = [0, 0], sizes = [16, 216], strides = [1, 1]} : vector<16x218xbf16> to vector<16x216xbf16>
      %c3_56 = arith.constant 3 : index
      %c0_57 = arith.constant 0 : index
      %c0_58 = arith.constant 0 : index
      %81 = vector.load %arg2[%c3_56, %c0_57, %c0_58] : memref<9x32x16xbf16, #tpu.memory_space<vmem>>, vector<1x32x16xbf16>
      %82 = vector.shape_cast %81 : vector<1x32x16xbf16> to vector<32x16xbf16>
      %cst_59 = arith.constant dense<0.000000e+00> : vector<32x216xf32>
      %83 = tpu.matmul %82, %80, %cst_59 {dimension_numbers = #tpu.dot_dimension_numbers<[1], [0], [0], [1], [0, 0, 1, 1], [], []>} : vector<32x16xbf16>, vector<16x216xbf16>, vector<32x216xf32> -> vector<32x216xf32>
      %84 = arith.addf %79, %83 : vector<32x216xf32>
      %85 = vector.extract_strided_slice %13 {offsets = [0, 1], sizes = [16, 216], strides = [1, 1]} : vector<16x218xbf16> to vector<16x216xbf16>
      %c4_60 = arith.constant 4 : index
      %c0_61 = arith.constant 0 : index
      %c0_62 = arith.constant 0 : index
      %86 = vector.load %arg2[%c4_60, %c0_61, %c0_62] : memref<9x32x16xbf16, #tpu.memory_space<vmem>>, vector<1x32x16xbf16>
      %87 = vector.shape_cast %86 : vector<1x32x16xbf16> to vector<32x16xbf16>
      %cst_63 = arith.constant dense<0.000000e+00> : vector<32x216xf32>
      %88 = tpu.matmul %87, %85, %cst_63 {dimension_numbers = #tpu.dot_dimension_numbers<[1], [0], [0], [1], [0, 0, 1, 1], [], []>} : vector<32x16xbf16>, vector<16x216xbf16>, vector<32x216xf32> -> vector<32x216xf32>
      %89 = arith.addf %84, %88 : vector<32x216xf32>
      %90 = vector.extract_strided_slice %13 {offsets = [0, 2], sizes = [16, 216], strides = [1, 1]} : vector<16x218xbf16> to vector<16x216xbf16>
      %c5_64 = arith.constant 5 : index
      %c0_65 = arith.constant 0 : index
      %c0_66 = arith.constant 0 : index
      %91 = vector.load %arg2[%c5_64, %c0_65, %c0_66] : memref<9x32x16xbf16, #tpu.memory_space<vmem>>, vector<1x32x16xbf16>
      %92 = vector.shape_cast %91 : vector<1x32x16xbf16> to vector<32x16xbf16>
      %cst_67 = arith.constant dense<0.000000e+00> : vector<32x216xf32>
      %93 = tpu.matmul %92, %90, %cst_67 {dimension_numbers = #tpu.dot_dimension_numbers<[1], [0], [0], [1], [0, 0, 1, 1], [], []>} : vector<32x16xbf16>, vector<16x216xbf16>, vector<32x216xf32> -> vector<32x216xf32>
      %94 = arith.addf %89, %93 : vector<32x216xf32>
      %95 = vector.extract_strided_slice %17 {offsets = [0, 0], sizes = [16, 216], strides = [1, 1]} : vector<16x218xbf16> to vector<16x216xbf16>
      %c6_68 = arith.constant 6 : index
      %c0_69 = arith.constant 0 : index
      %c0_70 = arith.constant 0 : index
      %96 = vector.load %arg2[%c6_68, %c0_69, %c0_70] : memref<9x32x16xbf16, #tpu.memory_space<vmem>>, vector<1x32x16xbf16>
      %97 = vector.shape_cast %96 : vector<1x32x16xbf16> to vector<32x16xbf16>
      %cst_71 = arith.constant dense<0.000000e+00> : vector<32x216xf32>
      %98 = tpu.matmul %97, %95, %cst_71 {dimension_numbers = #tpu.dot_dimension_numbers<[1], [0], [0], [1], [0, 0, 1, 1], [], []>} : vector<32x16xbf16>, vector<16x216xbf16>, vector<32x216xf32> -> vector<32x216xf32>
      %99 = arith.addf %94, %98 : vector<32x216xf32>
      %100 = vector.extract_strided_slice %17 {offsets = [0, 1], sizes = [16, 216], strides = [1, 1]} : vector<16x218xbf16> to vector<16x216xbf16>
      %c7_72 = arith.constant 7 : index
      %c0_73 = arith.constant 0 : index
      %c0_74 = arith.constant 0 : index
      %101 = vector.load %arg2[%c7_72, %c0_73, %c0_74] : memref<9x32x16xbf16, #tpu.memory_space<vmem>>, vector<1x32x16xbf16>
      %102 = vector.shape_cast %101 : vector<1x32x16xbf16> to vector<32x16xbf16>
      %cst_75 = arith.constant dense<0.000000e+00> : vector<32x216xf32>
      %103 = tpu.matmul %102, %100, %cst_75 {dimension_numbers = #tpu.dot_dimension_numbers<[1], [0], [0], [1], [0, 0, 1, 1], [], []>} : vector<32x16xbf16>, vector<16x216xbf16>, vector<32x216xf32> -> vector<32x216xf32>
      %104 = arith.addf %99, %103 : vector<32x216xf32>
      %105 = vector.extract_strided_slice %17 {offsets = [0, 2], sizes = [16, 216], strides = [1, 1]} : vector<16x218xbf16> to vector<16x216xbf16>
      %c8_76 = arith.constant 8 : index
      %c0_77 = arith.constant 0 : index
      %c0_78 = arith.constant 0 : index
      %106 = vector.load %arg2[%c8_76, %c0_77, %c0_78] : memref<9x32x16xbf16, #tpu.memory_space<vmem>>, vector<1x32x16xbf16>
      %107 = vector.shape_cast %106 : vector<1x32x16xbf16> to vector<32x16xbf16>
      %cst_79 = arith.constant dense<0.000000e+00> : vector<32x216xf32>
      %108 = tpu.matmul %107, %105, %cst_79 {dimension_numbers = #tpu.dot_dimension_numbers<[1], [0], [0], [1], [0, 0, 1, 1], [], []>} : vector<32x16xbf16>, vector<16x216xbf16>, vector<32x216xf32> -> vector<32x216xf32>
      %109 = arith.addf %104, %108 : vector<32x216xf32>
      %110 = arith.maximumf %63, %109 : vector<32x216xf32>
      %c0_80 = arith.constant 0 : index
      %c0_81 = arith.constant 0 : index
      %111 = vector.load %arg3[%c0_80, %c0_81] : memref<32x1xf32, #tpu.memory_space<vmem>>, vector<32x1xf32>
      %112 = vector.broadcast %111 : vector<32x1xf32> to vector<32x216xf32>
      %113 = arith.addf %110, %112 : vector<32x216xf32>
      %cst_82 = arith.constant 0.000000e+00 : f32
      %114 = vector.broadcast %cst_82 : f32 to vector<32x216xf32>
      %115 = arith.maximumf %113, %114 : vector<32x216xf32>
      %116 = arith.truncf %115 : vector<32x216xf32> to vector<32x216xbf16>
      %c0_83 = arith.constant 0 : index
      %117 = arith.index_cast %arg5 : i32 to index
      %c0_84 = arith.constant 0 : index
      %c0_85 = arith.constant 0 : index
      %118 = vector.load %arg4[%c0_83, %117, %c0_84, %c0_85] : memref<1x14x32x216xbf16, #tpu.memory_space<vmem>>, vector<1x1x32x216xbf16>
      %119 = vector.shape_cast %118 : vector<1x1x32x216xbf16> to vector<32x216xbf16>
      %120 = vector.shape_cast %116 : vector<32x216xbf16> to vector<1x1x32x216xbf16>
      tpu.vector_store %arg4[%c0_83, %117, %c0_84, %c0_85], %120 {strides = array<i32>} : memref<1x14x32x216xbf16, #tpu.memory_space<vmem>>, vector<1x1x32x216xbf16>,
    }
    %c14_i32_0 = arith.constant 14 : i32
    return
  }
  func.func @transform_0(%arg0: i32) -> (i32, i32, i32, i32) {
    %c0_i32 = arith.constant 0 : i32
    %c0_i32_0 = arith.constant 0 : i32
    %c0_i32_1 = arith.constant 0 : i32
    %c0_i32_2 = arith.constant 0 : i32
    return %arg0, %c0_i32, %c0_i32_0, %c0_i32_1 : i32, i32, i32, i32
  }
  func.func @transform_1(%arg0: i32) -> (i32, i32, i32) {
    %c0_i32 = arith.constant 0 : i32
    %c0_i32_0 = arith.constant 0 : i32
    %c0_i32_1 = arith.constant 0 : i32
    %c0_i32_2 = arith.constant 0 : i32
    return %c0_i32, %c0_i32_0, %c0_i32_1 : i32, i32, i32
  }
  func.func @transform_2(%arg0: i32) -> (i32, i32) {
    %c0_i32 = arith.constant 0 : i32
    %c0_i32_0 = arith.constant 0 : i32
    %c0_i32_1 = arith.constant 0 : i32
    return %c0_i32, %c0_i32_0 : i32, i32
  }
  func.func @transform_3(%arg0: i32) -> (i32, i32, i32, i32) {
    %c0_i32 = arith.constant 0 : i32
    %c0_i32_0 = arith.constant 0 : i32
    %c0_i32_1 = arith.constant 0 : i32
    %c0_i32_2 = arith.constant 0 : i32
    return %arg0, %c0_i32, %c0_i32_0, %c0_i32_1 : i32, i32, i32, i32
  }
}

module attributes {stable_mosaic.version = 11 : i64} {
  func.func @_conv3x3_relu_rowpool_kernel(%arg0: i32, %arg1: memref<1x14x32x108xbf16, #tpu.memory_space<vmem>>, %arg2: memref<9x64x32xbf16, #tpu.memory_space<vmem>>, %arg3: memref<64x1xf32, #tpu.memory_space<vmem>>, %arg4: memref<1x6x64x106xbf16, #tpu.memory_space<vmem>>) attributes {dimension_semantics = [#tpu.dimension_semantics<parallel>], iteration_bounds = array<i64: 2>, scalar_prefetch = 0 : i64, scratch_operands = 0 : i64, tpu.core_type = #tpu.core_type<tc>, window_params = [{transform_indices = @transform_0, window_bounds = array<i64: 1, 14, 32, 108>}, {pipeline_mode = #tpu.pipeline_mode<synchronous>, transform_indices = @transform_1, window_bounds = array<i64: 9, 64, 32>}, {pipeline_mode = #tpu.pipeline_mode<synchronous>, transform_indices = @transform_2, window_bounds = array<i64: 64, 1>}, {transform_indices = @transform_3, window_bounds = array<i64: 1, 6, 64, 106>}]} {
    %c0_i32 = arith.constant 0 : i32
    %c6_i32 = arith.constant 6 : i32
    %0 = arith.addi %c0_i32, %c6_i32 : i32
    %c1_i32 = arith.constant 1 : i32
    scf.for %arg5 = %c0_i32 to %0 step %c1_i32  : i32 {
      %c2_i32 = arith.constant 2 : i32
      %1 = arith.muli %c2_i32, %arg5 : i32
      %c0_i32_1 = arith.constant 0 : i32
      %2 = arith.addi %1, %c0_i32_1 : i32
      %c0 = arith.constant 0 : index
      %3 = arith.index_cast %2 : i32 to index
      %c0_2 = arith.constant 0 : index
      %c0_3 = arith.constant 0 : index
      %4 = vector.load %arg1[%c0, %3, %c0_2, %c0_3] : memref<1x14x32x108xbf16, #tpu.memory_space<vmem>>, vector<1x1x32x108xbf16>
      %5 = vector.shape_cast %4 : vector<1x1x32x108xbf16> to vector<32x108xbf16>
      %c1_i32_4 = arith.constant 1 : i32
      %6 = arith.addi %1, %c1_i32_4 : i32
      %c0_5 = arith.constant 0 : index
      %7 = arith.index_cast %6 : i32 to index
      %c0_6 = arith.constant 0 : index
      %c0_7 = arith.constant 0 : index
      %8 = vector.load %arg1[%c0_5, %7, %c0_6, %c0_7] : memref<1x14x32x108xbf16, #tpu.memory_space<vmem>>, vector<1x1x32x108xbf16>
      %9 = vector.shape_cast %8 : vector<1x1x32x108xbf16> to vector<32x108xbf16>
      %c2_i32_8 = arith.constant 2 : i32
      %10 = arith.addi %1, %c2_i32_8 : i32
      %c0_9 = arith.constant 0 : index
      %11 = arith.index_cast %10 : i32 to index
      %c0_10 = arith.constant 0 : index
      %c0_11 = arith.constant 0 : index
      %12 = vector.load %arg1[%c0_9, %11, %c0_10, %c0_11] : memref<1x14x32x108xbf16, #tpu.memory_space<vmem>>, vector<1x1x32x108xbf16>
      %13 = vector.shape_cast %12 : vector<1x1x32x108xbf16> to vector<32x108xbf16>
      %c3_i32 = arith.constant 3 : i32
      %14 = arith.addi %1, %c3_i32 : i32
      %c0_12 = arith.constant 0 : index
      %15 = arith.index_cast %14 : i32 to index
      %c0_13 = arith.constant 0 : index
      %c0_14 = arith.constant 0 : index
      %16 = vector.load %arg1[%c0_12, %15, %c0_13, %c0_14] : memref<1x14x32x108xbf16, #tpu.memory_space<vmem>>, vector<1x1x32x108xbf16>
      %17 = vector.shape_cast %16 : vector<1x1x32x108xbf16> to vector<32x108xbf16>
      %cst = arith.constant 0.000000e+00 : f32
      %18 = vector.broadcast %cst : f32 to vector<64x106xf32>
      %19 = vector.extract_strided_slice %5 {offsets = [0, 0], sizes = [32, 106], strides = [1, 1]} : vector<32x108xbf16> to vector<32x106xbf16>
      %c0_15 = arith.constant 0 : index
      %c0_16 = arith.constant 0 : index
      %c0_17 = arith.constant 0 : index
      %20 = vector.load %arg2[%c0_15, %c0_16, %c0_17] : memref<9x64x32xbf16, #tpu.memory_space<vmem>>, vector<1x64x32xbf16>
      %21 = vector.shape_cast %20 : vector<1x64x32xbf16> to vector<64x32xbf16>
      %cst_18 = arith.constant dense<0.000000e+00> : vector<64x106xf32>
      %22 = tpu.matmul %21, %19, %cst_18 {dimension_numbers = #tpu.dot_dimension_numbers<[1], [0], [0], [1], [0, 0, 1, 1], [], []>} : vector<64x32xbf16>, vector<32x106xbf16>, vector<64x106xf32> -> vector<64x106xf32>
      %23 = arith.addf %18, %22 : vector<64x106xf32>
      %24 = vector.extract_strided_slice %5 {offsets = [0, 1], sizes = [32, 106], strides = [1, 1]} : vector<32x108xbf16> to vector<32x106xbf16>
      %c1 = arith.constant 1 : index
      %c0_19 = arith.constant 0 : index
      %c0_20 = arith.constant 0 : index
      %25 = vector.load %arg2[%c1, %c0_19, %c0_20] : memref<9x64x32xbf16, #tpu.memory_space<vmem>>, vector<1x64x32xbf16>
      %26 = vector.shape_cast %25 : vector<1x64x32xbf16> to vector<64x32xbf16>
      %cst_21 = arith.constant dense<0.000000e+00> : vector<64x106xf32>
      %27 = tpu.matmul %26, %24, %cst_21 {dimension_numbers = #tpu.dot_dimension_numbers<[1], [0], [0], [1], [0, 0, 1, 1], [], []>} : vector<64x32xbf16>, vector<32x106xbf16>, vector<64x106xf32> -> vector<64x106xf32>
      %28 = arith.addf %23, %27 : vector<64x106xf32>
      %29 = vector.extract_strided_slice %5 {offsets = [0, 2], sizes = [32, 106], strides = [1, 1]} : vector<32x108xbf16> to vector<32x106xbf16>
      %c2 = arith.constant 2 : index
      %c0_22 = arith.constant 0 : index
      %c0_23 = arith.constant 0 : index
      %30 = vector.load %arg2[%c2, %c0_22, %c0_23] : memref<9x64x32xbf16, #tpu.memory_space<vmem>>, vector<1x64x32xbf16>
      %31 = vector.shape_cast %30 : vector<1x64x32xbf16> to vector<64x32xbf16>
      %cst_24 = arith.constant dense<0.000000e+00> : vector<64x106xf32>
      %32 = tpu.matmul %31, %29, %cst_24 {dimension_numbers = #tpu.dot_dimension_numbers<[1], [0], [0], [1], [0, 0, 1, 1], [], []>} : vector<64x32xbf16>, vector<32x106xbf16>, vector<64x106xf32> -> vector<64x106xf32>
      %33 = arith.addf %28, %32 : vector<64x106xf32>
      %34 = vector.extract_strided_slice %9 {offsets = [0, 0], sizes = [32, 106], strides = [1, 1]} : vector<32x108xbf16> to vector<32x106xbf16>
      %c3 = arith.constant 3 : index
      %c0_25 = arith.constant 0 : index
      %c0_26 = arith.constant 0 : index
      %35 = vector.load %arg2[%c3, %c0_25, %c0_26] : memref<9x64x32xbf16, #tpu.memory_space<vmem>>, vector<1x64x32xbf16>
      %36 = vector.shape_cast %35 : vector<1x64x32xbf16> to vector<64x32xbf16>
      %cst_27 = arith.constant dense<0.000000e+00> : vector<64x106xf32>
      %37 = tpu.matmul %36, %34, %cst_27 {dimension_numbers = #tpu.dot_dimension_numbers<[1], [0], [0], [1], [0, 0, 1, 1], [], []>} : vector<64x32xbf16>, vector<32x106xbf16>, vector<64x106xf32> -> vector<64x106xf32>
      %38 = arith.addf %33, %37 : vector<64x106xf32>
      %39 = vector.extract_strided_slice %9 {offsets = [0, 1], sizes = [32, 106], strides = [1, 1]} : vector<32x108xbf16> to vector<32x106xbf16>
      %c4 = arith.constant 4 : index
      %c0_28 = arith.constant 0 : index
      %c0_29 = arith.constant 0 : index
      %40 = vector.load %arg2[%c4, %c0_28, %c0_29] : memref<9x64x32xbf16, #tpu.memory_space<vmem>>, vector<1x64x32xbf16>
      %41 = vector.shape_cast %40 : vector<1x64x32xbf16> to vector<64x32xbf16>
      %cst_30 = arith.constant dense<0.000000e+00> : vector<64x106xf32>
      %42 = tpu.matmul %41, %39, %cst_30 {dimension_numbers = #tpu.dot_dimension_numbers<[1], [0], [0], [1], [0, 0, 1, 1], [], []>} : vector<64x32xbf16>, vector<32x106xbf16>, vector<64x106xf32> -> vector<64x106xf32>
      %43 = arith.addf %38, %42 : vector<64x106xf32>
      %44 = vector.extract_strided_slice %9 {offsets = [0, 2], sizes = [32, 106], strides = [1, 1]} : vector<32x108xbf16> to vector<32x106xbf16>
      %c5 = arith.constant 5 : index
      %c0_31 = arith.constant 0 : index
      %c0_32 = arith.constant 0 : index
      %45 = vector.load %arg2[%c5, %c0_31, %c0_32] : memref<9x64x32xbf16, #tpu.memory_space<vmem>>, vector<1x64x32xbf16>
      %46 = vector.shape_cast %45 : vector<1x64x32xbf16> to vector<64x32xbf16>
      %cst_33 = arith.constant dense<0.000000e+00> : vector<64x106xf32>
      %47 = tpu.matmul %46, %44, %cst_33 {dimension_numbers = #tpu.dot_dimension_numbers<[1], [0], [0], [1], [0, 0, 1, 1], [], []>} : vector<64x32xbf16>, vector<32x106xbf16>, vector<64x106xf32> -> vector<64x106xf32>
      %48 = arith.addf %43, %47 : vector<64x106xf32>
      %49 = vector.extract_strided_slice %13 {offsets = [0, 0], sizes = [32, 106], strides = [1, 1]} : vector<32x108xbf16> to vector<32x106xbf16>
      %c6 = arith.constant 6 : index
      %c0_34 = arith.constant 0 : index
      %c0_35 = arith.constant 0 : index
      %50 = vector.load %arg2[%c6, %c0_34, %c0_35] : memref<9x64x32xbf16, #tpu.memory_space<vmem>>, vector<1x64x32xbf16>
      %51 = vector.shape_cast %50 : vector<1x64x32xbf16> to vector<64x32xbf16>
      %cst_36 = arith.constant dense<0.000000e+00> : vector<64x106xf32>
      %52 = tpu.matmul %51, %49, %cst_36 {dimension_numbers = #tpu.dot_dimension_numbers<[1], [0], [0], [1], [0, 0, 1, 1], [], []>} : vector<64x32xbf16>, vector<32x106xbf16>, vector<64x106xf32> -> vector<64x106xf32>
      %53 = arith.addf %48, %52 : vector<64x106xf32>
      %54 = vector.extract_strided_slice %13 {offsets = [0, 1], sizes = [32, 106], strides = [1, 1]} : vector<32x108xbf16> to vector<32x106xbf16>
      %c7 = arith.constant 7 : index
      %c0_37 = arith.constant 0 : index
      %c0_38 = arith.constant 0 : index
      %55 = vector.load %arg2[%c7, %c0_37, %c0_38] : memref<9x64x32xbf16, #tpu.memory_space<vmem>>, vector<1x64x32xbf16>
      %56 = vector.shape_cast %55 : vector<1x64x32xbf16> to vector<64x32xbf16>
      %cst_39 = arith.constant dense<0.000000e+00> : vector<64x106xf32>
      %57 = tpu.matmul %56, %54, %cst_39 {dimension_numbers = #tpu.dot_dimension_numbers<[1], [0], [0], [1], [0, 0, 1, 1], [], []>} : vector<64x32xbf16>, vector<32x106xbf16>, vector<64x106xf32> -> vector<64x106xf32>
      %58 = arith.addf %53, %57 : vector<64x106xf32>
      %59 = vector.extract_strided_slice %13 {offsets = [0, 2], sizes = [32, 106], strides = [1, 1]} : vector<32x108xbf16> to vector<32x106xbf16>
      %c8 = arith.constant 8 : index
      %c0_40 = arith.constant 0 : index
      %c0_41 = arith.constant 0 : index
      %60 = vector.load %arg2[%c8, %c0_40, %c0_41] : memref<9x64x32xbf16, #tpu.memory_space<vmem>>, vector<1x64x32xbf16>
      %61 = vector.shape_cast %60 : vector<1x64x32xbf16> to vector<64x32xbf16>
      %cst_42 = arith.constant dense<0.000000e+00> : vector<64x106xf32>
      %62 = tpu.matmul %61, %59, %cst_42 {dimension_numbers = #tpu.dot_dimension_numbers<[1], [0], [0], [1], [0, 0, 1, 1], [], []>} : vector<64x32xbf16>, vector<32x106xbf16>, vector<64x106xf32> -> vector<64x106xf32>
      %63 = arith.addf %58, %62 : vector<64x106xf32>
      %cst_43 = arith.constant 0.000000e+00 : f32
      %64 = vector.broadcast %cst_43 : f32 to vector<64x106xf32>
      %65 = vector.extract_strided_slice %9 {offsets = [0, 0], sizes = [32, 106], strides = [1, 1]} : vector<32x108xbf16> to vector<32x106xbf16>
      %c0_44 = arith.constant 0 : index
      %c0_45 = arith.constant 0 : index
      %c0_46 = arith.constant 0 : index
      %66 = vector.load %arg2[%c0_44, %c0_45, %c0_46] : memref<9x64x32xbf16, #tpu.memory_space<vmem>>, vector<1x64x32xbf16>
      %67 = vector.shape_cast %66 : vector<1x64x32xbf16> to vector<64x32xbf16>
      %cst_47 = arith.constant dense<0.000000e+00> : vector<64x106xf32>
      %68 = tpu.matmul %67, %65, %cst_47 {dimension_numbers = #tpu.dot_dimension_numbers<[1], [0], [0], [1], [0, 0, 1, 1], [], []>} : vector<64x32xbf16>, vector<32x106xbf16>, vector<64x106xf32> -> vector<64x106xf32>
      %69 = arith.addf %64, %68 : vector<64x106xf32>
      %70 = vector.extract_strided_slice %9 {offsets = [0, 1], sizes = [32, 106], strides = [1, 1]} : vector<32x108xbf16> to vector<32x106xbf16>
      %c1_48 = arith.constant 1 : index
      %c0_49 = arith.constant 0 : index
      %c0_50 = arith.constant 0 : index
      %71 = vector.load %arg2[%c1_48, %c0_49, %c0_50] : memref<9x64x32xbf16, #tpu.memory_space<vmem>>, vector<1x64x32xbf16>
      %72 = vector.shape_cast %71 : vector<1x64x32xbf16> to vector<64x32xbf16>
      %cst_51 = arith.constant dense<0.000000e+00> : vector<64x106xf32>
      %73 = tpu.matmul %72, %70, %cst_51 {dimension_numbers = #tpu.dot_dimension_numbers<[1], [0], [0], [1], [0, 0, 1, 1], [], []>} : vector<64x32xbf16>, vector<32x106xbf16>, vector<64x106xf32> -> vector<64x106xf32>
      %74 = arith.addf %69, %73 : vector<64x106xf32>
      %75 = vector.extract_strided_slice %9 {offsets = [0, 2], sizes = [32, 106], strides = [1, 1]} : vector<32x108xbf16> to vector<32x106xbf16>
      %c2_52 = arith.constant 2 : index
      %c0_53 = arith.constant 0 : index
      %c0_54 = arith.constant 0 : index
      %76 = vector.load %arg2[%c2_52, %c0_53, %c0_54] : memref<9x64x32xbf16, #tpu.memory_space<vmem>>, vector<1x64x32xbf16>
      %77 = vector.shape_cast %76 : vector<1x64x32xbf16> to vector<64x32xbf16>
      %cst_55 = arith.constant dense<0.000000e+00> : vector<64x106xf32>
      %78 = tpu.matmul %77, %75, %cst_55 {dimension_numbers = #tpu.dot_dimension_numbers<[1], [0], [0], [1], [0, 0, 1, 1], [], []>} : vector<64x32xbf16>, vector<32x106xbf16>, vector<64x106xf32> -> vector<64x106xf32>
      %79 = arith.addf %74, %78 : vector<64x106xf32>
      %80 = vector.extract_strided_slice %13 {offsets = [0, 0], sizes = [32, 106], strides = [1, 1]} : vector<32x108xbf16> to vector<32x106xbf16>
      %c3_56 = arith.constant 3 : index
      %c0_57 = arith.constant 0 : index
      %c0_58 = arith.constant 0 : index
      %81 = vector.load %arg2[%c3_56, %c0_57, %c0_58] : memref<9x64x32xbf16, #tpu.memory_space<vmem>>, vector<1x64x32xbf16>
      %82 = vector.shape_cast %81 : vector<1x64x32xbf16> to vector<64x32xbf16>
      %cst_59 = arith.constant dense<0.000000e+00> : vector<64x106xf32>
      %83 = tpu.matmul %82, %80, %cst_59 {dimension_numbers = #tpu.dot_dimension_numbers<[1], [0], [0], [1], [0, 0, 1, 1], [], []>} : vector<64x32xbf16>, vector<32x106xbf16>, vector<64x106xf32> -> vector<64x106xf32>
      %84 = arith.addf %79, %83 : vector<64x106xf32>
      %85 = vector.extract_strided_slice %13 {offsets = [0, 1], sizes = [32, 106], strides = [1, 1]} : vector<32x108xbf16> to vector<32x106xbf16>
      %c4_60 = arith.constant 4 : index
      %c0_61 = arith.constant 0 : index
      %c0_62 = arith.constant 0 : index
      %86 = vector.load %arg2[%c4_60, %c0_61, %c0_62] : memref<9x64x32xbf16, #tpu.memory_space<vmem>>, vector<1x64x32xbf16>
      %87 = vector.shape_cast %86 : vector<1x64x32xbf16> to vector<64x32xbf16>
      %cst_63 = arith.constant dense<0.000000e+00> : vector<64x106xf32>
      %88 = tpu.matmul %87, %85, %cst_63 {dimension_numbers = #tpu.dot_dimension_numbers<[1], [0], [0], [1], [0, 0, 1, 1], [], []>} : vector<64x32xbf16>, vector<32x106xbf16>, vector<64x106xf32> -> vector<64x106xf32>
      %89 = arith.addf %84, %88 : vector<64x106xf32>
      %90 = vector.extract_strided_slice %13 {offsets = [0, 2], sizes = [32, 106], strides = [1, 1]} : vector<32x108xbf16> to vector<32x106xbf16>
      %c5_64 = arith.constant 5 : index
      %c0_65 = arith.constant 0 : index
      %c0_66 = arith.constant 0 : index
      %91 = vector.load %arg2[%c5_64, %c0_65, %c0_66] : memref<9x64x32xbf16, #tpu.memory_space<vmem>>, vector<1x64x32xbf16>
      %92 = vector.shape_cast %91 : vector<1x64x32xbf16> to vector<64x32xbf16>
      %cst_67 = arith.constant dense<0.000000e+00> : vector<64x106xf32>
      %93 = tpu.matmul %92, %90, %cst_67 {dimension_numbers = #tpu.dot_dimension_numbers<[1], [0], [0], [1], [0, 0, 1, 1], [], []>} : vector<64x32xbf16>, vector<32x106xbf16>, vector<64x106xf32> -> vector<64x106xf32>
      %94 = arith.addf %89, %93 : vector<64x106xf32>
      %95 = vector.extract_strided_slice %17 {offsets = [0, 0], sizes = [32, 106], strides = [1, 1]} : vector<32x108xbf16> to vector<32x106xbf16>
      %c6_68 = arith.constant 6 : index
      %c0_69 = arith.constant 0 : index
      %c0_70 = arith.constant 0 : index
      %96 = vector.load %arg2[%c6_68, %c0_69, %c0_70] : memref<9x64x32xbf16, #tpu.memory_space<vmem>>, vector<1x64x32xbf16>
      %97 = vector.shape_cast %96 : vector<1x64x32xbf16> to vector<64x32xbf16>
      %cst_71 = arith.constant dense<0.000000e+00> : vector<64x106xf32>
      %98 = tpu.matmul %97, %95, %cst_71 {dimension_numbers = #tpu.dot_dimension_numbers<[1], [0], [0], [1], [0, 0, 1, 1], [], []>} : vector<64x32xbf16>, vector<32x106xbf16>, vector<64x106xf32> -> vector<64x106xf32>
      %99 = arith.addf %94, %98 : vector<64x106xf32>
      %100 = vector.extract_strided_slice %17 {offsets = [0, 1], sizes = [32, 106], strides = [1, 1]} : vector<32x108xbf16> to vector<32x106xbf16>
      %c7_72 = arith.constant 7 : index
      %c0_73 = arith.constant 0 : index
      %c0_74 = arith.constant 0 : index
      %101 = vector.load %arg2[%c7_72, %c0_73, %c0_74] : memref<9x64x32xbf16, #tpu.memory_space<vmem>>, vector<1x64x32xbf16>
      %102 = vector.shape_cast %101 : vector<1x64x32xbf16> to vector<64x32xbf16>
      %cst_75 = arith.constant dense<0.000000e+00> : vector<64x106xf32>
      %103 = tpu.matmul %102, %100, %cst_75 {dimension_numbers = #tpu.dot_dimension_numbers<[1], [0], [0], [1], [0, 0, 1, 1], [], []>} : vector<64x32xbf16>, vector<32x106xbf16>, vector<64x106xf32> -> vector<64x106xf32>
      %104 = arith.addf %99, %103 : vector<64x106xf32>
      %105 = vector.extract_strided_slice %17 {offsets = [0, 2], sizes = [32, 106], strides = [1, 1]} : vector<32x108xbf16> to vector<32x106xbf16>
      %c8_76 = arith.constant 8 : index
      %c0_77 = arith.constant 0 : index
      %c0_78 = arith.constant 0 : index
      %106 = vector.load %arg2[%c8_76, %c0_77, %c0_78] : memref<9x64x32xbf16, #tpu.memory_space<vmem>>, vector<1x64x32xbf16>
      %107 = vector.shape_cast %106 : vector<1x64x32xbf16> to vector<64x32xbf16>
      %cst_79 = arith.constant dense<0.000000e+00> : vector<64x106xf32>
      %108 = tpu.matmul %107, %105, %cst_79 {dimension_numbers = #tpu.dot_dimension_numbers<[1], [0], [0], [1], [0, 0, 1, 1], [], []>} : vector<64x32xbf16>, vector<32x106xbf16>, vector<64x106xf32> -> vector<64x106xf32>
      %109 = arith.addf %104, %108 : vector<64x106xf32>
      %110 = arith.maximumf %63, %109 : vector<64x106xf32>
      %c0_80 = arith.constant 0 : index
      %c0_81 = arith.constant 0 : index
      %111 = vector.load %arg3[%c0_80, %c0_81] : memref<64x1xf32, #tpu.memory_space<vmem>>, vector<64x1xf32>
      %112 = vector.broadcast %111 : vector<64x1xf32> to vector<64x106xf32>
      %113 = arith.addf %110, %112 : vector<64x106xf32>
      %cst_82 = arith.constant 0.000000e+00 : f32
      %114 = vector.broadcast %cst_82 : f32 to vector<64x106xf32>
      %115 = arith.maximumf %113, %114 : vector<64x106xf32>
      %116 = arith.truncf %115 : vector<64x106xf32> to vector<64x106xbf16>
      %c0_83 = arith.constant 0 : index
      %117 = arith.index_cast %arg5 : i32 to index
      %c0_84 = arith.constant 0 : index
      %c0_85 = arith.constant 0 : index
      %118 = vector.load %arg4[%c0_83, %117, %c0_84, %c0_85] : memref<1x6x64x106xbf16, #tpu.memory_space<vmem>>, vector<1x1x64x106xbf16>
      %119 = vector.shape_cast %118 : vector<1x1x64x106xbf16> to vector<64x106xbf16>
      %120 = vector.shape_cast %116 : vector<64x106xbf16> to vector<1x1x64x106xbf16>
      tpu.vector_store %arg4[%c0_83, %117, %c0_84, %c0_85], %120 {strides = array<i32>} : memref<1x6x64x106xbf16, #tpu.memory_space<vmem>>, vector<1x1x64x106xbf16>,
    }
    %c6_i32_0 = arith.constant 6 : i32
    return
  }
  func.func @transform_0(%arg0: i32) -> (i32, i32, i32, i32) {
    %c0_i32 = arith.constant 0 : i32
    %c0_i32_0 = arith.constant 0 : i32
    %c0_i32_1 = arith.constant 0 : i32
    %c0_i32_2 = arith.constant 0 : i32
    return %arg0, %c0_i32, %c0_i32_0, %c0_i32_1 : i32, i32, i32, i32
  }
  func.func @transform_1(%arg0: i32) -> (i32, i32, i32) {
    %c0_i32 = arith.constant 0 : i32
    %c0_i32_0 = arith.constant 0 : i32
    %c0_i32_1 = arith.constant 0 : i32
    %c0_i32_2 = arith.constant 0 : i32
    return %c0_i32, %c0_i32_0, %c0_i32_1 : i32, i32, i32
  }
  func.func @transform_2(%arg0: i32) -> (i32, i32) {
    %c0_i32 = arith.constant 0 : i32
    %c0_i32_0 = arith.constant 0 : i32
    %c0_i32_1 = arith.constant 0 : i32
    return %c0_i32, %c0_i32_0 : i32, i32
  }
  func.func @transform_3(%arg0: i32) -> (i32, i32, i32, i32) {
    %c0_i32 = arith.constant 0 : i32
    %c0_i32_0 = arith.constant 0 : i32
    %c0_i32_1 = arith.constant 0 : i32
    %c0_i32_2 = arith.constant 0 : i32
    return %arg0, %c0_i32, %c0_i32_0, %c0_i32_1 : i32, i32, i32, i32
  }
}

module attributes {stable_mosaic.version = 11 : i64} {
  func.func @_linear_accum_kernel(%arg0: i32, %arg1: memref<2x6784xbf16, #tpu.memory_space<vmem>>, %arg2: memref<6784x10xbf16, #tpu.memory_space<vmem>>, %arg3: memref<1x10xf32, #tpu.memory_space<vmem>>, %arg4: memref<2x10xf32, #tpu.memory_space<vmem>>) attributes {dimension_semantics = [#tpu.dimension_semantics<arbitrary>], iteration_bounds = array<i64: 3>, scalar_prefetch = 0 : i64, scratch_operands = 0 : i64, tpu.core_type = #tpu.core_type<tc>, window_params = [{transform_indices = @transform_0, window_bounds = array<i64: 2, 6784>}, {transform_indices = @transform_1, window_bounds = array<i64: 6784, 10>}, {pipeline_mode = #tpu.pipeline_mode<synchronous>, transform_indices = @transform_2, window_bounds = array<i64: 1, 10>}, {pipeline_mode = #tpu.pipeline_mode<synchronous>, transform_indices = @transform_3, window_bounds = array<i64: 2, 10>}]} {
    %c0_i32 = arith.constant 0 : i32
    %0 = arith.cmpi eq, %arg0, %c0_i32 : i32
    %1 = arith.extui %0 : i1 to i32
    %c0_i32_0 = arith.constant 0 : i32
    %2 = arith.cmpi ne, %1, %c0_i32_0 : i32
    scf.if %2 {
      %c0_8 = arith.constant 0 : index
      %c0_9 = arith.constant 0 : index
      %9 = vector.load %arg3[%c0_8, %c0_9] : memref<1x10xf32, #tpu.memory_space<vmem>>, vector<1x10xf32>
      %10 = vector.shape_cast %9 : vector<1x10xf32> to vector<1x10xf32>
      %11 = vector.broadcast %10 : vector<1x10xf32> to vector<2x10xf32>
      %c0_10 = arith.constant 0 : index
      %c0_11 = arith.constant 0 : index
      %12 = vector.load %arg4[%c0_10, %c0_11] : memref<2x10xf32, #tpu.memory_space<vmem>>, vector<2x10xf32>
      tpu.vector_store %arg4[%c0_10, %c0_11], %11 {strides = array<i32>} : memref<2x10xf32, #tpu.memory_space<vmem>>, vector<2x10xf32>,
    } else {
    }
    %c0 = arith.constant 0 : index
    %c0_1 = arith.constant 0 : index
    %3 = vector.load %arg4[%c0, %c0_1] : memref<2x10xf32, #tpu.memory_space<vmem>>, vector<2x10xf32>
    %c0_2 = arith.constant 0 : index
    %c0_3 = arith.constant 0 : index
    %4 = vector.load %arg1[%c0_2, %c0_3] : memref<2x6784xbf16, #tpu.memory_space<vmem>>, vector<2x6784xbf16>
    %c0_4 = arith.constant 0 : index
    %c0_5 = arith.constant 0 : index
    %5 = vector.load %arg2[%c0_4, %c0_5] : memref<6784x10xbf16, #tpu.memory_space<vmem>>, vector<6784x10xbf16>
    %cst = arith.constant dense<0.000000e+00> : vector<2x10xf32>
    %6 = tpu.matmul %4, %5, %cst {dimension_numbers = #tpu.dot_dimension_numbers<[1], [0], [0], [1], [0, 0, 1, 1], [], []>} : vector<2x6784xbf16>, vector<6784x10xbf16>, vector<2x10xf32> -> vector<2x10xf32>
    %7 = arith.addf %3, %6 : vector<2x10xf32>
    %c0_6 = arith.constant 0 : index
    %c0_7 = arith.constant 0 : index
    %8 = vector.load %arg4[%c0_6, %c0_7] : memref<2x10xf32, #tpu.memory_space<vmem>>, vector<2x10xf32>
    tpu.vector_store %arg4[%c0_6, %c0_7], %7 {strides = array<i32>} : memref<2x10xf32, #tpu.memory_space<vmem>>, vector<2x10xf32>,
    return
  }
  func.func @transform_0(%arg0: i32) -> (i32, i32) {
    %c0_i32 = arith.constant 0 : i32
    %c0_i32_0 = arith.constant 0 : i32
    return %c0_i32, %arg0 : i32, i32
  }
  func.func @transform_1(%arg0: i32) -> (i32, i32) {
    %c0_i32 = arith.constant 0 : i32
    %c0_i32_0 = arith.constant 0 : i32
    return %arg0, %c0_i32 : i32, i32
  }
  func.func @transform_2(%arg0: i32) -> (i32, i32) {
    %c0_i32 = arith.constant 0 : i32
    %c0_i32_0 = arith.constant 0 : i32
    %c0_i32_1 = arith.constant 0 : i32
    return %c0_i32, %c0_i32_0 : i32, i32
  }
  func.func @transform_3(%arg0: i32) -> (i32, i32) {
    %c0_i32 = arith.constant 0 : i32
    %c0_i32_0 = arith.constant 0 : i32
    %c0_i32_1 = arith.constant 0 : i32
    return %c0_i32, %c0_i32_0 : i32, i32
  }
}

</mosaic_0001>

<llo_original>
// kernel: chapter_cnn_forward.4
$region0: #{chapter_cnn_forward.4}
  #allocation0 [shape = 'u32[]', space=smem, size = 0x4, offset = 0x4, fixed_abs, tag = 'smem constant byte address 0x4 - core index']
  #allocation1 [shape = 'u32[144,128]{1,0:T(1,128)}', space=vmem, size = 0x12000, scoped, tag = 'internal scratch']
  %s0 = inlined_call_operand.vmem [shape: bf16[2,62,1,438], index: 0, kind: input, shape index: {}]
  %s1 = inlined_call_operand.vmem [shape: bf16[9,16,1], index: 1, kind: input, shape index: {}]
  %s2 = inlined_call_operand.vmem [shape: f32[16,1], index: 2, kind: input, shape index: {}]
  %s3 = inlined_call_operand.vmem [shape: bf16[2,30,16,436], index: 3, kind: output, shape index: {}]
  %s4 = sld [smem:[#allocation0]]
  $region52: #{chapter_cnn_forward.4} parent=0
    _
  %s6 = ssub.s32 1, %s4
  %s7 = scalar_select 0, %s6, %s4
  loop: start=0, step=1, limit=4
  $region2: #{chapter_cnn_forward.4} parent=0 // loop_pre_header
    _
  $region3: #{chapter_cnn_forward.4} parent=0 // loop_header
    %s9 = sphi 0, %s13
    %p10 = scmp.ge.s32.totalorder %s9, 4
    %s19 = sphi 0, %s21
    %s22 = sphi 0, %s19
    %s23 = sphi 0, %s22
    %s39 = sphi 0, %s23
    %s43 = sphi 0, %s43
    %s45 = sphi 0, %s43
    %s46 = sphi 0, %s45
    %s60 = sphi 0, %s46
    %s64 = sphi 0, %s64
    %s66 = sphi 0, %s64
    %s67 = sphi 0, %s66
    %s81 = sphi 0, %s67
    %s87 = sphi 0, %s89
    %s90 = sphi 0, %s87
    %s91 = sphi 0, %s90
    %s107 = sphi 0, %s91
  $region4: #{chapter_cnn_forward.4} parent=0 // loop_header_branch
    %12 = sbr.rel (%p10) target = $region8
  $region5: #{chapter_cnn_forward.4} parent=0 // loop_body
    %s14 = ssub.s32 %s9, 1
    %s15 = ssub.s32 %s9, 2
    %s16 = sadd.s32 %s9, 1
    %s17 = ssub.s32 %s9, %s16
    %p18 = scmp.eq.s32.totalorder %s17, 0
    %s20 = sadd.s32 %s19, 1
    %s21 = scalar_select %p18, %s19, %s20
    %p24 = pneg %p18
    %p25 = scmp.eq.s32.totalorder %s9, 1
    %p26 = por %p24, %p25
    %p27 = scmp.ne.s32.totalorder %s19, %s22
    %p28 = scmp.eq.s32.totalorder %s9, 0
    %p29 = por %p27, %p28
    %p30 = scmp.ne.s32.totalorder %s19, %s22
    %p31 = scmp.eq.s32.totalorder %s14, 1
    %p32 = por %p30, %p31
    %p33 = scmp.ne.s32.totalorder %s22, %s23
    %p34 = scmp.eq.s32.totalorder %s14, 0
    %p35 = por %p33, %p34
    %p36 = scmp.ne.s32.totalorder %s22, %s23
    %p37 = scmp.eq.s32.totalorder %s15, 1
    %p38 = por %p36, %p37
    %p40 = scmp.ne.s32.totalorder %s23, %s39
    %p41 = scmp.eq.s32.totalorder %s15, 0
    %p42 = por %p40, %p41
    %s44 = sadd.s32 %s43, 1
    %p47 = scmp.eq.s32.totalorder %s9, 1
    %p48 = scmp.ne.s32.totalorder %s43, %s45
    %p49 = scmp.eq.s32.totalorder %s9, 0
    %p50 = por %p48, %p49
    %p51 = scmp.ne.s32.totalorder %s43, %s45
    %p52 = scmp.eq.s32.totalorder %s14, 1
    %p53 = por %p51, %p52
    %p54 = scmp.ne.s32.totalorder %s45, %s46
    %p55 = scmp.eq.s32.totalorder %s14, 0
    %p56 = por %p54, %p55
    %p57 = scmp.ne.s32.totalorder %s45, %s46
    %p58 = scmp.eq.s32.totalorder %s15, 1
    %p59 = por %p57, %p58
    %p61 = scmp.ne.s32.totalorder %s46, %s60
    %p62 = scmp.eq.s32.totalorder %s15, 0
    %p63 = por %p61, %p62
    %s65 = sadd.s32 %s64, 1
    %p68 = scmp.eq.s32.totalorder %s9, 1
    %p69 = scmp.ne.s32.totalorder %s64, %s66
    %p70 = scmp.eq.s32.totalorder %s9, 0
    %p71 = por %p69, %p70
    %p72 = scmp.ne.s32.totalorder %s64, %s66
    %p73 = scmp.eq.s32.totalorder %s14, 1
    %p74 = por %p72, %p73
    %p75 = scmp.ne.s32.totalorder %s66, %s67
    %p76 = scmp.eq.s32.totalorder %s14, 0
    %p77 = por %p75, %p76
    %p78 = scmp.ne.s32.totalorder %s66, %s67
    %p79 = scmp.eq.s32.totalorder %s15, 1
    %p80 = por %p78, %p79
    %p82 = scmp.ne.s32.totalorder %s67, %s81
    %p83 = scmp.eq.s32.totalorder %s15, 0
    %p84 = por %p82, %p83
    %s85 = ssub.s32 %s9, %s16
    %p86 = scmp.eq.s32.totalorder %s85, 0
    %s88 = sadd.s32 %s87, 1
    %s89 = scalar_select %p86, %s87, %s88
    %p92 = pneg %p86
    %p93 = scmp.eq.s32.totalorder %s9, 1
    %p94 = por %p92, %p93
    %p95 = scmp.ne.s32.totalorder %s87, %s90
    %p96 = scmp.eq.s32.totalorder %s9, 0
    %p97 = por %p95, %p96
    %p98 = scmp.ne.s32.totalorder %s87, %s90
    %p99 = scmp.eq.s32.totalorder %s14, 1
    %p100 = por %p98, %p99
    %p101 = scmp.ne.s32.totalorder %s90, %s91
    %p102 = scmp.eq.s32.totalorder %s14, 0
    %p103 = por %p101, %p102
    %p104 = scmp.ne.s32.totalorder %s90, %s91
    %p105 = scmp.eq.s32.totalorder %s15, 1
    %p106 = por %p104, %p105
    %p108 = scmp.ne.s32.totalorder %s91, %s107
    %p109 = scmp.eq.s32.totalorder %s15, 0
    %p110 = por %p108, %p109
    %p111 = scmp.le.s32.totalorder 1, %s9
    %p112 = scmp.lt.s32.totalorder %s9, 3
    %p113 = pnand %p111, %p112
    %p114 = pneg %p113
    // Predicated region
    $region9: #{chapter_cnn_forward.4} parent=5 // pred_check
      _
    $region10: #{chapter_cnn_forward.4} parent=5 // pred_check_branch
      %116 = sbr.rel (%p113) target = $region12
    $region11: #{chapter_cnn_forward.4} parent=5 // pred_region
      %s117 = ssub.s32 %s9, 1
      // Predicated region
      $region13: #{chapter_cnn_forward.4} parent=11 // pred_check
        %p118 = pneg %p56
      $region14: #{chapter_cnn_forward.4} parent=11 // pred_check_branch
        %120 = sbr.rel (%p118) target = $region16
      $region15: #{chapter_cnn_forward.4} parent=11 // pred_region
        _
      $region16: #{chapter_cnn_forward.4} parent=11 // pred_fallthru
        _
      // Predicated region
      $region17: #{chapter_cnn_forward.4} parent=11 // pred_check
        %p121 = pneg %p77
      $region18: #{chapter_cnn_forward.4} parent=11 // pred_check_branch
        %123 = sbr.rel (%p121) target = $region20
      $region19: #{chapter_cnn_forward.4} parent=11 // pred_region
        _
      $region20: #{chapter_cnn_forward.4} parent=11 // pred_fallthru
        _
    $region12: #{chapter_cnn_forward.4} parent=5 // pred_fallthru
      _
    %p124 = scmp.lt.s32.totalorder %s9, 2
    // Predicated region
    $region21: #{chapter_cnn_forward.4} parent=5 // pred_check
      %p125 = pneg %p124
    $region22: #{chapter_cnn_forward.4} parent=5 // pred_check_branch
      %127 = sbr.rel (%p125) target = $region24
    $region23: #{chapter_cnn_forward.4} parent=5 // pred_region
      // Predicated region
      $region25: #{chapter_cnn_forward.4} parent=23 // pred_check
        %p128 = pneg %p29
      $region26: #{chapter_cnn_forward.4} parent=23 // pred_check_branch
        %130 = sbr.rel (%p128) target = $region28
      $region27: #{chapter_cnn_forward.4} parent=23 // pred_region
        %p131 = scmp.lt.s32.totalorder %s9, 1
        %s132 = scalar_select %p131, %s9, 1
        %s133 = smul.addr %s132, 248
        %s134 = scalar_lea.vmem %s0, %s133
      $region28: #{chapter_cnn_forward.4} parent=23 // pred_fallthru
        _
    $region24: #{chapter_cnn_forward.4} parent=5 // pred_fallthru
      _
    %p135 = scmp.le.s32.totalorder 1, %s9
    %p136 = scmp.lt.s32.totalorder %s9, 3
    %p137 = pnand %p135, %p136
    %p138 = pneg %p137
    // Predicated region
    $region29: #{chapter_cnn_forward.4} parent=5 // pred_check
      _
    $region30: #{chapter_cnn_forward.4} parent=5 // pred_check_branch
      %140 = sbr.rel (%p137) target = $region32
    $region31: #{chapter_cnn_forward.4} parent=5 // pred_region
      %s141 = ssub.s32 %s9, 1
      %p142 = scmp.lt.s32.totalorder %s14, 1
      %s143 = scalar_select %p142, %s14, 1
      %s144 = smul.addr %s143, 248
      %s145 = scalar_lea.vmem %s0, %s144
      %p146 = pneg %p35
      %p147 = pneg %p32
      %p148 = pneg %p56
      %p149 = pneg %p53
      %p150 = pneg %p77
      %p151 = pneg %p74
      %p152 = pneg %p103
      %p153 = pneg %p100
      %p154 = scmp.lt.s32.totalorder %s14, 1
      %s155 = scalar_select %p154, %s14, 1
      %s156 = smul.addr %s155, 240
      %s157 = smul.addr %s156, 4
      %s158 = scalar_lea.vmem %s3, %s157
      %p159 = scmp.lt.s32.totalorder %s14, 1
      %s160 = scalar_select %p159, %s14, 1
      %s161 = smul.addr %s160, 248
      %s162 = scalar_lea.vmem %s0, %s161
      %p163 = scmp.lt.s32.totalorder %s14, 1
      %s164 = scalar_select %p163, %s14, 1
      %s165 = smul.addr %s164, 240
      %s166 = smul.addr %s165, 4
      %s167 = scalar_lea.vmem %s3, %s166
      loop: start=0, step=1, limit=30
      $region33: #{chapter_cnn_forward.4} parent=31 // loop_pre_header
        _
      $region34: #{chapter_cnn_forward.4} parent=31 // loop_header
        %s169 = sphi 0, %s173
        %p170 = scmp.ge.s32.totalorder %s169, 30
      $region35: #{chapter_cnn_forward.4} parent=31 // loop_header_branch
        %172 = sbr.rel (%p170) target = $region39
      $region36: #{chapter_cnn_forward.4} parent=31 // loop_body
        %s174 = smul.u32 %s169, 2
        %s175 = smul.u32 %s174, 4
        %s176 = scalar_lea.vmem %s162, %s175
        %v177 = vld [vmem:[%s176] sm:$0xf]
        %s178 = sadd.s32 %s174, 1
        %s179 = smul.u32 %s178, 4
        %s180 = scalar_lea.vmem %s162, %s179
        %v181 = vld [vmem:[%s180] sm:$0xf]
        %s182 = sadd.s32 %s174, 2
        %s183 = smul.u32 %s182, 4
        %s184 = scalar_lea.vmem %s162, %s183
        %v185 = vld [vmem:[%s184] sm:$0xf]
        %s186 = sadd.s32 %s174, 3
        %s187 = smul.u32 %s186, 4
        %s188 = scalar_lea.vmem %s162, %s187
        %v189 = vld [vmem:[%s188] sm:$0xf]
        %v190 = vld [vmem:[%s1] sm:$0xf]
        %v191 = vld [vmem:[%s1 + $0x4] sm:$0xf]
        %v192 = vunpack.c.l.bf16 %v190
        %v193 = vunpack.c.l.bf16 %v191
        %v194 = vunpack.c.l.bf16 %v177
        %196 = vset.pattern.permute.xlu0 0
        %197 = vperm.xlu0 %196, %v192
        %v198 = vpop.permute.xlu0 %197
        %201 = vset.pattern.permute.xlu0 0
        %202 = vperm.xlu0 %201, %v193
        %v203 = vpop.permute.xlu0 %202
        %v206 = vlaneseq
        %v207 = vshrl.u32 %v206, 7
        %v208 = vsub.s32 0, %v207
        %v209 = vrot.slane %v194, %v208
        %v210 = vlaneseq
        %v211 = vshrl.u32 %v210, 7
        %v212 = vsub.s32 2, %v211
        %v213 = vrot.slane %v194, %v212
        %v214 = vlaneseq
        %v215 = vshrl.u32 %v214, 7
        %v216 = vsub.s32 4, %v215
        %v217 = vrot.slane %v194, %v216
        %v218 = vlaneseq
        %v219 = vshrl.u32 %v218, 7
        %v220 = vsub.s32 6, %v219
        %v221 = vrot.slane %v194, %v220
        %v226 = vlaneseq
        %v227 = vshrl.u32 %v226, 7
        %v228 = vsub.s32 0, %v227
        %v229 = vrot.slane %v209, %v228
        %v230 = vlaneseq
        %v231 = vshrl.u32 %v230, 7
        %v232 = vsub.s32 0, %v231
        %v233 = vrot.slane %v213, %v232
        %v234 = vlaneseq
        %v235 = vshrl.u32 %v234, 7
        %v236 = vsub.s32 0, %v235
        %v237 = vrot.slane %v217, %v236
        %v238 = vlaneseq
        %v239 = vshrl.u32 %v238, 7
        %v240 = vsub.s32 0, %v239
        %v241 = vrot.slane %v221, %v240
        %v242 = vmul.f32 %v198, %v229
        %v243 = vmul.f32 %v198, %v233
        %v244 = vmul.f32 %v198, %v237
        %v245 = vmul.f32 %v198, %v241
        %v246 = vmul.f32 %v203, %v229
        %v247 = vmul.f32 %v203, %v233
        %v248 = vmul.f32 %v203, %v237
        %v249 = vmul.f32 %v203, %v241
        %v250 = vadd.f32 %v242, 0.0
        %v251 = vadd.f32 %v243, 0.0
        %v252 = vadd.f32 %v244, 0.0
        %v253 = vadd.f32 %v245, 0.0
        %v254 = vadd.f32 %v246, 0.0
        %v255 = vadd.f32 %v247, 0.0
        %v256 = vadd.f32 %v248, 0.0
        %v257 = vadd.f32 %v249, 0.0
        %s258 = scalar_lea.vmem %s1, 8
        %v259 = vld [vmem:[%s258] sm:$0xf]
        %v260 = vld [vmem:[%s258 + $0x4] sm:$0xf]
        %v261 = vunpack.c.l.bf16 %v259
        %v262 = vunpack.c.l.bf16 %v260
        %264 = vset.pattern.permute.xlu0 0
        %265 = vperm.xlu0 %264, %v261
        %v266 = vpop.permute.xlu0 %265
        %269 = vset.pattern.permute.xlu0 0
        %270 = vperm.xlu0 %269, %v262
        %v271 = vpop.permute.xlu0 %270
        %v273 = vmul.f32 %v266, %v229
        %v274 = vmul.f32 %v266, %v233
        %v275 = vmul.f32 %v266, %v237
        %v276 = vmul.f32 %v266, %v241
        %v277 = vmul.f32 %v271, %v229
        %v278 = vmul.f32 %v271, %v233
        %v279 = vmul.f32 %v271, %v237
        %v280 = vmul.f32 %v271, %v241
        %289 = vrot.lane.b32.xlu0 %v273, 127
        %v290 = vpop.permute.xlu0 %289
        %291 = vrot.lane.b32.xlu0 %v274, 127
        %v292 = vpop.permute.xlu0 %291
        %293 = vrot.lane.b32.xlu0 %v275, 127
        %v294 = vpop.permute.xlu0 %293
        %295 = vrot.lane.b32.xlu0 %v276, 127
        %v296 = vpop.permute.xlu0 %295
        %297 = vrot.lane.b32.xlu0 %v277, 127
        %v298 = vpop.permute.xlu0 %297
        %299 = vrot.lane.b32.xlu0 %v278, 127
        %v300 = vpop.permute.xlu0 %299
        %301 = vrot.lane.b32.xlu0 %v279, 127
        %v302 = vpop.permute.xlu0 %301
        %303 = vrot.lane.b32.xlu0 %v280, 127
        %v304 = vpop.permute.xlu0 %303
        %vm305 = vcmask 1039360
        %v306 = vsel %vm305, %v290, %v292
        %v307 = vsel %vm305, %v292, %v294
        %v308 = vsel %vm305, %v294, %v296
        %v309 = vsel %vm305, %v298, %v300
        %v310 = vsel %vm305, %v300, %v302
        %v311 = vsel %vm305, %v302, %v304
        %v320 = vadd.f32 %v250, %v306
        %v321 = vadd.f32 %v251, %v307
        %v322 = vadd.f32 %v252, %v308
        %v323 = vadd.f32 %v253, %v296
        %v324 = vadd.f32 %v254, %v309
        %v325 = vadd.f32 %v255, %v310
        %v326 = vadd.f32 %v256, %v311
        %v327 = vadd.f32 %v257, %v304
        %s328 = scalar_lea.vmem %s1, 16
        %v329 = vld [vmem:[%s328] sm:$0xf]
        %v330 = vld [vmem:[%s328 + $0x4] sm:$0xf]
        %v331 = vunpack.c.l.bf16 %v329
        %v332 = vunpack.c.l.bf16 %v330
        %334 = vset.pattern.permute.xlu0 0
        %335 = vperm.xlu0 %334, %v331
        %v336 = vpop.permute.xlu0 %335
        %339 = vset.pattern.permute.xlu0 0
        %340 = vperm.xlu0 %339, %v332
        %v341 = vpop.permute.xlu0 %340
        %v343 = vmul.f32 %v336, %v229
        %v344 = vmul.f32 %v336, %v233
        %v345 = vmul.f32 %v336, %v237
        %v346 = vmul.f32 %v336, %v241
        %v347 = vmul.f32 %v341, %v229
        %v348 = vmul.f32 %v341, %v233
        %v349 = vmul.f32 %v341, %v237
        %v350 = vmul.f32 %v341, %v241
        %359 = vrot.lane.b32.xlu0 %v343, 126
        %v360 = vpop.permute.xlu0 %359
        %361 = vrot.lane.b32.xlu0 %v344, 126
        %v362 = vpop.permute.xlu0 %361
        %363 = vrot.lane.b32.xlu0 %v345, 126
        %v364 = vpop.permute.xlu0 %363
        %365 = vrot.lane.b32.xlu0 %v346, 126
        %v366 = vpop.permute.xlu0 %365
        %367 = vrot.lane.b32.xlu0 %v347, 126
        %v368 = vpop.permute.xlu0 %367
        %369 = vrot.lane.b32.xlu0 %v348, 126
        %v370 = vpop.permute.xlu0 %369
        %371 = vrot.lane.b32.xlu0 %v349, 126
        %v372 = vpop.permute.xlu0 %371
        %373 = vrot.lane.b32.xlu0 %v350, 126
        %v374 = vpop.permute.xlu0 %373
        %vm375 = vcmask 1031168
        %v376 = vsel %vm375, %v360, %v362
        %v377 = vsel %vm375, %v362, %v364
        %v378 = vsel %vm375, %v364, %v366
        %v379 = vsel %vm375, %v368, %v370
        %v380 = vsel %vm375, %v370, %v372
        %v381 = vsel %vm375, %v372, %v374
        %v390 = vadd.f32 %v320, %v376
        %v391 = vadd.f32 %v321, %v377
        %v392 = vadd.f32 %v322, %v378
        %v393 = vadd.f32 %v323, %v366
        %v394 = vadd.f32 %v324, %v379
        %v395 = vadd.f32 %v325, %v380
        %v396 = vadd.f32 %v326, %v381
        %v397 = vadd.f32 %v327, %v374
        %s398 = scalar_lea.vmem %s1, 24
        %v399 = vld [vmem:[%s398] sm:$0xf]
        %v400 = vld [vmem:[%s398 + $0x4] sm:$0xf]
        %v401 = vunpack.c.l.bf16 %v399
        %v402 = vunpack.c.l.bf16 %v400
        %v403 = vunpack.c.l.bf16 %v181
        %405 = vset.pattern.permute.xlu0 0
        %406 = vperm.xlu0 %405, %v401
        %v407 = vpop.permute.xlu0 %406
        %410 = vset.pattern.permute.xlu0 0
        %411 = vperm.xlu0 %410, %v402
        %v412 = vpop.permute.xlu0 %411
        %v415 = vlaneseq
        %v416 = vshrl.u32 %v415, 7
        %v417 = vsub.s32 0, %v416
        %v418 = vrot.slane %v403, %v417
        %v419 = vlaneseq
        %v420 = vshrl.u32 %v419, 7
        %v421 = vsub.s32 2, %v420
        %v422 = vrot.slane %v403, %v421
        %v423 = vlaneseq
        %v424 = vshrl.u32 %v423, 7
        %v425 = vsub.s32 4, %v424
        %v426 = vrot.slane %v403, %v425
        %v427 = vlaneseq
        %v428 = vshrl.u32 %v427, 7
        %v429 = vsub.s32 6, %v428
        %v430 = vrot.slane %v403, %v429
        %v435 = vlaneseq
        %v436 = vshrl.u32 %v435, 7
        %v437 = vsub.s32 0, %v436
        %v438 = vrot.slane %v418, %v437
        %v439 = vlaneseq
        %v440 = vshrl.u32 %v439, 7
        %v441 = vsub.s32 0, %v440
        %v442 = vrot.slane %v422, %v441
        %v443 = vlaneseq
        %v444 = vshrl.u32 %v443, 7
        %v445 = vsub.s32 0, %v444
        %v446 = vrot.slane %v426, %v445
        %v447 = vlaneseq
        %v448 = vshrl.u32 %v447, 7
        %v449 = vsub.s32 0, %v448
        %v450 = vrot.slane %v430, %v449
        %v451 = vmul.f32 %v407, %v438
        %v452 = vmul.f32 %v407, %v442
        %v453 = vmul.f32 %v407, %v446
        %v454 = vmul.f32 %v407, %v450
        %v455 = vmul.f32 %v412, %v438
        %v456 = vmul.f32 %v412, %v442
        %v457 = vmul.f32 %v412, %v446
        %v458 = vmul.f32 %v412, %v450
        %v459 = vadd.f32 %v390, %v451
        %v460 = vadd.f32 %v391, %v452
        %v461 = vadd.f32 %v392, %v453
        %v462 = vadd.f32 %v393, %v454
        %v463 = vadd.f32 %v394, %v455
        %v464 = vadd.f32 %v395, %v456
        %v465 = vadd.f32 %v396, %v457
        %v466 = vadd.f32 %v397, %v458
        %s467 = scalar_lea.vmem %s1, 32
        %v468 = vld [vmem:[%s467] sm:$0xf]
        %v469 = vld [vmem:[%s467 + $0x4] sm:$0xf]
        %v470 = vunpack.c.l.bf16 %v468
        %v471 = vunpack.c.l.bf16 %v469
        %473 = vset.pattern.permute.xlu0 0
        %474 = vperm.xlu0 %473, %v470
        %v475 = vpop.permute.xlu0 %474
        %478 = vset.pattern.permute.xlu0 0
        %479 = vperm.xlu0 %478, %v471
        %v480 = vpop.permute.xlu0 %479
        %v482 = vmul.f32 %v475, %v438
        %v483 = vmul.f32 %v475, %v442
        %v484 = vmul.f32 %v475, %v446
        %v485 = vmul.f32 %v475, %v450
        %v486 = vmul.f32 %v480, %v438
        %v487 = vmul.f32 %v480, %v442
        %v488 = vmul.f32 %v480, %v446
        %v489 = vmul.f32 %v480, %v450
        %498 = vrot.lane.b32.xlu0 %v482, 127
        %v499 = vpop.permute.xlu0 %498
        %500 = vrot.lane.b32.xlu0 %v483, 127
        %v501 = vpop.permute.xlu0 %500
        %502 = vrot.lane.b32.xlu0 %v484, 127
        %v503 = vpop.permute.xlu0 %502
        %504 = vrot.lane.b32.xlu0 %v485, 127
        %v505 = vpop.permute.xlu0 %504
        %506 = vrot.lane.b32.xlu0 %v486, 127
        %v507 = vpop.permute.xlu0 %506
        %508 = vrot.lane.b32.xlu0 %v487, 127
        %v509 = vpop.permute.xlu0 %508
        %510 = vrot.lane.b32.xlu0 %v488, 127
        %v511 = vpop.permute.xlu0 %510
        %512 = vrot.lane.b32.xlu0 %v489, 127
        %v513 = vpop.permute.xlu0 %512
        %v514 = vsel %vm305, %v499, %v501
        %v515 = vsel %vm305, %v501, %v503
        %v516 = vsel %vm305, %v503, %v505
        %v517 = vsel %vm305, %v507, %v509
        %v518 = vsel %vm305, %v509, %v511
        %v519 = vsel %vm305, %v511, %v513
        %v528 = vadd.f32 %v459, %v514
        %v529 = vadd.f32 %v460, %v515
        %v530 = vadd.f32 %v461, %v516
        %v531 = vadd.f32 %v462, %v505
        %v532 = vadd.f32 %v463, %v517
        %v533 = vadd.f32 %v464, %v518
        %v534 = vadd.f32 %v465, %v519
        %v535 = vadd.f32 %v466, %v513
        %s536 = scalar_lea.vmem %s1, 40
        %v537 = vld [vmem:[%s536] sm:$0xf]
        %v538 = vld [vmem:[%s536 + $0x4] sm:$0xf]
        %v539 = vunpack.c.l.bf16 %v537
        %v540 = vunpack.c.l.bf16 %v538
        %542 = vset.pattern.permute.xlu0 0
        %543 = vperm.xlu0 %542, %v539
        %v544 = vpop.permute.xlu0 %543
        %547 = vset.pattern.permute.xlu0 0
        %548 = vperm.xlu0 %547, %v540
        %v549 = vpop.permute.xlu0 %548
        %v551 = vmul.f32 %v544, %v438
        %v552 = vmul.f32 %v544, %v442
        %v553 = vmul.f32 %v544, %v446
        %v554 = vmul.f32 %v544, %v450
        %v555 = vmul.f32 %v549, %v438
        %v556 = vmul.f32 %v549, %v442
        %v557 = vmul.f32 %v549, %v446
        %v558 = vmul.f32 %v549, %v450
        %567 = vrot.lane.b32.xlu0 %v551, 126
        %v568 = vpop.permute.xlu0 %567
        %569 = vrot.lane.b32.xlu0 %v552, 126
        %v570 = vpop.permute.xlu0 %569
        %571 = vrot.lane.b32.xlu0 %v553, 126
        %v572 = vpop.permute.xlu0 %571
        %573 = vrot.lane.b32.xlu0 %v554, 126
        %v574 = vpop.permute.xlu0 %573
        %575 = vrot.lane.b32.xlu0 %v555, 126
        %v576 = vpop.permute.xlu0 %575
        %577 = vrot.lane.b32.xlu0 %v556, 126
        %v578 = vpop.permute.xlu0 %577
        %579 = vrot.lane.b32.xlu0 %v557, 126
        %v580 = vpop.permute.xlu0 %579
        %581 = vrot.lane.b32.xlu0 %v558, 126
        %v582 = vpop.permute.xlu0 %581
        %v583 = vsel %vm375, %v568, %v570
        %v584 = vsel %vm375, %v570, %v572
        %v585 = vsel %vm375, %v572, %v574
        %v586 = vsel %vm375, %v576, %v578
        %v587 = vsel %vm375, %v578, %v580
        %v588 = vsel %vm375, %v580, %v582
        %v597 = vadd.f32 %v528, %v583
        %v598 = vadd.f32 %v529, %v584
        %v599 = vadd.f32 %v530, %v585
        %v600 = vadd.f32 %v531, %v574
        %v601 = vadd.f32 %v532, %v586
        %v602 = vadd.f32 %v533, %v587
        %v603 = vadd.f32 %v534, %v588
        %v604 = vadd.f32 %v535, %v582
        %s605 = scalar_lea.vmem %s1, 48
        %v606 = vld [vmem:[%s605] sm:$0xf]
        %v607 = vld [vmem:[%s605 + $0x4] sm:$0xf]
        %v608 = vunpack.c.l.bf16 %v606
        %v609 = vunpack.c.l.bf16 %v607
        %v610 = vunpack.c.l.bf16 %v185
        %612 = vset.pattern.permute.xlu0 0
        %613 = vperm.xlu0 %612, %v608
        %v614 = vpop.permute.xlu0 %613
        %617 = vset.pattern.permute.xlu0 0
        %618 = vperm.xlu0 %617, %v609
        %v619 = vpop.permute.xlu0 %618
        %v622 = vlaneseq
        %v623 = vshrl.u32 %v622, 7
        %v624 = vsub.s32 0, %v623
        %v625 = vrot.slane %v610, %v624
        %v626 = vlaneseq
        %v627 = vshrl.u32 %v626, 7
        %v628 = vsub.s32 2, %v627
        %v629 = vrot.slane %v610, %v628
        %v630 = vlaneseq
        %v631 = vshrl.u32 %v630, 7
        %v632 = vsub.s32 4, %v631
        %v633 = vrot.slane %v610, %v632
        %v634 = vlaneseq
        %v635 = vshrl.u32 %v634, 7
        %v636 = vsub.s32 6, %v635
        %v637 = vrot.slane %v610, %v636
        %v642 = vlaneseq
        %v643 = vshrl.u32 %v642, 7
        %v644 = vsub.s32 0, %v643
        %v645 = vrot.slane %v625, %v644
        %v646 = vlaneseq
        %v647 = vshrl.u32 %v646, 7
        %v648 = vsub.s32 0, %v647
        %v649 = vrot.slane %v629, %v648
        %v650 = vlaneseq
        %v651 = vshrl.u32 %v650, 7
        %v652 = vsub.s32 0, %v651
        %v653 = vrot.slane %v633, %v652
        %v654 = vlaneseq
        %v655 = vshrl.u32 %v654, 7
        %v656 = vsub.s32 0, %v655
        %v657 = vrot.slane %v637, %v656
        %v658 = vmul.f32 %v614, %v645
        %v659 = vmul.f32 %v614, %v649
        %v660 = vmul.f32 %v614, %v653
        %v661 = vmul.f32 %v614, %v657
        %v662 = vmul.f32 %v619, %v645
        %v663 = vmul.f32 %v619, %v649
        %v664 = vmul.f32 %v619, %v653
        %v665 = vmul.f32 %v619, %v657
        %v666 = vadd.f32 %v597, %v658
        %v667 = vadd.f32 %v598, %v659
        %v668 = vadd.f32 %v599, %v660
        %v669 = vadd.f32 %v600, %v661
        %v670 = vadd.f32 %v601, %v662
        %v671 = vadd.f32 %v602, %v663
        %v672 = vadd.f32 %v603, %v664
        %v673 = vadd.f32 %v604, %v665
        %s674 = scalar_lea.vmem %s1, 56
        %v675 = vld [vmem:[%s674] sm:$0xf]
        %v676 = vld [vmem:[%s674 + $0x4] sm:$0xf]
        %v677 = vunpack.c.l.bf16 %v675
        %v678 = vunpack.c.l.bf16 %v676
        %680 = vset.pattern.permute.xlu0 0
        %681 = vperm.xlu0 %680, %v677
        %v682 = vpop.permute.xlu0 %681
        %685 = vset.pattern.permute.xlu0 0
        %686 = vperm.xlu0 %685, %v678
        %v687 = vpop.permute.xlu0 %686
        %v689 = vmul.f32 %v682, %v645
        %v690 = vmul.f32 %v682, %v649
        %v691 = vmul.f32 %v682, %v653
        %v692 = vmul.f32 %v682, %v657
        %v693 = vmul.f32 %v687, %v645
        %v694 = vmul.f32 %v687, %v649
        %v695 = vmul.f32 %v687, %v653
        %v696 = vmul.f32 %v687, %v657
        %705 = vrot.lane.b32.xlu0 %v689, 127
        %v706 = vpop.permute.xlu0 %705
        %707 = vrot.lane.b32.xlu0 %v690, 127
        %v708 = vpop.permute.xlu0 %707
        %709 = vrot.lane.b32.xlu0 %v691, 127
        %v710 = vpop.permute.xlu0 %709
        %711 = vrot.lane.b32.xlu0 %v692, 127
        %v712 = vpop.permute.xlu0 %711
        %713 = vrot.lane.b32.xlu0 %v693, 127
        %v714 = vpop.permute.xlu0 %713
        %715 = vrot.lane.b32.xlu0 %v694, 127
        %v716 = vpop.permute.xlu0 %715
        %717 = vrot.lane.b32.xlu0 %v695, 127
        %v718 = vpop.permute.xlu0 %717
        %719 = vrot.lane.b32.xlu0 %v696, 127
        %v720 = vpop.permute.xlu0 %719
        %v721 = vsel %vm305, %v706, %v708
        %v722 = vsel %vm305, %v708, %v710
        %v723 = vsel %vm305, %v710, %v712
        %v724 = vsel %vm305, %v714, %v716
        %v725 = vsel %vm305, %v716, %v718
        %v726 = vsel %vm305, %v718, %v720
        %v735 = vadd.f32 %v666, %v721
        %v736 = vadd.f32 %v667, %v722
        %v737 = vadd.f32 %v668, %v723
        %v738 = vadd.f32 %v669, %v712
        %v739 = vadd.f32 %v670, %v724
        %v740 = vadd.f32 %v671, %v725
        %v741 = vadd.f32 %v672, %v726
        %v742 = vadd.f32 %v673, %v720
        %s743 = scalar_lea.vmem %s1, 64
        %v744 = vld [vmem:[%s743] sm:$0xf]
        %v745 = vld [vmem:[%s743 + $0x4] sm:$0xf]
        %v746 = vunpack.c.l.bf16 %v744
        %v747 = vunpack.c.l.bf16 %v745
        %749 = vset.pattern.permute.xlu0 0
        %750 = vperm.xlu0 %749, %v746
        %v751 = vpop.permute.xlu0 %750
        %754 = vset.pattern.permute.xlu0 0
        %755 = vperm.xlu0 %754, %v747
        %v756 = vpop.permute.xlu0 %755
        %v758 = vmul.f32 %v751, %v645
        %v759 = vmul.f32 %v751, %v649
        %v760 = vmul.f32 %v751, %v653
        %v761 = vmul.f32 %v751, %v657
        %v762 = vmul.f32 %v756, %v645
        %v763 = vmul.f32 %v756, %v649
        %v764 = vmul.f32 %v756, %v653
        %v765 = vmul.f32 %v756, %v657
        %774 = vrot.lane.b32.xlu0 %v758, 126
        %v775 = vpop.permute.xlu0 %774
        %776 = vrot.lane.b32.xlu0 %v759, 126
        %v777 = vpop.permute.xlu0 %776
        %778 = vrot.lane.b32.xlu0 %v760, 126
        %v779 = vpop.permute.xlu0 %778
        %780 = vrot.lane.b32.xlu0 %v761, 126
        %v781 = vpop.permute.xlu0 %780
        %782 = vrot.lane.b32.xlu0 %v762, 126
        %v783 = vpop.permute.xlu0 %782
        %784 = vrot.lane.b32.xlu0 %v763, 126
        %v785 = vpop.permute.xlu0 %784
        %786 = vrot.lane.b32.xlu0 %v764, 126
        %v787 = vpop.permute.xlu0 %786
        %788 = vrot.lane.b32.xlu0 %v765, 126
        %v789 = vpop.permute.xlu0 %788
        %v790 = vsel %vm375, %v775, %v777
        %v791 = vsel %vm375, %v777, %v779
        %v792 = vsel %vm375, %v779, %v781
        %v793 = vsel %vm375, %v783, %v785
        %v794 = vsel %vm375, %v785, %v787
        %v795 = vsel %vm375, %v787, %v789
        %v804 = vadd.f32 %v735, %v790
        %v805 = vadd.f32 %v736, %v791
        %v806 = vadd.f32 %v737, %v792
        %v807 = vadd.f32 %v738, %v781
        %v808 = vadd.f32 %v739, %v793
        %v809 = vadd.f32 %v740, %v794
        %v810 = vadd.f32 %v741, %v795
        %v811 = vadd.f32 %v742, %v789
        %v812 = vmul.f32 %v198, %v438
        %v813 = vmul.f32 %v198, %v442
        %v814 = vmul.f32 %v198, %v446
        %v815 = vmul.f32 %v198, %v450
        %v816 = vmul.f32 %v203, %v438
        %v817 = vmul.f32 %v203, %v442
        %v818 = vmul.f32 %v203, %v446
        %v819 = vmul.f32 %v203, %v450
        %v820 = vadd.f32 %v812, 0.0
        %v821 = vadd.f32 %v813, 0.0
        %v822 = vadd.f32 %v814, 0.0
        %v823 = vadd.f32 %v815, 0.0
        %v824 = vadd.f32 %v816, 0.0
        %v825 = vadd.f32 %v817, 0.0
        %v826 = vadd.f32 %v818, 0.0
        %v827 = vadd.f32 %v819, 0.0
        %v828 = vmul.f32 %v266, %v438
        %v829 = vmul.f32 %v266, %v442
        %v830 = vmul.f32 %v266, %v446
        %v831 = vmul.f32 %v266, %v450
        %v832 = vmul.f32 %v271, %v438
        %v833 = vmul.f32 %v271, %v442
        %v834 = vmul.f32 %v271, %v446
        %v835 = vmul.f32 %v271, %v450
        %844 = vrot.lane.b32.xlu0 %v828, 127
        %v845 = vpop.permute.xlu0 %844
        %846 = vrot.lane.b32.xlu0 %v829, 127
        %v847 = vpop.permute.xlu0 %846
        %848 = vrot.lane.b32.xlu0 %v830, 127
        %v849 = vpop.permute.xlu0 %848
        %850 = vrot.lane.b32.xlu0 %v831, 127
        %v851 = vpop.permute.xlu0 %850
        %852 = vrot.lane.b32.xlu0 %v832, 127
        %v853 = vpop.permute.xlu0 %852
        %854 = vrot.lane.b32.xlu0 %v833, 127
        %v855 = vpop.permute.xlu0 %854
        %856 = vrot.lane.b32.xlu0 %v834, 127
        %v857 = vpop.permute.xlu0 %856
        %858 = vrot.lane.b32.xlu0 %v835, 127
        %v859 = vpop.permute.xlu0 %858
        %v860 = vsel %vm305, %v845, %v847
        %v861 = vsel %vm305, %v847, %v849
        %v862 = vsel %vm305, %v849, %v851
        %v863 = vsel %vm305, %v853, %v855
        %v864 = vsel %vm305, %v855, %v857
        %v865 = vsel %vm305, %v857, %v859
        %v874 = vadd.f32 %v820, %v860
        %v875 = vadd.f32 %v821, %v861
        %v876 = vadd.f32 %v822, %v862
        %v877 = vadd.f32 %v823, %v851
        %v878 = vadd.f32 %v824, %v863
        %v879 = vadd.f32 %v825, %v864
        %v880 = vadd.f32 %v826, %v865
        %v881 = vadd.f32 %v827, %v859
        %v882 = vmul.f32 %v336, %v438
        %v883 = vmul.f32 %v336, %v442
        %v884 = vmul.f32 %v336, %v446
        %v885 = vmul.f32 %v336, %v450
        %v886 = vmul.f32 %v341, %v438
        %v887 = vmul.f32 %v341, %v442
        %v888 = vmul.f32 %v341, %v446
        %v889 = vmul.f32 %v341, %v450
        %898 = vrot.lane.b32.xlu0 %v882, 126
        %v899 = vpop.permute.xlu0 %898
        %900 = vrot.lane.b32.xlu0 %v883, 126
        %v901 = vpop.permute.xlu0 %900
        %902 = vrot.lane.b32.xlu0 %v884, 126
        %v903 = vpop.permute.xlu0 %902
        %904 = vrot.lane.b32.xlu0 %v885, 126
        %v905 = vpop.permute.xlu0 %904
        %906 = vrot.lane.b32.xlu0 %v886, 126
        %v907 = vpop.permute.xlu0 %906
        %908 = vrot.lane.b32.xlu0 %v887, 126
        %v909 = vpop.permute.xlu0 %908
        %910 = vrot.lane.b32.xlu0 %v888, 126
        %v911 = vpop.permute.xlu0 %910
        %912 = vrot.lane.b32.xlu0 %v889, 126
        %v913 = vpop.permute.xlu0 %912
        %v914 = vsel %vm375, %v899, %v901
        %v915 = vsel %vm375, %v901, %v903
        %v916 = vsel %vm375, %v903, %v905
        %v917 = vsel %vm375, %v907, %v909
        %v918 = vsel %vm375, %v909, %v911
        %v919 = vsel %vm375, %v911, %v913
        %v928 = vadd.f32 %v874, %v914
        %v929 = vadd.f32 %v875, %v915
        %v930 = vadd.f32 %v876, %v916
        %v931 = vadd.f32 %v877, %v905
        %v932 = vadd.f32 %v878, %v917
        %v933 = vadd.f32 %v879, %v918
        %v934 = vadd.f32 %v880, %v919
        %v935 = vadd.f32 %v881, %v913
        %v936 = vmul.f32 %v407, %v645
        %v937 = vmul.f32 %v407, %v649
        %v938 = vmul.f32 %v407, %v653
        %v939 = vmul.f32 %v407, %v657
        %v940 = vmul.f32 %v412, %v645
        %v941 = vmul.f32 %v412, %v649
        %v942 = vmul.f32 %v412, %v653
        %v943 = vmul.f32 %v412, %v657
        %v944 = vadd.f32 %v928, %v936
        %v945 = vadd.f32 %v929, %v937
        %v946 = vadd.f32 %v930, %v938
        %v947 = vadd.f32 %v931, %v939
        %v948 = vadd.f32 %v932, %v940
        %v949 = vadd.f32 %v933, %v941
        %v950 = vadd.f32 %v934, %v942
        %v951 = vadd.f32 %v935, %v943
        %v952 = vmul.f32 %v475, %v645
        %v953 = vmul.f32 %v475, %v649
        %v954 = vmul.f32 %v475, %v653
        %v955 = vmul.f32 %v475, %v657
        %v956 = vmul.f32 %v480, %v645
        %v957 = vmul.f32 %v480, %v649
        %v958 = vmul.f32 %v480, %v653
        %v959 = vmul.f32 %v480, %v657
        %968 = vrot.lane.b32.xlu0 %v952, 127
        %v969 = vpop.permute.xlu0 %968
        %970 = vrot.lane.b32.xlu0 %v953, 127
        %v971 = vpop.permute.xlu0 %970
        %972 = vrot.lane.b32.xlu0 %v954, 127
        %v973 = vpop.permute.xlu0 %972
        %974 = vrot.lane.b32.xlu0 %v955, 127
        %v975 = vpop.permute.xlu0 %974
        %976 = vrot.lane.b32.xlu0 %v956, 127
        %v977 = vpop.permute.xlu0 %976
        %978 = vrot.lane.b32.xlu0 %v957, 127
        %v979 = vpop.permute.xlu0 %978
        %980 = vrot.lane.b32.xlu0 %v958, 127
        %v981 = vpop.permute.xlu0 %980
        %982 = vrot.lane.b32.xlu0 %v959, 127
        %v983 = vpop.permute.xlu0 %982
        %v984 = vsel %vm305, %v969, %v971
        %v985 = vsel %vm305, %v971, %v973
        %v986 = vsel %vm305, %v973, %v975
        %v987 = vsel %vm305, %v977, %v979
        %v988 = vsel %vm305, %v979, %v981
        %v989 = vsel %vm305, %v981, %v983
        %v998 = vadd.f32 %v944, %v984
        %v999 = vadd.f32 %v945, %v985
        %v1000 = vadd.f32 %v946, %v986
        %v1001 = vadd.f32 %v947, %v975
        %v1002 = vadd.f32 %v948, %v987
        %v1003 = vadd.f32 %v949, %v988
        %v1004 = vadd.f32 %v950, %v989
        %v1005 = vadd.f32 %v951, %v983
        %v1006 = vmul.f32 %v544, %v645
        %v1007 = vmul.f32 %v544, %v649
        %v1008 = vmul.f32 %v544, %v653
        %v1009 = vmul.f32 %v544, %v657
        %v1010 = vmul.f32 %v549, %v645
        %v1011 = vmul.f32 %v549, %v649
        %v1012 = vmul.f32 %v549, %v653
        %v1013 = vmul.f32 %v549, %v657
        %1022 = vrot.lane.b32.xlu0 %v1006, 126
        %v1023 = vpop.permute.xlu0 %1022
        %1024 = vrot.lane.b32.xlu0 %v1007, 126
        %v1025 = vpop.permute.xlu0 %1024
        %1026 = vrot.lane.b32.xlu0 %v1008, 126
        %v1027 = vpop.permute.xlu0 %1026
        %1028 = vrot.lane.b32.xlu0 %v1009, 126
        %v1029 = vpop.permute.xlu0 %1028
        %1030 = vrot.lane.b32.xlu0 %v1010, 126
        %v1031 = vpop.permute.xlu0 %1030
        %1032 = vrot.lane.b32.xlu0 %v1011, 126
        %v1033 = vpop.permute.xlu0 %1032
        %1034 = vrot.lane.b32.xlu0 %v1012, 126
        %v1035 = vpop.permute.xlu0 %1034
        %1036 = vrot.lane.b32.xlu0 %v1013, 126
        %v1037 = vpop.permute.xlu0 %1036
        %v1038 = vsel %vm375, %v1023, %v1025
        %v1039 = vsel %vm375, %v1025, %v1027
        %v1040 = vsel %vm375, %v1027, %v1029
        %v1041 = vsel %vm375, %v1031, %v1033
        %v1042 = vsel %vm375, %v1033, %v1035
        %v1043 = vsel %vm375, %v1035, %v1037
        %v1052 = vadd.f32 %v998, %v1038
        %v1053 = vadd.f32 %v999, %v1039
        %v1054 = vadd.f32 %v1000, %v1040
        %v1055 = vadd.f32 %v1001, %v1029
        %v1056 = vadd.f32 %v1002, %v1041
        %v1057 = vadd.f32 %v1003, %v1042
        %v1058 = vadd.f32 %v1004, %v1043
        %v1059 = vadd.f32 %v1005, %v1037
        %v1060 = vunpack.c.l.bf16 %v189
        %v1062 = vlaneseq
        %v1063 = vshrl.u32 %v1062, 7
        %v1064 = vsub.s32 0, %v1063
        %v1065 = vrot.slane %v1060, %v1064
        %v1066 = vlaneseq
        %v1067 = vshrl.u32 %v1066, 7
        %v1068 = vsub.s32 2, %v1067
        %v1069 = vrot.slane %v1060, %v1068
        %v1070 = vlaneseq
        %v1071 = vshrl.u32 %v1070, 7
        %v1072 = vsub.s32 4, %v1071
        %v1073 = vrot.slane %v1060, %v1072
        %v1074 = vlaneseq
        %v1075 = vshrl.u32 %v1074, 7
        %v1076 = vsub.s32 6, %v1075
        %v1077 = vrot.slane %v1060, %v1076
        %v1082 = vlaneseq
        %v1083 = vshrl.u32 %v1082, 7
        %v1084 = vsub.s32 0, %v1083
        %v1085 = vrot.slane %v1065, %v1084
        %v1086 = vlaneseq
        %v1087 = vshrl.u32 %v1086, 7
        %v1088 = vsub.s32 0, %v1087
        %v1089 = vrot.slane %v1069, %v1088
        %v1090 = vlaneseq
        %v1091 = vshrl.u32 %v1090, 7
        %v1092 = vsub.s32 0, %v1091
        %v1093 = vrot.slane %v1073, %v1092
        %v1094 = vlaneseq
        %v1095 = vshrl.u32 %v1094, 7
        %v1096 = vsub.s32 0, %v1095
        %v1097 = vrot.slane %v1077, %v1096
        %v1098 = vmul.f32 %v614, %v1085
        %v1099 = vmul.f32 %v614, %v1089
        %v1100 = vmul.f32 %v614, %v1093
        %v1101 = vmul.f32 %v614, %v1097
        %v1102 = vmul.f32 %v619, %v1085
        %v1103 = vmul.f32 %v619, %v1089
        %v1104 = vmul.f32 %v619, %v1093
        %v1105 = vmul.f32 %v619, %v1097
        %v1106 = vadd.f32 %v1052, %v1098
        %v1107 = vadd.f32 %v1053, %v1099
        %v1108 = vadd.f32 %v1054, %v1100
        %v1109 = vadd.f32 %v1055, %v1101
        %v1110 = vadd.f32 %v1056, %v1102
        %v1111 = vadd.f32 %v1057, %v1103
        %v1112 = vadd.f32 %v1058, %v1104
        %v1113 = vadd.f32 %v1059, %v1105
        %v1114 = vmul.f32 %v682, %v1085
        %v1115 = vmul.f32 %v682, %v1089
        %v1116 = vmul.f32 %v682, %v1093
        %v1117 = vmul.f32 %v682, %v1097
        %v1118 = vmul.f32 %v687, %v1085
        %v1119 = vmul.f32 %v687, %v1089
        %v1120 = vmul.f32 %v687, %v1093
        %v1121 = vmul.f32 %v687, %v1097
        %1130 = vrot.lane.b32.xlu0 %v1114, 127
        %v1131 = vpop.permute.xlu0 %1130
        %1132 = vrot.lane.b32.xlu0 %v1115, 127
        %v1133 = vpop.permute.xlu0 %1132
        %1134 = vrot.lane.b32.xlu0 %v1116, 127
        %v1135 = vpop.permute.xlu0 %1134
        %1136 = vrot.lane.b32.xlu0 %v1117, 127
        %v1137 = vpop.permute.xlu0 %1136
        %1138 = vrot.lane.b32.xlu0 %v1118, 127
        %v1139 = vpop.permute.xlu0 %1138
        %1140 = vrot.lane.b32.xlu0 %v1119, 127
        %v1141 = vpop.permute.xlu0 %1140
        %1142 = vrot.lane.b32.xlu0 %v1120, 127
        %v1143 = vpop.permute.xlu0 %1142
        %1144 = vrot.lane.b32.xlu0 %v1121, 127
        %v1145 = vpop.permute.xlu0 %1144
        %v1146 = vsel %vm305, %v1131, %v1133
        %v1147 = vsel %vm305, %v1133, %v1135
        %v1148 = vsel %vm305, %v1135, %v1137
        %v1149 = vsel %vm305, %v1139, %v1141
        %v1150 = vsel %vm305, %v1141, %v1143
        %v1151 = vsel %vm305, %v1143, %v1145
        %v1160 = vadd.f32 %v1106, %v1146
        %v1161 = vadd.f32 %v1107, %v1147
        %v1162 = vadd.f32 %v1108, %v1148
        %v1163 = vadd.f32 %v1109, %v1137
        %v1164 = vadd.f32 %v1110, %v1149
        %v1165 = vadd.f32 %v1111, %v1150
        %v1166 = vadd.f32 %v1112, %v1151
        %v1167 = vadd.f32 %v1113, %v1145
        %v1168 = vmul.f32 %v751, %v1085
        %v1169 = vmul.f32 %v751, %v1089
        %v1170 = vmul.f32 %v751, %v1093
        %v1171 = vmul.f32 %v751, %v1097
        %v1172 = vmul.f32 %v756, %v1085
        %v1173 = vmul.f32 %v756, %v1089
        %v1174 = vmul.f32 %v756, %v1093
        %v1175 = vmul.f32 %v756, %v1097
        %1184 = vrot.lane.b32.xlu0 %v1168, 126
        %v1185 = vpop.permute.xlu0 %1184
        %1186 = vrot.lane.b32.xlu0 %v1169, 126
        %v1187 = vpop.permute.xlu0 %1186
        %1188 = vrot.lane.b32.xlu0 %v1170, 126
        %v1189 = vpop.permute.xlu0 %1188
        %1190 = vrot.lane.b32.xlu0 %v1171, 126
        %v1191 = vpop.permute.xlu0 %1190
        %1192 = vrot.lane.b32.xlu0 %v1172, 126
        %v1193 = vpop.permute.xlu0 %1192
        %1194 = vrot.lane.b32.xlu0 %v1173, 126
        %v1195 = vpop.permute.xlu0 %1194
        %1196 = vrot.lane.b32.xlu0 %v1174, 126
        %v1197 = vpop.permute.xlu0 %1196
        %1198 = vrot.lane.b32.xlu0 %v1175, 126
        %v1199 = vpop.permute.xlu0 %1198
        %v1200 = vsel %vm375, %v1185, %v1187
        %v1201 = vsel %vm375, %v1187, %v1189
        %v1202 = vsel %vm375, %v1189, %v1191
        %v1203 = vsel %vm375, %v1193, %v1195
        %v1204 = vsel %vm375, %v1195, %v1197
        %v1205 = vsel %vm375, %v1197, %v1199
        %v1214 = vadd.f32 %v1160, %v1200
        %v1215 = vadd.f32 %v1161, %v1201
        %v1216 = vadd.f32 %v1162, %v1202
        %v1217 = vadd.f32 %v1163, %v1191
        %v1218 = vadd.f32 %v1164, %v1203
        %v1219 = vadd.f32 %v1165, %v1204
        %v1220 = vadd.f32 %v1166, %v1205
        %v1221 = vadd.f32 %v1167, %v1199
        %v1222 = vmax.f32 %v804, %v1214
        %v1223 = vmax.f32 %v805, %v1215
        %v1224 = vmax.f32 %v806, %v1216
        %v1225 = vmax.f32 %v807, %v1217
        %v1226 = vmax.f32 %v808, %v1218
        %v1227 = vmax.f32 %v809, %v1219
        %v1228 = vmax.f32 %v810, %v1220
        %v1229 = vmax.f32 %v811, %v1221
        %v1230 = vld [vmem:[%s2] sm:$0xff]
        %v1231 = vld [vmem:[%s2 + $0x8] sm:$0xff]
        %1233 = vset.pattern.permute.xlu0 0
        %1234 = vperm.xlu0 %1233, %v1230
        %v1235 = vpop.permute.xlu0 %1234
        %1238 = vset.pattern.permute.xlu0 0
        %1239 = vperm.xlu0 %1238, %v1231
        %v1240 = vpop.permute.xlu0 %1239
        %v1242 = vadd.f32 %v1222, %v1235
        %v1243 = vadd.f32 %v1223, %v1235
        %v1244 = vadd.f32 %v1224, %v1235
        %v1245 = vadd.f32 %v1225, %v1235
        %v1246 = vadd.f32 %v1226, %v1240
        %v1247 = vadd.f32 %v1227, %v1240
        %v1248 = vadd.f32 %v1228, %v1240
        %v1249 = vadd.f32 %v1229, %v1240
        %v1250 = vmax.f32 %v1242, 0.0
        %v1251 = vmax.f32 %v1243, 0.0
        %v1252 = vmax.f32 %v1244, 0.0
        %v1253 = vmax.f32 %v1245, 0.0
        %v1254 = vmax.f32 %v1246, 0.0
        %v1255 = vmax.f32 %v1247, 0.0
        %v1256 = vmax.f32 %v1248, 0.0
        %v1257 = vmax.f32 %v1249, 0.0
        %v1258 = vpack.c.bf16 %v1254, %v1250
        %v1259 = vpack.c.bf16 %v1255, %v1251
        %v1260 = vpack.c.bf16 %v1256, %v1252
        %v1261 = vpack.c.bf16 %v1257, %v1253
        %v1266 = vunpack.c.l.b16 %v1258
        %v1267 = vunpack.c.l.b16 %v1259
        %v1268 = vunpack.c.l.b16 %v1260
        %v1269 = vunpack.c.l.b16 %v1261
        %v1270 = vunpack.c.h.b16 %v1258
        %v1271 = vunpack.c.h.b16 %v1259
        %v1272 = vunpack.c.h.b16 %v1260
        %v1273 = vunpack.c.h.b16 %v1261
        %v1274 = vpack.c.b16 %v1267, %v1266
        %v1275 = vpack.c.b16 %v1269, %v1268
        %v1276 = vpack.c.b16 %v1271, %v1270
        %v1277 = vpack.c.b16 %v1273, %v1272
        %s1282 = smul.u32 %s169, 8
        %s1283 = smul.addr %s1282, 4
        %s1284 = scalar_lea.vmem %s167, %s1283
        %1285 = vst [vmem:[%s1284] sm:$0xff] %v1274
        %vm1286 = vcmask 1043456
        %vm1287 = vcmask 424964
        %vm1288 = vmor %vm1287, %vm1286
        %1289 = vst.msk [vmem:[%s1284 + $0x8] sm:$0xff] %vm1288, %v1275
        %1290 = vst [vmem:[%s1284 + $0x10] sm:$0xff] %v1276
        %1291 = vst.msk [vmem:[%s1284 + $0x18] sm:$0xff] %vm1288, %v1277
      $region37: #{chapter_cnn_forward.4} parent=31 // loop_footer
        %s173 = sadd.s32 1, %s169
      $region38: #{chapter_cnn_forward.4} parent=31 // loop_footer_branch
        %168 = sbr.rel target = $region34
      $region39: #{chapter_cnn_forward.4} parent=31 // loop_exit
        _
      %p1292 = scmp.lt.s32.totalorder %s14, 1
      %s1293 = scalar_select %p1292, %s14, 1
      %s1294 = smul.addr %s1293, 240
      %s1295 = smul.addr %s1294, 4
      %s1296 = scalar_lea.vmem %s3, %s1295
      // Predicated region
      $region40: #{chapter_cnn_forward.4} parent=31 // pred_check
        %p1297 = pneg %p100
      $region41: #{chapter_cnn_forward.4} parent=31 // pred_check_branch
        %1299 = sbr.rel (%p1297) target = $region43
      $region42: #{chapter_cnn_forward.4} parent=31 // pred_region
        _
      $region43: #{chapter_cnn_forward.4} parent=31 // pred_fallthru
        _
    $region32: #{chapter_cnn_forward.4} parent=5 // pred_fallthru
      _
    %p1300 = scmp.le.s32.totalorder 2, %s9
    // Predicated region
    $region44: #{chapter_cnn_forward.4} parent=5 // pred_check
      %p1301 = pneg %p1300
    $region45: #{chapter_cnn_forward.4} parent=5 // pred_check_branch
      %1303 = sbr.rel (%p1301) target = $region47
    $region46: #{chapter_cnn_forward.4} parent=5 // pred_region
      %s1304 = ssub.s32 %s9, 2
      // Predicated region
      $region48: #{chapter_cnn_forward.4} parent=46 // pred_check
        %p1305 = pneg %p106
      $region49: #{chapter_cnn_forward.4} parent=46 // pred_check_branch
        %1307 = sbr.rel (%p1305) target = $region51
      $region50: #{chapter_cnn_forward.4} parent=46 // pred_region
        %p1308 = scmp.lt.s32.totalorder %s15, 1
        %s1309 = scalar_select %p1308, %s15, 1
        %s1310 = smul.addr %s1309, 240
        %s1311 = smul.addr %s1310, 4
        %s1312 = scalar_lea.vmem %s3, %s1311
      $region51: #{chapter_cnn_forward.4} parent=46 // pred_fallthru
        _
    $region47: #{chapter_cnn_forward.4} parent=5 // pred_fallthru
      _
  $region6: #{chapter_cnn_forward.4} parent=0 // loop_footer
    %s13 = sadd.s32 1, %s9
  $region7: #{chapter_cnn_forward.4} parent=0 // loop_footer_branch
    %8 = sbr.rel target = $region3
  $region8: #{chapter_cnn_forward.4} parent=0 // loop_exit
    _

// kernel: chapter_cnn_forward.5
$region0: #{chapter_cnn_forward.5}
  #allocation0 [shape = 'u32[]', space=smem, size = 0x4, offset = 0x4, fixed_abs, tag = 'smem constant byte address 0x4 - core index']
  #allocation1 [shape = 'u32[144,128]{1,0:T(1,128)}', space=vmem, size = 0x12000, scoped, tag = 'internal scratch']
  %s0 = inlined_call_operand.vmem [shape: bf16[2,30,16,218], index: 0, kind: input, shape index: {}]
  %s1 = inlined_call_operand.vmem [shape: bf16[9,32,16], index: 1, kind: input, shape index: {}]
  %s2 = inlined_call_operand.vmem [shape: f32[32,1], index: 2, kind: input, shape index: {}]
  %s3 = inlined_call_operand.vmem [shape: bf16[2,14,32,216], index: 3, kind: output, shape index: {}]
  %s4 = sld [smem:[#allocation0]]
  $region52: #{chapter_cnn_forward.5} parent=0
    _
  %s6 = ssub.s32 1, %s4
  %s7 = scalar_select 0, %s6, %s4
  loop: start=0, step=1, limit=4
  $region2: #{chapter_cnn_forward.5} parent=0 // loop_pre_header
    _
  $region3: #{chapter_cnn_forward.5} parent=0 // loop_header
    %s9 = sphi 0, %s13
    %p10 = scmp.ge.s32.totalorder %s9, 4
    %s19 = sphi 0, %s21
    %s22 = sphi 0, %s19
    %s23 = sphi 0, %s22
    %s39 = sphi 0, %s23
    %s43 = sphi 0, %s43
    %s45 = sphi 0, %s43
    %s46 = sphi 0, %s45
    %s60 = sphi 0, %s46
    %s64 = sphi 0, %s64
    %s66 = sphi 0, %s64
    %s67 = sphi 0, %s66
    %s81 = sphi 0, %s67
    %s87 = sphi 0, %s89
    %s90 = sphi 0, %s87
    %s91 = sphi 0, %s90
    %s107 = sphi 0, %s91
  $region4: #{chapter_cnn_forward.5} parent=0 // loop_header_branch
    %12 = sbr.rel (%p10) target = $region8
  $region5: #{chapter_cnn_forward.5} parent=0 // loop_body
    %s14 = ssub.s32 %s9, 1
    %s15 = ssub.s32 %s9, 2
    %s16 = sadd.s32 %s9, 1
    %s17 = ssub.s32 %s9, %s16
    %p18 = scmp.eq.s32.totalorder %s17, 0
    %s20 = sadd.s32 %s19, 1
    %s21 = scalar_select %p18, %s19, %s20
    %p24 = pneg %p18
    %p25 = scmp.eq.s32.totalorder %s9, 1
    %p26 = por %p24, %p25
    %p27 = scmp.ne.s32.totalorder %s19, %s22
    %p28 = scmp.eq.s32.totalorder %s9, 0
    %p29 = por %p27, %p28
    %p30 = scmp.ne.s32.totalorder %s19, %s22
    %p31 = scmp.eq.s32.totalorder %s14, 1
    %p32 = por %p30, %p31
    %p33 = scmp.ne.s32.totalorder %s22, %s23
    %p34 = scmp.eq.s32.totalorder %s14, 0
    %p35 = por %p33, %p34
    %p36 = scmp.ne.s32.totalorder %s22, %s23
    %p37 = scmp.eq.s32.totalorder %s15, 1
    %p38 = por %p36, %p37
    %p40 = scmp.ne.s32.totalorder %s23, %s39
    %p41 = scmp.eq.s32.totalorder %s15, 0
    %p42 = por %p40, %p41
    %s44 = sadd.s32 %s43, 1
    %p47 = scmp.eq.s32.totalorder %s9, 1
    %p48 = scmp.ne.s32.totalorder %s43, %s45
    %p49 = scmp.eq.s32.totalorder %s9, 0
    %p50 = por %p48, %p49
    %p51 = scmp.ne.s32.totalorder %s43, %s45
    %p52 = scmp.eq.s32.totalorder %s14, 1
    %p53 = por %p51, %p52
    %p54 = scmp.ne.s32.totalorder %s45, %s46
    %p55 = scmp.eq.s32.totalorder %s14, 0
    %p56 = por %p54, %p55
    %p57 = scmp.ne.s32.totalorder %s45, %s46
    %p58 = scmp.eq.s32.totalorder %s15, 1
    %p59 = por %p57, %p58
    %p61 = scmp.ne.s32.totalorder %s46, %s60
    %p62 = scmp.eq.s32.totalorder %s15, 0
    %p63 = por %p61, %p62
    %s65 = sadd.s32 %s64, 1
    %p68 = scmp.eq.s32.totalorder %s9, 1
    %p69 = scmp.ne.s32.totalorder %s64, %s66
    %p70 = scmp.eq.s32.totalorder %s9, 0
    %p71 = por %p69, %p70
    %p72 = scmp.ne.s32.totalorder %s64, %s66
    %p73 = scmp.eq.s32.totalorder %s14, 1
    %p74 = por %p72, %p73
    %p75 = scmp.ne.s32.totalorder %s66, %s67
    %p76 = scmp.eq.s32.totalorder %s14, 0
    %p77 = por %p75, %p76
    %p78 = scmp.ne.s32.totalorder %s66, %s67
    %p79 = scmp.eq.s32.totalorder %s15, 1
    %p80 = por %p78, %p79
    %p82 = scmp.ne.s32.totalorder %s67, %s81
    %p83 = scmp.eq.s32.totalorder %s15, 0
    %p84 = por %p82, %p83
    %s85 = ssub.s32 %s9, %s16
    %p86 = scmp.eq.s32.totalorder %s85, 0
    %s88 = sadd.s32 %s87, 1
    %s89 = scalar_select %p86, %s87, %s88
    %p92 = pneg %p86
    %p93 = scmp.eq.s32.totalorder %s9, 1
    %p94 = por %p92, %p93
    %p95 = scmp.ne.s32.totalorder %s87, %s90
    %p96 = scmp.eq.s32.totalorder %s9, 0
    %p97 = por %p95, %p96
    %p98 = scmp.ne.s32.totalorder %s87, %s90
    %p99 = scmp.eq.s32.totalorder %s14, 1
    %p100 = por %p98, %p99
    %p101 = scmp.ne.s32.totalorder %s90, %s91
    %p102 = scmp.eq.s32.totalorder %s14, 0
    %p103 = por %p101, %p102
    %p104 = scmp.ne.s32.totalorder %s90, %s91
    %p105 = scmp.eq.s32.totalorder %s15, 1
    %p106 = por %p104, %p105
    %p108 = scmp.ne.s32.totalorder %s91, %s107
    %p109 = scmp.eq.s32.totalorder %s15, 0
    %p110 = por %p108, %p109
    %p111 = scmp.le.s32.totalorder 1, %s9
    %p112 = scmp.lt.s32.totalorder %s9, 3
    %p113 = pnand %p111, %p112
    %p114 = pneg %p113
    // Predicated region
    $region9: #{chapter_cnn_forward.5} parent=5 // pred_check
      _
    $region10: #{chapter_cnn_forward.5} parent=5 // pred_check_branch
      %116 = sbr.rel (%p113) target = $region12
    $region11: #{chapter_cnn_forward.5} parent=5 // pred_region
      %s117 = ssub.s32 %s9, 1
      // Predicated region
      $region13: #{chapter_cnn_forward.5} parent=11 // pred_check
        %p118 = pneg %p56
      $region14: #{chapter_cnn_forward.5} parent=11 // pred_check_branch
        %120 = sbr.rel (%p118) target = $region16
      $region15: #{chapter_cnn_forward.5} parent=11 // pred_region
        _
      $region16: #{chapter_cnn_forward.5} parent=11 // pred_fallthru
        _
      // Predicated region
      $region17: #{chapter_cnn_forward.5} parent=11 // pred_check
        %p121 = pneg %p77
      $region18: #{chapter_cnn_forward.5} parent=11 // pred_check_branch
        %123 = sbr.rel (%p121) target = $region20
      $region19: #{chapter_cnn_forward.5} parent=11 // pred_region
        _
      $region20: #{chapter_cnn_forward.5} parent=11 // pred_fallthru
        _
    $region12: #{chapter_cnn_forward.5} parent=5 // pred_fallthru
      _
    %p124 = scmp.lt.s32.totalorder %s9, 2
    // Predicated region
    $region21: #{chapter_cnn_forward.5} parent=5 // pred_check
      %p125 = pneg %p124
    $region22: #{chapter_cnn_forward.5} parent=5 // pred_check_branch
      %127 = sbr.rel (%p125) target = $region24
    $region23: #{chapter_cnn_forward.5} parent=5 // pred_region
      // Predicated region
      $region25: #{chapter_cnn_forward.5} parent=23 // pred_check
        %p128 = pneg %p29
      $region26: #{chapter_cnn_forward.5} parent=23 // pred_check_branch
        %130 = sbr.rel (%p128) target = $region28
      $region27: #{chapter_cnn_forward.5} parent=23 // pred_region
        %p131 = scmp.lt.s32.totalorder %s9, 1
        %s132 = scalar_select %p131, %s9, 1
        %s133 = smul.addr %s132, 120
        %s134 = smul.addr %s133, 4
        %s135 = scalar_lea.vmem %s0, %s134
      $region28: #{chapter_cnn_forward.5} parent=23 // pred_fallthru
        _
    $region24: #{chapter_cnn_forward.5} parent=5 // pred_fallthru
      _
    %p136 = scmp.le.s32.totalorder 1, %s9
    %p137 = scmp.lt.s32.totalorder %s9, 3
    %p138 = pnand %p136, %p137
    %p139 = pneg %p138
    // Predicated region
    $region29: #{chapter_cnn_forward.5} parent=5 // pred_check
      _
    $region30: #{chapter_cnn_forward.5} parent=5 // pred_check_branch
      %141 = sbr.rel (%p138) target = $region32
    $region31: #{chapter_cnn_forward.5} parent=5 // pred_region
      %s142 = ssub.s32 %s9, 1
      %p143 = scmp.lt.s32.totalorder %s14, 1
      %s144 = scalar_select %p143, %s14, 1
      %s145 = smul.addr %s144, 120
      %s146 = smul.addr %s145, 4
      %s147 = scalar_lea.vmem %s0, %s146
      %p148 = pneg %p35
      %p149 = pneg %p32
      %p150 = pneg %p56
      %p151 = pneg %p53
      %p152 = pneg %p77
      %p153 = pneg %p74
      %p154 = pneg %p103
      %p155 = pneg %p100
      %p156 = scmp.lt.s32.totalorder %s14, 1
      %s157 = scalar_select %p156, %s14, 1
      %s158 = smul.addr %s157, 112
      %s159 = smul.addr %s158, 4
      %s160 = scalar_lea.vmem %s3, %s159
      %p161 = scmp.lt.s32.totalorder %s14, 1
      %s162 = scalar_select %p161, %s14, 1
      %s163 = smul.addr %s162, 120
      %s164 = smul.addr %s163, 4
      %s165 = scalar_lea.vmem %s0, %s164
      %p166 = scmp.lt.s32.totalorder %s14, 1
      %s167 = scalar_select %p166, %s14, 1
      %s168 = smul.addr %s167, 112
      %s169 = smul.addr %s168, 4
      %s170 = scalar_lea.vmem %s3, %s169
      loop: start=0, step=1, limit=14
      $region33: #{chapter_cnn_forward.5} parent=31 // loop_pre_header
        _
      $region34: #{chapter_cnn_forward.5} parent=31 // loop_header
        %s173 = sphi 0, %s177
        %p174 = scmp.ge.s32.totalorder %s173, 14
      $region35: #{chapter_cnn_forward.5} parent=31 // loop_header_branch
        %176 = sbr.rel (%p174) target = $region39
      $region36: #{chapter_cnn_forward.5} parent=31 // loop_body
        %s178 = smul.u32 %s173, 2
        %s179 = smul.u32 %s178, 4
        %s180 = smul.addr %s179, 4
        %s181 = scalar_lea.vmem %s165, %s180
        %v182 = vld [vmem:[%s181] sm:$0xff]
        %v183 = vld [vmem:[%s181 + $0x8] sm:$0xff]
        %s184 = sadd.s32 %s178, 1
        %s185 = smul.u32 %s184, 4
        %s186 = smul.addr %s185, 4
        %s187 = scalar_lea.vmem %s165, %s186
        %v188 = vld [vmem:[%s187] sm:$0xff]
        %v189 = vld [vmem:[%s187 + $0x8] sm:$0xff]
        %s190 = sadd.s32 %s178, 2
        %s191 = smul.u32 %s190, 4
        %s192 = smul.addr %s191, 4
        %s193 = scalar_lea.vmem %s165, %s192
        %v194 = vld [vmem:[%s193] sm:$0xff]
        %v195 = vld [vmem:[%s193 + $0x8] sm:$0xff]
        %s196 = sadd.s32 %s178, 3
        %s197 = smul.u32 %s196, 4
        %s198 = smul.addr %s197, 4
        %s199 = scalar_lea.vmem %s165, %s198
        %v200 = vld [vmem:[%s199] sm:$0xff]
        %v201 = vld [vmem:[%s199 + $0x8] sm:$0xff]
        %v202 = vld [vmem:[%s1] sm:$0xf]
        %v203 = vld [vmem:[%s1 + $0x4] sm:$0xf]
        %v204 = vld [vmem:[%s1 + $0x8] sm:$0xf]
        %v205 = vld [vmem:[%s1 + $0xc] sm:$0xf]
        %s206 = scalar_lea.vmem %s1, 16
        %v207 = vld [vmem:[%s206] sm:$0xf]
        %v208 = vld [vmem:[%s206 + $0x4] sm:$0xf]
        %v209 = vld [vmem:[%s206 + $0x8] sm:$0xf]
        %v210 = vld [vmem:[%s206 + $0xc] sm:$0xf]
        %v215 = vunpack.c.l.b16 %v207
        %v216 = vunpack.c.l.b16 %v208
        %v217 = vunpack.c.l.b16 %v209
        %v218 = vunpack.c.l.b16 %v210
        %v219 = vpack.c.b16 %v216, %v215
        %v220 = vpack.c.b16 %v218, %v217
        %v223 = vunpack.c.l.b16 %v182
        %v224 = vunpack.c.h.b16 %v182
        %v225 = vunpack.c.l.b16 %v183
        %v226 = vunpack.c.h.b16 %v183
        %v227 = vpack.c.b16 %v225, %v223
        %v228 = vpack.c.b16 %v226, %v224
        %229 = vrot.lane.b32.xlu0 %v227, 127
        %v230 = vpop.permute.xlu0 %229
        %231 = vrot.lane.b32.xlu0 %v228, 127
        %v232 = vpop.permute.xlu0 %231
        %vm233 = vcmask 1039360
        %v234 = vsel %vm233, %v230, %v232
        %vm237 = vcmask 130048
        %v239 = vsel %vm237, %v219, 0
        %v242 = vsel %vm237, %v220, 0
        %244 = vmatprep.subr.bf16.mxu0 0
        %245 = vmatpush1.bf16.msra.mxu0 0
        %246 = vmatprep.subr.bf16.mxu0 0
        %247 = vmatpush1.bf16.msra.mxu0 0
        %248 = vmatprep.subr.bf16.mxu0 0
        %249 = vmatpush1.bf16.msra.mxu0 0
        %250 = vmatprep.subr.bf16.mxu0 0
        %251 = vmatpush1.bf16.msra.mxu0 0
        %252 = vmatprep.subr.bf16.mxu0 0
        %253 = vmatpush1.bf16.msra.mxu0 0
        %254 = vmatprep.subr.bf16.mxu0 0
        %255 = vmatpush1.bf16.msra.mxu0 0
        %256 = vmatprep.subr.bf16.mxu0 0
        %257 = vmatpush1.bf16.msra.mxu0 0
        %258 = vmatprep.subr.bf16.mxu0 %v232
        %259 = vmatpush1.bf16.msra.mxu0 %v234
        %260 = vmatprep.subr.bf16.mxu0 0
        %261 = vmatpush2.bf16.msra.mxu0 0
        %262 = vmatprep.subr.bf16.mxu0 0
        %263 = vmatpush2.bf16.msra.mxu0 0
        %264 = vmatprep.subr.bf16.mxu0 0
        %265 = vmatpush2.bf16.msra.mxu0 0
        %266 = vmatprep.subr.bf16.mxu0 0
        %267 = vmatpush2.bf16.msra.mxu0 0
        %268 = vmatprep.subr.bf16.mxu0 0
        %269 = vmatpush2.bf16.msra.mxu0 0
        %270 = vmatprep.subr.bf16.mxu0 0
        %271 = vmatpush2.bf16.msra.mxu0 0
        %272 = vmatprep.subr.bf16.mxu0 0
        %273 = vmatpush2.bf16.msra.mxu0 0
        %274 = vmatprep.subr.bf16.mxu0 0
        %275 = vmatpush2.bf16.msra.mxu0 0
        %276 = vmatprep.mubr.bf16.mxu0 0
        %277 = vmatmul.mubr.bf16.gmra.mxu0 %v239
        %v278 = vpop.f32.mrf.mxu0
        %v279 = vadd.f32 0.0, %v278
        %v280 = vpop.f32.mrf.mxu0
        %v281 = vadd.f32 0.0, %v280
        %v282 = vpop.f32.mrf.mxu0
        %v283 = vadd.f32 0.0, %v282
        %v284 = vpop.f32.mrf.mxu0
        %v285 = vadd.f32 0.0, %v284
        %286 = vmatprep.mubr.bf16.mxu0 0
        %287 = vmatmul.mubr.bf16.gmra.mxu0 %v242
        %v288 = vpop.f32.mrf.mxu0
        %v289 = vadd.f32 0.0, %v288
        %v290 = vpop.f32.mrf.mxu0
        %v291 = vadd.f32 0.0, %v290
        %v292 = vpop.f32.mrf.mxu0
        %v293 = vadd.f32 0.0, %v292
        %v294 = vpop.f32.mrf.mxu0
        %v295 = vadd.f32 0.0, %v294
        %296 = vdwg.mxu0
        %v301 = vunpack.c.l.b16 %v202
        %v302 = vunpack.c.l.b16 %v203
        %v303 = vunpack.c.l.b16 %v204
        %v304 = vunpack.c.l.b16 %v205
        %v305 = vpack.c.b16 %v302, %v301
        %v306 = vpack.c.b16 %v304, %v303
        %v310 = vsel %vm237, %v305, 0
        %v313 = vsel %vm237, %v306, 0
        %315 = vmatprep.subr.bf16.mxu0 0
        %316 = vmatpush1.bf16.msra.mxu0 0
        %317 = vmatprep.subr.bf16.mxu0 0
        %318 = vmatpush1.bf16.msra.mxu0 0
        %319 = vmatprep.subr.bf16.mxu0 0
        %320 = vmatpush1.bf16.msra.mxu0 0
        %321 = vmatprep.subr.bf16.mxu0 0
        %322 = vmatpush1.bf16.msra.mxu0 0
        %323 = vmatprep.subr.bf16.mxu0 0
        %324 = vmatpush1.bf16.msra.mxu0 0
        %325 = vmatprep.subr.bf16.mxu0 0
        %326 = vmatpush1.bf16.msra.mxu0 0
        %327 = vmatprep.subr.bf16.mxu0 0
        %328 = vmatpush1.bf16.msra.mxu0 0
        %329 = vmatprep.subr.bf16.mxu0 %v228
        %330 = vmatpush1.bf16.msra.mxu0 %v227
        %331 = vmatprep.subr.bf16.mxu0 0
        %332 = vmatpush2.bf16.msra.mxu0 0
        %333 = vmatprep.subr.bf16.mxu0 0
        %334 = vmatpush2.bf16.msra.mxu0 0
        %335 = vmatprep.subr.bf16.mxu0 0
        %336 = vmatpush2.bf16.msra.mxu0 0
        %337 = vmatprep.subr.bf16.mxu0 0
        %338 = vmatpush2.bf16.msra.mxu0 0
        %339 = vmatprep.subr.bf16.mxu0 0
        %340 = vmatpush2.bf16.msra.mxu0 0
        %341 = vmatprep.subr.bf16.mxu0 0
        %342 = vmatpush2.bf16.msra.mxu0 0
        %343 = vmatprep.subr.bf16.mxu0 0
        %344 = vmatpush2.bf16.msra.mxu0 0
        %345 = vmatprep.subr.bf16.mxu0 0
        %346 = vmatpush2.bf16.msra.mxu0 0
        %347 = vmatprep.mubr.bf16.mxu0 0
        %348 = vmatmul.mubr.bf16.gmra.mxu0 %v310
        %v349 = vpop.f32.mrf.mxu0
        %v350 = vadd.f32 %v279, %v349
        %v351 = vpop.f32.mrf.mxu0
        %v352 = vadd.f32 %v281, %v351
        %v353 = vpop.f32.mrf.mxu0
        %v354 = vadd.f32 %v283, %v353
        %v355 = vpop.f32.mrf.mxu0
        %v356 = vadd.f32 %v285, %v355
        %357 = vmatprep.mubr.bf16.mxu0 0
        %358 = vmatmul.mubr.bf16.gmra.mxu0 %v313
        %v359 = vpop.f32.mrf.mxu0
        %v360 = vadd.f32 %v289, %v359
        %v361 = vpop.f32.mrf.mxu0
        %v362 = vadd.f32 %v291, %v361
        %v363 = vpop.f32.mrf.mxu0
        %v364 = vadd.f32 %v293, %v363
        %v365 = vpop.f32.mrf.mxu0
        %v366 = vadd.f32 %v295, %v365
        %367 = vdwg.mxu0
        %s368 = scalar_lea.vmem %s1, 32
        %v369 = vld [vmem:[%s368] sm:$0xf]
        %v370 = vld [vmem:[%s368 + $0x4] sm:$0xf]
        %v371 = vld [vmem:[%s368 + $0x8] sm:$0xf]
        %v372 = vld [vmem:[%s368 + $0xc] sm:$0xf]
        %v377 = vunpack.c.l.b16 %v369
        %v378 = vunpack.c.l.b16 %v370
        %v379 = vunpack.c.l.b16 %v371
        %v380 = vunpack.c.l.b16 %v372
        %v381 = vpack.c.b16 %v378, %v377
        %v382 = vpack.c.b16 %v380, %v379
        %383 = vrot.lane.b32.xlu0 %v227, 126
        %v384 = vpop.permute.xlu0 %383
        %385 = vrot.lane.b32.xlu0 %v228, 126
        %v386 = vpop.permute.xlu0 %385
        %vm387 = vcmask 1031168
        %v388 = vsel %vm387, %v384, %v386
        %v392 = vsel %vm237, %v381, 0
        %v395 = vsel %vm237, %v382, 0
        %397 = vmatprep.subr.bf16.mxu0 0
        %398 = vmatpush1.bf16.msra.mxu0 0
        %399 = vmatprep.subr.bf16.mxu0 0
        %400 = vmatpush1.bf16.msra.mxu0 0
        %401 = vmatprep.subr.bf16.mxu0 0
        %402 = vmatpush1.bf16.msra.mxu0 0
        %403 = vmatprep.subr.bf16.mxu0 0
        %404 = vmatpush1.bf16.msra.mxu0 0
        %405 = vmatprep.subr.bf16.mxu0 0
        %406 = vmatpush1.bf16.msra.mxu0 0
        %407 = vmatprep.subr.bf16.mxu0 0
        %408 = vmatpush1.bf16.msra.mxu0 0
        %409 = vmatprep.subr.bf16.mxu0 0
        %410 = vmatpush1.bf16.msra.mxu0 0
        %411 = vmatprep.subr.bf16.mxu0 %v386
        %412 = vmatpush1.bf16.msra.mxu0 %v388
        %413 = vmatprep.subr.bf16.mxu0 0
        %414 = vmatpush2.bf16.msra.mxu0 0
        %415 = vmatprep.subr.bf16.mxu0 0
        %416 = vmatpush2.bf16.msra.mxu0 0
        %417 = vmatprep.subr.bf16.mxu0 0
        %418 = vmatpush2.bf16.msra.mxu0 0
        %419 = vmatprep.subr.bf16.mxu0 0
        %420 = vmatpush2.bf16.msra.mxu0 0
        %421 = vmatprep.subr.bf16.mxu0 0
        %422 = vmatpush2.bf16.msra.mxu0 0
        %423 = vmatprep.subr.bf16.mxu0 0
        %424 = vmatpush2.bf16.msra.mxu0 0
        %425 = vmatprep.subr.bf16.mxu0 0
        %426 = vmatpush2.bf16.msra.mxu0 0
        %427 = vmatprep.subr.bf16.mxu0 0
        %428 = vmatpush2.bf16.msra.mxu0 0
        %429 = vmatprep.mubr.bf16.mxu0 0
        %430 = vmatmul.mubr.bf16.gmra.mxu0 %v392
        %v431 = vpop.f32.mrf.mxu0
        %v432 = vadd.f32 0.0, %v431
        %v433 = vpop.f32.mrf.mxu0
        %v434 = vadd.f32 0.0, %v433
        %v435 = vpop.f32.mrf.mxu0
        %v436 = vadd.f32 0.0, %v435
        %v437 = vpop.f32.mrf.mxu0
        %v438 = vadd.f32 0.0, %v437
        %439 = vmatprep.mubr.bf16.mxu0 0
        %440 = vmatmul.mubr.bf16.gmra.mxu0 %v395
        %v441 = vpop.f32.mrf.mxu0
        %v442 = vadd.f32 0.0, %v441
        %v443 = vpop.f32.mrf.mxu0
        %v444 = vadd.f32 0.0, %v443
        %v445 = vpop.f32.mrf.mxu0
        %v446 = vadd.f32 0.0, %v445
        %v447 = vpop.f32.mrf.mxu0
        %v448 = vadd.f32 0.0, %v447
        %449 = vdwg.mxu0
        %v450 = vadd.f32 %v350, %v432
        %v451 = vadd.f32 %v352, %v434
        %v452 = vadd.f32 %v354, %v436
        %v453 = vadd.f32 %v356, %v438
        %v454 = vadd.f32 %v360, %v442
        %v455 = vadd.f32 %v362, %v444
        %v456 = vadd.f32 %v364, %v446
        %v457 = vadd.f32 %v366, %v448
        %s458 = scalar_lea.vmem %s1, 48
        %v459 = vld [vmem:[%s458] sm:$0xf]
        %v460 = vld [vmem:[%s458 + $0x4] sm:$0xf]
        %v461 = vld [vmem:[%s458 + $0x8] sm:$0xf]
        %v462 = vld [vmem:[%s458 + $0xc] sm:$0xf]
        %v467 = vunpack.c.l.b16 %v459
        %v468 = vunpack.c.l.b16 %v460
        %v469 = vunpack.c.l.b16 %v461
        %v470 = vunpack.c.l.b16 %v462
        %v471 = vpack.c.b16 %v468, %v467
        %v472 = vpack.c.b16 %v470, %v469
        %v475 = vunpack.c.l.b16 %v188
        %v476 = vunpack.c.h.b16 %v188
        %v477 = vunpack.c.l.b16 %v189
        %v478 = vunpack.c.h.b16 %v189
        %v479 = vpack.c.b16 %v477, %v475
        %v480 = vpack.c.b16 %v478, %v476
        %v484 = vsel %vm237, %v471, 0
        %v487 = vsel %vm237, %v472, 0
        %489 = vmatprep.subr.bf16.mxu0 0
        %490 = vmatpush1.bf16.msra.mxu0 0
        %491 = vmatprep.subr.bf16.mxu0 0
        %492 = vmatpush1.bf16.msra.mxu0 0
        %493 = vmatprep.subr.bf16.mxu0 0
        %494 = vmatpush1.bf16.msra.mxu0 0
        %495 = vmatprep.subr.bf16.mxu0 0
        %496 = vmatpush1.bf16.msra.mxu0 0
        %497 = vmatprep.subr.bf16.mxu0 0
        %498 = vmatpush1.bf16.msra.mxu0 0
        %499 = vmatprep.subr.bf16.mxu0 0
        %500 = vmatpush1.bf16.msra.mxu0 0
        %501 = vmatprep.subr.bf16.mxu0 0
        %502 = vmatpush1.bf16.msra.mxu0 0
        %503 = vmatprep.subr.bf16.mxu0 %v480
        %504 = vmatpush1.bf16.msra.mxu0 %v479
        %505 = vmatprep.subr.bf16.mxu0 0
        %506 = vmatpush2.bf16.msra.mxu0 0
        %507 = vmatprep.subr.bf16.mxu0 0
        %508 = vmatpush2.bf16.msra.mxu0 0
        %509 = vmatprep.subr.bf16.mxu0 0
        %510 = vmatpush2.bf16.msra.mxu0 0
        %511 = vmatprep.subr.bf16.mxu0 0
        %512 = vmatpush2.bf16.msra.mxu0 0
        %513 = vmatprep.subr.bf16.mxu0 0
        %514 = vmatpush2.bf16.msra.mxu0 0
        %515 = vmatprep.subr.bf16.mxu0 0
        %516 = vmatpush2.bf16.msra.mxu0 0
        %517 = vmatprep.subr.bf16.mxu0 0
        %518 = vmatpush2.bf16.msra.mxu0 0
        %519 = vmatprep.subr.bf16.mxu0 0
        %520 = vmatpush2.bf16.msra.mxu0 0
        %521 = vmatprep.mubr.bf16.mxu0 0
        %522 = vmatmul.mubr.bf16.gmra.mxu0 %v484
        %v523 = vpop.f32.mrf.mxu0
        %v524 = vadd.f32 0.0, %v523
        %v525 = vpop.f32.mrf.mxu0
        %v526 = vadd.f32 0.0, %v525
        %v527 = vpop.f32.mrf.mxu0
        %v528 = vadd.f32 0.0, %v527
        %v529 = vpop.f32.mrf.mxu0
        %v530 = vadd.f32 0.0, %v529
        %531 = vmatprep.mubr.bf16.mxu0 0
        %532 = vmatmul.mubr.bf16.gmra.mxu0 %v487
        %v533 = vpop.f32.mrf.mxu0
        %v534 = vadd.f32 0.0, %v533
        %v535 = vpop.f32.mrf.mxu0
        %v536 = vadd.f32 0.0, %v535
        %v537 = vpop.f32.mrf.mxu0
        %v538 = vadd.f32 0.0, %v537
        %v539 = vpop.f32.mrf.mxu0
        %v540 = vadd.f32 0.0, %v539
        %541 = vdwg.mxu0
        %v542 = vadd.f32 %v450, %v524
        %v543 = vadd.f32 %v451, %v526
        %v544 = vadd.f32 %v452, %v528
        %v545 = vadd.f32 %v453, %v530
        %v546 = vadd.f32 %v454, %v534
        %v547 = vadd.f32 %v455, %v536
        %v548 = vadd.f32 %v456, %v538
        %v549 = vadd.f32 %v457, %v540
        %s550 = scalar_lea.vmem %s1, 64
        %v551 = vld [vmem:[%s550] sm:$0xf]
        %v552 = vld [vmem:[%s550 + $0x4] sm:$0xf]
        %v553 = vld [vmem:[%s550 + $0x8] sm:$0xf]
        %v554 = vld [vmem:[%s550 + $0xc] sm:$0xf]
        %v559 = vunpack.c.l.b16 %v551
        %v560 = vunpack.c.l.b16 %v552
        %v561 = vunpack.c.l.b16 %v553
        %v562 = vunpack.c.l.b16 %v554
        %v563 = vpack.c.b16 %v560, %v559
        %v564 = vpack.c.b16 %v562, %v561
        %565 = vrot.lane.b32.xlu0 %v479, 127
        %v566 = vpop.permute.xlu0 %565
        %567 = vrot.lane.b32.xlu0 %v480, 127
        %v568 = vpop.permute.xlu0 %567
        %v569 = vsel %vm233, %v566, %v568
        %v573 = vsel %vm237, %v563, 0
        %v576 = vsel %vm237, %v564, 0
        %578 = vmatprep.subr.bf16.mxu0 0
        %579 = vmatpush1.bf16.msra.mxu0 0
        %580 = vmatprep.subr.bf16.mxu0 0
        %581 = vmatpush1.bf16.msra.mxu0 0
        %582 = vmatprep.subr.bf16.mxu0 0
        %583 = vmatpush1.bf16.msra.mxu0 0
        %584 = vmatprep.subr.bf16.mxu0 0
        %585 = vmatpush1.bf16.msra.mxu0 0
        %586 = vmatprep.subr.bf16.mxu0 0
        %587 = vmatpush1.bf16.msra.mxu0 0
        %588 = vmatprep.subr.bf16.mxu0 0
        %589 = vmatpush1.bf16.msra.mxu0 0
        %590 = vmatprep.subr.bf16.mxu0 0
        %591 = vmatpush1.bf16.msra.mxu0 0
        %592 = vmatprep.subr.bf16.mxu0 %v568
        %593 = vmatpush1.bf16.msra.mxu0 %v569
        %594 = vmatprep.subr.bf16.mxu0 0
        %595 = vmatpush2.bf16.msra.mxu0 0
        %596 = vmatprep.subr.bf16.mxu0 0
        %597 = vmatpush2.bf16.msra.mxu0 0
        %598 = vmatprep.subr.bf16.mxu0 0
        %599 = vmatpush2.bf16.msra.mxu0 0
        %600 = vmatprep.subr.bf16.mxu0 0
        %601 = vmatpush2.bf16.msra.mxu0 0
        %602 = vmatprep.subr.bf16.mxu0 0
        %603 = vmatpush2.bf16.msra.mxu0 0
        %604 = vmatprep.subr.bf16.mxu0 0
        %605 = vmatpush2.bf16.msra.mxu0 0
        %606 = vmatprep.subr.bf16.mxu0 0
        %607 = vmatpush2.bf16.msra.mxu0 0
        %608 = vmatprep.subr.bf16.mxu0 0
        %609 = vmatpush2.bf16.msra.mxu0 0
        %610 = vmatprep.mubr.bf16.mxu0 0
        %611 = vmatmul.mubr.bf16.gmra.mxu0 %v573
        %v612 = vpop.f32.mrf.mxu0
        %v613 = vadd.f32 0.0, %v612
        %v614 = vpop.f32.mrf.mxu0
        %v615 = vadd.f32 0.0, %v614
        %v616 = vpop.f32.mrf.mxu0
        %v617 = vadd.f32 0.0, %v616
        %v618 = vpop.f32.mrf.mxu0
        %v619 = vadd.f32 0.0, %v618
        %620 = vmatprep.mubr.bf16.mxu0 0
        %621 = vmatmul.mubr.bf16.gmra.mxu0 %v576
        %v622 = vpop.f32.mrf.mxu0
        %v623 = vadd.f32 0.0, %v622
        %v624 = vpop.f32.mrf.mxu0
        %v625 = vadd.f32 0.0, %v624
        %v626 = vpop.f32.mrf.mxu0
        %v627 = vadd.f32 0.0, %v626
        %v628 = vpop.f32.mrf.mxu0
        %v629 = vadd.f32 0.0, %v628
        %630 = vdwg.mxu0
        %v631 = vadd.f32 %v542, %v613
        %v632 = vadd.f32 %v543, %v615
        %v633 = vadd.f32 %v544, %v617
        %v634 = vadd.f32 %v545, %v619
        %v635 = vadd.f32 %v546, %v623
        %v636 = vadd.f32 %v547, %v625
        %v637 = vadd.f32 %v548, %v627
        %v638 = vadd.f32 %v549, %v629
        %s639 = scalar_lea.vmem %s1, 80
        %v640 = vld [vmem:[%s639] sm:$0xf]
        %v641 = vld [vmem:[%s639 + $0x4] sm:$0xf]
        %v642 = vld [vmem:[%s639 + $0x8] sm:$0xf]
        %v643 = vld [vmem:[%s639 + $0xc] sm:$0xf]
        %v648 = vunpack.c.l.b16 %v640
        %v649 = vunpack.c.l.b16 %v641
        %v650 = vunpack.c.l.b16 %v642
        %v651 = vunpack.c.l.b16 %v643
        %v652 = vpack.c.b16 %v649, %v648
        %v653 = vpack.c.b16 %v651, %v650
        %654 = vrot.lane.b32.xlu0 %v479, 126
        %v655 = vpop.permute.xlu0 %654
        %656 = vrot.lane.b32.xlu0 %v480, 126
        %v657 = vpop.permute.xlu0 %656
        %v658 = vsel %vm387, %v655, %v657
        %v662 = vsel %vm237, %v652, 0
        %v665 = vsel %vm237, %v653, 0
        %667 = vmatprep.subr.bf16.mxu0 0
        %668 = vmatpush1.bf16.msra.mxu0 0
        %669 = vmatprep.subr.bf16.mxu0 0
        %670 = vmatpush1.bf16.msra.mxu0 0
        %671 = vmatprep.subr.bf16.mxu0 0
        %672 = vmatpush1.bf16.msra.mxu0 0
        %673 = vmatprep.subr.bf16.mxu0 0
        %674 = vmatpush1.bf16.msra.mxu0 0
        %675 = vmatprep.subr.bf16.mxu0 0
        %676 = vmatpush1.bf16.msra.mxu0 0
        %677 = vmatprep.subr.bf16.mxu0 0
        %678 = vmatpush1.bf16.msra.mxu0 0
        %679 = vmatprep.subr.bf16.mxu0 0
        %680 = vmatpush1.bf16.msra.mxu0 0
        %681 = vmatprep.subr.bf16.mxu0 %v657
        %682 = vmatpush1.bf16.msra.mxu0 %v658
        %683 = vmatprep.subr.bf16.mxu0 0
        %684 = vmatpush2.bf16.msra.mxu0 0
        %685 = vmatprep.subr.bf16.mxu0 0
        %686 = vmatpush2.bf16.msra.mxu0 0
        %687 = vmatprep.subr.bf16.mxu0 0
        %688 = vmatpush2.bf16.msra.mxu0 0
        %689 = vmatprep.subr.bf16.mxu0 0
        %690 = vmatpush2.bf16.msra.mxu0 0
        %691 = vmatprep.subr.bf16.mxu0 0
        %692 = vmatpush2.bf16.msra.mxu0 0
        %693 = vmatprep.subr.bf16.mxu0 0
        %694 = vmatpush2.bf16.msra.mxu0 0
        %695 = vmatprep.subr.bf16.mxu0 0
        %696 = vmatpush2.bf16.msra.mxu0 0
        %697 = vmatprep.subr.bf16.mxu0 0
        %698 = vmatpush2.bf16.msra.mxu0 0
        %699 = vmatprep.mubr.bf16.mxu0 0
        %700 = vmatmul.mubr.bf16.gmra.mxu0 %v662
        %v701 = vpop.f32.mrf.mxu0
        %v702 = vadd.f32 0.0, %v701
        %v703 = vpop.f32.mrf.mxu0
        %v704 = vadd.f32 0.0, %v703
        %v705 = vpop.f32.mrf.mxu0
        %v706 = vadd.f32 0.0, %v705
        %v707 = vpop.f32.mrf.mxu0
        %v708 = vadd.f32 0.0, %v707
        %709 = vmatprep.mubr.bf16.mxu0 0
        %710 = vmatmul.mubr.bf16.gmra.mxu0 %v665
        %v711 = vpop.f32.mrf.mxu0
        %v712 = vadd.f32 0.0, %v711
        %v713 = vpop.f32.mrf.mxu0
        %v714 = vadd.f32 0.0, %v713
        %v715 = vpop.f32.mrf.mxu0
        %v716 = vadd.f32 0.0, %v715
        %v717 = vpop.f32.mrf.mxu0
        %v718 = vadd.f32 0.0, %v717
        %719 = vdwg.mxu0
        %v720 = vadd.f32 %v631, %v702
        %v721 = vadd.f32 %v632, %v704
        %v722 = vadd.f32 %v633, %v706
        %v723 = vadd.f32 %v634, %v708
        %v724 = vadd.f32 %v635, %v712
        %v725 = vadd.f32 %v636, %v714
        %v726 = vadd.f32 %v637, %v716
        %v727 = vadd.f32 %v638, %v718
        %s728 = scalar_lea.vmem %s1, 96
        %v729 = vld [vmem:[%s728] sm:$0xf]
        %v730 = vld [vmem:[%s728 + $0x4] sm:$0xf]
        %v731 = vld [vmem:[%s728 + $0x8] sm:$0xf]
        %v732 = vld [vmem:[%s728 + $0xc] sm:$0xf]
        %v737 = vunpack.c.l.b16 %v729
        %v738 = vunpack.c.l.b16 %v730
        %v739 = vunpack.c.l.b16 %v731
        %v740 = vunpack.c.l.b16 %v732
        %v741 = vpack.c.b16 %v738, %v737
        %v742 = vpack.c.b16 %v740, %v739
        %v745 = vunpack.c.l.b16 %v194
        %v746 = vunpack.c.h.b16 %v194
        %v747 = vunpack.c.l.b16 %v195
        %v748 = vunpack.c.h.b16 %v195
        %v749 = vpack.c.b16 %v747, %v745
        %v750 = vpack.c.b16 %v748, %v746
        %v754 = vsel %vm237, %v741, 0
        %v757 = vsel %vm237, %v742, 0
        %759 = vmatprep.subr.bf16.mxu0 0
        %760 = vmatpush1.bf16.msra.mxu0 0
        %761 = vmatprep.subr.bf16.mxu0 0
        %762 = vmatpush1.bf16.msra.mxu0 0
        %763 = vmatprep.subr.bf16.mxu0 0
        %764 = vmatpush1.bf16.msra.mxu0 0
        %765 = vmatprep.subr.bf16.mxu0 0
        %766 = vmatpush1.bf16.msra.mxu0 0
        %767 = vmatprep.subr.bf16.mxu0 0
        %768 = vmatpush1.bf16.msra.mxu0 0
        %769 = vmatprep.subr.bf16.mxu0 0
        %770 = vmatpush1.bf16.msra.mxu0 0
        %771 = vmatprep.subr.bf16.mxu0 0
        %772 = vmatpush1.bf16.msra.mxu0 0
        %773 = vmatprep.subr.bf16.mxu0 %v750
        %774 = vmatpush1.bf16.msra.mxu0 %v749
        %775 = vmatprep.subr.bf16.mxu0 0
        %776 = vmatpush2.bf16.msra.mxu0 0
        %777 = vmatprep.subr.bf16.mxu0 0
        %778 = vmatpush2.bf16.msra.mxu0 0
        %779 = vmatprep.subr.bf16.mxu0 0
        %780 = vmatpush2.bf16.msra.mxu0 0
        %781 = vmatprep.subr.bf16.mxu0 0
        %782 = vmatpush2.bf16.msra.mxu0 0
        %783 = vmatprep.subr.bf16.mxu0 0
        %784 = vmatpush2.bf16.msra.mxu0 0
        %785 = vmatprep.subr.bf16.mxu0 0
        %786 = vmatpush2.bf16.msra.mxu0 0
        %787 = vmatprep.subr.bf16.mxu0 0
        %788 = vmatpush2.bf16.msra.mxu0 0
        %789 = vmatprep.subr.bf16.mxu0 0
        %790 = vmatpush2.bf16.msra.mxu0 0
        %791 = vmatprep.mubr.bf16.mxu0 0
        %792 = vmatmul.mubr.bf16.gmra.mxu0 %v754
        %v793 = vpop.f32.mrf.mxu0
        %v794 = vadd.f32 0.0, %v793
        %v795 = vpop.f32.mrf.mxu0
        %v796 = vadd.f32 0.0, %v795
        %v797 = vpop.f32.mrf.mxu0
        %v798 = vadd.f32 0.0, %v797
        %v799 = vpop.f32.mrf.mxu0
        %v800 = vadd.f32 0.0, %v799
        %801 = vmatprep.mubr.bf16.mxu0 0
        %802 = vmatmul.mubr.bf16.gmra.mxu0 %v757
        %v803 = vpop.f32.mrf.mxu0
        %v804 = vadd.f32 0.0, %v803
        %v805 = vpop.f32.mrf.mxu0
        %v806 = vadd.f32 0.0, %v805
        %v807 = vpop.f32.mrf.mxu0
        %v808 = vadd.f32 0.0, %v807
        %v809 = vpop.f32.mrf.mxu0
        %v810 = vadd.f32 0.0, %v809
        %811 = vdwg.mxu0
        %v812 = vadd.f32 %v720, %v794
        %v813 = vadd.f32 %v721, %v796
        %v814 = vadd.f32 %v722, %v798
        %v815 = vadd.f32 %v723, %v800
        %v816 = vadd.f32 %v724, %v804
        %v817 = vadd.f32 %v725, %v806
        %v818 = vadd.f32 %v726, %v808
        %v819 = vadd.f32 %v727, %v810
        %s820 = scalar_lea.vmem %s1, 112
        %v821 = vld [vmem:[%s820] sm:$0xf]
        %v822 = vld [vmem:[%s820 + $0x4] sm:$0xf]
        %v823 = vld [vmem:[%s820 + $0x8] sm:$0xf]
        %v824 = vld [vmem:[%s820 + $0xc] sm:$0xf]
        %v829 = vunpack.c.l.b16 %v821
        %v830 = vunpack.c.l.b16 %v822
        %v831 = vunpack.c.l.b16 %v823
        %v832 = vunpack.c.l.b16 %v824
        %v833 = vpack.c.b16 %v830, %v829
        %v834 = vpack.c.b16 %v832, %v831
        %835 = vrot.lane.b32.xlu0 %v749, 127
        %v836 = vpop.permute.xlu0 %835
        %837 = vrot.lane.b32.xlu0 %v750, 127
        %v838 = vpop.permute.xlu0 %837
        %v839 = vsel %vm233, %v836, %v838
        %v843 = vsel %vm237, %v833, 0
        %v846 = vsel %vm237, %v834, 0
        %848 = vmatprep.subr.bf16.mxu0 0
        %849 = vmatpush1.bf16.msra.mxu0 0
        %850 = vmatprep.subr.bf16.mxu0 0
        %851 = vmatpush1.bf16.msra.mxu0 0
        %852 = vmatprep.subr.bf16.mxu0 0
        %853 = vmatpush1.bf16.msra.mxu0 0
        %854 = vmatprep.subr.bf16.mxu0 0
        %855 = vmatpush1.bf16.msra.mxu0 0
        %856 = vmatprep.subr.bf16.mxu0 0
        %857 = vmatpush1.bf16.msra.mxu0 0
        %858 = vmatprep.subr.bf16.mxu0 0
        %859 = vmatpush1.bf16.msra.mxu0 0
        %860 = vmatprep.subr.bf16.mxu0 0
        %861 = vmatpush1.bf16.msra.mxu0 0
        %862 = vmatprep.subr.bf16.mxu0 %v838
        %863 = vmatpush1.bf16.msra.mxu0 %v839
        %864 = vmatprep.subr.bf16.mxu0 0
        %865 = vmatpush2.bf16.msra.mxu0 0
        %866 = vmatprep.subr.bf16.mxu0 0
        %867 = vmatpush2.bf16.msra.mxu0 0
        %868 = vmatprep.subr.bf16.mxu0 0
        %869 = vmatpush2.bf16.msra.mxu0 0
        %870 = vmatprep.subr.bf16.mxu0 0
        %871 = vmatpush2.bf16.msra.mxu0 0
        %872 = vmatprep.subr.bf16.mxu0 0
        %873 = vmatpush2.bf16.msra.mxu0 0
        %874 = vmatprep.subr.bf16.mxu0 0
        %875 = vmatpush2.bf16.msra.mxu0 0
        %876 = vmatprep.subr.bf16.mxu0 0
        %877 = vmatpush2.bf16.msra.mxu0 0
        %878 = vmatprep.subr.bf16.mxu0 0
        %879 = vmatpush2.bf16.msra.mxu0 0
        %880 = vmatprep.mubr.bf16.mxu0 0
        %881 = vmatmul.mubr.bf16.gmra.mxu0 %v843
        %v882 = vpop.f32.mrf.mxu0
        %v883 = vadd.f32 0.0, %v882
        %v884 = vpop.f32.mrf.mxu0
        %v885 = vadd.f32 0.0, %v884
        %v886 = vpop.f32.mrf.mxu0
        %v887 = vadd.f32 0.0, %v886
        %v888 = vpop.f32.mrf.mxu0
        %v889 = vadd.f32 0.0, %v888
        %890 = vmatprep.mubr.bf16.mxu0 0
        %891 = vmatmul.mubr.bf16.gmra.mxu0 %v846
        %v892 = vpop.f32.mrf.mxu0
        %v893 = vadd.f32 0.0, %v892
        %v894 = vpop.f32.mrf.mxu0
        %v895 = vadd.f32 0.0, %v894
        %v896 = vpop.f32.mrf.mxu0
        %v897 = vadd.f32 0.0, %v896
        %v898 = vpop.f32.mrf.mxu0
        %v899 = vadd.f32 0.0, %v898
        %900 = vdwg.mxu0
        %v901 = vadd.f32 %v812, %v883
        %v902 = vadd.f32 %v813, %v885
        %v903 = vadd.f32 %v814, %v887
        %v904 = vadd.f32 %v815, %v889
        %v905 = vadd.f32 %v816, %v893
        %v906 = vadd.f32 %v817, %v895
        %v907 = vadd.f32 %v818, %v897
        %v908 = vadd.f32 %v819, %v899
        %s909 = scalar_lea.vmem %s1, 128
        %v910 = vld [vmem:[%s909] sm:$0xf]
        %v911 = vld [vmem:[%s909 + $0x4] sm:$0xf]
        %v912 = vld [vmem:[%s909 + $0x8] sm:$0xf]
        %v913 = vld [vmem:[%s909 + $0xc] sm:$0xf]
        %v918 = vunpack.c.l.b16 %v910
        %v919 = vunpack.c.l.b16 %v911
        %v920 = vunpack.c.l.b16 %v912
        %v921 = vunpack.c.l.b16 %v913
        %v922 = vpack.c.b16 %v919, %v918
        %v923 = vpack.c.b16 %v921, %v920
        %924 = vrot.lane.b32.xlu0 %v749, 126
        %v925 = vpop.permute.xlu0 %924
        %926 = vrot.lane.b32.xlu0 %v750, 126
        %v927 = vpop.permute.xlu0 %926
        %v928 = vsel %vm387, %v925, %v927
        %v932 = vsel %vm237, %v922, 0
        %v935 = vsel %vm237, %v923, 0
        %937 = vmatprep.subr.bf16.mxu0 0
        %938 = vmatpush1.bf16.msra.mxu0 0
        %939 = vmatprep.subr.bf16.mxu0 0
        %940 = vmatpush1.bf16.msra.mxu0 0
        %941 = vmatprep.subr.bf16.mxu0 0
        %942 = vmatpush1.bf16.msra.mxu0 0
        %943 = vmatprep.subr.bf16.mxu0 0
        %944 = vmatpush1.bf16.msra.mxu0 0
        %945 = vmatprep.subr.bf16.mxu0 0
        %946 = vmatpush1.bf16.msra.mxu0 0
        %947 = vmatprep.subr.bf16.mxu0 0
        %948 = vmatpush1.bf16.msra.mxu0 0
        %949 = vmatprep.subr.bf16.mxu0 0
        %950 = vmatpush1.bf16.msra.mxu0 0
        %951 = vmatprep.subr.bf16.mxu0 %v927
        %952 = vmatpush1.bf16.msra.mxu0 %v928
        %953 = vmatprep.subr.bf16.mxu0 0
        %954 = vmatpush2.bf16.msra.mxu0 0
        %955 = vmatprep.subr.bf16.mxu0 0
        %956 = vmatpush2.bf16.msra.mxu0 0
        %957 = vmatprep.subr.bf16.mxu0 0
        %958 = vmatpush2.bf16.msra.mxu0 0
        %959 = vmatprep.subr.bf16.mxu0 0
        %960 = vmatpush2.bf16.msra.mxu0 0
        %961 = vmatprep.subr.bf16.mxu0 0
        %962 = vmatpush2.bf16.msra.mxu0 0
        %963 = vmatprep.subr.bf16.mxu0 0
        %964 = vmatpush2.bf16.msra.mxu0 0
        %965 = vmatprep.subr.bf16.mxu0 0
        %966 = vmatpush2.bf16.msra.mxu0 0
        %967 = vmatprep.subr.bf16.mxu0 0
        %968 = vmatpush2.bf16.msra.mxu0 0
        %969 = vmatprep.mubr.bf16.mxu0 0
        %970 = vmatmul.mubr.bf16.gmra.mxu0 %v932
        %v971 = vpop.f32.mrf.mxu0
        %v972 = vadd.f32 0.0, %v971
        %v973 = vpop.f32.mrf.mxu0
        %v974 = vadd.f32 0.0, %v973
        %v975 = vpop.f32.mrf.mxu0
        %v976 = vadd.f32 0.0, %v975
        %v977 = vpop.f32.mrf.mxu0
        %v978 = vadd.f32 0.0, %v977
        %979 = vmatprep.mubr.bf16.mxu0 0
        %980 = vmatmul.mubr.bf16.gmra.mxu0 %v935
        %v981 = vpop.f32.mrf.mxu0
        %v982 = vadd.f32 0.0, %v981
        %v983 = vpop.f32.mrf.mxu0
        %v984 = vadd.f32 0.0, %v983
        %v985 = vpop.f32.mrf.mxu0
        %v986 = vadd.f32 0.0, %v985
        %v987 = vpop.f32.mrf.mxu0
        %v988 = vadd.f32 0.0, %v987
        %989 = vdwg.mxu0
        %v990 = vadd.f32 %v901, %v972
        %v991 = vadd.f32 %v902, %v974
        %v992 = vadd.f32 %v903, %v976
        %v993 = vadd.f32 %v904, %v978
        %v994 = vadd.f32 %v905, %v982
        %v995 = vadd.f32 %v906, %v984
        %v996 = vadd.f32 %v907, %v986
        %v997 = vadd.f32 %v908, %v988
        %998 = vmatprep.subr.bf16.mxu0 0
        %999 = vmatpush1.bf16.msra.mxu0 0
        %1000 = vmatprep.subr.bf16.mxu0 0
        %1001 = vmatpush1.bf16.msra.mxu0 0
        %1002 = vmatprep.subr.bf16.mxu0 0
        %1003 = vmatpush1.bf16.msra.mxu0 0
        %1004 = vmatprep.subr.bf16.mxu0 0
        %1005 = vmatpush1.bf16.msra.mxu0 0
        %1006 = vmatprep.subr.bf16.mxu0 0
        %1007 = vmatpush1.bf16.msra.mxu0 0
        %1008 = vmatprep.subr.bf16.mxu0 0
        %1009 = vmatpush1.bf16.msra.mxu0 0
        %1010 = vmatprep.subr.bf16.mxu0 0
        %1011 = vmatpush1.bf16.msra.mxu0 0
        %1012 = vmatprep.subr.bf16.mxu0 %v568
        %1013 = vmatpush1.bf16.msra.mxu0 %v569
        %1014 = vmatprep.subr.bf16.mxu0 0
        %1015 = vmatpush2.bf16.msra.mxu0 0
        %1016 = vmatprep.subr.bf16.mxu0 0
        %1017 = vmatpush2.bf16.msra.mxu0 0
        %1018 = vmatprep.subr.bf16.mxu0 0
        %1019 = vmatpush2.bf16.msra.mxu0 0
        %1020 = vmatprep.subr.bf16.mxu0 0
        %1021 = vmatpush2.bf16.msra.mxu0 0
        %1022 = vmatprep.subr.bf16.mxu0 0
        %1023 = vmatpush2.bf16.msra.mxu0 0
        %1024 = vmatprep.subr.bf16.mxu0 0
        %1025 = vmatpush2.bf16.msra.mxu0 0
        %1026 = vmatprep.subr.bf16.mxu0 0
        %1027 = vmatpush2.bf16.msra.mxu0 0
        %1028 = vmatprep.subr.bf16.mxu0 0
        %1029 = vmatpush2.bf16.msra.mxu0 0
        %1030 = vmatprep.mubr.bf16.mxu0 0
        %1031 = vmatmul.mubr.bf16.gmra.mxu0 %v239
        %v1032 = vpop.f32.mrf.mxu0
        %v1033 = vadd.f32 0.0, %v1032
        %v1034 = vpop.f32.mrf.mxu0
        %v1035 = vadd.f32 0.0, %v1034
        %v1036 = vpop.f32.mrf.mxu0
        %v1037 = vadd.f32 0.0, %v1036
        %v1038 = vpop.f32.mrf.mxu0
        %v1039 = vadd.f32 0.0, %v1038
        %1040 = vmatprep.mubr.bf16.mxu0 0
        %1041 = vmatmul.mubr.bf16.gmra.mxu0 %v242
        %v1042 = vpop.f32.mrf.mxu0
        %v1043 = vadd.f32 0.0, %v1042
        %v1044 = vpop.f32.mrf.mxu0
        %v1045 = vadd.f32 0.0, %v1044
        %v1046 = vpop.f32.mrf.mxu0
        %v1047 = vadd.f32 0.0, %v1046
        %v1048 = vpop.f32.mrf.mxu0
        %v1049 = vadd.f32 0.0, %v1048
        %1050 = vdwg.mxu0
        %1051 = vmatprep.subr.bf16.mxu0 0
        %1052 = vmatpush1.bf16.msra.mxu0 0
        %1053 = vmatprep.subr.bf16.mxu0 0
        %1054 = vmatpush1.bf16.msra.mxu0 0
        %1055 = vmatprep.subr.bf16.mxu0 0
        %1056 = vmatpush1.bf16.msra.mxu0 0
        %1057 = vmatprep.subr.bf16.mxu0 0
        %1058 = vmatpush1.bf16.msra.mxu0 0
        %1059 = vmatprep.subr.bf16.mxu0 0
        %1060 = vmatpush1.bf16.msra.mxu0 0
        %1061 = vmatprep.subr.bf16.mxu0 0
        %1062 = vmatpush1.bf16.msra.mxu0 0
        %1063 = vmatprep.subr.bf16.mxu0 0
        %1064 = vmatpush1.bf16.msra.mxu0 0
        %1065 = vmatprep.subr.bf16.mxu0 %v480
        %1066 = vmatpush1.bf16.msra.mxu0 %v479
        %1067 = vmatprep.subr.bf16.mxu0 0
        %1068 = vmatpush2.bf16.msra.mxu0 0
        %1069 = vmatprep.subr.bf16.mxu0 0
        %1070 = vmatpush2.bf16.msra.mxu0 0
        %1071 = vmatprep.subr.bf16.mxu0 0
        %1072 = vmatpush2.bf16.msra.mxu0 0
        %1073 = vmatprep.subr.bf16.mxu0 0
        %1074 = vmatpush2.bf16.msra.mxu0 0
        %1075 = vmatprep.subr.bf16.mxu0 0
        %1076 = vmatpush2.bf16.msra.mxu0 0
        %1077 = vmatprep.subr.bf16.mxu0 0
        %1078 = vmatpush2.bf16.msra.mxu0 0
        %1079 = vmatprep.subr.bf16.mxu0 0
        %1080 = vmatpush2.bf16.msra.mxu0 0
        %1081 = vmatprep.subr.bf16.mxu0 0
        %1082 = vmatpush2.bf16.msra.mxu0 0
        %1083 = vmatprep.mubr.bf16.mxu0 0
        %1084 = vmatmul.mubr.bf16.gmra.mxu0 %v310
        %v1085 = vpop.f32.mrf.mxu0
        %v1086 = vadd.f32 %v1033, %v1085
        %v1087 = vpop.f32.mrf.mxu0
        %v1088 = vadd.f32 %v1035, %v1087
        %v1089 = vpop.f32.mrf.mxu0
        %v1090 = vadd.f32 %v1037, %v1089
        %v1091 = vpop.f32.mrf.mxu0
        %v1092 = vadd.f32 %v1039, %v1091
        %1093 = vmatprep.mubr.bf16.mxu0 0
        %1094 = vmatmul.mubr.bf16.gmra.mxu0 %v313
        %v1095 = vpop.f32.mrf.mxu0
        %v1096 = vadd.f32 %v1043, %v1095
        %v1097 = vpop.f32.mrf.mxu0
        %v1098 = vadd.f32 %v1045, %v1097
        %v1099 = vpop.f32.mrf.mxu0
        %v1100 = vadd.f32 %v1047, %v1099
        %v1101 = vpop.f32.mrf.mxu0
        %v1102 = vadd.f32 %v1049, %v1101
        %1103 = vdwg.mxu0
        %1104 = vmatprep.subr.bf16.mxu0 0
        %1105 = vmatpush1.bf16.msra.mxu0 0
        %1106 = vmatprep.subr.bf16.mxu0 0
        %1107 = vmatpush1.bf16.msra.mxu0 0
        %1108 = vmatprep.subr.bf16.mxu0 0
        %1109 = vmatpush1.bf16.msra.mxu0 0
        %1110 = vmatprep.subr.bf16.mxu0 0
        %1111 = vmatpush1.bf16.msra.mxu0 0
        %1112 = vmatprep.subr.bf16.mxu0 0
        %1113 = vmatpush1.bf16.msra.mxu0 0
        %1114 = vmatprep.subr.bf16.mxu0 0
        %1115 = vmatpush1.bf16.msra.mxu0 0
        %1116 = vmatprep.subr.bf16.mxu0 0
        %1117 = vmatpush1.bf16.msra.mxu0 0
        %1118 = vmatprep.subr.bf16.mxu0 %v657
        %1119 = vmatpush1.bf16.msra.mxu0 %v658
        %1120 = vmatprep.subr.bf16.mxu0 0
        %1121 = vmatpush2.bf16.msra.mxu0 0
        %1122 = vmatprep.subr.bf16.mxu0 0
        %1123 = vmatpush2.bf16.msra.mxu0 0
        %1124 = vmatprep.subr.bf16.mxu0 0
        %1125 = vmatpush2.bf16.msra.mxu0 0
        %1126 = vmatprep.subr.bf16.mxu0 0
        %1127 = vmatpush2.bf16.msra.mxu0 0
        %1128 = vmatprep.subr.bf16.mxu0 0
        %1129 = vmatpush2.bf16.msra.mxu0 0
        %1130 = vmatprep.subr.bf16.mxu0 0
        %1131 = vmatpush2.bf16.msra.mxu0 0
        %1132 = vmatprep.subr.bf16.mxu0 0
        %1133 = vmatpush2.bf16.msra.mxu0 0
        %1134 = vmatprep.subr.bf16.mxu0 0
        %1135 = vmatpush2.bf16.msra.mxu0 0
        %1136 = vmatprep.mubr.bf16.mxu0 0
        %1137 = vmatmul.mubr.bf16.gmra.mxu0 %v392
        %v1138 = vpop.f32.mrf.mxu0
        %v1139 = vadd.f32 0.0, %v1138
        %v1140 = vpop.f32.mrf.mxu0
        %v1141 = vadd.f32 0.0, %v1140
        %v1142 = vpop.f32.mrf.mxu0
        %v1143 = vadd.f32 0.0, %v1142
        %v1144 = vpop.f32.mrf.mxu0
        %v1145 = vadd.f32 0.0, %v1144
        %1146 = vmatprep.mubr.bf16.mxu0 0
        %1147 = vmatmul.mubr.bf16.gmra.mxu0 %v395
        %v1148 = vpop.f32.mrf.mxu0
        %v1149 = vadd.f32 0.0, %v1148
        %v1150 = vpop.f32.mrf.mxu0
        %v1151 = vadd.f32 0.0, %v1150
        %v1152 = vpop.f32.mrf.mxu0
        %v1153 = vadd.f32 0.0, %v1152
        %v1154 = vpop.f32.mrf.mxu0
        %v1155 = vadd.f32 0.0, %v1154
        %1156 = vdwg.mxu0
        %v1157 = vadd.f32 %v1086, %v1139
        %v1158 = vadd.f32 %v1088, %v1141
        %v1159 = vadd.f32 %v1090, %v1143
        %v1160 = vadd.f32 %v1092, %v1145
        %v1161 = vadd.f32 %v1096, %v1149
        %v1162 = vadd.f32 %v1098, %v1151
        %v1163 = vadd.f32 %v1100, %v1153
        %v1164 = vadd.f32 %v1102, %v1155
        %1165 = vmatprep.subr.bf16.mxu0 0
        %1166 = vmatpush1.bf16.msra.mxu0 0
        %1167 = vmatprep.subr.bf16.mxu0 0
        %1168 = vmatpush1.bf16.msra.mxu0 0
        %1169 = vmatprep.subr.bf16.mxu0 0
        %1170 = vmatpush1.bf16.msra.mxu0 0
        %1171 = vmatprep.subr.bf16.mxu0 0
        %1172 = vmatpush1.bf16.msra.mxu0 0
        %1173 = vmatprep.subr.bf16.mxu0 0
        %1174 = vmatpush1.bf16.msra.mxu0 0
        %1175 = vmatprep.subr.bf16.mxu0 0
        %1176 = vmatpush1.bf16.msra.mxu0 0
        %1177 = vmatprep.subr.bf16.mxu0 0
        %1178 = vmatpush1.bf16.msra.mxu0 0
        %1179 = vmatprep.subr.bf16.mxu0 %v750
        %1180 = vmatpush1.bf16.msra.mxu0 %v749
        %1181 = vmatprep.subr.bf16.mxu0 0
        %1182 = vmatpush2.bf16.msra.mxu0 0
        %1183 = vmatprep.subr.bf16.mxu0 0
        %1184 = vmatpush2.bf16.msra.mxu0 0
        %1185 = vmatprep.subr.bf16.mxu0 0
        %1186 = vmatpush2.bf16.msra.mxu0 0
        %1187 = vmatprep.subr.bf16.mxu0 0
        %1188 = vmatpush2.bf16.msra.mxu0 0
        %1189 = vmatprep.subr.bf16.mxu0 0
        %1190 = vmatpush2.bf16.msra.mxu0 0
        %1191 = vmatprep.subr.bf16.mxu0 0
        %1192 = vmatpush2.bf16.msra.mxu0 0
        %1193 = vmatprep.subr.bf16.mxu0 0
        %1194 = vmatpush2.bf16.msra.mxu0 0
        %1195 = vmatprep.subr.bf16.mxu0 0
        %1196 = vmatpush2.bf16.msra.mxu0 0
        %1197 = vmatprep.mubr.bf16.mxu0 0
        %1198 = vmatmul.mubr.bf16.gmra.mxu0 %v484
        %v1199 = vpop.f32.mrf.mxu0
        %v1200 = vadd.f32 0.0, %v1199
        %v1201 = vpop.f32.mrf.mxu0
        %v1202 = vadd.f32 0.0, %v1201
        %v1203 = vpop.f32.mrf.mxu0
        %v1204 = vadd.f32 0.0, %v1203
        %v1205 = vpop.f32.mrf.mxu0
        %v1206 = vadd.f32 0.0, %v1205
        %1207 = vmatprep.mubr.bf16.mxu0 0
        %1208 = vmatmul.mubr.bf16.gmra.mxu0 %v487
        %v1209 = vpop.f32.mrf.mxu0
        %v1210 = vadd.f32 0.0, %v1209
        %v1211 = vpop.f32.mrf.mxu0
        %v1212 = vadd.f32 0.0, %v1211
        %v1213 = vpop.f32.mrf.mxu0
        %v1214 = vadd.f32 0.0, %v1213
        %v1215 = vpop.f32.mrf.mxu0
        %v1216 = vadd.f32 0.0, %v1215
        %1217 = vdwg.mxu0
        %v1218 = vadd.f32 %v1157, %v1200
        %v1219 = vadd.f32 %v1158, %v1202
        %v1220 = vadd.f32 %v1159, %v1204
        %v1221 = vadd.f32 %v1160, %v1206
        %v1222 = vadd.f32 %v1161, %v1210
        %v1223 = vadd.f32 %v1162, %v1212
        %v1224 = vadd.f32 %v1163, %v1214
        %v1225 = vadd.f32 %v1164, %v1216
        %1226 = vmatprep.subr.bf16.mxu0 0
        %1227 = vmatpush1.bf16.msra.mxu0 0
        %1228 = vmatprep.subr.bf16.mxu0 0
        %1229 = vmatpush1.bf16.msra.mxu0 0
        %1230 = vmatprep.subr.bf16.mxu0 0
        %1231 = vmatpush1.bf16.msra.mxu0 0
        %1232 = vmatprep.subr.bf16.mxu0 0
        %1233 = vmatpush1.bf16.msra.mxu0 0
        %1234 = vmatprep.subr.bf16.mxu0 0
        %1235 = vmatpush1.bf16.msra.mxu0 0
        %1236 = vmatprep.subr.bf16.mxu0 0
        %1237 = vmatpush1.bf16.msra.mxu0 0
        %1238 = vmatprep.subr.bf16.mxu0 0
        %1239 = vmatpush1.bf16.msra.mxu0 0
        %1240 = vmatprep.subr.bf16.mxu0 %v838
        %1241 = vmatpush1.bf16.msra.mxu0 %v839
        %1242 = vmatprep.subr.bf16.mxu0 0
        %1243 = vmatpush2.bf16.msra.mxu0 0
        %1244 = vmatprep.subr.bf16.mxu0 0
        %1245 = vmatpush2.bf16.msra.mxu0 0
        %1246 = vmatprep.subr.bf16.mxu0 0
        %1247 = vmatpush2.bf16.msra.mxu0 0
        %1248 = vmatprep.subr.bf16.mxu0 0
        %1249 = vmatpush2.bf16.msra.mxu0 0
        %1250 = vmatprep.subr.bf16.mxu0 0
        %1251 = vmatpush2.bf16.msra.mxu0 0
        %1252 = vmatprep.subr.bf16.mxu0 0
        %1253 = vmatpush2.bf16.msra.mxu0 0
        %1254 = vmatprep.subr.bf16.mxu0 0
        %1255 = vmatpush2.bf16.msra.mxu0 0
        %1256 = vmatprep.subr.bf16.mxu0 0
        %1257 = vmatpush2.bf16.msra.mxu0 0
        %1258 = vmatprep.mubr.bf16.mxu0 0
        %1259 = vmatmul.mubr.bf16.gmra.mxu0 %v573
        %v1260 = vpop.f32.mrf.mxu0
        %v1261 = vadd.f32 0.0, %v1260
        %v1262 = vpop.f32.mrf.mxu0
        %v1263 = vadd.f32 0.0, %v1262
        %v1264 = vpop.f32.mrf.mxu0
        %v1265 = vadd.f32 0.0, %v1264
        %v1266 = vpop.f32.mrf.mxu0
        %v1267 = vadd.f32 0.0, %v1266
        %1268 = vmatprep.mubr.bf16.mxu0 0
        %1269 = vmatmul.mubr.bf16.gmra.mxu0 %v576
        %v1270 = vpop.f32.mrf.mxu0
        %v1271 = vadd.f32 0.0, %v1270
        %v1272 = vpop.f32.mrf.mxu0
        %v1273 = vadd.f32 0.0, %v1272
        %v1274 = vpop.f32.mrf.mxu0
        %v1275 = vadd.f32 0.0, %v1274
        %v1276 = vpop.f32.mrf.mxu0
        %v1277 = vadd.f32 0.0, %v1276
        %1278 = vdwg.mxu0
        %v1279 = vadd.f32 %v1218, %v1261
        %v1280 = vadd.f32 %v1219, %v1263
        %v1281 = vadd.f32 %v1220, %v1265
        %v1282 = vadd.f32 %v1221, %v1267
        %v1283 = vadd.f32 %v1222, %v1271
        %v1284 = vadd.f32 %v1223, %v1273
        %v1285 = vadd.f32 %v1224, %v1275
        %v1286 = vadd.f32 %v1225, %v1277
        %1287 = vmatprep.subr.bf16.mxu0 0
        %1288 = vmatpush1.bf16.msra.mxu0 0
        %1289 = vmatprep.subr.bf16.mxu0 0
        %1290 = vmatpush1.bf16.msra.mxu0 0
        %1291 = vmatprep.subr.bf16.mxu0 0
        %1292 = vmatpush1.bf16.msra.mxu0 0
        %1293 = vmatprep.subr.bf16.mxu0 0
        %1294 = vmatpush1.bf16.msra.mxu0 0
        %1295 = vmatprep.subr.bf16.mxu0 0
        %1296 = vmatpush1.bf16.msra.mxu0 0
        %1297 = vmatprep.subr.bf16.mxu0 0
        %1298 = vmatpush1.bf16.msra.mxu0 0
        %1299 = vmatprep.subr.bf16.mxu0 0
        %1300 = vmatpush1.bf16.msra.mxu0 0
        %1301 = vmatprep.subr.bf16.mxu0 %v927
        %1302 = vmatpush1.bf16.msra.mxu0 %v928
        %1303 = vmatprep.subr.bf16.mxu0 0
        %1304 = vmatpush2.bf16.msra.mxu0 0
        %1305 = vmatprep.subr.bf16.mxu0 0
        %1306 = vmatpush2.bf16.msra.mxu0 0
        %1307 = vmatprep.subr.bf16.mxu0 0
        %1308 = vmatpush2.bf16.msra.mxu0 0
        %1309 = vmatprep.subr.bf16.mxu0 0
        %1310 = vmatpush2.bf16.msra.mxu0 0
        %1311 = vmatprep.subr.bf16.mxu0 0
        %1312 = vmatpush2.bf16.msra.mxu0 0
        %1313 = vmatprep.subr.bf16.mxu0 0
        %1314 = vmatpush2.bf16.msra.mxu0 0
        %1315 = vmatprep.subr.bf16.mxu0 0
        %1316 = vmatpush2.bf16.msra.mxu0 0
        %1317 = vmatprep.subr.bf16.mxu0 0
        %1318 = vmatpush2.bf16.msra.mxu0 0
        %1319 = vmatprep.mubr.bf16.mxu0 0
        %1320 = vmatmul.mubr.bf16.gmra.mxu0 %v662
        %v1321 = vpop.f32.mrf.mxu0
        %v1322 = vadd.f32 0.0, %v1321
        %v1323 = vpop.f32.mrf.mxu0
        %v1324 = vadd.f32 0.0, %v1323
        %v1325 = vpop.f32.mrf.mxu0
        %v1326 = vadd.f32 0.0, %v1325
        %v1327 = vpop.f32.mrf.mxu0
        %v1328 = vadd.f32 0.0, %v1327
        %1329 = vmatprep.mubr.bf16.mxu0 0
        %1330 = vmatmul.mubr.bf16.gmra.mxu0 %v665
        %v1331 = vpop.f32.mrf.mxu0
        %v1332 = vadd.f32 0.0, %v1331
        %v1333 = vpop.f32.mrf.mxu0
        %v1334 = vadd.f32 0.0, %v1333
        %v1335 = vpop.f32.mrf.mxu0
        %v1336 = vadd.f32 0.0, %v1335
        %v1337 = vpop.f32.mrf.mxu0
        %v1338 = vadd.f32 0.0, %v1337
        %1339 = vdwg.mxu0
        %v1340 = vadd.f32 %v1279, %v1322
        %v1341 = vadd.f32 %v1280, %v1324
        %v1342 = vadd.f32 %v1281, %v1326
        %v1343 = vadd.f32 %v1282, %v1328
        %v1344 = vadd.f32 %v1283, %v1332
        %v1345 = vadd.f32 %v1284, %v1334
        %v1346 = vadd.f32 %v1285, %v1336
        %v1347 = vadd.f32 %v1286, %v1338
        %v1350 = vunpack.c.l.b16 %v200
        %v1351 = vunpack.c.h.b16 %v200
        %v1352 = vunpack.c.l.b16 %v201
        %v1353 = vunpack.c.h.b16 %v201
        %v1354 = vpack.c.b16 %v1352, %v1350
        %v1355 = vpack.c.b16 %v1353, %v1351
        %1358 = vmatprep.subr.bf16.mxu0 0
        %1359 = vmatpush1.bf16.msra.mxu0 0
        %1360 = vmatprep.subr.bf16.mxu0 0
        %1361 = vmatpush1.bf16.msra.mxu0 0
        %1362 = vmatprep.subr.bf16.mxu0 0
        %1363 = vmatpush1.bf16.msra.mxu0 0
        %1364 = vmatprep.subr.bf16.mxu0 0
        %1365 = vmatpush1.bf16.msra.mxu0 0
        %1366 = vmatprep.subr.bf16.mxu0 0
        %1367 = vmatpush1.bf16.msra.mxu0 0
        %1368 = vmatprep.subr.bf16.mxu0 0
        %1369 = vmatpush1.bf16.msra.mxu0 0
        %1370 = vmatprep.subr.bf16.mxu0 0
        %1371 = vmatpush1.bf16.msra.mxu0 0
        %1372 = vmatprep.subr.bf16.mxu0 %v1355
        %1373 = vmatpush1.bf16.msra.mxu0 %v1354
        %1374 = vmatprep.subr.bf16.mxu0 0
        %1375 = vmatpush2.bf16.msra.mxu0 0
        %1376 = vmatprep.subr.bf16.mxu0 0
        %1377 = vmatpush2.bf16.msra.mxu0 0
        %1378 = vmatprep.subr.bf16.mxu0 0
        %1379 = vmatpush2.bf16.msra.mxu0 0
        %1380 = vmatprep.subr.bf16.mxu0 0
        %1381 = vmatpush2.bf16.msra.mxu0 0
        %1382 = vmatprep.subr.bf16.mxu0 0
        %1383 = vmatpush2.bf16.msra.mxu0 0
        %1384 = vmatprep.subr.bf16.mxu0 0
        %1385 = vmatpush2.bf16.msra.mxu0 0
        %1386 = vmatprep.subr.bf16.mxu0 0
        %1387 = vmatpush2.bf16.msra.mxu0 0
        %1388 = vmatprep.subr.bf16.mxu0 0
        %1389 = vmatpush2.bf16.msra.mxu0 0
        %1390 = vmatprep.mubr.bf16.mxu0 0
        %1391 = vmatmul.mubr.bf16.gmra.mxu0 %v754
        %v1392 = vpop.f32.mrf.mxu0
        %v1393 = vadd.f32 0.0, %v1392
        %v1394 = vpop.f32.mrf.mxu0
        %v1395 = vadd.f32 0.0, %v1394
        %v1396 = vpop.f32.mrf.mxu0
        %v1397 = vadd.f32 0.0, %v1396
        %v1398 = vpop.f32.mrf.mxu0
        %v1399 = vadd.f32 0.0, %v1398
        %1400 = vmatprep.mubr.bf16.mxu0 0
        %1401 = vmatmul.mubr.bf16.gmra.mxu0 %v757
        %v1402 = vpop.f32.mrf.mxu0
        %v1403 = vadd.f32 0.0, %v1402
        %v1404 = vpop.f32.mrf.mxu0
        %v1405 = vadd.f32 0.0, %v1404
        %v1406 = vpop.f32.mrf.mxu0
        %v1407 = vadd.f32 0.0, %v1406
        %v1408 = vpop.f32.mrf.mxu0
        %v1409 = vadd.f32 0.0, %v1408
        %1410 = vdwg.mxu0
        %v1411 = vadd.f32 %v1340, %v1393
        %v1412 = vadd.f32 %v1341, %v1395
        %v1413 = vadd.f32 %v1342, %v1397
        %v1414 = vadd.f32 %v1343, %v1399
        %v1415 = vadd.f32 %v1344, %v1403
        %v1416 = vadd.f32 %v1345, %v1405
        %v1417 = vadd.f32 %v1346, %v1407
        %v1418 = vadd.f32 %v1347, %v1409
        %1419 = vrot.lane.b32.xlu0 %v1354, 127
        %v1420 = vpop.permute.xlu0 %1419
        %1421 = vrot.lane.b32.xlu0 %v1355, 127
        %v1422 = vpop.permute.xlu0 %1421
        %v1423 = vsel %vm233, %v1420, %v1422
        %1426 = vmatprep.subr.bf16.mxu0 0
        %1427 = vmatpush1.bf16.msra.mxu0 0
        %1428 = vmatprep.subr.bf16.mxu0 0
        %1429 = vmatpush1.bf16.msra.mxu0 0
        %1430 = vmatprep.subr.bf16.mxu0 0
        %1431 = vmatpush1.bf16.msra.mxu0 0
        %1432 = vmatprep.subr.bf16.mxu0 0
        %1433 = vmatpush1.bf16.msra.mxu0 0
        %1434 = vmatprep.subr.bf16.mxu0 0
        %1435 = vmatpush1.bf16.msra.mxu0 0
        %1436 = vmatprep.subr.bf16.mxu0 0
        %1437 = vmatpush1.bf16.msra.mxu0 0
        %1438 = vmatprep.subr.bf16.mxu0 0
        %1439 = vmatpush1.bf16.msra.mxu0 0
        %1440 = vmatprep.subr.bf16.mxu0 %v1422
        %1441 = vmatpush1.bf16.msra.mxu0 %v1423
        %1442 = vmatprep.subr.bf16.mxu0 0
        %1443 = vmatpush2.bf16.msra.mxu0 0
        %1444 = vmatprep.subr.bf16.mxu0 0
        %1445 = vmatpush2.bf16.msra.mxu0 0
        %1446 = vmatprep.subr.bf16.mxu0 0
        %1447 = vmatpush2.bf16.msra.mxu0 0
        %1448 = vmatprep.subr.bf16.mxu0 0
        %1449 = vmatpush2.bf16.msra.mxu0 0
        %1450 = vmatprep.subr.bf16.mxu0 0
        %1451 = vmatpush2.bf16.msra.mxu0 0
        %1452 = vmatprep.subr.bf16.mxu0 0
        %1453 = vmatpush2.bf16.msra.mxu0 0
        %1454 = vmatprep.subr.bf16.mxu0 0
        %1455 = vmatpush2.bf16.msra.mxu0 0
        %1456 = vmatprep.subr.bf16.mxu0 0
        %1457 = vmatpush2.bf16.msra.mxu0 0
        %1458 = vmatprep.mubr.bf16.mxu0 0
        %1459 = vmatmul.mubr.bf16.gmra.mxu0 %v843
        %v1460 = vpop.f32.mrf.mxu0
        %v1461 = vadd.f32 0.0, %v1460
        %v1462 = vpop.f32.mrf.mxu0
        %v1463 = vadd.f32 0.0, %v1462
        %v1464 = vpop.f32.mrf.mxu0
        %v1465 = vadd.f32 0.0, %v1464
        %v1466 = vpop.f32.mrf.mxu0
        %v1467 = vadd.f32 0.0, %v1466
        %1468 = vmatprep.mubr.bf16.mxu0 0
        %1469 = vmatmul.mubr.bf16.gmra.mxu0 %v846
        %v1470 = vpop.f32.mrf.mxu0
        %v1471 = vadd.f32 0.0, %v1470
        %v1472 = vpop.f32.mrf.mxu0
        %v1473 = vadd.f32 0.0, %v1472
        %v1474 = vpop.f32.mrf.mxu0
        %v1475 = vadd.f32 0.0, %v1474
        %v1476 = vpop.f32.mrf.mxu0
        %v1477 = vadd.f32 0.0, %v1476
        %1478 = vdwg.mxu0
        %v1479 = vadd.f32 %v1411, %v1461
        %v1480 = vadd.f32 %v1412, %v1463
        %v1481 = vadd.f32 %v1413, %v1465
        %v1482 = vadd.f32 %v1414, %v1467
        %v1483 = vadd.f32 %v1415, %v1471
        %v1484 = vadd.f32 %v1416, %v1473
        %v1485 = vadd.f32 %v1417, %v1475
        %v1486 = vadd.f32 %v1418, %v1477
        %1487 = vrot.lane.b32.xlu0 %v1354, 126
        %v1488 = vpop.permute.xlu0 %1487
        %1489 = vrot.lane.b32.xlu0 %v1355, 126
        %v1490 = vpop.permute.xlu0 %1489
        %v1491 = vsel %vm387, %v1488, %v1490
        %1494 = vmatprep.subr.bf16.mxu0 0
        %1495 = vmatpush1.bf16.msra.mxu0 0
        %1496 = vmatprep.subr.bf16.mxu0 0
        %1497 = vmatpush1.bf16.msra.mxu0 0
        %1498 = vmatprep.subr.bf16.mxu0 0
        %1499 = vmatpush1.bf16.msra.mxu0 0
        %1500 = vmatprep.subr.bf16.mxu0 0
        %1501 = vmatpush1.bf16.msra.mxu0 0
        %1502 = vmatprep.subr.bf16.mxu0 0
        %1503 = vmatpush1.bf16.msra.mxu0 0
        %1504 = vmatprep.subr.bf16.mxu0 0
        %1505 = vmatpush1.bf16.msra.mxu0 0
        %1506 = vmatprep.subr.bf16.mxu0 0
        %1507 = vmatpush1.bf16.msra.mxu0 0
        %1508 = vmatprep.subr.bf16.mxu0 %v1490
        %1509 = vmatpush1.bf16.msra.mxu0 %v1491
        %1510 = vmatprep.subr.bf16.mxu0 0
        %1511 = vmatpush2.bf16.msra.mxu0 0
        %1512 = vmatprep.subr.bf16.mxu0 0
        %1513 = vmatpush2.bf16.msra.mxu0 0
        %1514 = vmatprep.subr.bf16.mxu0 0
        %1515 = vmatpush2.bf16.msra.mxu0 0
        %1516 = vmatprep.subr.bf16.mxu0 0
        %1517 = vmatpush2.bf16.msra.mxu0 0
        %1518 = vmatprep.subr.bf16.mxu0 0
        %1519 = vmatpush2.bf16.msra.mxu0 0
        %1520 = vmatprep.subr.bf16.mxu0 0
        %1521 = vmatpush2.bf16.msra.mxu0 0
        %1522 = vmatprep.subr.bf16.mxu0 0
        %1523 = vmatpush2.bf16.msra.mxu0 0
        %1524 = vmatprep.subr.bf16.mxu0 0
        %1525 = vmatpush2.bf16.msra.mxu0 0
        %1526 = vmatprep.mubr.bf16.mxu0 0
        %1527 = vmatmul.mubr.bf16.gmra.mxu0 %v932
        %v1528 = vpop.f32.mrf.mxu0
        %v1529 = vadd.f32 0.0, %v1528
        %v1530 = vpop.f32.mrf.mxu0
        %v1531 = vadd.f32 0.0, %v1530
        %v1532 = vpop.f32.mrf.mxu0
        %v1533 = vadd.f32 0.0, %v1532
        %v1534 = vpop.f32.mrf.mxu0
        %v1535 = vadd.f32 0.0, %v1534
        %1536 = vmatprep.mubr.bf16.mxu0 0
        %1537 = vmatmul.mubr.bf16.gmra.mxu0 %v935
        %v1538 = vpop.f32.mrf.mxu0
        %v1539 = vadd.f32 0.0, %v1538
        %v1540 = vpop.f32.mrf.mxu0
        %v1541 = vadd.f32 0.0, %v1540
        %v1542 = vpop.f32.mrf.mxu0
        %v1543 = vadd.f32 0.0, %v1542
        %v1544 = vpop.f32.mrf.mxu0
        %v1545 = vadd.f32 0.0, %v1544
        %1546 = vdwg.mxu0
        %v1547 = vadd.f32 %v1479, %v1529
        %v1548 = vadd.f32 %v1480, %v1531
        %v1549 = vadd.f32 %v1481, %v1533
        %v1550 = vadd.f32 %v1482, %v1535
        %v1551 = vadd.f32 %v1483, %v1539
        %v1552 = vadd.f32 %v1484, %v1541
        %v1553 = vadd.f32 %v1485, %v1543
        %v1554 = vadd.f32 %v1486, %v1545
        %v1555 = vmax.f32 %v990, %v1547
        %v1556 = vmax.f32 %v991, %v1548
        %v1557 = vmax.f32 %v992, %v1549
        %v1558 = vmax.f32 %v993, %v1550
        %v1559 = vmax.f32 %v994, %v1551
        %v1560 = vmax.f32 %v995, %v1552
        %v1561 = vmax.f32 %v996, %v1553
        %v1562 = vmax.f32 %v997, %v1554
        %v1563 = vld [vmem:[%s2] sm:$0xff]
        %v1564 = vld [vmem:[%s2 + $0x8] sm:$0xff]
        %v1565 = vld [vmem:[%s2 + $0x10] sm:$0xff]
        %v1566 = vld [vmem:[%s2 + $0x18] sm:$0xff]
        %1568 = vset.pattern.permute.xlu0 0
        %1569 = vperm.xlu0 %1568, %v1563
        %v1570 = vpop.permute.xlu0 %1569
        %1573 = vset.pattern.permute.xlu0 0
        %1574 = vperm.xlu0 %1573, %v1564
        %v1575 = vpop.permute.xlu0 %1574
        %1578 = vset.pattern.permute.xlu0 0
        %1579 = vperm.xlu0 %1578, %v1565
        %v1580 = vpop.permute.xlu0 %1579
        %1583 = vset.pattern.permute.xlu0 0
        %1584 = vperm.xlu0 %1583, %v1566
        %v1585 = vpop.permute.xlu0 %1584
        %v1587 = vadd.f32 %v1555, %v1570
        %v1588 = vadd.f32 %v1556, %v1570
        %v1589 = vadd.f32 %v1557, %v1575
        %v1590 = vadd.f32 %v1558, %v1575
        %v1591 = vadd.f32 %v1559, %v1580
        %v1592 = vadd.f32 %v1560, %v1580
        %v1593 = vadd.f32 %v1561, %v1585
        %v1594 = vadd.f32 %v1562, %v1585
        %v1595 = vmax.f32 %v1587, 0.0
        %v1596 = vmax.f32 %v1588, 0.0
        %v1597 = vmax.f32 %v1589, 0.0
        %v1598 = vmax.f32 %v1590, 0.0
        %v1599 = vmax.f32 %v1591, 0.0
        %v1600 = vmax.f32 %v1592, 0.0
        %v1601 = vmax.f32 %v1593, 0.0
        %v1602 = vmax.f32 %v1594, 0.0
        %v1603 = vpack.c.bf16 %v1597, %v1595
        %v1604 = vpack.c.bf16 %v1598, %v1596
        %v1605 = vpack.c.bf16 %v1601, %v1599
        %v1606 = vpack.c.bf16 %v1602, %v1600
        %v1611 = vunpack.c.l.b16 %v1603
        %v1612 = vunpack.c.l.b16 %v1604
        %v1613 = vunpack.c.h.b16 %v1603
        %v1614 = vunpack.c.h.b16 %v1604
        %v1615 = vunpack.c.l.b16 %v1605
        %v1616 = vunpack.c.l.b16 %v1606
        %v1617 = vunpack.c.h.b16 %v1605
        %v1618 = vunpack.c.h.b16 %v1606
        %v1619 = vpack.c.b16 %v1612, %v1611
        %v1620 = vpack.c.b16 %v1614, %v1613
        %v1621 = vpack.c.b16 %v1616, %v1615
        %v1622 = vpack.c.b16 %v1618, %v1617
        %s1627 = smul.u32 %s173, 8
        %s1628 = smul.addr %s1627, 4
        %s1629 = scalar_lea.vmem %s170, %s1628
        %vm1630 = vcmask 1043456
        %vm1631 = vcmask 719876
        %vm1632 = vmor %vm1631, %vm1630
        %1633 = vst.msk [vmem:[%s1629] sm:$0xff] %vm1632, %v1619
        %1634 = vst.msk [vmem:[%s1629 + $0x8] sm:$0xff] %vm1632, %v1620
        %1635 = vst.msk [vmem:[%s1629 + $0x10] sm:$0xff] %vm1632, %v1621
        %1636 = vst.msk [vmem:[%s1629 + $0x18] sm:$0xff] %vm1632, %v1622
      $region37: #{chapter_cnn_forward.5} parent=31 // loop_footer
        %s177 = sadd.s32 1, %s173
      $region38: #{chapter_cnn_forward.5} parent=31 // loop_footer_branch
        %172 = sbr.rel target = $region34
      $region39: #{chapter_cnn_forward.5} parent=31 // loop_exit
        _
      %p1637 = scmp.lt.s32.totalorder %s14, 1
      %s1638 = scalar_select %p1637, %s14, 1
      %s1639 = smul.addr %s1638, 112
      %s1640 = smul.addr %s1639, 4
      %s1641 = scalar_lea.vmem %s3, %s1640
      // Predicated region
      $region40: #{chapter_cnn_forward.5} parent=31 // pred_check
        %p1642 = pneg %p100
      $region41: #{chapter_cnn_forward.5} parent=31 // pred_check_branch
        %1644 = sbr.rel (%p1642) target = $region43
      $region42: #{chapter_cnn_forward.5} parent=31 // pred_region
        _
      $region43: #{chapter_cnn_forward.5} parent=31 // pred_fallthru
        _
    $region32: #{chapter_cnn_forward.5} parent=5 // pred_fallthru
      _
    %p1645 = scmp.le.s32.totalorder 2, %s9
    // Predicated region
    $region44: #{chapter_cnn_forward.5} parent=5 // pred_check
      %p1646 = pneg %p1645
    $region45: #{chapter_cnn_forward.5} parent=5 // pred_check_branch
      %1648 = sbr.rel (%p1646) target = $region47
    $region46: #{chapter_cnn_forward.5} parent=5 // pred_region
      %s1649 = ssub.s32 %s9, 2
      // Predicated region
      $region48: #{chapter_cnn_forward.5} parent=46 // pred_check
        %p1650 = pneg %p106
      $region49: #{chapter_cnn_forward.5} parent=46 // pred_check_branch
        %1652 = sbr.rel (%p1650) target = $region51
      $region50: #{chapter_cnn_forward.5} parent=46 // pred_region
        %p1653 = scmp.lt.s32.totalorder %s15, 1
        %s1654 = scalar_select %p1653, %s15, 1
        %s1655 = smul.addr %s1654, 112
        %s1656 = smul.addr %s1655, 4
        %s1657 = scalar_lea.vmem %s3, %s1656
      $region51: #{chapter_cnn_forward.5} parent=46 // pred_fallthru
        _
    $region47: #{chapter_cnn_forward.5} parent=5 // pred_fallthru
      _
  $region6: #{chapter_cnn_forward.5} parent=0 // loop_footer
    %s13 = sadd.s32 1, %s9
  $region7: #{chapter_cnn_forward.5} parent=0 // loop_footer_branch
    %8 = sbr.rel target = $region3
  $region8: #{chapter_cnn_forward.5} parent=0 // loop_exit
    _

// kernel: chapter_cnn_forward.6
$region0: #{chapter_cnn_forward.6}
  #allocation0 [shape = 'u32[]', space=smem, size = 0x4, offset = 0x4, fixed_abs, tag = 'smem constant byte address 0x4 - core index']
  #allocation1 [shape = 'u32[144,128]{1,0:T(1,128)}', space=vmem, size = 0x12000, scoped, tag = 'internal scratch']
  %s0 = inlined_call_operand.vmem [shape: bf16[2,14,32,108], index: 0, kind: input, shape index: {}]
  %s1 = inlined_call_operand.vmem [shape: bf16[9,64,32], index: 1, kind: input, shape index: {}]
  %s2 = inlined_call_operand.vmem [shape: f32[64,1], index: 2, kind: input, shape index: {}]
  %s3 = inlined_call_operand.vmem [shape: bf16[2,6,64,106], index: 3, kind: output, shape index: {}]
  %s4 = sld [smem:[#allocation0]]
  $region52: #{chapter_cnn_forward.6} parent=0
    _
  %s6 = ssub.s32 1, %s4
  %s7 = scalar_select 0, %s6, %s4
  loop: start=0, step=1, limit=4
  $region2: #{chapter_cnn_forward.6} parent=0 // loop_pre_header
    _
  $region3: #{chapter_cnn_forward.6} parent=0 // loop_header
    %s9 = sphi 0, %s13
    %p10 = scmp.ge.s32.totalorder %s9, 4
    %s19 = sphi 0, %s21
    %s22 = sphi 0, %s19
    %s23 = sphi 0, %s22
    %s39 = sphi 0, %s23
    %s43 = sphi 0, %s43
    %s45 = sphi 0, %s43
    %s46 = sphi 0, %s45
    %s60 = sphi 0, %s46
    %s64 = sphi 0, %s64
    %s66 = sphi 0, %s64
    %s67 = sphi 0, %s66
    %s81 = sphi 0, %s67
    %s87 = sphi 0, %s89
    %s90 = sphi 0, %s87
    %s91 = sphi 0, %s90
    %s107 = sphi 0, %s91
  $region4: #{chapter_cnn_forward.6} parent=0 // loop_header_branch
    %12 = sbr.rel (%p10) target = $region8
  $region5: #{chapter_cnn_forward.6} parent=0 // loop_body
    %s14 = ssub.s32 %s9, 1
    %s15 = ssub.s32 %s9, 2
    %s16 = sadd.s32 %s9, 1
    %s17 = ssub.s32 %s9, %s16
    %p18 = scmp.eq.s32.totalorder %s17, 0
    %s20 = sadd.s32 %s19, 1
    %s21 = scalar_select %p18, %s19, %s20
    %p24 = pneg %p18
    %p25 = scmp.eq.s32.totalorder %s9, 1
    %p26 = por %p24, %p25
    %p27 = scmp.ne.s32.totalorder %s19, %s22
    %p28 = scmp.eq.s32.totalorder %s9, 0
    %p29 = por %p27, %p28
    %p30 = scmp.ne.s32.totalorder %s19, %s22
    %p31 = scmp.eq.s32.totalorder %s14, 1
    %p32 = por %p30, %p31
    %p33 = scmp.ne.s32.totalorder %s22, %s23
    %p34 = scmp.eq.s32.totalorder %s14, 0
    %p35 = por %p33, %p34
    %p36 = scmp.ne.s32.totalorder %s22, %s23
    %p37 = scmp.eq.s32.totalorder %s15, 1
    %p38 = por %p36, %p37
    %p40 = scmp.ne.s32.totalorder %s23, %s39
    %p41 = scmp.eq.s32.totalorder %s15, 0
    %p42 = por %p40, %p41
    %s44 = sadd.s32 %s43, 1
    %p47 = scmp.eq.s32.totalorder %s9, 1
    %p48 = scmp.ne.s32.totalorder %s43, %s45
    %p49 = scmp.eq.s32.totalorder %s9, 0
    %p50 = por %p48, %p49
    %p51 = scmp.ne.s32.totalorder %s43, %s45
    %p52 = scmp.eq.s32.totalorder %s14, 1
    %p53 = por %p51, %p52
    %p54 = scmp.ne.s32.totalorder %s45, %s46
    %p55 = scmp.eq.s32.totalorder %s14, 0
    %p56 = por %p54, %p55
    %p57 = scmp.ne.s32.totalorder %s45, %s46
    %p58 = scmp.eq.s32.totalorder %s15, 1
    %p59 = por %p57, %p58
    %p61 = scmp.ne.s32.totalorder %s46, %s60
    %p62 = scmp.eq.s32.totalorder %s15, 0
    %p63 = por %p61, %p62
    %s65 = sadd.s32 %s64, 1
    %p68 = scmp.eq.s32.totalorder %s9, 1
    %p69 = scmp.ne.s32.totalorder %s64, %s66
    %p70 = scmp.eq.s32.totalorder %s9, 0
    %p71 = por %p69, %p70
    %p72 = scmp.ne.s32.totalorder %s64, %s66
    %p73 = scmp.eq.s32.totalorder %s14, 1
    %p74 = por %p72, %p73
    %p75 = scmp.ne.s32.totalorder %s66, %s67
    %p76 = scmp.eq.s32.totalorder %s14, 0
    %p77 = por %p75, %p76
    %p78 = scmp.ne.s32.totalorder %s66, %s67
    %p79 = scmp.eq.s32.totalorder %s15, 1
    %p80 = por %p78, %p79
    %p82 = scmp.ne.s32.totalorder %s67, %s81
    %p83 = scmp.eq.s32.totalorder %s15, 0
    %p84 = por %p82, %p83
    %s85 = ssub.s32 %s9, %s16
    %p86 = scmp.eq.s32.totalorder %s85, 0
    %s88 = sadd.s32 %s87, 1
    %s89 = scalar_select %p86, %s87, %s88
    %p92 = pneg %p86
    %p93 = scmp.eq.s32.totalorder %s9, 1
    %p94 = por %p92, %p93
    %p95 = scmp.ne.s32.totalorder %s87, %s90
    %p96 = scmp.eq.s32.totalorder %s9, 0
    %p97 = por %p95, %p96
    %p98 = scmp.ne.s32.totalorder %s87, %s90
    %p99 = scmp.eq.s32.totalorder %s14, 1
    %p100 = por %p98, %p99
    %p101 = scmp.ne.s32.totalorder %s90, %s91
    %p102 = scmp.eq.s32.totalorder %s14, 0
    %p103 = por %p101, %p102
    %p104 = scmp.ne.s32.totalorder %s90, %s91
    %p105 = scmp.eq.s32.totalorder %s15, 1
    %p106 = por %p104, %p105
    %p108 = scmp.ne.s32.totalorder %s91, %s107
    %p109 = scmp.eq.s32.totalorder %s15, 0
    %p110 = por %p108, %p109
    %p111 = scmp.le.s32.totalorder 1, %s9
    %p112 = scmp.lt.s32.totalorder %s9, 3
    %p113 = pnand %p111, %p112
    %p114 = pneg %p113
    // Predicated region
    $region9: #{chapter_cnn_forward.6} parent=5 // pred_check
      _
    $region10: #{chapter_cnn_forward.6} parent=5 // pred_check_branch
      %116 = sbr.rel (%p113) target = $region12
    $region11: #{chapter_cnn_forward.6} parent=5 // pred_region
      %s117 = ssub.s32 %s9, 1
      // Predicated region
      $region13: #{chapter_cnn_forward.6} parent=11 // pred_check
        %p118 = pneg %p56
      $region14: #{chapter_cnn_forward.6} parent=11 // pred_check_branch
        %120 = sbr.rel (%p118) target = $region16
      $region15: #{chapter_cnn_forward.6} parent=11 // pred_region
        _
      $region16: #{chapter_cnn_forward.6} parent=11 // pred_fallthru
        _
      // Predicated region
      $region17: #{chapter_cnn_forward.6} parent=11 // pred_check
        %p121 = pneg %p77
      $region18: #{chapter_cnn_forward.6} parent=11 // pred_check_branch
        %123 = sbr.rel (%p121) target = $region20
      $region19: #{chapter_cnn_forward.6} parent=11 // pred_region
        _
      $region20: #{chapter_cnn_forward.6} parent=11 // pred_fallthru
        _
    $region12: #{chapter_cnn_forward.6} parent=5 // pred_fallthru
      _
    %p124 = scmp.lt.s32.totalorder %s9, 2
    // Predicated region
    $region21: #{chapter_cnn_forward.6} parent=5 // pred_check
      %p125 = pneg %p124
    $region22: #{chapter_cnn_forward.6} parent=5 // pred_check_branch
      %127 = sbr.rel (%p125) target = $region24
    $region23: #{chapter_cnn_forward.6} parent=5 // pred_region
      // Predicated region
      $region25: #{chapter_cnn_forward.6} parent=23 // pred_check
        %p128 = pneg %p29
      $region26: #{chapter_cnn_forward.6} parent=23 // pred_check_branch
        %130 = sbr.rel (%p128) target = $region28
      $region27: #{chapter_cnn_forward.6} parent=23 // pred_region
        %p131 = scmp.lt.s32.totalorder %s9, 1
        %s132 = scalar_select %p131, %s9, 1
        %s133 = smul.addr %s132, 56
        %s134 = smul.addr %s133, 4
        %s135 = scalar_lea.vmem %s0, %s134
      $region28: #{chapter_cnn_forward.6} parent=23 // pred_fallthru
        _
    $region24: #{chapter_cnn_forward.6} parent=5 // pred_fallthru
      _
    %p136 = scmp.le.s32.totalorder 1, %s9
    %p137 = scmp.lt.s32.totalorder %s9, 3
    %p138 = pnand %p136, %p137
    %p139 = pneg %p138
    // Predicated region
    $region29: #{chapter_cnn_forward.6} parent=5 // pred_check
      _
    $region30: #{chapter_cnn_forward.6} parent=5 // pred_check_branch
      %141 = sbr.rel (%p138) target = $region32
    $region31: #{chapter_cnn_forward.6} parent=5 // pred_region
      %s142 = ssub.s32 %s9, 1
      %p143 = scmp.lt.s32.totalorder %s14, 1
      %s144 = scalar_select %p143, %s14, 1
      %s145 = smul.addr %s144, 56
      %s146 = smul.addr %s145, 4
      %s147 = scalar_lea.vmem %s0, %s146
      %p148 = pneg %p35
      %p149 = pneg %p32
      %p150 = pneg %p56
      %p151 = pneg %p53
      %p152 = pneg %p77
      %p153 = pneg %p74
      %p154 = pneg %p103
      %p155 = pneg %p100
      %p156 = scmp.lt.s32.totalorder %s14, 1
      %s157 = scalar_select %p156, %s14, 1
      %s158 = smul.addr %s157, 48
      %s159 = smul.addr %s158, 4
      %s160 = scalar_lea.vmem %s3, %s159
      %p161 = scmp.lt.s32.totalorder %s14, 1
      %s162 = scalar_select %p161, %s14, 1
      %s163 = smul.addr %s162, 56
      %s164 = smul.addr %s163, 4
      %s165 = scalar_lea.vmem %s0, %s164
      %p166 = scmp.lt.s32.totalorder %s14, 1
      %s167 = scalar_select %p166, %s14, 1
      %s168 = smul.addr %s167, 48
      %s169 = smul.addr %s168, 4
      %s170 = scalar_lea.vmem %s3, %s169
      loop: start=0, step=1, limit=6
      $region33: #{chapter_cnn_forward.6} parent=31 // loop_pre_header
        _
      $region34: #{chapter_cnn_forward.6} parent=31 // loop_header
        %s173 = sphi 0, %s177
        %p174 = scmp.ge.s32.totalorder %s173, 6
      $region35: #{chapter_cnn_forward.6} parent=31 // loop_header_branch
        %176 = sbr.rel (%p174) target = $region39
      $region36: #{chapter_cnn_forward.6} parent=31 // loop_body
        %s178 = smul.u32 %s173, 2
        %s179 = smul.u32 %s178, 4
        %s180 = smul.addr %s179, 4
        %s181 = scalar_lea.vmem %s165, %s180
        %v182 = vld [vmem:[%s181] sm:$0xf]
        %v183 = vld [vmem:[%s181 + $0x4] sm:$0xf]
        %v184 = vld [vmem:[%s181 + $0x8] sm:$0xf]
        %v185 = vld [vmem:[%s181 + $0xc] sm:$0xf]
        %s186 = sadd.s32 %s178, 1
        %s187 = smul.u32 %s186, 4
        %s188 = smul.addr %s187, 4
        %s189 = scalar_lea.vmem %s165, %s188
        %v190 = vld [vmem:[%s189] sm:$0xf]
        %v191 = vld [vmem:[%s189 + $0x4] sm:$0xf]
        %v192 = vld [vmem:[%s189 + $0x8] sm:$0xf]
        %v193 = vld [vmem:[%s189 + $0xc] sm:$0xf]
        %s194 = sadd.s32 %s178, 2
        %s195 = smul.u32 %s194, 4
        %s196 = smul.addr %s195, 4
        %s197 = scalar_lea.vmem %s165, %s196
        %v198 = vld [vmem:[%s197] sm:$0xf]
        %v199 = vld [vmem:[%s197 + $0x4] sm:$0xf]
        %v200 = vld [vmem:[%s197 + $0x8] sm:$0xf]
        %v201 = vld [vmem:[%s197 + $0xc] sm:$0xf]
        %s202 = sadd.s32 %s178, 3
        %s203 = smul.u32 %s202, 4
        %s204 = smul.addr %s203, 4
        %s205 = scalar_lea.vmem %s165, %s204
        %v206 = vld [vmem:[%s205] sm:$0xf]
        %v207 = vld [vmem:[%s205 + $0x4] sm:$0xf]
        %v208 = vld [vmem:[%s205 + $0x8] sm:$0xf]
        %v209 = vld [vmem:[%s205 + $0xc] sm:$0xf]
        %v210 = vld [vmem:[%s1] sm:$0xf]
        %v211 = vld [vmem:[%s1 + $0x4] sm:$0xf]
        %v212 = vld [vmem:[%s1 + $0x8] sm:$0xf]
        %v213 = vld [vmem:[%s1 + $0xc] sm:$0xf]
        %v214 = vld [vmem:[%s1 + $0x10] sm:$0xf]
        %v215 = vld [vmem:[%s1 + $0x14] sm:$0xf]
        %v216 = vld [vmem:[%s1 + $0x18] sm:$0xf]
        %v217 = vld [vmem:[%s1 + $0x1c] sm:$0xf]
        %s218 = scalar_lea.vmem %s1, 32
        %v219 = vld [vmem:[%s218] sm:$0xf]
        %v220 = vld [vmem:[%s218 + $0x4] sm:$0xf]
        %v221 = vld [vmem:[%s218 + $0x8] sm:$0xf]
        %v222 = vld [vmem:[%s218 + $0xc] sm:$0xf]
        %v223 = vld [vmem:[%s218 + $0x10] sm:$0xf]
        %v224 = vld [vmem:[%s218 + $0x14] sm:$0xf]
        %v225 = vld [vmem:[%s218 + $0x18] sm:$0xf]
        %v226 = vld [vmem:[%s218 + $0x1c] sm:$0xf]
        %v235 = vunpack.c.l.b16 %v219
        %v236 = vunpack.c.l.b16 %v220
        %v237 = vunpack.c.l.b16 %v221
        %v238 = vunpack.c.l.b16 %v222
        %v239 = vunpack.c.l.b16 %v223
        %v240 = vunpack.c.l.b16 %v224
        %v241 = vunpack.c.l.b16 %v225
        %v242 = vunpack.c.l.b16 %v226
        %v243 = vpack.c.b16 %v236, %v235
        %v244 = vpack.c.b16 %v238, %v237
        %v245 = vpack.c.b16 %v240, %v239
        %v246 = vpack.c.b16 %v242, %v241
        %v251 = vunpack.c.l.b16 %v182
        %v252 = vunpack.c.l.b16 %v183
        %v253 = vunpack.c.l.b16 %v184
        %v254 = vunpack.c.l.b16 %v185
        %v255 = vpack.c.b16 %v252, %v251
        %v256 = vpack.c.b16 %v254, %v253
        %257 = vrot.lane.b32.xlu0 %v255, 127
        %v258 = vpop.permute.xlu0 %257
        %259 = vrot.lane.b32.xlu0 %v256, 127
        %v260 = vpop.permute.xlu0 %259
        %vm263 = vcmask 261120
        %v265 = vsel %vm263, %v243, 0
        %v268 = vsel %vm263, %v244, 0
        %v271 = vsel %vm263, %v245, 0
        %v274 = vsel %vm263, %v246, 0
        %276 = vmatprep.subr.bf16.mxu0 0
        %277 = vmatpush1.bf16.msra.mxu0 0
        %278 = vmatprep.subr.bf16.mxu0 0
        %279 = vmatpush1.bf16.msra.mxu0 0
        %280 = vmatprep.subr.bf16.mxu0 0
        %281 = vmatpush1.bf16.msra.mxu0 0
        %282 = vmatprep.subr.bf16.mxu0 0
        %283 = vmatpush1.bf16.msra.mxu0 0
        %284 = vmatprep.subr.bf16.mxu0 0
        %285 = vmatpush1.bf16.msra.mxu0 0
        %286 = vmatprep.subr.bf16.mxu0 0
        %287 = vmatpush1.bf16.msra.mxu0 0
        %288 = vmatprep.subr.bf16.mxu0 0
        %289 = vmatpush1.bf16.msra.mxu0 %v260
        %290 = vmatprep.subr.bf16.mxu0 0
        %291 = vmatpush1.bf16.msra.mxu0 %v258
        %292 = vmatprep.subr.bf16.mxu0 0
        %293 = vmatpush2.bf16.msra.mxu0 0
        %294 = vmatprep.subr.bf16.mxu0 0
        %295 = vmatpush2.bf16.msra.mxu0 0
        %296 = vmatprep.subr.bf16.mxu0 0
        %297 = vmatpush2.bf16.msra.mxu0 0
        %298 = vmatprep.subr.bf16.mxu0 0
        %299 = vmatpush2.bf16.msra.mxu0 0
        %300 = vmatprep.subr.bf16.mxu0 0
        %301 = vmatpush2.bf16.msra.mxu0 0
        %302 = vmatprep.subr.bf16.mxu0 0
        %303 = vmatpush2.bf16.msra.mxu0 0
        %304 = vmatprep.subr.bf16.mxu0 0
        %305 = vmatpush2.bf16.msra.mxu0 0
        %306 = vmatprep.subr.bf16.mxu0 0
        %307 = vmatpush2.bf16.msra.mxu0 0
        %308 = vmatprep.mubr.bf16.mxu0 0
        %309 = vmatmul.mubr.bf16.gmra.mxu0 %v265
        %v310 = vpop.f32.mrf.mxu0
        %v311 = vadd.f32 0.0, %v310
        %v312 = vpop.f32.mrf.mxu0
        %v313 = vpop.f32.mrf.mxu0
        %v314 = vadd.f32 0.0, %v313
        %v315 = vpop.f32.mrf.mxu0
        %316 = vmatprep.mubr.bf16.mxu0 0
        %317 = vmatmul.mubr.bf16.gmra.mxu0 %v268
        %v318 = vpop.f32.mrf.mxu0
        %v319 = vadd.f32 0.0, %v318
        %v320 = vpop.f32.mrf.mxu0
        %v321 = vpop.f32.mrf.mxu0
        %v322 = vadd.f32 0.0, %v321
        %v323 = vpop.f32.mrf.mxu0
        %324 = vmatprep.mubr.bf16.mxu0 0
        %325 = vmatmul.mubr.bf16.gmra.mxu0 %v271
        %v326 = vpop.f32.mrf.mxu0
        %v327 = vadd.f32 0.0, %v326
        %v328 = vpop.f32.mrf.mxu0
        %v329 = vpop.f32.mrf.mxu0
        %v330 = vadd.f32 0.0, %v329
        %v331 = vpop.f32.mrf.mxu0
        %332 = vmatprep.mubr.bf16.mxu0 0
        %333 = vmatmul.mubr.bf16.gmra.mxu0 %v274
        %v334 = vpop.f32.mrf.mxu0
        %v335 = vadd.f32 0.0, %v334
        %v336 = vpop.f32.mrf.mxu0
        %v337 = vpop.f32.mrf.mxu0
        %v338 = vadd.f32 0.0, %v337
        %v339 = vpop.f32.mrf.mxu0
        %340 = vdwg.mxu0
        %v349 = vunpack.c.l.b16 %v210
        %v350 = vunpack.c.l.b16 %v211
        %v351 = vunpack.c.l.b16 %v212
        %v352 = vunpack.c.l.b16 %v213
        %v353 = vunpack.c.l.b16 %v214
        %v354 = vunpack.c.l.b16 %v215
        %v355 = vunpack.c.l.b16 %v216
        %v356 = vunpack.c.l.b16 %v217
        %v357 = vpack.c.b16 %v350, %v349
        %v358 = vpack.c.b16 %v352, %v351
        %v359 = vpack.c.b16 %v354, %v353
        %v360 = vpack.c.b16 %v356, %v355
        %v364 = vsel %vm263, %v357, 0
        %v367 = vsel %vm263, %v358, 0
        %v370 = vsel %vm263, %v359, 0
        %v373 = vsel %vm263, %v360, 0
        %375 = vmatprep.subr.bf16.mxu0 0
        %376 = vmatpush1.bf16.msra.mxu0 0
        %377 = vmatprep.subr.bf16.mxu0 0
        %378 = vmatpush1.bf16.msra.mxu0 0
        %379 = vmatprep.subr.bf16.mxu0 0
        %380 = vmatpush1.bf16.msra.mxu0 0
        %381 = vmatprep.subr.bf16.mxu0 0
        %382 = vmatpush1.bf16.msra.mxu0 0
        %383 = vmatprep.subr.bf16.mxu0 0
        %384 = vmatpush1.bf16.msra.mxu0 0
        %385 = vmatprep.subr.bf16.mxu0 0
        %386 = vmatpush1.bf16.msra.mxu0 0
        %387 = vmatprep.subr.bf16.mxu0 0
        %388 = vmatpush1.bf16.msra.mxu0 %v256
        %389 = vmatprep.subr.bf16.mxu0 0
        %390 = vmatpush1.bf16.msra.mxu0 %v255
        %391 = vmatprep.subr.bf16.mxu0 0
        %392 = vmatpush2.bf16.msra.mxu0 0
        %393 = vmatprep.subr.bf16.mxu0 0
        %394 = vmatpush2.bf16.msra.mxu0 0
        %395 = vmatprep.subr.bf16.mxu0 0
        %396 = vmatpush2.bf16.msra.mxu0 0
        %397 = vmatprep.subr.bf16.mxu0 0
        %398 = vmatpush2.bf16.msra.mxu0 0
        %399 = vmatprep.subr.bf16.mxu0 0
        %400 = vmatpush2.bf16.msra.mxu0 0
        %401 = vmatprep.subr.bf16.mxu0 0
        %402 = vmatpush2.bf16.msra.mxu0 0
        %403 = vmatprep.subr.bf16.mxu0 0
        %404 = vmatpush2.bf16.msra.mxu0 0
        %405 = vmatprep.subr.bf16.mxu0 0
        %406 = vmatpush2.bf16.msra.mxu0 0
        %407 = vmatprep.mubr.bf16.mxu0 0
        %408 = vmatmul.mubr.bf16.gmra.mxu0 %v364
        %v409 = vpop.f32.mrf.mxu0
        %v410 = vadd.f32 %v311, %v409
        %v411 = vpop.f32.mrf.mxu0
        %v412 = vpop.f32.mrf.mxu0
        %v413 = vadd.f32 %v314, %v412
        %v414 = vpop.f32.mrf.mxu0
        %415 = vmatprep.mubr.bf16.mxu0 0
        %416 = vmatmul.mubr.bf16.gmra.mxu0 %v367
        %v417 = vpop.f32.mrf.mxu0
        %v418 = vadd.f32 %v319, %v417
        %v419 = vpop.f32.mrf.mxu0
        %v420 = vpop.f32.mrf.mxu0
        %v421 = vadd.f32 %v322, %v420
        %v422 = vpop.f32.mrf.mxu0
        %423 = vmatprep.mubr.bf16.mxu0 0
        %424 = vmatmul.mubr.bf16.gmra.mxu0 %v370
        %v425 = vpop.f32.mrf.mxu0
        %v426 = vadd.f32 %v327, %v425
        %v427 = vpop.f32.mrf.mxu0
        %v428 = vpop.f32.mrf.mxu0
        %v429 = vadd.f32 %v330, %v428
        %v430 = vpop.f32.mrf.mxu0
        %431 = vmatprep.mubr.bf16.mxu0 0
        %432 = vmatmul.mubr.bf16.gmra.mxu0 %v373
        %v433 = vpop.f32.mrf.mxu0
        %v434 = vadd.f32 %v335, %v433
        %v435 = vpop.f32.mrf.mxu0
        %v436 = vpop.f32.mrf.mxu0
        %v437 = vadd.f32 %v338, %v436
        %v438 = vpop.f32.mrf.mxu0
        %439 = vdwg.mxu0
        %s440 = scalar_lea.vmem %s1, 64
        %v441 = vld [vmem:[%s440] sm:$0xf]
        %v442 = vld [vmem:[%s440 + $0x4] sm:$0xf]
        %v443 = vld [vmem:[%s440 + $0x8] sm:$0xf]
        %v444 = vld [vmem:[%s440 + $0xc] sm:$0xf]
        %v445 = vld [vmem:[%s440 + $0x10] sm:$0xf]
        %v446 = vld [vmem:[%s440 + $0x14] sm:$0xf]
        %v447 = vld [vmem:[%s440 + $0x18] sm:$0xf]
        %v448 = vld [vmem:[%s440 + $0x1c] sm:$0xf]
        %v457 = vunpack.c.l.b16 %v441
        %v458 = vunpack.c.l.b16 %v442
        %v459 = vunpack.c.l.b16 %v443
        %v460 = vunpack.c.l.b16 %v444
        %v461 = vunpack.c.l.b16 %v445
        %v462 = vunpack.c.l.b16 %v446
        %v463 = vunpack.c.l.b16 %v447
        %v464 = vunpack.c.l.b16 %v448
        %v465 = vpack.c.b16 %v458, %v457
        %v466 = vpack.c.b16 %v460, %v459
        %v467 = vpack.c.b16 %v462, %v461
        %v468 = vpack.c.b16 %v464, %v463
        %469 = vrot.lane.b32.xlu0 %v255, 126
        %v470 = vpop.permute.xlu0 %469
        %471 = vrot.lane.b32.xlu0 %v256, 126
        %v472 = vpop.permute.xlu0 %471
        %v476 = vsel %vm263, %v465, 0
        %v479 = vsel %vm263, %v466, 0
        %v482 = vsel %vm263, %v467, 0
        %v485 = vsel %vm263, %v468, 0
        %487 = vmatprep.subr.bf16.mxu0 0
        %488 = vmatpush1.bf16.msra.mxu0 0
        %489 = vmatprep.subr.bf16.mxu0 0
        %490 = vmatpush1.bf16.msra.mxu0 0
        %491 = vmatprep.subr.bf16.mxu0 0
        %492 = vmatpush1.bf16.msra.mxu0 0
        %493 = vmatprep.subr.bf16.mxu0 0
        %494 = vmatpush1.bf16.msra.mxu0 0
        %495 = vmatprep.subr.bf16.mxu0 0
        %496 = vmatpush1.bf16.msra.mxu0 0
        %497 = vmatprep.subr.bf16.mxu0 0
        %498 = vmatpush1.bf16.msra.mxu0 0
        %499 = vmatprep.subr.bf16.mxu0 0
        %500 = vmatpush1.bf16.msra.mxu0 %v472
        %501 = vmatprep.subr.bf16.mxu0 0
        %502 = vmatpush1.bf16.msra.mxu0 %v470
        %503 = vmatprep.subr.bf16.mxu0 0
        %504 = vmatpush2.bf16.msra.mxu0 0
        %505 = vmatprep.subr.bf16.mxu0 0
        %506 = vmatpush2.bf16.msra.mxu0 0
        %507 = vmatprep.subr.bf16.mxu0 0
        %508 = vmatpush2.bf16.msra.mxu0 0
        %509 = vmatprep.subr.bf16.mxu0 0
        %510 = vmatpush2.bf16.msra.mxu0 0
        %511 = vmatprep.subr.bf16.mxu0 0
        %512 = vmatpush2.bf16.msra.mxu0 0
        %513 = vmatprep.subr.bf16.mxu0 0
        %514 = vmatpush2.bf16.msra.mxu0 0
        %515 = vmatprep.subr.bf16.mxu0 0
        %516 = vmatpush2.bf16.msra.mxu0 0
        %517 = vmatprep.subr.bf16.mxu0 0
        %518 = vmatpush2.bf16.msra.mxu0 0
        %519 = vmatprep.mubr.bf16.mxu0 0
        %520 = vmatmul.mubr.bf16.gmra.mxu0 %v476
        %v521 = vpop.f32.mrf.mxu0
        %v522 = vadd.f32 0.0, %v521
        %v523 = vpop.f32.mrf.mxu0
        %v524 = vpop.f32.mrf.mxu0
        %v525 = vadd.f32 0.0, %v524
        %v526 = vpop.f32.mrf.mxu0
        %527 = vmatprep.mubr.bf16.mxu0 0
        %528 = vmatmul.mubr.bf16.gmra.mxu0 %v479
        %v529 = vpop.f32.mrf.mxu0
        %v530 = vadd.f32 0.0, %v529
        %v531 = vpop.f32.mrf.mxu0
        %v532 = vpop.f32.mrf.mxu0
        %v533 = vadd.f32 0.0, %v532
        %v534 = vpop.f32.mrf.mxu0
        %535 = vmatprep.mubr.bf16.mxu0 0
        %536 = vmatmul.mubr.bf16.gmra.mxu0 %v482
        %v537 = vpop.f32.mrf.mxu0
        %v538 = vadd.f32 0.0, %v537
        %v539 = vpop.f32.mrf.mxu0
        %v540 = vpop.f32.mrf.mxu0
        %v541 = vadd.f32 0.0, %v540
        %v542 = vpop.f32.mrf.mxu0
        %543 = vmatprep.mubr.bf16.mxu0 0
        %544 = vmatmul.mubr.bf16.gmra.mxu0 %v485
        %v545 = vpop.f32.mrf.mxu0
        %v546 = vadd.f32 0.0, %v545
        %v547 = vpop.f32.mrf.mxu0
        %v548 = vpop.f32.mrf.mxu0
        %v549 = vadd.f32 0.0, %v548
        %v550 = vpop.f32.mrf.mxu0
        %551 = vdwg.mxu0
        %v552 = vadd.f32 %v410, %v522
        %v553 = vadd.f32 %v413, %v525
        %v554 = vadd.f32 %v418, %v530
        %v555 = vadd.f32 %v421, %v533
        %v556 = vadd.f32 %v426, %v538
        %v557 = vadd.f32 %v429, %v541
        %v558 = vadd.f32 %v434, %v546
        %v559 = vadd.f32 %v437, %v549
        %s560 = scalar_lea.vmem %s1, 96
        %v561 = vld [vmem:[%s560] sm:$0xf]
        %v562 = vld [vmem:[%s560 + $0x4] sm:$0xf]
        %v563 = vld [vmem:[%s560 + $0x8] sm:$0xf]
        %v564 = vld [vmem:[%s560 + $0xc] sm:$0xf]
        %v565 = vld [vmem:[%s560 + $0x10] sm:$0xf]
        %v566 = vld [vmem:[%s560 + $0x14] sm:$0xf]
        %v567 = vld [vmem:[%s560 + $0x18] sm:$0xf]
        %v568 = vld [vmem:[%s560 + $0x1c] sm:$0xf]
        %v577 = vunpack.c.l.b16 %v561
        %v578 = vunpack.c.l.b16 %v562
        %v579 = vunpack.c.l.b16 %v563
        %v580 = vunpack.c.l.b16 %v564
        %v581 = vunpack.c.l.b16 %v565
        %v582 = vunpack.c.l.b16 %v566
        %v583 = vunpack.c.l.b16 %v567
        %v584 = vunpack.c.l.b16 %v568
        %v585 = vpack.c.b16 %v578, %v577
        %v586 = vpack.c.b16 %v580, %v579
        %v587 = vpack.c.b16 %v582, %v581
        %v588 = vpack.c.b16 %v584, %v583
        %v593 = vunpack.c.l.b16 %v190
        %v594 = vunpack.c.l.b16 %v191
        %v595 = vunpack.c.l.b16 %v192
        %v596 = vunpack.c.l.b16 %v193
        %v597 = vpack.c.b16 %v594, %v593
        %v598 = vpack.c.b16 %v596, %v595
        %v602 = vsel %vm263, %v585, 0
        %v605 = vsel %vm263, %v586, 0
        %v608 = vsel %vm263, %v587, 0
        %v611 = vsel %vm263, %v588, 0
        %613 = vmatprep.subr.bf16.mxu0 0
        %614 = vmatpush1.bf16.msra.mxu0 0
        %615 = vmatprep.subr.bf16.mxu0 0
        %616 = vmatpush1.bf16.msra.mxu0 0
        %617 = vmatprep.subr.bf16.mxu0 0
        %618 = vmatpush1.bf16.msra.mxu0 0
        %619 = vmatprep.subr.bf16.mxu0 0
        %620 = vmatpush1.bf16.msra.mxu0 0
        %621 = vmatprep.subr.bf16.mxu0 0
        %622 = vmatpush1.bf16.msra.mxu0 0
        %623 = vmatprep.subr.bf16.mxu0 0
        %624 = vmatpush1.bf16.msra.mxu0 0
        %625 = vmatprep.subr.bf16.mxu0 0
        %626 = vmatpush1.bf16.msra.mxu0 %v598
        %627 = vmatprep.subr.bf16.mxu0 0
        %628 = vmatpush1.bf16.msra.mxu0 %v597
        %629 = vmatprep.subr.bf16.mxu0 0
        %630 = vmatpush2.bf16.msra.mxu0 0
        %631 = vmatprep.subr.bf16.mxu0 0
        %632 = vmatpush2.bf16.msra.mxu0 0
        %633 = vmatprep.subr.bf16.mxu0 0
        %634 = vmatpush2.bf16.msra.mxu0 0
        %635 = vmatprep.subr.bf16.mxu0 0
        %636 = vmatpush2.bf16.msra.mxu0 0
        %637 = vmatprep.subr.bf16.mxu0 0
        %638 = vmatpush2.bf16.msra.mxu0 0
        %639 = vmatprep.subr.bf16.mxu0 0
        %640 = vmatpush2.bf16.msra.mxu0 0
        %641 = vmatprep.subr.bf16.mxu0 0
        %642 = vmatpush2.bf16.msra.mxu0 0
        %643 = vmatprep.subr.bf16.mxu0 0
        %644 = vmatpush2.bf16.msra.mxu0 0
        %645 = vmatprep.mubr.bf16.mxu0 0
        %646 = vmatmul.mubr.bf16.gmra.mxu0 %v602
        %v647 = vpop.f32.mrf.mxu0
        %v648 = vadd.f32 0.0, %v647
        %v649 = vpop.f32.mrf.mxu0
        %v650 = vpop.f32.mrf.mxu0
        %v651 = vadd.f32 0.0, %v650
        %v652 = vpop.f32.mrf.mxu0
        %653 = vmatprep.mubr.bf16.mxu0 0
        %654 = vmatmul.mubr.bf16.gmra.mxu0 %v605
        %v655 = vpop.f32.mrf.mxu0
        %v656 = vadd.f32 0.0, %v655
        %v657 = vpop.f32.mrf.mxu0
        %v658 = vpop.f32.mrf.mxu0
        %v659 = vadd.f32 0.0, %v658
        %v660 = vpop.f32.mrf.mxu0
        %661 = vmatprep.mubr.bf16.mxu0 0
        %662 = vmatmul.mubr.bf16.gmra.mxu0 %v608
        %v663 = vpop.f32.mrf.mxu0
        %v664 = vadd.f32 0.0, %v663
        %v665 = vpop.f32.mrf.mxu0
        %v666 = vpop.f32.mrf.mxu0
        %v667 = vadd.f32 0.0, %v666
        %v668 = vpop.f32.mrf.mxu0
        %669 = vmatprep.mubr.bf16.mxu0 0
        %670 = vmatmul.mubr.bf16.gmra.mxu0 %v611
        %v671 = vpop.f32.mrf.mxu0
        %v672 = vadd.f32 0.0, %v671
        %v673 = vpop.f32.mrf.mxu0
        %v674 = vpop.f32.mrf.mxu0
        %v675 = vadd.f32 0.0, %v674
        %v676 = vpop.f32.mrf.mxu0
        %677 = vdwg.mxu0
        %v678 = vadd.f32 %v552, %v648
        %v679 = vadd.f32 %v553, %v651
        %v680 = vadd.f32 %v554, %v656
        %v681 = vadd.f32 %v555, %v659
        %v682 = vadd.f32 %v556, %v664
        %v683 = vadd.f32 %v557, %v667
        %v684 = vadd.f32 %v558, %v672
        %v685 = vadd.f32 %v559, %v675
        %s686 = scalar_lea.vmem %s1, 128
        %v687 = vld [vmem:[%s686] sm:$0xf]
        %v688 = vld [vmem:[%s686 + $0x4] sm:$0xf]
        %v689 = vld [vmem:[%s686 + $0x8] sm:$0xf]
        %v690 = vld [vmem:[%s686 + $0xc] sm:$0xf]
        %v691 = vld [vmem:[%s686 + $0x10] sm:$0xf]
        %v692 = vld [vmem:[%s686 + $0x14] sm:$0xf]
        %v693 = vld [vmem:[%s686 + $0x18] sm:$0xf]
        %v694 = vld [vmem:[%s686 + $0x1c] sm:$0xf]
        %v703 = vunpack.c.l.b16 %v687
        %v704 = vunpack.c.l.b16 %v688
        %v705 = vunpack.c.l.b16 %v689
        %v706 = vunpack.c.l.b16 %v690
        %v707 = vunpack.c.l.b16 %v691
        %v708 = vunpack.c.l.b16 %v692
        %v709 = vunpack.c.l.b16 %v693
        %v710 = vunpack.c.l.b16 %v694
        %v711 = vpack.c.b16 %v704, %v703
        %v712 = vpack.c.b16 %v706, %v705
        %v713 = vpack.c.b16 %v708, %v707
        %v714 = vpack.c.b16 %v710, %v709
        %715 = vrot.lane.b32.xlu0 %v597, 127
        %v716 = vpop.permute.xlu0 %715
        %717 = vrot.lane.b32.xlu0 %v598, 127
        %v718 = vpop.permute.xlu0 %717
        %v722 = vsel %vm263, %v711, 0
        %v725 = vsel %vm263, %v712, 0
        %v728 = vsel %vm263, %v713, 0
        %v731 = vsel %vm263, %v714, 0
        %733 = vmatprep.subr.bf16.mxu0 0
        %734 = vmatpush1.bf16.msra.mxu0 0
        %735 = vmatprep.subr.bf16.mxu0 0
        %736 = vmatpush1.bf16.msra.mxu0 0
        %737 = vmatprep.subr.bf16.mxu0 0
        %738 = vmatpush1.bf16.msra.mxu0 0
        %739 = vmatprep.subr.bf16.mxu0 0
        %740 = vmatpush1.bf16.msra.mxu0 0
        %741 = vmatprep.subr.bf16.mxu0 0
        %742 = vmatpush1.bf16.msra.mxu0 0
        %743 = vmatprep.subr.bf16.mxu0 0
        %744 = vmatpush1.bf16.msra.mxu0 0
        %745 = vmatprep.subr.bf16.mxu0 0
        %746 = vmatpush1.bf16.msra.mxu0 %v718
        %747 = vmatprep.subr.bf16.mxu0 0
        %748 = vmatpush1.bf16.msra.mxu0 %v716
        %749 = vmatprep.subr.bf16.mxu0 0
        %750 = vmatpush2.bf16.msra.mxu0 0
        %751 = vmatprep.subr.bf16.mxu0 0
        %752 = vmatpush2.bf16.msra.mxu0 0
        %753 = vmatprep.subr.bf16.mxu0 0
        %754 = vmatpush2.bf16.msra.mxu0 0
        %755 = vmatprep.subr.bf16.mxu0 0
        %756 = vmatpush2.bf16.msra.mxu0 0
        %757 = vmatprep.subr.bf16.mxu0 0
        %758 = vmatpush2.bf16.msra.mxu0 0
        %759 = vmatprep.subr.bf16.mxu0 0
        %760 = vmatpush2.bf16.msra.mxu0 0
        %761 = vmatprep.subr.bf16.mxu0 0
        %762 = vmatpush2.bf16.msra.mxu0 0
        %763 = vmatprep.subr.bf16.mxu0 0
        %764 = vmatpush2.bf16.msra.mxu0 0
        %765 = vmatprep.mubr.bf16.mxu0 0
        %766 = vmatmul.mubr.bf16.gmra.mxu0 %v722
        %v767 = vpop.f32.mrf.mxu0
        %v768 = vadd.f32 0.0, %v767
        %v769 = vpop.f32.mrf.mxu0
        %v770 = vpop.f32.mrf.mxu0
        %v771 = vadd.f32 0.0, %v770
        %v772 = vpop.f32.mrf.mxu0
        %773 = vmatprep.mubr.bf16.mxu0 0
        %774 = vmatmul.mubr.bf16.gmra.mxu0 %v725
        %v775 = vpop.f32.mrf.mxu0
        %v776 = vadd.f32 0.0, %v775
        %v777 = vpop.f32.mrf.mxu0
        %v778 = vpop.f32.mrf.mxu0
        %v779 = vadd.f32 0.0, %v778
        %v780 = vpop.f32.mrf.mxu0
        %781 = vmatprep.mubr.bf16.mxu0 0
        %782 = vmatmul.mubr.bf16.gmra.mxu0 %v728
        %v783 = vpop.f32.mrf.mxu0
        %v784 = vadd.f32 0.0, %v783
        %v785 = vpop.f32.mrf.mxu0
        %v786 = vpop.f32.mrf.mxu0
        %v787 = vadd.f32 0.0, %v786
        %v788 = vpop.f32.mrf.mxu0
        %789 = vmatprep.mubr.bf16.mxu0 0
        %790 = vmatmul.mubr.bf16.gmra.mxu0 %v731
        %v791 = vpop.f32.mrf.mxu0
        %v792 = vadd.f32 0.0, %v791
        %v793 = vpop.f32.mrf.mxu0
        %v794 = vpop.f32.mrf.mxu0
        %v795 = vadd.f32 0.0, %v794
        %v796 = vpop.f32.mrf.mxu0
        %797 = vdwg.mxu0
        %v798 = vadd.f32 %v678, %v768
        %v799 = vadd.f32 %v679, %v771
        %v800 = vadd.f32 %v680, %v776
        %v801 = vadd.f32 %v681, %v779
        %v802 = vadd.f32 %v682, %v784
        %v803 = vadd.f32 %v683, %v787
        %v804 = vadd.f32 %v684, %v792
        %v805 = vadd.f32 %v685, %v795
        %s806 = scalar_lea.vmem %s1, 160
        %v807 = vld [vmem:[%s806] sm:$0xf]
        %v808 = vld [vmem:[%s806 + $0x4] sm:$0xf]
        %v809 = vld [vmem:[%s806 + $0x8] sm:$0xf]
        %v810 = vld [vmem:[%s806 + $0xc] sm:$0xf]
        %v811 = vld [vmem:[%s806 + $0x10] sm:$0xf]
        %v812 = vld [vmem:[%s806 + $0x14] sm:$0xf]
        %v813 = vld [vmem:[%s806 + $0x18] sm:$0xf]
        %v814 = vld [vmem:[%s806 + $0x1c] sm:$0xf]
        %v823 = vunpack.c.l.b16 %v807
        %v824 = vunpack.c.l.b16 %v808
        %v825 = vunpack.c.l.b16 %v809
        %v826 = vunpack.c.l.b16 %v810
        %v827 = vunpack.c.l.b16 %v811
        %v828 = vunpack.c.l.b16 %v812
        %v829 = vunpack.c.l.b16 %v813
        %v830 = vunpack.c.l.b16 %v814
        %v831 = vpack.c.b16 %v824, %v823
        %v832 = vpack.c.b16 %v826, %v825
        %v833 = vpack.c.b16 %v828, %v827
        %v834 = vpack.c.b16 %v830, %v829
        %835 = vrot.lane.b32.xlu0 %v597, 126
        %v836 = vpop.permute.xlu0 %835
        %837 = vrot.lane.b32.xlu0 %v598, 126
        %v838 = vpop.permute.xlu0 %837
        %v842 = vsel %vm263, %v831, 0
        %v845 = vsel %vm263, %v832, 0
        %v848 = vsel %vm263, %v833, 0
        %v851 = vsel %vm263, %v834, 0
        %853 = vmatprep.subr.bf16.mxu0 0
        %854 = vmatpush1.bf16.msra.mxu0 0
        %855 = vmatprep.subr.bf16.mxu0 0
        %856 = vmatpush1.bf16.msra.mxu0 0
        %857 = vmatprep.subr.bf16.mxu0 0
        %858 = vmatpush1.bf16.msra.mxu0 0
        %859 = vmatprep.subr.bf16.mxu0 0
        %860 = vmatpush1.bf16.msra.mxu0 0
        %861 = vmatprep.subr.bf16.mxu0 0
        %862 = vmatpush1.bf16.msra.mxu0 0
        %863 = vmatprep.subr.bf16.mxu0 0
        %864 = vmatpush1.bf16.msra.mxu0 0
        %865 = vmatprep.subr.bf16.mxu0 0
        %866 = vmatpush1.bf16.msra.mxu0 %v838
        %867 = vmatprep.subr.bf16.mxu0 0
        %868 = vmatpush1.bf16.msra.mxu0 %v836
        %869 = vmatprep.subr.bf16.mxu0 0
        %870 = vmatpush2.bf16.msra.mxu0 0
        %871 = vmatprep.subr.bf16.mxu0 0
        %872 = vmatpush2.bf16.msra.mxu0 0
        %873 = vmatprep.subr.bf16.mxu0 0
        %874 = vmatpush2.bf16.msra.mxu0 0
        %875 = vmatprep.subr.bf16.mxu0 0
        %876 = vmatpush2.bf16.msra.mxu0 0
        %877 = vmatprep.subr.bf16.mxu0 0
        %878 = vmatpush2.bf16.msra.mxu0 0
        %879 = vmatprep.subr.bf16.mxu0 0
        %880 = vmatpush2.bf16.msra.mxu0 0
        %881 = vmatprep.subr.bf16.mxu0 0
        %882 = vmatpush2.bf16.msra.mxu0 0
        %883 = vmatprep.subr.bf16.mxu0 0
        %884 = vmatpush2.bf16.msra.mxu0 0
        %885 = vmatprep.mubr.bf16.mxu0 0
        %886 = vmatmul.mubr.bf16.gmra.mxu0 %v842
        %v887 = vpop.f32.mrf.mxu0
        %v888 = vadd.f32 0.0, %v887
        %v889 = vpop.f32.mrf.mxu0
        %v890 = vpop.f32.mrf.mxu0
        %v891 = vadd.f32 0.0, %v890
        %v892 = vpop.f32.mrf.mxu0
        %893 = vmatprep.mubr.bf16.mxu0 0
        %894 = vmatmul.mubr.bf16.gmra.mxu0 %v845
        %v895 = vpop.f32.mrf.mxu0
        %v896 = vadd.f32 0.0, %v895
        %v897 = vpop.f32.mrf.mxu0
        %v898 = vpop.f32.mrf.mxu0
        %v899 = vadd.f32 0.0, %v898
        %v900 = vpop.f32.mrf.mxu0
        %901 = vmatprep.mubr.bf16.mxu0 0
        %902 = vmatmul.mubr.bf16.gmra.mxu0 %v848
        %v903 = vpop.f32.mrf.mxu0
        %v904 = vadd.f32 0.0, %v903
        %v905 = vpop.f32.mrf.mxu0
        %v906 = vpop.f32.mrf.mxu0
        %v907 = vadd.f32 0.0, %v906
        %v908 = vpop.f32.mrf.mxu0
        %909 = vmatprep.mubr.bf16.mxu0 0
        %910 = vmatmul.mubr.bf16.gmra.mxu0 %v851
        %v911 = vpop.f32.mrf.mxu0
        %v912 = vadd.f32 0.0, %v911
        %v913 = vpop.f32.mrf.mxu0
        %v914 = vpop.f32.mrf.mxu0
        %v915 = vadd.f32 0.0, %v914
        %v916 = vpop.f32.mrf.mxu0
        %917 = vdwg.mxu0
        %v918 = vadd.f32 %v798, %v888
        %v919 = vadd.f32 %v799, %v891
        %v920 = vadd.f32 %v800, %v896
        %v921 = vadd.f32 %v801, %v899
        %v922 = vadd.f32 %v802, %v904
        %v923 = vadd.f32 %v803, %v907
        %v924 = vadd.f32 %v804, %v912
        %v925 = vadd.f32 %v805, %v915
        %s926 = scalar_lea.vmem %s1, 192
        %v927 = vld [vmem:[%s926] sm:$0xf]
        %v928 = vld [vmem:[%s926 + $0x4] sm:$0xf]
        %v929 = vld [vmem:[%s926 + $0x8] sm:$0xf]
        %v930 = vld [vmem:[%s926 + $0xc] sm:$0xf]
        %v931 = vld [vmem:[%s926 + $0x10] sm:$0xf]
        %v932 = vld [vmem:[%s926 + $0x14] sm:$0xf]
        %v933 = vld [vmem:[%s926 + $0x18] sm:$0xf]
        %v934 = vld [vmem:[%s926 + $0x1c] sm:$0xf]
        %v943 = vunpack.c.l.b16 %v927
        %v944 = vunpack.c.l.b16 %v928
        %v945 = vunpack.c.l.b16 %v929
        %v946 = vunpack.c.l.b16 %v930
        %v947 = vunpack.c.l.b16 %v931
        %v948 = vunpack.c.l.b16 %v932
        %v949 = vunpack.c.l.b16 %v933
        %v950 = vunpack.c.l.b16 %v934
        %v951 = vpack.c.b16 %v944, %v943
        %v952 = vpack.c.b16 %v946, %v945
        %v953 = vpack.c.b16 %v948, %v947
        %v954 = vpack.c.b16 %v950, %v949
        %v959 = vunpack.c.l.b16 %v198
        %v960 = vunpack.c.l.b16 %v199
        %v961 = vunpack.c.l.b16 %v200
        %v962 = vunpack.c.l.b16 %v201
        %v963 = vpack.c.b16 %v960, %v959
        %v964 = vpack.c.b16 %v962, %v961
        %v968 = vsel %vm263, %v951, 0
        %v971 = vsel %vm263, %v952, 0
        %v974 = vsel %vm263, %v953, 0
        %v977 = vsel %vm263, %v954, 0
        %979 = vmatprep.subr.bf16.mxu0 0
        %980 = vmatpush1.bf16.msra.mxu0 0
        %981 = vmatprep.subr.bf16.mxu0 0
        %982 = vmatpush1.bf16.msra.mxu0 0
        %983 = vmatprep.subr.bf16.mxu0 0
        %984 = vmatpush1.bf16.msra.mxu0 0
        %985 = vmatprep.subr.bf16.mxu0 0
        %986 = vmatpush1.bf16.msra.mxu0 0
        %987 = vmatprep.subr.bf16.mxu0 0
        %988 = vmatpush1.bf16.msra.mxu0 0
        %989 = vmatprep.subr.bf16.mxu0 0
        %990 = vmatpush1.bf16.msra.mxu0 0
        %991 = vmatprep.subr.bf16.mxu0 0
        %992 = vmatpush1.bf16.msra.mxu0 %v964
        %993 = vmatprep.subr.bf16.mxu0 0
        %994 = vmatpush1.bf16.msra.mxu0 %v963
        %995 = vmatprep.subr.bf16.mxu0 0
        %996 = vmatpush2.bf16.msra.mxu0 0
        %997 = vmatprep.subr.bf16.mxu0 0
        %998 = vmatpush2.bf16.msra.mxu0 0
        %999 = vmatprep.subr.bf16.mxu0 0
        %1000 = vmatpush2.bf16.msra.mxu0 0
        %1001 = vmatprep.subr.bf16.mxu0 0
        %1002 = vmatpush2.bf16.msra.mxu0 0
        %1003 = vmatprep.subr.bf16.mxu0 0
        %1004 = vmatpush2.bf16.msra.mxu0 0
        %1005 = vmatprep.subr.bf16.mxu0 0
        %1006 = vmatpush2.bf16.msra.mxu0 0
        %1007 = vmatprep.subr.bf16.mxu0 0
        %1008 = vmatpush2.bf16.msra.mxu0 0
        %1009 = vmatprep.subr.bf16.mxu0 0
        %1010 = vmatpush2.bf16.msra.mxu0 0
        %1011 = vmatprep.mubr.bf16.mxu0 0
        %1012 = vmatmul.mubr.bf16.gmra.mxu0 %v968
        %v1013 = vpop.f32.mrf.mxu0
        %v1014 = vadd.f32 0.0, %v1013
        %v1015 = vpop.f32.mrf.mxu0
        %v1016 = vpop.f32.mrf.mxu0
        %v1017 = vadd.f32 0.0, %v1016
        %v1018 = vpop.f32.mrf.mxu0
        %1019 = vmatprep.mubr.bf16.mxu0 0
        %1020 = vmatmul.mubr.bf16.gmra.mxu0 %v971
        %v1021 = vpop.f32.mrf.mxu0
        %v1022 = vadd.f32 0.0, %v1021
        %v1023 = vpop.f32.mrf.mxu0
        %v1024 = vpop.f32.mrf.mxu0
        %v1025 = vadd.f32 0.0, %v1024
        %v1026 = vpop.f32.mrf.mxu0
        %1027 = vmatprep.mubr.bf16.mxu0 0
        %1028 = vmatmul.mubr.bf16.gmra.mxu0 %v974
        %v1029 = vpop.f32.mrf.mxu0
        %v1030 = vadd.f32 0.0, %v1029
        %v1031 = vpop.f32.mrf.mxu0
        %v1032 = vpop.f32.mrf.mxu0
        %v1033 = vadd.f32 0.0, %v1032
        %v1034 = vpop.f32.mrf.mxu0
        %1035 = vmatprep.mubr.bf16.mxu0 0
        %1036 = vmatmul.mubr.bf16.gmra.mxu0 %v977
        %v1037 = vpop.f32.mrf.mxu0
        %v1038 = vadd.f32 0.0, %v1037
        %v1039 = vpop.f32.mrf.mxu0
        %v1040 = vpop.f32.mrf.mxu0
        %v1041 = vadd.f32 0.0, %v1040
        %v1042 = vpop.f32.mrf.mxu0
        %1043 = vdwg.mxu0
        %v1044 = vadd.f32 %v918, %v1014
        %v1045 = vadd.f32 %v919, %v1017
        %v1046 = vadd.f32 %v920, %v1022
        %v1047 = vadd.f32 %v921, %v1025
        %v1048 = vadd.f32 %v922, %v1030
        %v1049 = vadd.f32 %v923, %v1033
        %v1050 = vadd.f32 %v924, %v1038
        %v1051 = vadd.f32 %v925, %v1041
        %s1052 = scalar_lea.vmem %s1, 224
        %v1053 = vld [vmem:[%s1052] sm:$0xf]
        %v1054 = vld [vmem:[%s1052 + $0x4] sm:$0xf]
        %v1055 = vld [vmem:[%s1052 + $0x8] sm:$0xf]
        %v1056 = vld [vmem:[%s1052 + $0xc] sm:$0xf]
        %v1057 = vld [vmem:[%s1052 + $0x10] sm:$0xf]
        %v1058 = vld [vmem:[%s1052 + $0x14] sm:$0xf]
        %v1059 = vld [vmem:[%s1052 + $0x18] sm:$0xf]
        %v1060 = vld [vmem:[%s1052 + $0x1c] sm:$0xf]
        %v1069 = vunpack.c.l.b16 %v1053
        %v1070 = vunpack.c.l.b16 %v1054
        %v1071 = vunpack.c.l.b16 %v1055
        %v1072 = vunpack.c.l.b16 %v1056
        %v1073 = vunpack.c.l.b16 %v1057
        %v1074 = vunpack.c.l.b16 %v1058
        %v1075 = vunpack.c.l.b16 %v1059
        %v1076 = vunpack.c.l.b16 %v1060
        %v1077 = vpack.c.b16 %v1070, %v1069
        %v1078 = vpack.c.b16 %v1072, %v1071
        %v1079 = vpack.c.b16 %v1074, %v1073
        %v1080 = vpack.c.b16 %v1076, %v1075
        %1081 = vrot.lane.b32.xlu0 %v963, 127
        %v1082 = vpop.permute.xlu0 %1081
        %1083 = vrot.lane.b32.xlu0 %v964, 127
        %v1084 = vpop.permute.xlu0 %1083
        %v1088 = vsel %vm263, %v1077, 0
        %v1091 = vsel %vm263, %v1078, 0
        %v1094 = vsel %vm263, %v1079, 0
        %v1097 = vsel %vm263, %v1080, 0
        %1099 = vmatprep.subr.bf16.mxu0 0
        %1100 = vmatpush1.bf16.msra.mxu0 0
        %1101 = vmatprep.subr.bf16.mxu0 0
        %1102 = vmatpush1.bf16.msra.mxu0 0
        %1103 = vmatprep.subr.bf16.mxu0 0
        %1104 = vmatpush1.bf16.msra.mxu0 0
        %1105 = vmatprep.subr.bf16.mxu0 0
        %1106 = vmatpush1.bf16.msra.mxu0 0
        %1107 = vmatprep.subr.bf16.mxu0 0
        %1108 = vmatpush1.bf16.msra.mxu0 0
        %1109 = vmatprep.subr.bf16.mxu0 0
        %1110 = vmatpush1.bf16.msra.mxu0 0
        %1111 = vmatprep.subr.bf16.mxu0 0
        %1112 = vmatpush1.bf16.msra.mxu0 %v1084
        %1113 = vmatprep.subr.bf16.mxu0 0
        %1114 = vmatpush1.bf16.msra.mxu0 %v1082
        %1115 = vmatprep.subr.bf16.mxu0 0
        %1116 = vmatpush2.bf16.msra.mxu0 0
        %1117 = vmatprep.subr.bf16.mxu0 0
        %1118 = vmatpush2.bf16.msra.mxu0 0
        %1119 = vmatprep.subr.bf16.mxu0 0
        %1120 = vmatpush2.bf16.msra.mxu0 0
        %1121 = vmatprep.subr.bf16.mxu0 0
        %1122 = vmatpush2.bf16.msra.mxu0 0
        %1123 = vmatprep.subr.bf16.mxu0 0
        %1124 = vmatpush2.bf16.msra.mxu0 0
        %1125 = vmatprep.subr.bf16.mxu0 0
        %1126 = vmatpush2.bf16.msra.mxu0 0
        %1127 = vmatprep.subr.bf16.mxu0 0
        %1128 = vmatpush2.bf16.msra.mxu0 0
        %1129 = vmatprep.subr.bf16.mxu0 0
        %1130 = vmatpush2.bf16.msra.mxu0 0
        %1131 = vmatprep.mubr.bf16.mxu0 0
        %1132 = vmatmul.mubr.bf16.gmra.mxu0 %v1088
        %v1133 = vpop.f32.mrf.mxu0
        %v1134 = vadd.f32 0.0, %v1133
        %v1135 = vpop.f32.mrf.mxu0
        %v1136 = vpop.f32.mrf.mxu0
        %v1137 = vadd.f32 0.0, %v1136
        %v1138 = vpop.f32.mrf.mxu0
        %1139 = vmatprep.mubr.bf16.mxu0 0
        %1140 = vmatmul.mubr.bf16.gmra.mxu0 %v1091
        %v1141 = vpop.f32.mrf.mxu0
        %v1142 = vadd.f32 0.0, %v1141
        %v1143 = vpop.f32.mrf.mxu0
        %v1144 = vpop.f32.mrf.mxu0
        %v1145 = vadd.f32 0.0, %v1144
        %v1146 = vpop.f32.mrf.mxu0
        %1147 = vmatprep.mubr.bf16.mxu0 0
        %1148 = vmatmul.mubr.bf16.gmra.mxu0 %v1094
        %v1149 = vpop.f32.mrf.mxu0
        %v1150 = vadd.f32 0.0, %v1149
        %v1151 = vpop.f32.mrf.mxu0
        %v1152 = vpop.f32.mrf.mxu0
        %v1153 = vadd.f32 0.0, %v1152
        %v1154 = vpop.f32.mrf.mxu0
        %1155 = vmatprep.mubr.bf16.mxu0 0
        %1156 = vmatmul.mubr.bf16.gmra.mxu0 %v1097
        %v1157 = vpop.f32.mrf.mxu0
        %v1158 = vadd.f32 0.0, %v1157
        %v1159 = vpop.f32.mrf.mxu0
        %v1160 = vpop.f32.mrf.mxu0
        %v1161 = vadd.f32 0.0, %v1160
        %v1162 = vpop.f32.mrf.mxu0
        %1163 = vdwg.mxu0
        %v1164 = vadd.f32 %v1044, %v1134
        %v1165 = vadd.f32 %v1045, %v1137
        %v1166 = vadd.f32 %v1046, %v1142
        %v1167 = vadd.f32 %v1047, %v1145
        %v1168 = vadd.f32 %v1048, %v1150
        %v1169 = vadd.f32 %v1049, %v1153
        %v1170 = vadd.f32 %v1050, %v1158
        %v1171 = vadd.f32 %v1051, %v1161
        %s1172 = scalar_lea.vmem %s1, 256
        %v1173 = vld [vmem:[%s1172] sm:$0xf]
        %v1174 = vld [vmem:[%s1172 + $0x4] sm:$0xf]
        %v1175 = vld [vmem:[%s1172 + $0x8] sm:$0xf]
        %v1176 = vld [vmem:[%s1172 + $0xc] sm:$0xf]
        %v1177 = vld [vmem:[%s1172 + $0x10] sm:$0xf]
        %v1178 = vld [vmem:[%s1172 + $0x14] sm:$0xf]
        %v1179 = vld [vmem:[%s1172 + $0x18] sm:$0xf]
        %v1180 = vld [vmem:[%s1172 + $0x1c] sm:$0xf]
        %v1189 = vunpack.c.l.b16 %v1173
        %v1190 = vunpack.c.l.b16 %v1174
        %v1191 = vunpack.c.l.b16 %v1175
        %v1192 = vunpack.c.l.b16 %v1176
        %v1193 = vunpack.c.l.b16 %v1177
        %v1194 = vunpack.c.l.b16 %v1178
        %v1195 = vunpack.c.l.b16 %v1179
        %v1196 = vunpack.c.l.b16 %v1180
        %v1197 = vpack.c.b16 %v1190, %v1189
        %v1198 = vpack.c.b16 %v1192, %v1191
        %v1199 = vpack.c.b16 %v1194, %v1193
        %v1200 = vpack.c.b16 %v1196, %v1195
        %1201 = vrot.lane.b32.xlu0 %v963, 126
        %v1202 = vpop.permute.xlu0 %1201
        %1203 = vrot.lane.b32.xlu0 %v964, 126
        %v1204 = vpop.permute.xlu0 %1203
        %v1208 = vsel %vm263, %v1197, 0
        %v1211 = vsel %vm263, %v1198, 0
        %v1214 = vsel %vm263, %v1199, 0
        %v1217 = vsel %vm263, %v1200, 0
        %1219 = vmatprep.subr.bf16.mxu0 0
        %1220 = vmatpush1.bf16.msra.mxu0 0
        %1221 = vmatprep.subr.bf16.mxu0 0
        %1222 = vmatpush1.bf16.msra.mxu0 0
        %1223 = vmatprep.subr.bf16.mxu0 0
        %1224 = vmatpush1.bf16.msra.mxu0 0
        %1225 = vmatprep.subr.bf16.mxu0 0
        %1226 = vmatpush1.bf16.msra.mxu0 0
        %1227 = vmatprep.subr.bf16.mxu0 0
        %1228 = vmatpush1.bf16.msra.mxu0 0
        %1229 = vmatprep.subr.bf16.mxu0 0
        %1230 = vmatpush1.bf16.msra.mxu0 0
        %1231 = vmatprep.subr.bf16.mxu0 0
        %1232 = vmatpush1.bf16.msra.mxu0 %v1204
        %1233 = vmatprep.subr.bf16.mxu0 0
        %1234 = vmatpush1.bf16.msra.mxu0 %v1202
        %1235 = vmatprep.subr.bf16.mxu0 0
        %1236 = vmatpush2.bf16.msra.mxu0 0
        %1237 = vmatprep.subr.bf16.mxu0 0
        %1238 = vmatpush2.bf16.msra.mxu0 0
        %1239 = vmatprep.subr.bf16.mxu0 0
        %1240 = vmatpush2.bf16.msra.mxu0 0
        %1241 = vmatprep.subr.bf16.mxu0 0
        %1242 = vmatpush2.bf16.msra.mxu0 0
        %1243 = vmatprep.subr.bf16.mxu0 0
        %1244 = vmatpush2.bf16.msra.mxu0 0
        %1245 = vmatprep.subr.bf16.mxu0 0
        %1246 = vmatpush2.bf16.msra.mxu0 0
        %1247 = vmatprep.subr.bf16.mxu0 0
        %1248 = vmatpush2.bf16.msra.mxu0 0
        %1249 = vmatprep.subr.bf16.mxu0 0
        %1250 = vmatpush2.bf16.msra.mxu0 0
        %1251 = vmatprep.mubr.bf16.mxu0 0
        %1252 = vmatmul.mubr.bf16.gmra.mxu0 %v1208
        %v1253 = vpop.f32.mrf.mxu0
        %v1254 = vadd.f32 0.0, %v1253
        %v1255 = vpop.f32.mrf.mxu0
        %v1256 = vpop.f32.mrf.mxu0
        %v1257 = vadd.f32 0.0, %v1256
        %v1258 = vpop.f32.mrf.mxu0
        %1259 = vmatprep.mubr.bf16.mxu0 0
        %1260 = vmatmul.mubr.bf16.gmra.mxu0 %v1211
        %v1261 = vpop.f32.mrf.mxu0
        %v1262 = vadd.f32 0.0, %v1261
        %v1263 = vpop.f32.mrf.mxu0
        %v1264 = vpop.f32.mrf.mxu0
        %v1265 = vadd.f32 0.0, %v1264
        %v1266 = vpop.f32.mrf.mxu0
        %1267 = vmatprep.mubr.bf16.mxu0 0
        %1268 = vmatmul.mubr.bf16.gmra.mxu0 %v1214
        %v1269 = vpop.f32.mrf.mxu0
        %v1270 = vadd.f32 0.0, %v1269
        %v1271 = vpop.f32.mrf.mxu0
        %v1272 = vpop.f32.mrf.mxu0
        %v1273 = vadd.f32 0.0, %v1272
        %v1274 = vpop.f32.mrf.mxu0
        %1275 = vmatprep.mubr.bf16.mxu0 0
        %1276 = vmatmul.mubr.bf16.gmra.mxu0 %v1217
        %v1277 = vpop.f32.mrf.mxu0
        %v1278 = vadd.f32 0.0, %v1277
        %v1279 = vpop.f32.mrf.mxu0
        %v1280 = vpop.f32.mrf.mxu0
        %v1281 = vadd.f32 0.0, %v1280
        %v1282 = vpop.f32.mrf.mxu0
        %1283 = vdwg.mxu0
        %v1284 = vadd.f32 %v1164, %v1254
        %v1285 = vadd.f32 %v1165, %v1257
        %v1286 = vadd.f32 %v1166, %v1262
        %v1287 = vadd.f32 %v1167, %v1265
        %v1288 = vadd.f32 %v1168, %v1270
        %v1289 = vadd.f32 %v1169, %v1273
        %v1290 = vadd.f32 %v1170, %v1278
        %v1291 = vadd.f32 %v1171, %v1281
        %1292 = vmatprep.subr.bf16.mxu0 0
        %1293 = vmatpush1.bf16.msra.mxu0 0
        %1294 = vmatprep.subr.bf16.mxu0 0
        %1295 = vmatpush1.bf16.msra.mxu0 0
        %1296 = vmatprep.subr.bf16.mxu0 0
        %1297 = vmatpush1.bf16.msra.mxu0 0
        %1298 = vmatprep.subr.bf16.mxu0 0
        %1299 = vmatpush1.bf16.msra.mxu0 0
        %1300 = vmatprep.subr.bf16.mxu0 0
        %1301 = vmatpush1.bf16.msra.mxu0 0
        %1302 = vmatprep.subr.bf16.mxu0 0
        %1303 = vmatpush1.bf16.msra.mxu0 0
        %1304 = vmatprep.subr.bf16.mxu0 0
        %1305 = vmatpush1.bf16.msra.mxu0 %v718
        %1306 = vmatprep.subr.bf16.mxu0 0
        %1307 = vmatpush1.bf16.msra.mxu0 %v716
        %1308 = vmatprep.subr.bf16.mxu0 0
        %1309 = vmatpush2.bf16.msra.mxu0 0
        %1310 = vmatprep.subr.bf16.mxu0 0
        %1311 = vmatpush2.bf16.msra.mxu0 0
        %1312 = vmatprep.subr.bf16.mxu0 0
        %1313 = vmatpush2.bf16.msra.mxu0 0
        %1314 = vmatprep.subr.bf16.mxu0 0
        %1315 = vmatpush2.bf16.msra.mxu0 0
        %1316 = vmatprep.subr.bf16.mxu0 0
        %1317 = vmatpush2.bf16.msra.mxu0 0
        %1318 = vmatprep.subr.bf16.mxu0 0
        %1319 = vmatpush2.bf16.msra.mxu0 0
        %1320 = vmatprep.subr.bf16.mxu0 0
        %1321 = vmatpush2.bf16.msra.mxu0 0
        %1322 = vmatprep.subr.bf16.mxu0 0
        %1323 = vmatpush2.bf16.msra.mxu0 0
        %1324 = vmatprep.mubr.bf16.mxu0 0
        %1325 = vmatmul.mubr.bf16.gmra.mxu0 %v265
        %v1326 = vpop.f32.mrf.mxu0
        %v1327 = vadd.f32 0.0, %v1326
        %v1328 = vpop.f32.mrf.mxu0
        %v1329 = vpop.f32.mrf.mxu0
        %v1330 = vadd.f32 0.0, %v1329
        %v1331 = vpop.f32.mrf.mxu0
        %1332 = vmatprep.mubr.bf16.mxu0 0
        %1333 = vmatmul.mubr.bf16.gmra.mxu0 %v268
        %v1334 = vpop.f32.mrf.mxu0
        %v1335 = vadd.f32 0.0, %v1334
        %v1336 = vpop.f32.mrf.mxu0
        %v1337 = vpop.f32.mrf.mxu0
        %v1338 = vadd.f32 0.0, %v1337
        %v1339 = vpop.f32.mrf.mxu0
        %1340 = vmatprep.mubr.bf16.mxu0 0
        %1341 = vmatmul.mubr.bf16.gmra.mxu0 %v271
        %v1342 = vpop.f32.mrf.mxu0
        %v1343 = vadd.f32 0.0, %v1342
        %v1344 = vpop.f32.mrf.mxu0
        %v1345 = vpop.f32.mrf.mxu0
        %v1346 = vadd.f32 0.0, %v1345
        %v1347 = vpop.f32.mrf.mxu0
        %1348 = vmatprep.mubr.bf16.mxu0 0
        %1349 = vmatmul.mubr.bf16.gmra.mxu0 %v274
        %v1350 = vpop.f32.mrf.mxu0
        %v1351 = vadd.f32 0.0, %v1350
        %v1352 = vpop.f32.mrf.mxu0
        %v1353 = vpop.f32.mrf.mxu0
        %v1354 = vadd.f32 0.0, %v1353
        %v1355 = vpop.f32.mrf.mxu0
        %1356 = vdwg.mxu0
        %1357 = vmatprep.subr.bf16.mxu0 0
        %1358 = vmatpush1.bf16.msra.mxu0 0
        %1359 = vmatprep.subr.bf16.mxu0 0
        %1360 = vmatpush1.bf16.msra.mxu0 0
        %1361 = vmatprep.subr.bf16.mxu0 0
        %1362 = vmatpush1.bf16.msra.mxu0 0
        %1363 = vmatprep.subr.bf16.mxu0 0
        %1364 = vmatpush1.bf16.msra.mxu0 0
        %1365 = vmatprep.subr.bf16.mxu0 0
        %1366 = vmatpush1.bf16.msra.mxu0 0
        %1367 = vmatprep.subr.bf16.mxu0 0
        %1368 = vmatpush1.bf16.msra.mxu0 0
        %1369 = vmatprep.subr.bf16.mxu0 0
        %1370 = vmatpush1.bf16.msra.mxu0 %v598
        %1371 = vmatprep.subr.bf16.mxu0 0
        %1372 = vmatpush1.bf16.msra.mxu0 %v597
        %1373 = vmatprep.subr.bf16.mxu0 0
        %1374 = vmatpush2.bf16.msra.mxu0 0
        %1375 = vmatprep.subr.bf16.mxu0 0
        %1376 = vmatpush2.bf16.msra.mxu0 0
        %1377 = vmatprep.subr.bf16.mxu0 0
        %1378 = vmatpush2.bf16.msra.mxu0 0
        %1379 = vmatprep.subr.bf16.mxu0 0
        %1380 = vmatpush2.bf16.msra.mxu0 0
        %1381 = vmatprep.subr.bf16.mxu0 0
        %1382 = vmatpush2.bf16.msra.mxu0 0
        %1383 = vmatprep.subr.bf16.mxu0 0
        %1384 = vmatpush2.bf16.msra.mxu0 0
        %1385 = vmatprep.subr.bf16.mxu0 0
        %1386 = vmatpush2.bf16.msra.mxu0 0
        %1387 = vmatprep.subr.bf16.mxu0 0
        %1388 = vmatpush2.bf16.msra.mxu0 0
        %1389 = vmatprep.mubr.bf16.mxu0 0
        %1390 = vmatmul.mubr.bf16.gmra.mxu0 %v364
        %v1391 = vpop.f32.mrf.mxu0
        %v1392 = vadd.f32 %v1327, %v1391
        %v1393 = vpop.f32.mrf.mxu0
        %v1394 = vpop.f32.mrf.mxu0
        %v1395 = vadd.f32 %v1330, %v1394
        %v1396 = vpop.f32.mrf.mxu0
        %1397 = vmatprep.mubr.bf16.mxu0 0
        %1398 = vmatmul.mubr.bf16.gmra.mxu0 %v367
        %v1399 = vpop.f32.mrf.mxu0
        %v1400 = vadd.f32 %v1335, %v1399
        %v1401 = vpop.f32.mrf.mxu0
        %v1402 = vpop.f32.mrf.mxu0
        %v1403 = vadd.f32 %v1338, %v1402
        %v1404 = vpop.f32.mrf.mxu0
        %1405 = vmatprep.mubr.bf16.mxu0 0
        %1406 = vmatmul.mubr.bf16.gmra.mxu0 %v370
        %v1407 = vpop.f32.mrf.mxu0
        %v1408 = vadd.f32 %v1343, %v1407
        %v1409 = vpop.f32.mrf.mxu0
        %v1410 = vpop.f32.mrf.mxu0
        %v1411 = vadd.f32 %v1346, %v1410
        %v1412 = vpop.f32.mrf.mxu0
        %1413 = vmatprep.mubr.bf16.mxu0 0
        %1414 = vmatmul.mubr.bf16.gmra.mxu0 %v373
        %v1415 = vpop.f32.mrf.mxu0
        %v1416 = vadd.f32 %v1351, %v1415
        %v1417 = vpop.f32.mrf.mxu0
        %v1418 = vpop.f32.mrf.mxu0
        %v1419 = vadd.f32 %v1354, %v1418
        %v1420 = vpop.f32.mrf.mxu0
        %1421 = vdwg.mxu0
        %1422 = vmatprep.subr.bf16.mxu0 0
        %1423 = vmatpush1.bf16.msra.mxu0 0
        %1424 = vmatprep.subr.bf16.mxu0 0
        %1425 = vmatpush1.bf16.msra.mxu0 0
        %1426 = vmatprep.subr.bf16.mxu0 0
        %1427 = vmatpush1.bf16.msra.mxu0 0
        %1428 = vmatprep.subr.bf16.mxu0 0
        %1429 = vmatpush1.bf16.msra.mxu0 0
        %1430 = vmatprep.subr.bf16.mxu0 0
        %1431 = vmatpush1.bf16.msra.mxu0 0
        %1432 = vmatprep.subr.bf16.mxu0 0
        %1433 = vmatpush1.bf16.msra.mxu0 0
        %1434 = vmatprep.subr.bf16.mxu0 0
        %1435 = vmatpush1.bf16.msra.mxu0 %v838
        %1436 = vmatprep.subr.bf16.mxu0 0
        %1437 = vmatpush1.bf16.msra.mxu0 %v836
        %1438 = vmatprep.subr.bf16.mxu0 0
        %1439 = vmatpush2.bf16.msra.mxu0 0
        %1440 = vmatprep.subr.bf16.mxu0 0
        %1441 = vmatpush2.bf16.msra.mxu0 0
        %1442 = vmatprep.subr.bf16.mxu0 0
        %1443 = vmatpush2.bf16.msra.mxu0 0
        %1444 = vmatprep.subr.bf16.mxu0 0
        %1445 = vmatpush2.bf16.msra.mxu0 0
        %1446 = vmatprep.subr.bf16.mxu0 0
        %1447 = vmatpush2.bf16.msra.mxu0 0
        %1448 = vmatprep.subr.bf16.mxu0 0
        %1449 = vmatpush2.bf16.msra.mxu0 0
        %1450 = vmatprep.subr.bf16.mxu0 0
        %1451 = vmatpush2.bf16.msra.mxu0 0
        %1452 = vmatprep.subr.bf16.mxu0 0
        %1453 = vmatpush2.bf16.msra.mxu0 0
        %1454 = vmatprep.mubr.bf16.mxu0 0
        %1455 = vmatmul.mubr.bf16.gmra.mxu0 %v476
        %v1456 = vpop.f32.mrf.mxu0
        %v1457 = vadd.f32 0.0, %v1456
        %v1458 = vpop.f32.mrf.mxu0
        %v1459 = vpop.f32.mrf.mxu0
        %v1460 = vadd.f32 0.0, %v1459
        %v1461 = vpop.f32.mrf.mxu0
        %1462 = vmatprep.mubr.bf16.mxu0 0
        %1463 = vmatmul.mubr.bf16.gmra.mxu0 %v479
        %v1464 = vpop.f32.mrf.mxu0
        %v1465 = vadd.f32 0.0, %v1464
        %v1466 = vpop.f32.mrf.mxu0
        %v1467 = vpop.f32.mrf.mxu0
        %v1468 = vadd.f32 0.0, %v1467
        %v1469 = vpop.f32.mrf.mxu0
        %1470 = vmatprep.mubr.bf16.mxu0 0
        %1471 = vmatmul.mubr.bf16.gmra.mxu0 %v482
        %v1472 = vpop.f32.mrf.mxu0
        %v1473 = vadd.f32 0.0, %v1472
        %v1474 = vpop.f32.mrf.mxu0
        %v1475 = vpop.f32.mrf.mxu0
        %v1476 = vadd.f32 0.0, %v1475
        %v1477 = vpop.f32.mrf.mxu0
        %1478 = vmatprep.mubr.bf16.mxu0 0
        %1479 = vmatmul.mubr.bf16.gmra.mxu0 %v485
        %v1480 = vpop.f32.mrf.mxu0
        %v1481 = vadd.f32 0.0, %v1480
        %v1482 = vpop.f32.mrf.mxu0
        %v1483 = vpop.f32.mrf.mxu0
        %v1484 = vadd.f32 0.0, %v1483
        %v1485 = vpop.f32.mrf.mxu0
        %1486 = vdwg.mxu0
        %v1487 = vadd.f32 %v1392, %v1457
        %v1488 = vadd.f32 %v1395, %v1460
        %v1489 = vadd.f32 %v1400, %v1465
        %v1490 = vadd.f32 %v1403, %v1468
        %v1491 = vadd.f32 %v1408, %v1473
        %v1492 = vadd.f32 %v1411, %v1476
        %v1493 = vadd.f32 %v1416, %v1481
        %v1494 = vadd.f32 %v1419, %v1484
        %1495 = vmatprep.subr.bf16.mxu0 0
        %1496 = vmatpush1.bf16.msra.mxu0 0
        %1497 = vmatprep.subr.bf16.mxu0 0
        %1498 = vmatpush1.bf16.msra.mxu0 0
        %1499 = vmatprep.subr.bf16.mxu0 0
        %1500 = vmatpush1.bf16.msra.mxu0 0
        %1501 = vmatprep.subr.bf16.mxu0 0
        %1502 = vmatpush1.bf16.msra.mxu0 0
        %1503 = vmatprep.subr.bf16.mxu0 0
        %1504 = vmatpush1.bf16.msra.mxu0 0
        %1505 = vmatprep.subr.bf16.mxu0 0
        %1506 = vmatpush1.bf16.msra.mxu0 0
        %1507 = vmatprep.subr.bf16.mxu0 0
        %1508 = vmatpush1.bf16.msra.mxu0 %v964
        %1509 = vmatprep.subr.bf16.mxu0 0
        %1510 = vmatpush1.bf16.msra.mxu0 %v963
        %1511 = vmatprep.subr.bf16.mxu0 0
        %1512 = vmatpush2.bf16.msra.mxu0 0
        %1513 = vmatprep.subr.bf16.mxu0 0
        %1514 = vmatpush2.bf16.msra.mxu0 0
        %1515 = vmatprep.subr.bf16.mxu0 0
        %1516 = vmatpush2.bf16.msra.mxu0 0
        %1517 = vmatprep.subr.bf16.mxu0 0
        %1518 = vmatpush2.bf16.msra.mxu0 0
        %1519 = vmatprep.subr.bf16.mxu0 0
        %1520 = vmatpush2.bf16.msra.mxu0 0
        %1521 = vmatprep.subr.bf16.mxu0 0
        %1522 = vmatpush2.bf16.msra.mxu0 0
        %1523 = vmatprep.subr.bf16.mxu0 0
        %1524 = vmatpush2.bf16.msra.mxu0 0
        %1525 = vmatprep.subr.bf16.mxu0 0
        %1526 = vmatpush2.bf16.msra.mxu0 0
        %1527 = vmatprep.mubr.bf16.mxu0 0
        %1528 = vmatmul.mubr.bf16.gmra.mxu0 %v602
        %v1529 = vpop.f32.mrf.mxu0
        %v1530 = vadd.f32 0.0, %v1529
        %v1531 = vpop.f32.mrf.mxu0
        %v1532 = vpop.f32.mrf.mxu0
        %v1533 = vadd.f32 0.0, %v1532
        %v1534 = vpop.f32.mrf.mxu0
        %1535 = vmatprep.mubr.bf16.mxu0 0
        %1536 = vmatmul.mubr.bf16.gmra.mxu0 %v605
        %v1537 = vpop.f32.mrf.mxu0
        %v1538 = vadd.f32 0.0, %v1537
        %v1539 = vpop.f32.mrf.mxu0
        %v1540 = vpop.f32.mrf.mxu0
        %v1541 = vadd.f32 0.0, %v1540
        %v1542 = vpop.f32.mrf.mxu0
        %1543 = vmatprep.mubr.bf16.mxu0 0
        %1544 = vmatmul.mubr.bf16.gmra.mxu0 %v608
        %v1545 = vpop.f32.mrf.mxu0
        %v1546 = vadd.f32 0.0, %v1545
        %v1547 = vpop.f32.mrf.mxu0
        %v1548 = vpop.f32.mrf.mxu0
        %v1549 = vadd.f32 0.0, %v1548
        %v1550 = vpop.f32.mrf.mxu0
        %1551 = vmatprep.mubr.bf16.mxu0 0
        %1552 = vmatmul.mubr.bf16.gmra.mxu0 %v611
        %v1553 = vpop.f32.mrf.mxu0
        %v1554 = vadd.f32 0.0, %v1553
        %v1555 = vpop.f32.mrf.mxu0
        %v1556 = vpop.f32.mrf.mxu0
        %v1557 = vadd.f32 0.0, %v1556
        %v1558 = vpop.f32.mrf.mxu0
        %1559 = vdwg.mxu0
        %v1560 = vadd.f32 %v1487, %v1530
        %v1561 = vadd.f32 %v1488, %v1533
        %v1562 = vadd.f32 %v1489, %v1538
        %v1563 = vadd.f32 %v1490, %v1541
        %v1564 = vadd.f32 %v1491, %v1546
        %v1565 = vadd.f32 %v1492, %v1549
        %v1566 = vadd.f32 %v1493, %v1554
        %v1567 = vadd.f32 %v1494, %v1557
        %1568 = vmatprep.subr.bf16.mxu0 0
        %1569 = vmatpush1.bf16.msra.mxu0 0
        %1570 = vmatprep.subr.bf16.mxu0 0
        %1571 = vmatpush1.bf16.msra.mxu0 0
        %1572 = vmatprep.subr.bf16.mxu0 0
        %1573 = vmatpush1.bf16.msra.mxu0 0
        %1574 = vmatprep.subr.bf16.mxu0 0
        %1575 = vmatpush1.bf16.msra.mxu0 0
        %1576 = vmatprep.subr.bf16.mxu0 0
        %1577 = vmatpush1.bf16.msra.mxu0 0
        %1578 = vmatprep.subr.bf16.mxu0 0
        %1579 = vmatpush1.bf16.msra.mxu0 0
        %1580 = vmatprep.subr.bf16.mxu0 0
        %1581 = vmatpush1.bf16.msra.mxu0 %v1084
        %1582 = vmatprep.subr.bf16.mxu0 0
        %1583 = vmatpush1.bf16.msra.mxu0 %v1082
        %1584 = vmatprep.subr.bf16.mxu0 0
        %1585 = vmatpush2.bf16.msra.mxu0 0
        %1586 = vmatprep.subr.bf16.mxu0 0
        %1587 = vmatpush2.bf16.msra.mxu0 0
        %1588 = vmatprep.subr.bf16.mxu0 0
        %1589 = vmatpush2.bf16.msra.mxu0 0
        %1590 = vmatprep.subr.bf16.mxu0 0
        %1591 = vmatpush2.bf16.msra.mxu0 0
        %1592 = vmatprep.subr.bf16.mxu0 0
        %1593 = vmatpush2.bf16.msra.mxu0 0
        %1594 = vmatprep.subr.bf16.mxu0 0
        %1595 = vmatpush2.bf16.msra.mxu0 0
        %1596 = vmatprep.subr.bf16.mxu0 0
        %1597 = vmatpush2.bf16.msra.mxu0 0
        %1598 = vmatprep.subr.bf16.mxu0 0
        %1599 = vmatpush2.bf16.msra.mxu0 0
        %1600 = vmatprep.mubr.bf16.mxu0 0
        %1601 = vmatmul.mubr.bf16.gmra.mxu0 %v722
        %v1602 = vpop.f32.mrf.mxu0
        %v1603 = vadd.f32 0.0, %v1602
        %v1604 = vpop.f32.mrf.mxu0
        %v1605 = vpop.f32.mrf.mxu0
        %v1606 = vadd.f32 0.0, %v1605
        %v1607 = vpop.f32.mrf.mxu0
        %1608 = vmatprep.mubr.bf16.mxu0 0
        %1609 = vmatmul.mubr.bf16.gmra.mxu0 %v725
        %v1610 = vpop.f32.mrf.mxu0
        %v1611 = vadd.f32 0.0, %v1610
        %v1612 = vpop.f32.mrf.mxu0
        %v1613 = vpop.f32.mrf.mxu0
        %v1614 = vadd.f32 0.0, %v1613
        %v1615 = vpop.f32.mrf.mxu0
        %1616 = vmatprep.mubr.bf16.mxu0 0
        %1617 = vmatmul.mubr.bf16.gmra.mxu0 %v728
        %v1618 = vpop.f32.mrf.mxu0
        %v1619 = vadd.f32 0.0, %v1618
        %v1620 = vpop.f32.mrf.mxu0
        %v1621 = vpop.f32.mrf.mxu0
        %v1622 = vadd.f32 0.0, %v1621
        %v1623 = vpop.f32.mrf.mxu0
        %1624 = vmatprep.mubr.bf16.mxu0 0
        %1625 = vmatmul.mubr.bf16.gmra.mxu0 %v731
        %v1626 = vpop.f32.mrf.mxu0
        %v1627 = vadd.f32 0.0, %v1626
        %v1628 = vpop.f32.mrf.mxu0
        %v1629 = vpop.f32.mrf.mxu0
        %v1630 = vadd.f32 0.0, %v1629
        %v1631 = vpop.f32.mrf.mxu0
        %1632 = vdwg.mxu0
        %v1633 = vadd.f32 %v1560, %v1603
        %v1634 = vadd.f32 %v1561, %v1606
        %v1635 = vadd.f32 %v1562, %v1611
        %v1636 = vadd.f32 %v1563, %v1614
        %v1637 = vadd.f32 %v1564, %v1619
        %v1638 = vadd.f32 %v1565, %v1622
        %v1639 = vadd.f32 %v1566, %v1627
        %v1640 = vadd.f32 %v1567, %v1630
        %1641 = vmatprep.subr.bf16.mxu0 0
        %1642 = vmatpush1.bf16.msra.mxu0 0
        %1643 = vmatprep.subr.bf16.mxu0 0
        %1644 = vmatpush1.bf16.msra.mxu0 0
        %1645 = vmatprep.subr.bf16.mxu0 0
        %1646 = vmatpush1.bf16.msra.mxu0 0
        %1647 = vmatprep.subr.bf16.mxu0 0
        %1648 = vmatpush1.bf16.msra.mxu0 0
        %1649 = vmatprep.subr.bf16.mxu0 0
        %1650 = vmatpush1.bf16.msra.mxu0 0
        %1651 = vmatprep.subr.bf16.mxu0 0
        %1652 = vmatpush1.bf16.msra.mxu0 0
        %1653 = vmatprep.subr.bf16.mxu0 0
        %1654 = vmatpush1.bf16.msra.mxu0 %v1204
        %1655 = vmatprep.subr.bf16.mxu0 0
        %1656 = vmatpush1.bf16.msra.mxu0 %v1202
        %1657 = vmatprep.subr.bf16.mxu0 0
        %1658 = vmatpush2.bf16.msra.mxu0 0
        %1659 = vmatprep.subr.bf16.mxu0 0
        %1660 = vmatpush2.bf16.msra.mxu0 0
        %1661 = vmatprep.subr.bf16.mxu0 0
        %1662 = vmatpush2.bf16.msra.mxu0 0
        %1663 = vmatprep.subr.bf16.mxu0 0
        %1664 = vmatpush2.bf16.msra.mxu0 0
        %1665 = vmatprep.subr.bf16.mxu0 0
        %1666 = vmatpush2.bf16.msra.mxu0 0
        %1667 = vmatprep.subr.bf16.mxu0 0
        %1668 = vmatpush2.bf16.msra.mxu0 0
        %1669 = vmatprep.subr.bf16.mxu0 0
        %1670 = vmatpush2.bf16.msra.mxu0 0
        %1671 = vmatprep.subr.bf16.mxu0 0
        %1672 = vmatpush2.bf16.msra.mxu0 0
        %1673 = vmatprep.mubr.bf16.mxu0 0
        %1674 = vmatmul.mubr.bf16.gmra.mxu0 %v842
        %v1675 = vpop.f32.mrf.mxu0
        %v1676 = vadd.f32 0.0, %v1675
        %v1677 = vpop.f32.mrf.mxu0
        %v1678 = vpop.f32.mrf.mxu0
        %v1679 = vadd.f32 0.0, %v1678
        %v1680 = vpop.f32.mrf.mxu0
        %1681 = vmatprep.mubr.bf16.mxu0 0
        %1682 = vmatmul.mubr.bf16.gmra.mxu0 %v845
        %v1683 = vpop.f32.mrf.mxu0
        %v1684 = vadd.f32 0.0, %v1683
        %v1685 = vpop.f32.mrf.mxu0
        %v1686 = vpop.f32.mrf.mxu0
        %v1687 = vadd.f32 0.0, %v1686
        %v1688 = vpop.f32.mrf.mxu0
        %1689 = vmatprep.mubr.bf16.mxu0 0
        %1690 = vmatmul.mubr.bf16.gmra.mxu0 %v848
        %v1691 = vpop.f32.mrf.mxu0
        %v1692 = vadd.f32 0.0, %v1691
        %v1693 = vpop.f32.mrf.mxu0
        %v1694 = vpop.f32.mrf.mxu0
        %v1695 = vadd.f32 0.0, %v1694
        %v1696 = vpop.f32.mrf.mxu0
        %1697 = vmatprep.mubr.bf16.mxu0 0
        %1698 = vmatmul.mubr.bf16.gmra.mxu0 %v851
        %v1699 = vpop.f32.mrf.mxu0
        %v1700 = vadd.f32 0.0, %v1699
        %v1701 = vpop.f32.mrf.mxu0
        %v1702 = vpop.f32.mrf.mxu0
        %v1703 = vadd.f32 0.0, %v1702
        %v1704 = vpop.f32.mrf.mxu0
        %1705 = vdwg.mxu0
        %v1706 = vadd.f32 %v1633, %v1676
        %v1707 = vadd.f32 %v1634, %v1679
        %v1708 = vadd.f32 %v1635, %v1684
        %v1709 = vadd.f32 %v1636, %v1687
        %v1710 = vadd.f32 %v1637, %v1692
        %v1711 = vadd.f32 %v1638, %v1695
        %v1712 = vadd.f32 %v1639, %v1700
        %v1713 = vadd.f32 %v1640, %v1703
        %v1718 = vunpack.c.l.b16 %v206
        %v1719 = vunpack.c.l.b16 %v207
        %v1720 = vunpack.c.l.b16 %v208
        %v1721 = vunpack.c.l.b16 %v209
        %v1722 = vpack.c.b16 %v1719, %v1718
        %v1723 = vpack.c.b16 %v1721, %v1720
        %1726 = vmatprep.subr.bf16.mxu0 0
        %1727 = vmatpush1.bf16.msra.mxu0 0
        %1728 = vmatprep.subr.bf16.mxu0 0
        %1729 = vmatpush1.bf16.msra.mxu0 0
        %1730 = vmatprep.subr.bf16.mxu0 0
        %1731 = vmatpush1.bf16.msra.mxu0 0
        %1732 = vmatprep.subr.bf16.mxu0 0
        %1733 = vmatpush1.bf16.msra.mxu0 0
        %1734 = vmatprep.subr.bf16.mxu0 0
        %1735 = vmatpush1.bf16.msra.mxu0 0
        %1736 = vmatprep.subr.bf16.mxu0 0
        %1737 = vmatpush1.bf16.msra.mxu0 0
        %1738 = vmatprep.subr.bf16.mxu0 0
        %1739 = vmatpush1.bf16.msra.mxu0 %v1723
        %1740 = vmatprep.subr.bf16.mxu0 0
        %1741 = vmatpush1.bf16.msra.mxu0 %v1722
        %1742 = vmatprep.subr.bf16.mxu0 0
        %1743 = vmatpush2.bf16.msra.mxu0 0
        %1744 = vmatprep.subr.bf16.mxu0 0
        %1745 = vmatpush2.bf16.msra.mxu0 0
        %1746 = vmatprep.subr.bf16.mxu0 0
        %1747 = vmatpush2.bf16.msra.mxu0 0
        %1748 = vmatprep.subr.bf16.mxu0 0
        %1749 = vmatpush2.bf16.msra.mxu0 0
        %1750 = vmatprep.subr.bf16.mxu0 0
        %1751 = vmatpush2.bf16.msra.mxu0 0
        %1752 = vmatprep.subr.bf16.mxu0 0
        %1753 = vmatpush2.bf16.msra.mxu0 0
        %1754 = vmatprep.subr.bf16.mxu0 0
        %1755 = vmatpush2.bf16.msra.mxu0 0
        %1756 = vmatprep.subr.bf16.mxu0 0
        %1757 = vmatpush2.bf16.msra.mxu0 0
        %1758 = vmatprep.mubr.bf16.mxu0 0
        %1759 = vmatmul.mubr.bf16.gmra.mxu0 %v968
        %v1760 = vpop.f32.mrf.mxu0
        %v1761 = vadd.f32 0.0, %v1760
        %v1762 = vpop.f32.mrf.mxu0
        %v1763 = vpop.f32.mrf.mxu0
        %v1764 = vadd.f32 0.0, %v1763
        %v1765 = vpop.f32.mrf.mxu0
        %1766 = vmatprep.mubr.bf16.mxu0 0
        %1767 = vmatmul.mubr.bf16.gmra.mxu0 %v971
        %v1768 = vpop.f32.mrf.mxu0
        %v1769 = vadd.f32 0.0, %v1768
        %v1770 = vpop.f32.mrf.mxu0
        %v1771 = vpop.f32.mrf.mxu0
        %v1772 = vadd.f32 0.0, %v1771
        %v1773 = vpop.f32.mrf.mxu0
        %1774 = vmatprep.mubr.bf16.mxu0 0
        %1775 = vmatmul.mubr.bf16.gmra.mxu0 %v974
        %v1776 = vpop.f32.mrf.mxu0
        %v1777 = vadd.f32 0.0, %v1776
        %v1778 = vpop.f32.mrf.mxu0
        %v1779 = vpop.f32.mrf.mxu0
        %v1780 = vadd.f32 0.0, %v1779
        %v1781 = vpop.f32.mrf.mxu0
        %1782 = vmatprep.mubr.bf16.mxu0 0
        %1783 = vmatmul.mubr.bf16.gmra.mxu0 %v977
        %v1784 = vpop.f32.mrf.mxu0
        %v1785 = vadd.f32 0.0, %v1784
        %v1786 = vpop.f32.mrf.mxu0
        %v1787 = vpop.f32.mrf.mxu0
        %v1788 = vadd.f32 0.0, %v1787
        %v1789 = vpop.f32.mrf.mxu0
        %1790 = vdwg.mxu0
        %v1791 = vadd.f32 %v1706, %v1761
        %v1792 = vadd.f32 %v1707, %v1764
        %v1793 = vadd.f32 %v1708, %v1769
        %v1794 = vadd.f32 %v1709, %v1772
        %v1795 = vadd.f32 %v1710, %v1777
        %v1796 = vadd.f32 %v1711, %v1780
        %v1797 = vadd.f32 %v1712, %v1785
        %v1798 = vadd.f32 %v1713, %v1788
        %1799 = vrot.lane.b32.xlu0 %v1722, 127
        %v1800 = vpop.permute.xlu0 %1799
        %1801 = vrot.lane.b32.xlu0 %v1723, 127
        %v1802 = vpop.permute.xlu0 %1801
        %1805 = vmatprep.subr.bf16.mxu0 0
        %1806 = vmatpush1.bf16.msra.mxu0 0
        %1807 = vmatprep.subr.bf16.mxu0 0
        %1808 = vmatpush1.bf16.msra.mxu0 0
        %1809 = vmatprep.subr.bf16.mxu0 0
        %1810 = vmatpush1.bf16.msra.mxu0 0
        %1811 = vmatprep.subr.bf16.mxu0 0
        %1812 = vmatpush1.bf16.msra.mxu0 0
        %1813 = vmatprep.subr.bf16.mxu0 0
        %1814 = vmatpush1.bf16.msra.mxu0 0
        %1815 = vmatprep.subr.bf16.mxu0 0
        %1816 = vmatpush1.bf16.msra.mxu0 0
        %1817 = vmatprep.subr.bf16.mxu0 0
        %1818 = vmatpush1.bf16.msra.mxu0 %v1802
        %1819 = vmatprep.subr.bf16.mxu0 0
        %1820 = vmatpush1.bf16.msra.mxu0 %v1800
        %1821 = vmatprep.subr.bf16.mxu0 0
        %1822 = vmatpush2.bf16.msra.mxu0 0
        %1823 = vmatprep.subr.bf16.mxu0 0
        %1824 = vmatpush2.bf16.msra.mxu0 0
        %1825 = vmatprep.subr.bf16.mxu0 0
        %1826 = vmatpush2.bf16.msra.mxu0 0
        %1827 = vmatprep.subr.bf16.mxu0 0
        %1828 = vmatpush2.bf16.msra.mxu0 0
        %1829 = vmatprep.subr.bf16.mxu0 0
        %1830 = vmatpush2.bf16.msra.mxu0 0
        %1831 = vmatprep.subr.bf16.mxu0 0
        %1832 = vmatpush2.bf16.msra.mxu0 0
        %1833 = vmatprep.subr.bf16.mxu0 0
        %1834 = vmatpush2.bf16.msra.mxu0 0
        %1835 = vmatprep.subr.bf16.mxu0 0
        %1836 = vmatpush2.bf16.msra.mxu0 0
        %1837 = vmatprep.mubr.bf16.mxu0 0
        %1838 = vmatmul.mubr.bf16.gmra.mxu0 %v1088
        %v1839 = vpop.f32.mrf.mxu0
        %v1840 = vadd.f32 0.0, %v1839
        %v1841 = vpop.f32.mrf.mxu0
        %v1842 = vpop.f32.mrf.mxu0
        %v1843 = vadd.f32 0.0, %v1842
        %v1844 = vpop.f32.mrf.mxu0
        %1845 = vmatprep.mubr.bf16.mxu0 0
        %1846 = vmatmul.mubr.bf16.gmra.mxu0 %v1091
        %v1847 = vpop.f32.mrf.mxu0
        %v1848 = vadd.f32 0.0, %v1847
        %v1849 = vpop.f32.mrf.mxu0
        %v1850 = vpop.f32.mrf.mxu0
        %v1851 = vadd.f32 0.0, %v1850
        %v1852 = vpop.f32.mrf.mxu0
        %1853 = vmatprep.mubr.bf16.mxu0 0
        %1854 = vmatmul.mubr.bf16.gmra.mxu0 %v1094
        %v1855 = vpop.f32.mrf.mxu0
        %v1856 = vadd.f32 0.0, %v1855
        %v1857 = vpop.f32.mrf.mxu0
        %v1858 = vpop.f32.mrf.mxu0
        %v1859 = vadd.f32 0.0, %v1858
        %v1860 = vpop.f32.mrf.mxu0
        %1861 = vmatprep.mubr.bf16.mxu0 0
        %1862 = vmatmul.mubr.bf16.gmra.mxu0 %v1097
        %v1863 = vpop.f32.mrf.mxu0
        %v1864 = vadd.f32 0.0, %v1863
        %v1865 = vpop.f32.mrf.mxu0
        %v1866 = vpop.f32.mrf.mxu0
        %v1867 = vadd.f32 0.0, %v1866
        %v1868 = vpop.f32.mrf.mxu0
        %1869 = vdwg.mxu0
        %v1870 = vadd.f32 %v1791, %v1840
        %v1871 = vadd.f32 %v1792, %v1843
        %v1872 = vadd.f32 %v1793, %v1848
        %v1873 = vadd.f32 %v1794, %v1851
        %v1874 = vadd.f32 %v1795, %v1856
        %v1875 = vadd.f32 %v1796, %v1859
        %v1876 = vadd.f32 %v1797, %v1864
        %v1877 = vadd.f32 %v1798, %v1867
        %1878 = vrot.lane.b32.xlu0 %v1722, 126
        %v1879 = vpop.permute.xlu0 %1878
        %1880 = vrot.lane.b32.xlu0 %v1723, 126
        %v1881 = vpop.permute.xlu0 %1880
        %1884 = vmatprep.subr.bf16.mxu0 0
        %1885 = vmatpush1.bf16.msra.mxu0 0
        %1886 = vmatprep.subr.bf16.mxu0 0
        %1887 = vmatpush1.bf16.msra.mxu0 0
        %1888 = vmatprep.subr.bf16.mxu0 0
        %1889 = vmatpush1.bf16.msra.mxu0 0
        %1890 = vmatprep.subr.bf16.mxu0 0
        %1891 = vmatpush1.bf16.msra.mxu0 0
        %1892 = vmatprep.subr.bf16.mxu0 0
        %1893 = vmatpush1.bf16.msra.mxu0 0
        %1894 = vmatprep.subr.bf16.mxu0 0
        %1895 = vmatpush1.bf16.msra.mxu0 0
        %1896 = vmatprep.subr.bf16.mxu0 0
        %1897 = vmatpush1.bf16.msra.mxu0 %v1881
        %1898 = vmatprep.subr.bf16.mxu0 0
        %1899 = vmatpush1.bf16.msra.mxu0 %v1879
        %1900 = vmatprep.subr.bf16.mxu0 0
        %1901 = vmatpush2.bf16.msra.mxu0 0
        %1902 = vmatprep.subr.bf16.mxu0 0
        %1903 = vmatpush2.bf16.msra.mxu0 0
        %1904 = vmatprep.subr.bf16.mxu0 0
        %1905 = vmatpush2.bf16.msra.mxu0 0
        %1906 = vmatprep.subr.bf16.mxu0 0
        %1907 = vmatpush2.bf16.msra.mxu0 0
        %1908 = vmatprep.subr.bf16.mxu0 0
        %1909 = vmatpush2.bf16.msra.mxu0 0
        %1910 = vmatprep.subr.bf16.mxu0 0
        %1911 = vmatpush2.bf16.msra.mxu0 0
        %1912 = vmatprep.subr.bf16.mxu0 0
        %1913 = vmatpush2.bf16.msra.mxu0 0
        %1914 = vmatprep.subr.bf16.mxu0 0
        %1915 = vmatpush2.bf16.msra.mxu0 0
        %1916 = vmatprep.mubr.bf16.mxu0 0
        %1917 = vmatmul.mubr.bf16.gmra.mxu0 %v1208
        %v1918 = vpop.f32.mrf.mxu0
        %v1919 = vadd.f32 0.0, %v1918
        %v1920 = vpop.f32.mrf.mxu0
        %v1921 = vpop.f32.mrf.mxu0
        %v1922 = vadd.f32 0.0, %v1921
        %v1923 = vpop.f32.mrf.mxu0
        %1924 = vmatprep.mubr.bf16.mxu0 0
        %1925 = vmatmul.mubr.bf16.gmra.mxu0 %v1211
        %v1926 = vpop.f32.mrf.mxu0
        %v1927 = vadd.f32 0.0, %v1926
        %v1928 = vpop.f32.mrf.mxu0
        %v1929 = vpop.f32.mrf.mxu0
        %v1930 = vadd.f32 0.0, %v1929
        %v1931 = vpop.f32.mrf.mxu0
        %1932 = vmatprep.mubr.bf16.mxu0 0
        %1933 = vmatmul.mubr.bf16.gmra.mxu0 %v1214
        %v1934 = vpop.f32.mrf.mxu0
        %v1935 = vadd.f32 0.0, %v1934
        %v1936 = vpop.f32.mrf.mxu0
        %v1937 = vpop.f32.mrf.mxu0
        %v1938 = vadd.f32 0.0, %v1937
        %v1939 = vpop.f32.mrf.mxu0
        %1940 = vmatprep.mubr.bf16.mxu0 0
        %1941 = vmatmul.mubr.bf16.gmra.mxu0 %v1217
        %v1942 = vpop.f32.mrf.mxu0
        %v1943 = vadd.f32 0.0, %v1942
        %v1944 = vpop.f32.mrf.mxu0
        %v1945 = vpop.f32.mrf.mxu0
        %v1946 = vadd.f32 0.0, %v1945
        %v1947 = vpop.f32.mrf.mxu0
        %1948 = vdwg.mxu0
        %v1949 = vadd.f32 %v1870, %v1919
        %v1950 = vadd.f32 %v1871, %v1922
        %v1951 = vadd.f32 %v1872, %v1927
        %v1952 = vadd.f32 %v1873, %v1930
        %v1953 = vadd.f32 %v1874, %v1935
        %v1954 = vadd.f32 %v1875, %v1938
        %v1955 = vadd.f32 %v1876, %v1943
        %v1956 = vadd.f32 %v1877, %v1946
        %v1957 = vmax.f32 %v1284, %v1949
        %v1958 = vmax.f32 %v1285, %v1950
        %v1959 = vmax.f32 %v1286, %v1951
        %v1960 = vmax.f32 %v1287, %v1952
        %v1961 = vmax.f32 %v1288, %v1953
        %v1962 = vmax.f32 %v1289, %v1954
        %v1963 = vmax.f32 %v1290, %v1955
        %v1964 = vmax.f32 %v1291, %v1956
        %v1965 = vld [vmem:[%s2] sm:$0xff]
        %v1966 = vld [vmem:[%s2 + $0x8] sm:$0xff]
        %v1967 = vld [vmem:[%s2 + $0x10] sm:$0xff]
        %v1968 = vld [vmem:[%s2 + $0x18] sm:$0xff]
        %v1969 = vld [vmem:[%s2 + $0x20] sm:$0xff]
        %v1970 = vld [vmem:[%s2 + $0x28] sm:$0xff]
        %v1971 = vld [vmem:[%s2 + $0x30] sm:$0xff]
        %v1972 = vld [vmem:[%s2 + $0x38] sm:$0xff]
        %1974 = vset.pattern.permute.xlu0 0
        %1975 = vperm.xlu0 %1974, %v1965
        %v1976 = vpop.permute.xlu0 %1975
        %1979 = vset.pattern.permute.xlu0 0
        %1980 = vperm.xlu0 %1979, %v1966
        %v1981 = vpop.permute.xlu0 %1980
        %1984 = vset.pattern.permute.xlu0 0
        %1985 = vperm.xlu0 %1984, %v1967
        %v1986 = vpop.permute.xlu0 %1985
        %1989 = vset.pattern.permute.xlu0 0
        %1990 = vperm.xlu0 %1989, %v1968
        %v1991 = vpop.permute.xlu0 %1990
        %1994 = vset.pattern.permute.xlu0 0
        %1995 = vperm.xlu0 %1994, %v1969
        %v1996 = vpop.permute.xlu0 %1995
        %1999 = vset.pattern.permute.xlu0 0
        %2000 = vperm.xlu0 %1999, %v1970
        %v2001 = vpop.permute.xlu0 %2000
        %2004 = vset.pattern.permute.xlu0 0
        %2005 = vperm.xlu0 %2004, %v1971
        %v2006 = vpop.permute.xlu0 %2005
        %2009 = vset.pattern.permute.xlu0 0
        %2010 = vperm.xlu0 %2009, %v1972
        %v2011 = vpop.permute.xlu0 %2010
        %v2013 = vadd.f32 %v1957, %v1976
        %v2014 = vadd.f32 %v1958, %v1981
        %v2015 = vadd.f32 %v1959, %v1986
        %v2016 = vadd.f32 %v1960, %v1991
        %v2017 = vadd.f32 %v1961, %v1996
        %v2018 = vadd.f32 %v1962, %v2001
        %v2019 = vadd.f32 %v1963, %v2006
        %v2020 = vadd.f32 %v1964, %v2011
        %v2021 = vmax.f32 %v2013, 0.0
        %v2022 = vmax.f32 %v2014, 0.0
        %v2023 = vmax.f32 %v2015, 0.0
        %v2024 = vmax.f32 %v2016, 0.0
        %v2025 = vmax.f32 %v2017, 0.0
        %v2026 = vmax.f32 %v2018, 0.0
        %v2027 = vmax.f32 %v2019, 0.0
        %v2028 = vmax.f32 %v2020, 0.0
        %v2029 = vpack.c.bf16 %v2022, %v2021
        %v2030 = vpack.c.bf16 %v2024, %v2023
        %v2031 = vpack.c.bf16 %v2026, %v2025
        %v2032 = vpack.c.bf16 %v2028, %v2027
        %v2037 = vunpack.c.l.b16 %v2029
        %v2038 = vunpack.c.h.b16 %v2029
        %v2039 = vunpack.c.l.b16 %v2030
        %v2040 = vunpack.c.h.b16 %v2030
        %v2041 = vunpack.c.l.b16 %v2031
        %v2042 = vunpack.c.h.b16 %v2031
        %v2043 = vunpack.c.l.b16 %v2032
        %v2044 = vunpack.c.h.b16 %v2032
        %v2045 = vpack.c.b16 %v2037, %v2037
        %v2046 = vpack.c.b16 %v2038, %v2038
        %v2047 = vpack.c.b16 %v2039, %v2039
        %v2048 = vpack.c.b16 %v2040, %v2040
        %v2049 = vpack.c.b16 %v2041, %v2041
        %v2050 = vpack.c.b16 %v2042, %v2042
        %v2051 = vpack.c.b16 %v2043, %v2043
        %v2052 = vpack.c.b16 %v2044, %v2044
        %s2061 = smul.u32 %s173, 8
        %s2062 = smul.addr %s2061, 4
        %s2063 = scalar_lea.vmem %s170, %s2062
        %vm2064 = vcmask 863232
        %2065 = vst.msk [vmem:[%s2063] sm:$0xf] %vm2064, %v2045
        %2066 = vst.msk [vmem:[%s2063 + $0x4] sm:$0xf] %vm2064, %v2046
        %2067 = vst.msk [vmem:[%s2063 + $0x8] sm:$0xf] %vm2064, %v2047
        %2068 = vst.msk [vmem:[%s2063 + $0xc] sm:$0xf] %vm2064, %v2048
        %2069 = vst.msk [vmem:[%s2063 + $0x10] sm:$0xf] %vm2064, %v2049
        %2070 = vst.msk [vmem:[%s2063 + $0x14] sm:$0xf] %vm2064, %v2050
        %2071 = vst.msk [vmem:[%s2063 + $0x18] sm:$0xf] %vm2064, %v2051
        %2072 = vst.msk [vmem:[%s2063 + $0x1c] sm:$0xf] %vm2064, %v2052
      $region37: #{chapter_cnn_forward.6} parent=31 // loop_footer
        %s177 = sadd.s32 1, %s173
      $region38: #{chapter_cnn_forward.6} parent=31 // loop_footer_branch
        %172 = sbr.rel target = $region34
      $region39: #{chapter_cnn_forward.6} parent=31 // loop_exit
        _
      %p2073 = scmp.lt.s32.totalorder %s14, 1
      %s2074 = scalar_select %p2073, %s14, 1
      %s2075 = smul.addr %s2074, 48
      %s2076 = smul.addr %s2075, 4
      %s2077 = scalar_lea.vmem %s3, %s2076
      // Predicated region
      $region40: #{chapter_cnn_forward.6} parent=31 // pred_check
        %p2078 = pneg %p100
      $region41: #{chapter_cnn_forward.6} parent=31 // pred_check_branch
        %2080 = sbr.rel (%p2078) target = $region43
      $region42: #{chapter_cnn_forward.6} parent=31 // pred_region
        _
      $region43: #{chapter_cnn_forward.6} parent=31 // pred_fallthru
        _
    $region32: #{chapter_cnn_forward.6} parent=5 // pred_fallthru
      _
    %p2081 = scmp.le.s32.totalorder 2, %s9
    // Predicated region
    $region44: #{chapter_cnn_forward.6} parent=5 // pred_check
      %p2082 = pneg %p2081
    $region45: #{chapter_cnn_forward.6} parent=5 // pred_check_branch
      %2084 = sbr.rel (%p2082) target = $region47
    $region46: #{chapter_cnn_forward.6} parent=5 // pred_region
      %s2085 = ssub.s32 %s9, 2
      // Predicated region
      $region48: #{chapter_cnn_forward.6} parent=46 // pred_check
        %p2086 = pneg %p106
      $region49: #{chapter_cnn_forward.6} parent=46 // pred_check_branch
        %2088 = sbr.rel (%p2086) target = $region51
      $region50: #{chapter_cnn_forward.6} parent=46 // pred_region
        %p2089 = scmp.lt.s32.totalorder %s15, 1
        %s2090 = scalar_select %p2089, %s15, 1
        %s2091 = smul.addr %s2090, 48
        %s2092 = smul.addr %s2091, 4
        %s2093 = scalar_lea.vmem %s3, %s2092
      $region51: #{chapter_cnn_forward.6} parent=46 // pred_fallthru
        _
    $region47: #{chapter_cnn_forward.6} parent=5 // pred_fallthru
      _
  $region6: #{chapter_cnn_forward.6} parent=0 // loop_footer
    %s13 = sadd.s32 1, %s9
  $region7: #{chapter_cnn_forward.6} parent=0 // loop_footer_branch
    %8 = sbr.rel target = $region3
  $region8: #{chapter_cnn_forward.6} parent=0 // loop_exit
    _

// kernel: chapter_cnn_forward.7
$region0: #{chapter_cnn_forward.7}
  #allocation0 [shape = 'u32[]', space=smem, size = 0x4, offset = 0x4, fixed_abs, tag = 'smem constant byte address 0x4 - core index']
  #allocation1 [shape = 'u32[144,128]{1,0:T(1,128)}', space=vmem, size = 0x12000, scoped, tag = 'internal scratch']
  %s0 = inlined_call_operand.vmem [shape: bf16[2,20352], index: 0, kind: input, shape index: {}]
  %s1 = inlined_call_operand.vmem [shape: bf16[20352,10], index: 1, kind: input, shape index: {}]
  %s2 = inlined_call_operand.vmem [shape: f32[1,10], index: 2, kind: input, shape index: {}]
  %s3 = inlined_call_operand.hbm [shape: f32[2,10], index: 3, kind: output, shape index: {}]
  %s4 = sld [smem:[#allocation0]]
  $region49: #{chapter_cnn_forward.7} parent=0
    _
  %s6 = ssub.s32 1, %s4
  %s7 = scalar_select 0, %s6, %s4
  $region1: #{chapter_cnn_forward.7} parent=0
    #allocation2 [shape = 'u8[1024]{0}', space=vmem, size = 0x400, scoped, tag = 'output window, operand 0, single buffered']
    #allocation3 [shape = 's32[2]{0}', space=sflag, size = 0x8, scoped, tag = 'scoped memory for chapter_cnn_forward.7']
    %8 = vsyncpa [#allocation3], 0
    loop: start=0, step=1, limit=5
    $region2: #{chapter_cnn_forward.7} parent=1 // loop_pre_header
      _
    $region3: #{chapter_cnn_forward.7} parent=1 // loop_header
      %s10 = sphi 0, %s14
      %p11 = scmp.ge.s32.totalorder %s10, 5
      %s20 = sphi 0, %s22
      %s23 = sphi 0, %s20
      %s24 = sphi 0, %s23
      %s40 = sphi 0, %s24
      %s46 = sphi 0, %s48
      %s49 = sphi 0, %s46
      %s50 = sphi 0, %s49
      %s66 = sphi 0, %s50
      %s70 = sphi 0, %s70
      %s72 = sphi 0, %s70
      %s73 = sphi 0, %s72
      %s87 = sphi 0, %s73
      %s91 = sphi 0, %s91
      %s93 = sphi 0, %s91
      %s94 = sphi 0, %s93
      %s108 = sphi 0, %s94
    $region4: #{chapter_cnn_forward.7} parent=1 // loop_header_branch
      %13 = sbr.rel (%p11) target = $region8
    $region5: #{chapter_cnn_forward.7} parent=1 // loop_body
      %s15 = ssub.s32 %s10, 1
      %s16 = ssub.s32 %s10, 2
      %s17 = sadd.s32 %s10, 1
      %s18 = ssub.s32 %s10, %s17
      %p19 = scmp.eq.s32.totalorder %s18, 0
      %s21 = sadd.s32 %s20, 1
      %s22 = scalar_select %p19, %s20, %s21
      %p25 = pneg %p19
      %p26 = scmp.eq.s32.totalorder %s10, 2
      %p27 = por %p25, %p26
      %p28 = scmp.ne.s32.totalorder %s20, %s23
      %p29 = scmp.eq.s32.totalorder %s10, 0
      %p30 = por %p28, %p29
      %p31 = scmp.ne.s32.totalorder %s20, %s23
      %p32 = scmp.eq.s32.totalorder %s15, 2
      %p33 = por %p31, %p32
      %p34 = scmp.ne.s32.totalorder %s23, %s24
      %p35 = scmp.eq.s32.totalorder %s15, 0
      %p36 = por %p34, %p35
      %p37 = scmp.ne.s32.totalorder %s23, %s24
      %p38 = scmp.eq.s32.totalorder %s16, 2
      %p39 = por %p37, %p38
      %p41 = scmp.ne.s32.totalorder %s24, %s40
      %p42 = scmp.eq.s32.totalorder %s16, 0
      %p43 = por %p41, %p42
      %s44 = ssub.s32 %s10, %s17
      %p45 = scmp.eq.s32.totalorder %s44, 0
      %s47 = sadd.s32 %s46, 1
      %s48 = scalar_select %p45, %s46, %s47
      %p51 = pneg %p45
      %p52 = scmp.eq.s32.totalorder %s10, 2
      %p53 = por %p51, %p52
      %p54 = scmp.ne.s32.totalorder %s46, %s49
      %p55 = scmp.eq.s32.totalorder %s10, 0
      %p56 = por %p54, %p55
      %p57 = scmp.ne.s32.totalorder %s46, %s49
      %p58 = scmp.eq.s32.totalorder %s15, 2
      %p59 = por %p57, %p58
      %p60 = scmp.ne.s32.totalorder %s49, %s50
      %p61 = scmp.eq.s32.totalorder %s15, 0
      %p62 = por %p60, %p61
      %p63 = scmp.ne.s32.totalorder %s49, %s50
      %p64 = scmp.eq.s32.totalorder %s16, 2
      %p65 = por %p63, %p64
      %p67 = scmp.ne.s32.totalorder %s50, %s66
      %p68 = scmp.eq.s32.totalorder %s16, 0
      %p69 = por %p67, %p68
      %s71 = sadd.s32 %s70, 1
      %p74 = scmp.eq.s32.totalorder %s10, 2
      %p75 = scmp.ne.s32.totalorder %s70, %s72
      %p76 = scmp.eq.s32.totalorder %s10, 0
      %p77 = por %p75, %p76
      %p78 = scmp.ne.s32.totalorder %s70, %s72
      %p79 = scmp.eq.s32.totalorder %s15, 2
      %p80 = por %p78, %p79
      %p81 = scmp.ne.s32.totalorder %s72, %s73
      %p82 = scmp.eq.s32.totalorder %s15, 0
      %p83 = por %p81, %p82
      %p84 = scmp.ne.s32.totalorder %s72, %s73
      %p85 = scmp.eq.s32.totalorder %s16, 2
      %p86 = por %p84, %p85
      %p88 = scmp.ne.s32.totalorder %s73, %s87
      %p89 = scmp.eq.s32.totalorder %s16, 0
      %p90 = por %p88, %p89
      %s92 = sadd.s32 %s91, 1
      %p95 = scmp.eq.s32.totalorder %s10, 2
      %p96 = scmp.ne.s32.totalorder %s91, %s93
      %p97 = scmp.eq.s32.totalorder %s10, 0
      %p98 = por %p96, %p97
      %p99 = scmp.ne.s32.totalorder %s91, %s93
      %p100 = scmp.eq.s32.totalorder %s15, 2
      %p101 = por %p99, %p100
      %p102 = scmp.ne.s32.totalorder %s93, %s94
      %p103 = scmp.eq.s32.totalorder %s15, 0
      %p104 = por %p102, %p103
      %p105 = scmp.ne.s32.totalorder %s93, %s94
      %p106 = scmp.eq.s32.totalorder %s16, 2
      %p107 = por %p105, %p106
      %p109 = scmp.ne.s32.totalorder %s94, %s108
      %p110 = scmp.eq.s32.totalorder %s16, 0
      %p111 = por %p109, %p110
      %p112 = scmp.le.s32.totalorder 1, %s10
      %p113 = scmp.lt.s32.totalorder %s10, 4
      %p114 = pnand %p112, %p113
      %p115 = pneg %p114
      // Predicated region
      $region9: #{chapter_cnn_forward.7} parent=5 // pred_check
        _
      $region10: #{chapter_cnn_forward.7} parent=5 // pred_check_branch
        %117 = sbr.rel (%p114) target = $region12
      $region11: #{chapter_cnn_forward.7} parent=5 // pred_region
        %s118 = ssub.s32 %s10, 1
        // Predicated region
        $region13: #{chapter_cnn_forward.7} parent=11 // pred_check
          %p119 = pneg %p83
        $region14: #{chapter_cnn_forward.7} parent=11 // pred_check_branch
          %121 = sbr.rel (%p119) target = $region16
        $region15: #{chapter_cnn_forward.7} parent=11 // pred_region
          _
        $region16: #{chapter_cnn_forward.7} parent=11 // pred_fallthru
          _
      $region12: #{chapter_cnn_forward.7} parent=5 // pred_fallthru
        _
      %p122 = scmp.lt.s32.totalorder %s10, 3
      // Predicated region
      $region17: #{chapter_cnn_forward.7} parent=5 // pred_check
        %p123 = pneg %p122
      $region18: #{chapter_cnn_forward.7} parent=5 // pred_check_branch
        %125 = sbr.rel (%p123) target = $region20
      $region19: #{chapter_cnn_forward.7} parent=5 // pred_region
        // Predicated region
        $region21: #{chapter_cnn_forward.7} parent=19 // pred_check
          %p126 = pneg %p30
        $region22: #{chapter_cnn_forward.7} parent=19 // pred_check_branch
          %128 = sbr.rel (%p126) target = $region24
        $region23: #{chapter_cnn_forward.7} parent=19 // pred_region
          %s129 = smul.u32 53, %s10
          %p130 = scmp.lt.s32.totalorder %s129, 158
          %s131 = scalar_select %p130, %s129, 158
          %s132 = scalar_lea.vmem %s0, %s131
          %s133 = smul.u32 53, %s10
        $region24: #{chapter_cnn_forward.7} parent=19 // pred_fallthru
          _
        // Predicated region
        $region25: #{chapter_cnn_forward.7} parent=19 // pred_check
          %p134 = pneg %p56
        $region26: #{chapter_cnn_forward.7} parent=19 // pred_check_branch
          %136 = sbr.rel (%p134) target = $region28
        $region27: #{chapter_cnn_forward.7} parent=19 // pred_region
          %s137 = smul.u32 848, %s10
          %p138 = scmp.lt.s32.totalorder %s137, 2543
          %s139 = scalar_select %p138, %s137, 2543
          %s140 = smul.addr %s139, 4
          %s141 = scalar_lea.vmem %s1, %s140
          %s142 = smul.u32 848, %s10
        $region28: #{chapter_cnn_forward.7} parent=19 // pred_fallthru
          _
      $region20: #{chapter_cnn_forward.7} parent=5 // pred_fallthru
        _
      %p143 = scmp.le.s32.totalorder 1, %s10
      %p144 = scmp.lt.s32.totalorder %s10, 4
      %p145 = pnand %p143, %p144
      %p146 = pneg %p145
      // Predicated region
      $region29: #{chapter_cnn_forward.7} parent=5 // pred_check
        _
      $region30: #{chapter_cnn_forward.7} parent=5 // pred_check_branch
        %148 = sbr.rel (%p145) target = $region32
      $region31: #{chapter_cnn_forward.7} parent=5 // pred_region
        %s149 = ssub.s32 %s10, 1
        %s150 = smul.u32 53, %s15
        %p151 = scmp.lt.s32.totalorder %s150, 158
        %s152 = scalar_select %p151, %s150, 158
        %s153 = scalar_lea.vmem %s0, %s152
        %p154 = pneg %p36
        %p155 = pneg %p33
        %s156 = smul.u32 848, %s15
        %p157 = scmp.lt.s32.totalorder %s156, 2543
        %s158 = scalar_select %p157, %s156, 2543
        %s159 = smul.addr %s158, 4
        %s160 = scalar_lea.vmem %s1, %s159
        %p161 = pneg %p62
        %p162 = pneg %p59
        %p163 = pneg %p83
        %p164 = pneg %p80
        %p165 = pneg %p104
        %p166 = pneg %p101
        %s167 = smul.u32 53, %s15
        %p168 = scmp.lt.s32.totalorder %s167, 158
        %s169 = scalar_select %p168, %s167, 158
        %s170 = scalar_lea.vmem %s0, %s169
        %s171 = smul.u32 53, %s15
        %s172 = smul.u32 848, %s15
        %p173 = scmp.lt.s32.totalorder %s172, 2543
        %s174 = scalar_select %p173, %s172, 2543
        %s175 = smul.addr %s174, 4
        %s176 = scalar_lea.vmem %s1, %s175
        %s177 = smul.u32 848, %s15
        %p179 = scmp.eq.s32.totalorder %s15, 0
        // Predicated region
        $region33: #{chapter_cnn_forward.7} parent=31 // pred_check
          %p180 = pneg %p179
        $region34: #{chapter_cnn_forward.7} parent=31 // pred_check_branch
          %182 = sbr.rel (%p180) target = $region36
        $region35: #{chapter_cnn_forward.7} parent=31 // pred_region
          %v183 = vld [vmem:[%s2] sm:$0x1]
          %v185 = vlaneseq
          %v186 = vshrl.u32 %v185, 7
          %v187 = vsub.s32 0, %v186
          %v188 = vrot.slane %v183, %v187
          %vm190 = vcmask 74752
          %191 = vst.msk [vmem:[#allocation2] sm:$0x3] %vm190, %v188
        $region36: #{chapter_cnn_forward.7} parent=31 // pred_fallthru
          _
        %v192 = vld [vmem:[#allocation2] sm:$0x3]
        %v193 = vld [vmem:[%s170] sm:$0xff]
        %v194 = vld [vmem:[%s170 + $0x8] sm:$0xff]
        %v195 = vld [vmem:[%s170 + $0x10] sm:$0xff]
        %v196 = vld [vmem:[%s170 + $0x18] sm:$0xff]
        %v197 = vld [vmem:[%s170 + $0x20] sm:$0xff]
        %v198 = vld [vmem:[%s170 + $0x28] sm:$0xff]
        %v199 = vld [vmem:[%s170 + $0x30] sm:$0x1f]
        %v200 = vld [vmem:[%s176] sm:$0xf]
        %v201 = vld [vmem:[%s176 + $0x4] sm:$0xf]
        %v202 = vld [vmem:[%s176 + $0x8] sm:$0xf]
        %v203 = vld [vmem:[%s176 + $0xc] sm:$0xf]
        %v204 = vld [vmem:[%s176 + $0x10] sm:$0xf]
        %v205 = vld [vmem:[%s176 + $0x14] sm:$0xf]
        %v206 = vld [vmem:[%s176 + $0x18] sm:$0xf]
        %v207 = vld [vmem:[%s176 + $0x1c] sm:$0xf]
        %v208 = vld [vmem:[%s176 + $0x20] sm:$0xf]
        %v209 = vld [vmem:[%s176 + $0x24] sm:$0xf]
        %v210 = vld [vmem:[%s176 + $0x28] sm:$0xf]
        %v211 = vld [vmem:[%s176 + $0x2c] sm:$0xf]
        %v212 = vld [vmem:[%s176 + $0x30] sm:$0xf]
        %v213 = vld [vmem:[%s176 + $0x34] sm:$0xf]
        %v214 = vld [vmem:[%s176 + $0x38] sm:$0xf]
        %v215 = vld [vmem:[%s176 + $0x3c] sm:$0xf]
        %v216 = vld [vmem:[%s176 + $0x40] sm:$0xf]
        %v217 = vld [vmem:[%s176 + $0x44] sm:$0xf]
        %v218 = vld [vmem:[%s176 + $0x48] sm:$0xf]
        %v219 = vld [vmem:[%s176 + $0x4c] sm:$0xf]
        %v220 = vld [vmem:[%s176 + $0x50] sm:$0xf]
        %v221 = vld [vmem:[%s176 + $0x54] sm:$0xf]
        %v222 = vld [vmem:[%s176 + $0x58] sm:$0xf]
        %v223 = vld [vmem:[%s176 + $0x5c] sm:$0xf]
        %v224 = vld [vmem:[%s176 + $0x60] sm:$0xf]
        %v225 = vld [vmem:[%s176 + $0x64] sm:$0xf]
        %v226 = vld [vmem:[%s176 + $0x68] sm:$0xf]
        %v227 = vld [vmem:[%s176 + $0x6c] sm:$0xf]
        %v228 = vld [vmem:[%s176 + $0x70] sm:$0xf]
        %v229 = vld [vmem:[%s176 + $0x74] sm:$0xf]
        %v230 = vld [vmem:[%s176 + $0x78] sm:$0xf]
        %v231 = vld [vmem:[%s176 + $0x7c] sm:$0xf]
        %v232 = vld [vmem:[%s176 + $0x80] sm:$0xf]
        %v233 = vld [vmem:[%s176 + $0x84] sm:$0xf]
        %v234 = vld [vmem:[%s176 + $0x88] sm:$0xf]
        %v235 = vld [vmem:[%s176 + $0x8c] sm:$0xf]
        %v236 = vld [vmem:[%s176 + $0x90] sm:$0xf]
        %v237 = vld [vmem:[%s176 + $0x94] sm:$0xf]
        %v238 = vld [vmem:[%s176 + $0x98] sm:$0xf]
        %v239 = vld [vmem:[%s176 + $0x9c] sm:$0xf]
        %v240 = vld [vmem:[%s176 + $0xa0] sm:$0xf]
        %v241 = vld [vmem:[%s176 + $0xa4] sm:$0xf]
        %v242 = vld [vmem:[%s176 + $0xa8] sm:$0xf]
        %v243 = vld [vmem:[%s176 + $0xac] sm:$0xf]
        %v244 = vld [vmem:[%s176 + $0xb0] sm:$0xf]
        %v245 = vld [vmem:[%s176 + $0xb4] sm:$0xf]
        %v246 = vld [vmem:[%s176 + $0xb8] sm:$0xf]
        %v247 = vld [vmem:[%s176 + $0xbc] sm:$0xf]
        %v248 = vld [vmem:[%s176 + $0xc0] sm:$0xf]
        %v249 = vld [vmem:[%s176 + $0xc4] sm:$0xf]
        %v250 = vld [vmem:[%s176 + $0xc8] sm:$0xf]
        %v251 = vld [vmem:[%s176 + $0xcc] sm:$0xf]
        %v252 = vld [vmem:[%s176 + $0xd0] sm:$0xf]
        %v253 = vld [vmem:[%s176 + $0xd4] sm:$0xf]
        %v254 = vld [vmem:[%s176 + $0xd8] sm:$0xf]
        %v255 = vld [vmem:[%s176 + $0xdc] sm:$0xf]
        %v256 = vld [vmem:[%s176 + $0xe0] sm:$0xf]
        %v257 = vld [vmem:[%s176 + $0xe4] sm:$0xf]
        %v258 = vld [vmem:[%s176 + $0xe8] sm:$0xf]
        %v259 = vld [vmem:[%s176 + $0xec] sm:$0xf]
        %v260 = vld [vmem:[%s176 + $0xf0] sm:$0xf]
        %v261 = vld [vmem:[%s176 + $0xf4] sm:$0xf]
        %v262 = vld [vmem:[%s176 + $0xf8] sm:$0xf]
        %v263 = vld [vmem:[%s176 + $0xfc] sm:$0xf]
        %v264 = vld [vmem:[%s176 + $0x100] sm:$0xf]
        %v265 = vld [vmem:[%s176 + $0x104] sm:$0xf]
        %v266 = vld [vmem:[%s176 + $0x108] sm:$0xf]
        %v267 = vld [vmem:[%s176 + $0x10c] sm:$0xf]
        %v268 = vld [vmem:[%s176 + $0x110] sm:$0xf]
        %v269 = vld [vmem:[%s176 + $0x114] sm:$0xf]
        %v270 = vld [vmem:[%s176 + $0x118] sm:$0xf]
        %v271 = vld [vmem:[%s176 + $0x11c] sm:$0xf]
        %v272 = vld [vmem:[%s176 + $0x120] sm:$0xf]
        %v273 = vld [vmem:[%s176 + $0x124] sm:$0xf]
        %v274 = vld [vmem:[%s176 + $0x128] sm:$0xf]
        %v275 = vld [vmem:[%s176 + $0x12c] sm:$0xf]
        %v276 = vld [vmem:[%s176 + $0x130] sm:$0xf]
        %v277 = vld [vmem:[%s176 + $0x134] sm:$0xf]
        %v278 = vld [vmem:[%s176 + $0x138] sm:$0xf]
        %v279 = vld [vmem:[%s176 + $0x13c] sm:$0xf]
        %v280 = vld [vmem:[%s176 + $0x140] sm:$0xf]
        %v281 = vld [vmem:[%s176 + $0x144] sm:$0xf]
        %v282 = vld [vmem:[%s176 + $0x148] sm:$0xf]
        %v283 = vld [vmem:[%s176 + $0x14c] sm:$0xf]
        %v284 = vld [vmem:[%s176 + $0x150] sm:$0xf]
        %v285 = vld [vmem:[%s176 + $0x154] sm:$0xf]
        %v286 = vld [vmem:[%s176 + $0x158] sm:$0xf]
        %v287 = vld [vmem:[%s176 + $0x15c] sm:$0xf]
        %v288 = vld [vmem:[%s176 + $0x160] sm:$0xf]
        %v289 = vld [vmem:[%s176 + $0x164] sm:$0xf]
        %v290 = vld [vmem:[%s176 + $0x168] sm:$0xf]
        %v291 = vld [vmem:[%s176 + $0x16c] sm:$0xf]
        %v292 = vld [vmem:[%s176 + $0x170] sm:$0xf]
        %v293 = vld [vmem:[%s176 + $0x174] sm:$0xf]
        %v294 = vld [vmem:[%s176 + $0x178] sm:$0xf]
        %v295 = vld [vmem:[%s176 + $0x17c] sm:$0xf]
        %v296 = vld [vmem:[%s176 + $0x180] sm:$0xf]
        %v297 = vld [vmem:[%s176 + $0x184] sm:$0xf]
        %v298 = vld [vmem:[%s176 + $0x188] sm:$0xf]
        %v299 = vld [vmem:[%s176 + $0x18c] sm:$0xf]
        %v300 = vld [vmem:[%s176 + $0x190] sm:$0xf]
        %v301 = vld [vmem:[%s176 + $0x194] sm:$0xf]
        %v302 = vld [vmem:[%s176 + $0x198] sm:$0xf]
        %v303 = vld [vmem:[%s176 + $0x19c] sm:$0xf]
        %v304 = vld [vmem:[%s176 + $0x1a0] sm:$0xf]
        %v305 = vld [vmem:[%s176 + $0x1a4] sm:$0xf]
        %v306 = vld [vmem:[%s176 + $0x1a8] sm:$0xf]
        %v307 = vld [vmem:[%s176 + $0x1ac] sm:$0xf]
        %v308 = vld [vmem:[%s176 + $0x1b0] sm:$0xf]
        %v309 = vld [vmem:[%s176 + $0x1b4] sm:$0xf]
        %v310 = vld [vmem:[%s176 + $0x1b8] sm:$0xf]
        %v311 = vld [vmem:[%s176 + $0x1bc] sm:$0xf]
        %v312 = vld [vmem:[%s176 + $0x1c0] sm:$0xf]
        %v313 = vld [vmem:[%s176 + $0x1c4] sm:$0xf]
        %v314 = vld [vmem:[%s176 + $0x1c8] sm:$0xf]
        %v315 = vld [vmem:[%s176 + $0x1cc] sm:$0xf]
        %v316 = vld [vmem:[%s176 + $0x1d0] sm:$0xf]
        %v317 = vld [vmem:[%s176 + $0x1d4] sm:$0xf]
        %v318 = vld [vmem:[%s176 + $0x1d8] sm:$0xf]
        %v319 = vld [vmem:[%s176 + $0x1dc] sm:$0xf]
        %v320 = vld [vmem:[%s176 + $0x1e0] sm:$0xf]
        %v321 = vld [vmem:[%s176 + $0x1e4] sm:$0xf]
        %v322 = vld [vmem:[%s176 + $0x1e8] sm:$0xf]
        %v323 = vld [vmem:[%s176 + $0x1ec] sm:$0xf]
        %v324 = vld [vmem:[%s176 + $0x1f0] sm:$0xf]
        %v325 = vld [vmem:[%s176 + $0x1f4] sm:$0xf]
        %v326 = vld [vmem:[%s176 + $0x1f8] sm:$0xf]
        %v327 = vld [vmem:[%s176 + $0x1fc] sm:$0xf]
        %v328 = vld [vmem:[%s176 + $0x200] sm:$0xf]
        %v329 = vld [vmem:[%s176 + $0x204] sm:$0xf]
        %v330 = vld [vmem:[%s176 + $0x208] sm:$0xf]
        %v331 = vld [vmem:[%s176 + $0x20c] sm:$0xf]
        %v332 = vld [vmem:[%s176 + $0x210] sm:$0xf]
        %v333 = vld [vmem:[%s176 + $0x214] sm:$0xf]
        %v334 = vld [vmem:[%s176 + $0x218] sm:$0xf]
        %v335 = vld [vmem:[%s176 + $0x21c] sm:$0xf]
        %v336 = vld [vmem:[%s176 + $0x220] sm:$0xf]
        %v337 = vld [vmem:[%s176 + $0x224] sm:$0xf]
        %v338 = vld [vmem:[%s176 + $0x228] sm:$0xf]
        %v339 = vld [vmem:[%s176 + $0x22c] sm:$0xf]
        %v340 = vld [vmem:[%s176 + $0x230] sm:$0xf]
        %v341 = vld [vmem:[%s176 + $0x234] sm:$0xf]
        %v342 = vld [vmem:[%s176 + $0x238] sm:$0xf]
        %v343 = vld [vmem:[%s176 + $0x23c] sm:$0xf]
        %v344 = vld [vmem:[%s176 + $0x240] sm:$0xf]
        %v345 = vld [vmem:[%s176 + $0x244] sm:$0xf]
        %v346 = vld [vmem:[%s176 + $0x248] sm:$0xf]
        %v347 = vld [vmem:[%s176 + $0x24c] sm:$0xf]
        %v348 = vld [vmem:[%s176 + $0x250] sm:$0xf]
        %v349 = vld [vmem:[%s176 + $0x254] sm:$0xf]
        %v350 = vld [vmem:[%s176 + $0x258] sm:$0xf]
        %v351 = vld [vmem:[%s176 + $0x25c] sm:$0xf]
        %v352 = vld [vmem:[%s176 + $0x260] sm:$0xf]
        %v353 = vld [vmem:[%s176 + $0x264] sm:$0xf]
        %v354 = vld [vmem:[%s176 + $0x268] sm:$0xf]
        %v355 = vld [vmem:[%s176 + $0x26c] sm:$0xf]
        %v356 = vld [vmem:[%s176 + $0x270] sm:$0xf]
        %v357 = vld [vmem:[%s176 + $0x274] sm:$0xf]
        %v358 = vld [vmem:[%s176 + $0x278] sm:$0xf]
        %v359 = vld [vmem:[%s176 + $0x27c] sm:$0xf]
        %v360 = vld [vmem:[%s176 + $0x280] sm:$0xf]
        %v361 = vld [vmem:[%s176 + $0x284] sm:$0xf]
        %v362 = vld [vmem:[%s176 + $0x288] sm:$0xf]
        %v363 = vld [vmem:[%s176 + $0x28c] sm:$0xf]
        %v364 = vld [vmem:[%s176 + $0x290] sm:$0xf]
        %v365 = vld [vmem:[%s176 + $0x294] sm:$0xf]
        %v366 = vld [vmem:[%s176 + $0x298] sm:$0xf]
        %v367 = vld [vmem:[%s176 + $0x29c] sm:$0xf]
        %v368 = vld [vmem:[%s176 + $0x2a0] sm:$0xf]
        %v369 = vld [vmem:[%s176 + $0x2a4] sm:$0xf]
        %v370 = vld [vmem:[%s176 + $0x2a8] sm:$0xf]
        %v371 = vld [vmem:[%s176 + $0x2ac] sm:$0xf]
        %v372 = vld [vmem:[%s176 + $0x2b0] sm:$0xf]
        %v373 = vld [vmem:[%s176 + $0x2b4] sm:$0xf]
        %v374 = vld [vmem:[%s176 + $0x2b8] sm:$0xf]
        %v375 = vld [vmem:[%s176 + $0x2bc] sm:$0xf]
        %v376 = vld [vmem:[%s176 + $0x2c0] sm:$0xf]
        %v377 = vld [vmem:[%s176 + $0x2c4] sm:$0xf]
        %v378 = vld [vmem:[%s176 + $0x2c8] sm:$0xf]
        %v379 = vld [vmem:[%s176 + $0x2cc] sm:$0xf]
        %v380 = vld [vmem:[%s176 + $0x2d0] sm:$0xf]
        %v381 = vld [vmem:[%s176 + $0x2d4] sm:$0xf]
        %v382 = vld [vmem:[%s176 + $0x2d8] sm:$0xf]
        %v383 = vld [vmem:[%s176 + $0x2dc] sm:$0xf]
        %v384 = vld [vmem:[%s176 + $0x2e0] sm:$0xf]
        %v385 = vld [vmem:[%s176 + $0x2e4] sm:$0xf]
        %v386 = vld [vmem:[%s176 + $0x2e8] sm:$0xf]
        %v387 = vld [vmem:[%s176 + $0x2ec] sm:$0xf]
        %v388 = vld [vmem:[%s176 + $0x2f0] sm:$0xf]
        %v389 = vld [vmem:[%s176 + $0x2f4] sm:$0xf]
        %v390 = vld [vmem:[%s176 + $0x2f8] sm:$0xf]
        %v391 = vld [vmem:[%s176 + $0x2fc] sm:$0xf]
        %v392 = vld [vmem:[%s176 + $0x300] sm:$0xf]
        %v393 = vld [vmem:[%s176 + $0x304] sm:$0xf]
        %v394 = vld [vmem:[%s176 + $0x308] sm:$0xf]
        %v395 = vld [vmem:[%s176 + $0x30c] sm:$0xf]
        %v396 = vld [vmem:[%s176 + $0x310] sm:$0xf]
        %v397 = vld [vmem:[%s176 + $0x314] sm:$0xf]
        %v398 = vld [vmem:[%s176 + $0x318] sm:$0xf]
        %v399 = vld [vmem:[%s176 + $0x31c] sm:$0xf]
        %v400 = vld [vmem:[%s176 + $0x320] sm:$0xf]
        %v401 = vld [vmem:[%s176 + $0x324] sm:$0xf]
        %v402 = vld [vmem:[%s176 + $0x328] sm:$0xf]
        %v403 = vld [vmem:[%s176 + $0x32c] sm:$0xf]
        %v404 = vld [vmem:[%s176 + $0x330] sm:$0xf]
        %v405 = vld [vmem:[%s176 + $0x334] sm:$0xf]
        %v406 = vld [vmem:[%s176 + $0x338] sm:$0xf]
        %v407 = vld [vmem:[%s176 + $0x33c] sm:$0xf]
        %v408 = vld [vmem:[%s176 + $0x340] sm:$0xf]
        %v409 = vld [vmem:[%s176 + $0x344] sm:$0xf]
        %v410 = vld [vmem:[%s176 + $0x348] sm:$0xf]
        %v411 = vld [vmem:[%s176 + $0x34c] sm:$0xf]
        %v412 = vld [vmem:[%s176 + $0x350] sm:$0xf]
        %v413 = vld [vmem:[%s176 + $0x354] sm:$0xf]
        %v414 = vld [vmem:[%s176 + $0x358] sm:$0xf]
        %v415 = vld [vmem:[%s176 + $0x35c] sm:$0xf]
        %v416 = vld [vmem:[%s176 + $0x360] sm:$0xf]
        %v417 = vld [vmem:[%s176 + $0x364] sm:$0xf]
        %v418 = vld [vmem:[%s176 + $0x368] sm:$0xf]
        %v419 = vld [vmem:[%s176 + $0x36c] sm:$0xf]
        %v420 = vld [vmem:[%s176 + $0x370] sm:$0xf]
        %v421 = vld [vmem:[%s176 + $0x374] sm:$0xf]
        %v422 = vld [vmem:[%s176 + $0x378] sm:$0xf]
        %v423 = vld [vmem:[%s176 + $0x37c] sm:$0xf]
        %v424 = vld [vmem:[%s176 + $0x380] sm:$0xf]
        %v425 = vld [vmem:[%s176 + $0x384] sm:$0xf]
        %v426 = vld [vmem:[%s176 + $0x388] sm:$0xf]
        %v427 = vld [vmem:[%s176 + $0x38c] sm:$0xf]
        %v428 = vld [vmem:[%s176 + $0x390] sm:$0xf]
        %v429 = vld [vmem:[%s176 + $0x394] sm:$0xf]
        %v430 = vld [vmem:[%s176 + $0x398] sm:$0xf]
        %v431 = vld [vmem:[%s176 + $0x39c] sm:$0xf]
        %v432 = vld [vmem:[%s176 + $0x3a0] sm:$0xf]
        %v433 = vld [vmem:[%s176 + $0x3a4] sm:$0xf]
        %v434 = vld [vmem:[%s176 + $0x3a8] sm:$0xf]
        %v435 = vld [vmem:[%s176 + $0x3ac] sm:$0xf]
        %v436 = vld [vmem:[%s176 + $0x3b0] sm:$0xf]
        %v437 = vld [vmem:[%s176 + $0x3b4] sm:$0xf]
        %v438 = vld [vmem:[%s176 + $0x3b8] sm:$0xf]
        %v439 = vld [vmem:[%s176 + $0x3bc] sm:$0xf]
        %v440 = vld [vmem:[%s176 + $0x3c0] sm:$0xf]
        %v441 = vld [vmem:[%s176 + $0x3c4] sm:$0xf]
        %v442 = vld [vmem:[%s176 + $0x3c8] sm:$0xf]
        %v443 = vld [vmem:[%s176 + $0x3cc] sm:$0xf]
        %v444 = vld [vmem:[%s176 + $0x3d0] sm:$0xf]
        %v445 = vld [vmem:[%s176 + $0x3d4] sm:$0xf]
        %v446 = vld [vmem:[%s176 + $0x3d8] sm:$0xf]
        %v447 = vld [vmem:[%s176 + $0x3dc] sm:$0xf]
        %v448 = vld [vmem:[%s176 + $0x3e0] sm:$0xf]
        %v449 = vld [vmem:[%s176 + $0x3e4] sm:$0xf]
        %v450 = vld [vmem:[%s176 + $0x3e8] sm:$0xf]
        %v451 = vld [vmem:[%s176 + $0x3ec] sm:$0xf]
        %v452 = vld [vmem:[%s176 + $0x3f0] sm:$0xf]
        %v453 = vld [vmem:[%s176 + $0x3f4] sm:$0xf]
        %v454 = vld [vmem:[%s176 + $0x3f8] sm:$0xf]
        %v455 = vld [vmem:[%s176 + $0x3fc] sm:$0xf]
        %v456 = vld [vmem:[%s176 + $0x400] sm:$0xf]
        %v457 = vld [vmem:[%s176 + $0x404] sm:$0xf]
        %v458 = vld [vmem:[%s176 + $0x408] sm:$0xf]
        %v459 = vld [vmem:[%s176 + $0x40c] sm:$0xf]
        %v460 = vld [vmem:[%s176 + $0x410] sm:$0xf]
        %v461 = vld [vmem:[%s176 + $0x414] sm:$0xf]
        %v462 = vld [vmem:[%s176 + $0x418] sm:$0xf]
        %v463 = vld [vmem:[%s176 + $0x41c] sm:$0xf]
        %v464 = vld [vmem:[%s176 + $0x420] sm:$0xf]
        %v465 = vld [vmem:[%s176 + $0x424] sm:$0xf]
        %v466 = vld [vmem:[%s176 + $0x428] sm:$0xf]
        %v467 = vld [vmem:[%s176 + $0x42c] sm:$0xf]
        %v468 = vld [vmem:[%s176 + $0x430] sm:$0xf]
        %v469 = vld [vmem:[%s176 + $0x434] sm:$0xf]
        %v470 = vld [vmem:[%s176 + $0x438] sm:$0xf]
        %v471 = vld [vmem:[%s176 + $0x43c] sm:$0xf]
        %v472 = vld [vmem:[%s176 + $0x440] sm:$0xf]
        %v473 = vld [vmem:[%s176 + $0x444] sm:$0xf]
        %v474 = vld [vmem:[%s176 + $0x448] sm:$0xf]
        %v475 = vld [vmem:[%s176 + $0x44c] sm:$0xf]
        %v476 = vld [vmem:[%s176 + $0x450] sm:$0xf]
        %v477 = vld [vmem:[%s176 + $0x454] sm:$0xf]
        %v478 = vld [vmem:[%s176 + $0x458] sm:$0xf]
        %v479 = vld [vmem:[%s176 + $0x45c] sm:$0xf]
        %v480 = vld [vmem:[%s176 + $0x460] sm:$0xf]
        %v481 = vld [vmem:[%s176 + $0x464] sm:$0xf]
        %v482 = vld [vmem:[%s176 + $0x468] sm:$0xf]
        %v483 = vld [vmem:[%s176 + $0x46c] sm:$0xf]
        %v484 = vld [vmem:[%s176 + $0x470] sm:$0xf]
        %v485 = vld [vmem:[%s176 + $0x474] sm:$0xf]
        %v486 = vld [vmem:[%s176 + $0x478] sm:$0xf]
        %v487 = vld [vmem:[%s176 + $0x47c] sm:$0xf]
        %v488 = vld [vmem:[%s176 + $0x480] sm:$0xf]
        %v489 = vld [vmem:[%s176 + $0x484] sm:$0xf]
        %v490 = vld [vmem:[%s176 + $0x488] sm:$0xf]
        %v491 = vld [vmem:[%s176 + $0x48c] sm:$0xf]
        %v492 = vld [vmem:[%s176 + $0x490] sm:$0xf]
        %v493 = vld [vmem:[%s176 + $0x494] sm:$0xf]
        %v494 = vld [vmem:[%s176 + $0x498] sm:$0xf]
        %v495 = vld [vmem:[%s176 + $0x49c] sm:$0xf]
        %v496 = vld [vmem:[%s176 + $0x4a0] sm:$0xf]
        %v497 = vld [vmem:[%s176 + $0x4a4] sm:$0xf]
        %v498 = vld [vmem:[%s176 + $0x4a8] sm:$0xf]
        %v499 = vld [vmem:[%s176 + $0x4ac] sm:$0xf]
        %v500 = vld [vmem:[%s176 + $0x4b0] sm:$0xf]
        %v501 = vld [vmem:[%s176 + $0x4b4] sm:$0xf]
        %v502 = vld [vmem:[%s176 + $0x4b8] sm:$0xf]
        %v503 = vld [vmem:[%s176 + $0x4bc] sm:$0xf]
        %v504 = vld [vmem:[%s176 + $0x4c0] sm:$0xf]
        %v505 = vld [vmem:[%s176 + $0x4c4] sm:$0xf]
        %v506 = vld [vmem:[%s176 + $0x4c8] sm:$0xf]
        %v507 = vld [vmem:[%s176 + $0x4cc] sm:$0xf]
        %v508 = vld [vmem:[%s176 + $0x4d0] sm:$0xf]
        %v509 = vld [vmem:[%s176 + $0x4d4] sm:$0xf]
        %v510 = vld [vmem:[%s176 + $0x4d8] sm:$0xf]
        %v511 = vld [vmem:[%s176 + $0x4dc] sm:$0xf]
        %v512 = vld [vmem:[%s176 + $0x4e0] sm:$0xf]
        %v513 = vld [vmem:[%s176 + $0x4e4] sm:$0xf]
        %v514 = vld [vmem:[%s176 + $0x4e8] sm:$0xf]
        %v515 = vld [vmem:[%s176 + $0x4ec] sm:$0xf]
        %v516 = vld [vmem:[%s176 + $0x4f0] sm:$0xf]
        %v517 = vld [vmem:[%s176 + $0x4f4] sm:$0xf]
        %v518 = vld [vmem:[%s176 + $0x4f8] sm:$0xf]
        %v519 = vld [vmem:[%s176 + $0x4fc] sm:$0xf]
        %v520 = vld [vmem:[%s176 + $0x500] sm:$0xf]
        %v521 = vld [vmem:[%s176 + $0x504] sm:$0xf]
        %v522 = vld [vmem:[%s176 + $0x508] sm:$0xf]
        %v523 = vld [vmem:[%s176 + $0x50c] sm:$0xf]
        %v524 = vld [vmem:[%s176 + $0x510] sm:$0xf]
        %v525 = vld [vmem:[%s176 + $0x514] sm:$0xf]
        %v526 = vld [vmem:[%s176 + $0x518] sm:$0xf]
        %v527 = vld [vmem:[%s176 + $0x51c] sm:$0xf]
        %v528 = vld [vmem:[%s176 + $0x520] sm:$0xf]
        %v529 = vld [vmem:[%s176 + $0x524] sm:$0xf]
        %v530 = vld [vmem:[%s176 + $0x528] sm:$0xf]
        %v531 = vld [vmem:[%s176 + $0x52c] sm:$0xf]
        %v532 = vld [vmem:[%s176 + $0x530] sm:$0xf]
        %v533 = vld [vmem:[%s176 + $0x534] sm:$0xf]
        %v534 = vld [vmem:[%s176 + $0x538] sm:$0xf]
        %v535 = vld [vmem:[%s176 + $0x53c] sm:$0xf]
        %v536 = vld [vmem:[%s176 + $0x540] sm:$0xf]
        %v537 = vld [vmem:[%s176 + $0x544] sm:$0xf]
        %v538 = vld [vmem:[%s176 + $0x548] sm:$0xf]
        %v539 = vld [vmem:[%s176 + $0x54c] sm:$0xf]
        %v540 = vld [vmem:[%s176 + $0x550] sm:$0xf]
        %v541 = vld [vmem:[%s176 + $0x554] sm:$0xf]
        %v542 = vld [vmem:[%s176 + $0x558] sm:$0xf]
        %v543 = vld [vmem:[%s176 + $0x55c] sm:$0xf]
        %v544 = vld [vmem:[%s176 + $0x560] sm:$0xf]
        %v545 = vld [vmem:[%s176 + $0x564] sm:$0xf]
        %v546 = vld [vmem:[%s176 + $0x568] sm:$0xf]
        %v547 = vld [vmem:[%s176 + $0x56c] sm:$0xf]
        %v548 = vld [vmem:[%s176 + $0x570] sm:$0xf]
        %v549 = vld [vmem:[%s176 + $0x574] sm:$0xf]
        %v550 = vld [vmem:[%s176 + $0x578] sm:$0xf]
        %v551 = vld [vmem:[%s176 + $0x57c] sm:$0xf]
        %v552 = vld [vmem:[%s176 + $0x580] sm:$0xf]
        %v553 = vld [vmem:[%s176 + $0x584] sm:$0xf]
        %v554 = vld [vmem:[%s176 + $0x588] sm:$0xf]
        %v555 = vld [vmem:[%s176 + $0x58c] sm:$0xf]
        %v556 = vld [vmem:[%s176 + $0x590] sm:$0xf]
        %v557 = vld [vmem:[%s176 + $0x594] sm:$0xf]
        %v558 = vld [vmem:[%s176 + $0x598] sm:$0xf]
        %v559 = vld [vmem:[%s176 + $0x59c] sm:$0xf]
        %v560 = vld [vmem:[%s176 + $0x5a0] sm:$0xf]
        %v561 = vld [vmem:[%s176 + $0x5a4] sm:$0xf]
        %v562 = vld [vmem:[%s176 + $0x5a8] sm:$0xf]
        %v563 = vld [vmem:[%s176 + $0x5ac] sm:$0xf]
        %v564 = vld [vmem:[%s176 + $0x5b0] sm:$0xf]
        %v565 = vld [vmem:[%s176 + $0x5b4] sm:$0xf]
        %v566 = vld [vmem:[%s176 + $0x5b8] sm:$0xf]
        %v567 = vld [vmem:[%s176 + $0x5bc] sm:$0xf]
        %v568 = vld [vmem:[%s176 + $0x5c0] sm:$0xf]
        %v569 = vld [vmem:[%s176 + $0x5c4] sm:$0xf]
        %v570 = vld [vmem:[%s176 + $0x5c8] sm:$0xf]
        %v571 = vld [vmem:[%s176 + $0x5cc] sm:$0xf]
        %v572 = vld [vmem:[%s176 + $0x5d0] sm:$0xf]
        %v573 = vld [vmem:[%s176 + $0x5d4] sm:$0xf]
        %v574 = vld [vmem:[%s176 + $0x5d8] sm:$0xf]
        %v575 = vld [vmem:[%s176 + $0x5dc] sm:$0xf]
        %v576 = vld [vmem:[%s176 + $0x5e0] sm:$0xf]
        %v577 = vld [vmem:[%s176 + $0x5e4] sm:$0xf]
        %v578 = vld [vmem:[%s176 + $0x5e8] sm:$0xf]
        %v579 = vld [vmem:[%s176 + $0x5ec] sm:$0xf]
        %v580 = vld [vmem:[%s176 + $0x5f0] sm:$0xf]
        %v581 = vld [vmem:[%s176 + $0x5f4] sm:$0xf]
        %v582 = vld [vmem:[%s176 + $0x5f8] sm:$0xf]
        %v583 = vld [vmem:[%s176 + $0x5fc] sm:$0xf]
        %v584 = vld [vmem:[%s176 + $0x600] sm:$0xf]
        %v585 = vld [vmem:[%s176 + $0x604] sm:$0xf]
        %v586 = vld [vmem:[%s176 + $0x608] sm:$0xf]
        %v587 = vld [vmem:[%s176 + $0x60c] sm:$0xf]
        %v588 = vld [vmem:[%s176 + $0x610] sm:$0xf]
        %v589 = vld [vmem:[%s176 + $0x614] sm:$0xf]
        %v590 = vld [vmem:[%s176 + $0x618] sm:$0xf]
        %v591 = vld [vmem:[%s176 + $0x61c] sm:$0xf]
        %v592 = vld [vmem:[%s176 + $0x620] sm:$0xf]
        %v593 = vld [vmem:[%s176 + $0x624] sm:$0xf]
        %v594 = vld [vmem:[%s176 + $0x628] sm:$0xf]
        %v595 = vld [vmem:[%s176 + $0x62c] sm:$0xf]
        %v596 = vld [vmem:[%s176 + $0x630] sm:$0xf]
        %v597 = vld [vmem:[%s176 + $0x634] sm:$0xf]
        %v598 = vld [vmem:[%s176 + $0x638] sm:$0xf]
        %v599 = vld [vmem:[%s176 + $0x63c] sm:$0xf]
        %v600 = vld [vmem:[%s176 + $0x640] sm:$0xf]
        %v601 = vld [vmem:[%s176 + $0x644] sm:$0xf]
        %v602 = vld [vmem:[%s176 + $0x648] sm:$0xf]
        %v603 = vld [vmem:[%s176 + $0x64c] sm:$0xf]
        %v604 = vld [vmem:[%s176 + $0x650] sm:$0xf]
        %v605 = vld [vmem:[%s176 + $0x654] sm:$0xf]
        %v606 = vld [vmem:[%s176 + $0x658] sm:$0xf]
        %v607 = vld [vmem:[%s176 + $0x65c] sm:$0xf]
        %v608 = vld [vmem:[%s176 + $0x660] sm:$0xf]
        %v609 = vld [vmem:[%s176 + $0x664] sm:$0xf]
        %v610 = vld [vmem:[%s176 + $0x668] sm:$0xf]
        %v611 = vld [vmem:[%s176 + $0x66c] sm:$0xf]
        %v612 = vld [vmem:[%s176 + $0x670] sm:$0xf]
        %v613 = vld [vmem:[%s176 + $0x674] sm:$0xf]
        %v614 = vld [vmem:[%s176 + $0x678] sm:$0xf]
        %v615 = vld [vmem:[%s176 + $0x67c] sm:$0xf]
        %v616 = vld [vmem:[%s176 + $0x680] sm:$0xf]
        %v617 = vld [vmem:[%s176 + $0x684] sm:$0xf]
        %v618 = vld [vmem:[%s176 + $0x688] sm:$0xf]
        %v619 = vld [vmem:[%s176 + $0x68c] sm:$0xf]
        %v620 = vld [vmem:[%s176 + $0x690] sm:$0xf]
        %v621 = vld [vmem:[%s176 + $0x694] sm:$0xf]
        %v622 = vld [vmem:[%s176 + $0x698] sm:$0xf]
        %v623 = vld [vmem:[%s176 + $0x69c] sm:$0xf]
        %v624 = vld [vmem:[%s176 + $0x6a0] sm:$0xf]
        %v625 = vld [vmem:[%s176 + $0x6a4] sm:$0xf]
        %v626 = vld [vmem:[%s176 + $0x6a8] sm:$0xf]
        %v627 = vld [vmem:[%s176 + $0x6ac] sm:$0xf]
        %v628 = vld [vmem:[%s176 + $0x6b0] sm:$0xf]
        %v629 = vld [vmem:[%s176 + $0x6b4] sm:$0xf]
        %v630 = vld [vmem:[%s176 + $0x6b8] sm:$0xf]
        %v631 = vld [vmem:[%s176 + $0x6bc] sm:$0xf]
        %v632 = vld [vmem:[%s176 + $0x6c0] sm:$0xf]
        %v633 = vld [vmem:[%s176 + $0x6c4] sm:$0xf]
        %v634 = vld [vmem:[%s176 + $0x6c8] sm:$0xf]
        %v635 = vld [vmem:[%s176 + $0x6cc] sm:$0xf]
        %v636 = vld [vmem:[%s176 + $0x6d0] sm:$0xf]
        %v637 = vld [vmem:[%s176 + $0x6d4] sm:$0xf]
        %v638 = vld [vmem:[%s176 + $0x6d8] sm:$0xf]
        %v639 = vld [vmem:[%s176 + $0x6dc] sm:$0xf]
        %v640 = vld [vmem:[%s176 + $0x6e0] sm:$0xf]
        %v641 = vld [vmem:[%s176 + $0x6e4] sm:$0xf]
        %v642 = vld [vmem:[%s176 + $0x6e8] sm:$0xf]
        %v643 = vld [vmem:[%s176 + $0x6ec] sm:$0xf]
        %v644 = vld [vmem:[%s176 + $0x6f0] sm:$0xf]
        %v645 = vld [vmem:[%s176 + $0x6f4] sm:$0xf]
        %v646 = vld [vmem:[%s176 + $0x6f8] sm:$0xf]
        %v647 = vld [vmem:[%s176 + $0x6fc] sm:$0xf]
        %v648 = vld [vmem:[%s176 + $0x700] sm:$0xf]
        %v649 = vld [vmem:[%s176 + $0x704] sm:$0xf]
        %v650 = vld [vmem:[%s176 + $0x708] sm:$0xf]
        %v651 = vld [vmem:[%s176 + $0x70c] sm:$0xf]
        %v652 = vld [vmem:[%s176 + $0x710] sm:$0xf]
        %v653 = vld [vmem:[%s176 + $0x714] sm:$0xf]
        %v654 = vld [vmem:[%s176 + $0x718] sm:$0xf]
        %v655 = vld [vmem:[%s176 + $0x71c] sm:$0xf]
        %v656 = vld [vmem:[%s176 + $0x720] sm:$0xf]
        %v657 = vld [vmem:[%s176 + $0x724] sm:$0xf]
        %v658 = vld [vmem:[%s176 + $0x728] sm:$0xf]
        %v659 = vld [vmem:[%s176 + $0x72c] sm:$0xf]
        %v660 = vld [vmem:[%s176 + $0x730] sm:$0xf]
        %v661 = vld [vmem:[%s176 + $0x734] sm:$0xf]
        %v662 = vld [vmem:[%s176 + $0x738] sm:$0xf]
        %v663 = vld [vmem:[%s176 + $0x73c] sm:$0xf]
        %v664 = vld [vmem:[%s176 + $0x740] sm:$0xf]
        %v665 = vld [vmem:[%s176 + $0x744] sm:$0xf]
        %v666 = vld [vmem:[%s176 + $0x748] sm:$0xf]
        %v667 = vld [vmem:[%s176 + $0x74c] sm:$0xf]
        %v668 = vld [vmem:[%s176 + $0x750] sm:$0xf]
        %v669 = vld [vmem:[%s176 + $0x754] sm:$0xf]
        %v670 = vld [vmem:[%s176 + $0x758] sm:$0xf]
        %v671 = vld [vmem:[%s176 + $0x75c] sm:$0xf]
        %v672 = vld [vmem:[%s176 + $0x760] sm:$0xf]
        %v673 = vld [vmem:[%s176 + $0x764] sm:$0xf]
        %v674 = vld [vmem:[%s176 + $0x768] sm:$0xf]
        %v675 = vld [vmem:[%s176 + $0x76c] sm:$0xf]
        %v676 = vld [vmem:[%s176 + $0x770] sm:$0xf]
        %v677 = vld [vmem:[%s176 + $0x774] sm:$0xf]
        %v678 = vld [vmem:[%s176 + $0x778] sm:$0xf]
        %v679 = vld [vmem:[%s176 + $0x77c] sm:$0xf]
        %v680 = vld [vmem:[%s176 + $0x780] sm:$0xf]
        %v681 = vld [vmem:[%s176 + $0x784] sm:$0xf]
        %v682 = vld [vmem:[%s176 + $0x788] sm:$0xf]
        %v683 = vld [vmem:[%s176 + $0x78c] sm:$0xf]
        %v684 = vld [vmem:[%s176 + $0x790] sm:$0xf]
        %v685 = vld [vmem:[%s176 + $0x794] sm:$0xf]
        %v686 = vld [vmem:[%s176 + $0x798] sm:$0xf]
        %v687 = vld [vmem:[%s176 + $0x79c] sm:$0xf]
        %v688 = vld [vmem:[%s176 + $0x7a0] sm:$0xf]
        %v689 = vld [vmem:[%s176 + $0x7a4] sm:$0xf]
        %v690 = vld [vmem:[%s176 + $0x7a8] sm:$0xf]
        %v691 = vld [vmem:[%s176 + $0x7ac] sm:$0xf]
        %v692 = vld [vmem:[%s176 + $0x7b0] sm:$0xf]
        %v693 = vld [vmem:[%s176 + $0x7b4] sm:$0xf]
        %v694 = vld [vmem:[%s176 + $0x7b8] sm:$0xf]
        %v695 = vld [vmem:[%s176 + $0x7bc] sm:$0xf]
        %v696 = vld [vmem:[%s176 + $0x7c0] sm:$0xf]
        %v697 = vld [vmem:[%s176 + $0x7c4] sm:$0xf]
        %v698 = vld [vmem:[%s176 + $0x7c8] sm:$0xf]
        %v699 = vld [vmem:[%s176 + $0x7cc] sm:$0xf]
        %v700 = vld [vmem:[%s176 + $0x7d0] sm:$0xf]
        %v701 = vld [vmem:[%s176 + $0x7d4] sm:$0xf]
        %v702 = vld [vmem:[%s176 + $0x7d8] sm:$0xf]
        %v703 = vld [vmem:[%s176 + $0x7dc] sm:$0xf]
        %v704 = vld [vmem:[%s176 + $0x7e0] sm:$0xf]
        %v705 = vld [vmem:[%s176 + $0x7e4] sm:$0xf]
        %v706 = vld [vmem:[%s176 + $0x7e8] sm:$0xf]
        %v707 = vld [vmem:[%s176 + $0x7ec] sm:$0xf]
        %v708 = vld [vmem:[%s176 + $0x7f0] sm:$0xf]
        %v709 = vld [vmem:[%s176 + $0x7f4] sm:$0xf]
        %v710 = vld [vmem:[%s176 + $0x7f8] sm:$0xf]
        %v711 = vld [vmem:[%s176 + $0x7fc] sm:$0xf]
        %v712 = vld [vmem:[%s176 + $0x800] sm:$0xf]
        %v713 = vld [vmem:[%s176 + $0x804] sm:$0xf]
        %v714 = vld [vmem:[%s176 + $0x808] sm:$0xf]
        %v715 = vld [vmem:[%s176 + $0x80c] sm:$0xf]
        %v716 = vld [vmem:[%s176 + $0x810] sm:$0xf]
        %v717 = vld [vmem:[%s176 + $0x814] sm:$0xf]
        %v718 = vld [vmem:[%s176 + $0x818] sm:$0xf]
        %v719 = vld [vmem:[%s176 + $0x81c] sm:$0xf]
        %v720 = vld [vmem:[%s176 + $0x820] sm:$0xf]
        %v721 = vld [vmem:[%s176 + $0x824] sm:$0xf]
        %v722 = vld [vmem:[%s176 + $0x828] sm:$0xf]
        %v723 = vld [vmem:[%s176 + $0x82c] sm:$0xf]
        %v724 = vld [vmem:[%s176 + $0x830] sm:$0xf]
        %v725 = vld [vmem:[%s176 + $0x834] sm:$0xf]
        %v726 = vld [vmem:[%s176 + $0x838] sm:$0xf]
        %v727 = vld [vmem:[%s176 + $0x83c] sm:$0xf]
        %v728 = vld [vmem:[%s176 + $0x840] sm:$0xf]
        %v729 = vld [vmem:[%s176 + $0x844] sm:$0xf]
        %v730 = vld [vmem:[%s176 + $0x848] sm:$0xf]
        %v731 = vld [vmem:[%s176 + $0x84c] sm:$0xf]
        %v732 = vld [vmem:[%s176 + $0x850] sm:$0xf]
        %v733 = vld [vmem:[%s176 + $0x854] sm:$0xf]
        %v734 = vld [vmem:[%s176 + $0x858] sm:$0xf]
        %v735 = vld [vmem:[%s176 + $0x85c] sm:$0xf]
        %v736 = vld [vmem:[%s176 + $0x860] sm:$0xf]
        %v737 = vld [vmem:[%s176 + $0x864] sm:$0xf]
        %v738 = vld [vmem:[%s176 + $0x868] sm:$0xf]
        %v739 = vld [vmem:[%s176 + $0x86c] sm:$0xf]
        %v740 = vld [vmem:[%s176 + $0x870] sm:$0xf]
        %v741 = vld [vmem:[%s176 + $0x874] sm:$0xf]
        %v742 = vld [vmem:[%s176 + $0x878] sm:$0xf]
        %v743 = vld [vmem:[%s176 + $0x87c] sm:$0xf]
        %v744 = vld [vmem:[%s176 + $0x880] sm:$0xf]
        %v745 = vld [vmem:[%s176 + $0x884] sm:$0xf]
        %v746 = vld [vmem:[%s176 + $0x888] sm:$0xf]
        %v747 = vld [vmem:[%s176 + $0x88c] sm:$0xf]
        %v748 = vld [vmem:[%s176 + $0x890] sm:$0xf]
        %v749 = vld [vmem:[%s176 + $0x894] sm:$0xf]
        %v750 = vld [vmem:[%s176 + $0x898] sm:$0xf]
        %v751 = vld [vmem:[%s176 + $0x89c] sm:$0xf]
        %v752 = vld [vmem:[%s176 + $0x8a0] sm:$0xf]
        %v753 = vld [vmem:[%s176 + $0x8a4] sm:$0xf]
        %v754 = vld [vmem:[%s176 + $0x8a8] sm:$0xf]
        %v755 = vld [vmem:[%s176 + $0x8ac] sm:$0xf]
        %v756 = vld [vmem:[%s176 + $0x8b0] sm:$0xf]
        %v757 = vld [vmem:[%s176 + $0x8b4] sm:$0xf]
        %v758 = vld [vmem:[%s176 + $0x8b8] sm:$0xf]
        %v759 = vld [vmem:[%s176 + $0x8bc] sm:$0xf]
        %v760 = vld [vmem:[%s176 + $0x8c0] sm:$0xf]
        %v761 = vld [vmem:[%s176 + $0x8c4] sm:$0xf]
        %v762 = vld [vmem:[%s176 + $0x8c8] sm:$0xf]
        %v763 = vld [vmem:[%s176 + $0x8cc] sm:$0xf]
        %v764 = vld [vmem:[%s176 + $0x8d0] sm:$0xf]
        %v765 = vld [vmem:[%s176 + $0x8d4] sm:$0xf]
        %v766 = vld [vmem:[%s176 + $0x8d8] sm:$0xf]
        %v767 = vld [vmem:[%s176 + $0x8dc] sm:$0xf]
        %v768 = vld [vmem:[%s176 + $0x8e0] sm:$0xf]
        %v769 = vld [vmem:[%s176 + $0x8e4] sm:$0xf]
        %v770 = vld [vmem:[%s176 + $0x8e8] sm:$0xf]
        %v771 = vld [vmem:[%s176 + $0x8ec] sm:$0xf]
        %v772 = vld [vmem:[%s176 + $0x8f0] sm:$0xf]
        %v773 = vld [vmem:[%s176 + $0x8f4] sm:$0xf]
        %v774 = vld [vmem:[%s176 + $0x8f8] sm:$0xf]
        %v775 = vld [vmem:[%s176 + $0x8fc] sm:$0xf]
        %v776 = vld [vmem:[%s176 + $0x900] sm:$0xf]
        %v777 = vld [vmem:[%s176 + $0x904] sm:$0xf]
        %v778 = vld [vmem:[%s176 + $0x908] sm:$0xf]
        %v779 = vld [vmem:[%s176 + $0x90c] sm:$0xf]
        %v780 = vld [vmem:[%s176 + $0x910] sm:$0xf]
        %v781 = vld [vmem:[%s176 + $0x914] sm:$0xf]
        %v782 = vld [vmem:[%s176 + $0x918] sm:$0xf]
        %v783 = vld [vmem:[%s176 + $0x91c] sm:$0xf]
        %v784 = vld [vmem:[%s176 + $0x920] sm:$0xf]
        %v785 = vld [vmem:[%s176 + $0x924] sm:$0xf]
        %v786 = vld [vmem:[%s176 + $0x928] sm:$0xf]
        %v787 = vld [vmem:[%s176 + $0x92c] sm:$0xf]
        %v788 = vld [vmem:[%s176 + $0x930] sm:$0xf]
        %v789 = vld [vmem:[%s176 + $0x934] sm:$0xf]
        %v790 = vld [vmem:[%s176 + $0x938] sm:$0xf]
        %v791 = vld [vmem:[%s176 + $0x93c] sm:$0xf]
        %v792 = vld [vmem:[%s176 + $0x940] sm:$0xf]
        %v793 = vld [vmem:[%s176 + $0x944] sm:$0xf]
        %v794 = vld [vmem:[%s176 + $0x948] sm:$0xf]
        %v795 = vld [vmem:[%s176 + $0x94c] sm:$0xf]
        %v796 = vld [vmem:[%s176 + $0x950] sm:$0xf]
        %v797 = vld [vmem:[%s176 + $0x954] sm:$0xf]
        %v798 = vld [vmem:[%s176 + $0x958] sm:$0xf]
        %v799 = vld [vmem:[%s176 + $0x95c] sm:$0xf]
        %v800 = vld [vmem:[%s176 + $0x960] sm:$0xf]
        %v801 = vld [vmem:[%s176 + $0x964] sm:$0xf]
        %v802 = vld [vmem:[%s176 + $0x968] sm:$0xf]
        %v803 = vld [vmem:[%s176 + $0x96c] sm:$0xf]
        %v804 = vld [vmem:[%s176 + $0x970] sm:$0xf]
        %v805 = vld [vmem:[%s176 + $0x974] sm:$0xf]
        %v806 = vld [vmem:[%s176 + $0x978] sm:$0xf]
        %v807 = vld [vmem:[%s176 + $0x97c] sm:$0xf]
        %v808 = vld [vmem:[%s176 + $0x980] sm:$0xf]
        %v809 = vld [vmem:[%s176 + $0x984] sm:$0xf]
        %v810 = vld [vmem:[%s176 + $0x988] sm:$0xf]
        %v811 = vld [vmem:[%s176 + $0x98c] sm:$0xf]
        %v812 = vld [vmem:[%s176 + $0x990] sm:$0xf]
        %v813 = vld [vmem:[%s176 + $0x994] sm:$0xf]
        %v814 = vld [vmem:[%s176 + $0x998] sm:$0xf]
        %v815 = vld [vmem:[%s176 + $0x99c] sm:$0xf]
        %v816 = vld [vmem:[%s176 + $0x9a0] sm:$0xf]
        %v817 = vld [vmem:[%s176 + $0x9a4] sm:$0xf]
        %v818 = vld [vmem:[%s176 + $0x9a8] sm:$0xf]
        %v819 = vld [vmem:[%s176 + $0x9ac] sm:$0xf]
        %v820 = vld [vmem:[%s176 + $0x9b0] sm:$0xf]
        %v821 = vld [vmem:[%s176 + $0x9b4] sm:$0xf]
        %v822 = vld [vmem:[%s176 + $0x9b8] sm:$0xf]
        %v823 = vld [vmem:[%s176 + $0x9bc] sm:$0xf]
        %v824 = vld [vmem:[%s176 + $0x9c0] sm:$0xf]
        %v825 = vld [vmem:[%s176 + $0x9c4] sm:$0xf]
        %v826 = vld [vmem:[%s176 + $0x9c8] sm:$0xf]
        %v827 = vld [vmem:[%s176 + $0x9cc] sm:$0xf]
        %v828 = vld [vmem:[%s176 + $0x9d0] sm:$0xf]
        %v829 = vld [vmem:[%s176 + $0x9d4] sm:$0xf]
        %v830 = vld [vmem:[%s176 + $0x9d8] sm:$0xf]
        %v831 = vld [vmem:[%s176 + $0x9dc] sm:$0xf]
        %v832 = vld [vmem:[%s176 + $0x9e0] sm:$0xf]
        %v833 = vld [vmem:[%s176 + $0x9e4] sm:$0xf]
        %v834 = vld [vmem:[%s176 + $0x9e8] sm:$0xf]
        %v835 = vld [vmem:[%s176 + $0x9ec] sm:$0xf]
        %v836 = vld [vmem:[%s176 + $0x9f0] sm:$0xf]
        %v837 = vld [vmem:[%s176 + $0x9f4] sm:$0xf]
        %v838 = vld [vmem:[%s176 + $0x9f8] sm:$0xf]
        %v839 = vld [vmem:[%s176 + $0x9fc] sm:$0xf]
        %v840 = vld [vmem:[%s176 + $0xa00] sm:$0xf]
        %v841 = vld [vmem:[%s176 + $0xa04] sm:$0xf]
        %v842 = vld [vmem:[%s176 + $0xa08] sm:$0xf]
        %v843 = vld [vmem:[%s176 + $0xa0c] sm:$0xf]
        %v844 = vld [vmem:[%s176 + $0xa10] sm:$0xf]
        %v845 = vld [vmem:[%s176 + $0xa14] sm:$0xf]
        %v846 = vld [vmem:[%s176 + $0xa18] sm:$0xf]
        %v847 = vld [vmem:[%s176 + $0xa1c] sm:$0xf]
        %v848 = vld [vmem:[%s176 + $0xa20] sm:$0xf]
        %v849 = vld [vmem:[%s176 + $0xa24] sm:$0xf]
        %v850 = vld [vmem:[%s176 + $0xa28] sm:$0xf]
        %v851 = vld [vmem:[%s176 + $0xa2c] sm:$0xf]
        %v852 = vld [vmem:[%s176 + $0xa30] sm:$0xf]
        %v853 = vld [vmem:[%s176 + $0xa34] sm:$0xf]
        %v854 = vld [vmem:[%s176 + $0xa38] sm:$0xf]
        %v855 = vld [vmem:[%s176 + $0xa3c] sm:$0xf]
        %v856 = vld [vmem:[%s176 + $0xa40] sm:$0xf]
        %v857 = vld [vmem:[%s176 + $0xa44] sm:$0xf]
        %v858 = vld [vmem:[%s176 + $0xa48] sm:$0xf]
        %v859 = vld [vmem:[%s176 + $0xa4c] sm:$0xf]
        %v860 = vld [vmem:[%s176 + $0xa50] sm:$0xf]
        %v861 = vld [vmem:[%s176 + $0xa54] sm:$0xf]
        %v862 = vld [vmem:[%s176 + $0xa58] sm:$0xf]
        %v863 = vld [vmem:[%s176 + $0xa5c] sm:$0xf]
        %v864 = vld [vmem:[%s176 + $0xa60] sm:$0xf]
        %v865 = vld [vmem:[%s176 + $0xa64] sm:$0xf]
        %v866 = vld [vmem:[%s176 + $0xa68] sm:$0xf]
        %v867 = vld [vmem:[%s176 + $0xa6c] sm:$0xf]
        %v868 = vld [vmem:[%s176 + $0xa70] sm:$0xf]
        %v869 = vld [vmem:[%s176 + $0xa74] sm:$0xf]
        %v870 = vld [vmem:[%s176 + $0xa78] sm:$0xf]
        %v871 = vld [vmem:[%s176 + $0xa7c] sm:$0xf]
        %v872 = vld [vmem:[%s176 + $0xa80] sm:$0xf]
        %v873 = vld [vmem:[%s176 + $0xa84] sm:$0xf]
        %v874 = vld [vmem:[%s176 + $0xa88] sm:$0xf]
        %v875 = vld [vmem:[%s176 + $0xa8c] sm:$0xf]
        %v876 = vld [vmem:[%s176 + $0xa90] sm:$0xf]
        %v877 = vld [vmem:[%s176 + $0xa94] sm:$0xf]
        %v878 = vld [vmem:[%s176 + $0xa98] sm:$0xf]
        %v879 = vld [vmem:[%s176 + $0xa9c] sm:$0xf]
        %v880 = vld [vmem:[%s176 + $0xaa0] sm:$0xf]
        %v881 = vld [vmem:[%s176 + $0xaa4] sm:$0xf]
        %v882 = vld [vmem:[%s176 + $0xaa8] sm:$0xf]
        %v883 = vld [vmem:[%s176 + $0xaac] sm:$0xf]
        %v884 = vld [vmem:[%s176 + $0xab0] sm:$0xf]
        %v885 = vld [vmem:[%s176 + $0xab4] sm:$0xf]
        %v886 = vld [vmem:[%s176 + $0xab8] sm:$0xf]
        %v887 = vld [vmem:[%s176 + $0xabc] sm:$0xf]
        %v888 = vld [vmem:[%s176 + $0xac0] sm:$0xf]
        %v889 = vld [vmem:[%s176 + $0xac4] sm:$0xf]
        %v890 = vld [vmem:[%s176 + $0xac8] sm:$0xf]
        %v891 = vld [vmem:[%s176 + $0xacc] sm:$0xf]
        %v892 = vld [vmem:[%s176 + $0xad0] sm:$0xf]
        %v893 = vld [vmem:[%s176 + $0xad4] sm:$0xf]
        %v894 = vld [vmem:[%s176 + $0xad8] sm:$0xf]
        %v895 = vld [vmem:[%s176 + $0xadc] sm:$0xf]
        %v896 = vld [vmem:[%s176 + $0xae0] sm:$0xf]
        %v897 = vld [vmem:[%s176 + $0xae4] sm:$0xf]
        %v898 = vld [vmem:[%s176 + $0xae8] sm:$0xf]
        %v899 = vld [vmem:[%s176 + $0xaec] sm:$0xf]
        %v900 = vld [vmem:[%s176 + $0xaf0] sm:$0xf]
        %v901 = vld [vmem:[%s176 + $0xaf4] sm:$0xf]
        %v902 = vld [vmem:[%s176 + $0xaf8] sm:$0xf]
        %v903 = vld [vmem:[%s176 + $0xafc] sm:$0xf]
        %v904 = vld [vmem:[%s176 + $0xb00] sm:$0xf]
        %v905 = vld [vmem:[%s176 + $0xb04] sm:$0xf]
        %v906 = vld [vmem:[%s176 + $0xb08] sm:$0xf]
        %v907 = vld [vmem:[%s176 + $0xb0c] sm:$0xf]
        %v908 = vld [vmem:[%s176 + $0xb10] sm:$0xf]
        %v909 = vld [vmem:[%s176 + $0xb14] sm:$0xf]
        %v910 = vld [vmem:[%s176 + $0xb18] sm:$0xf]
        %v911 = vld [vmem:[%s176 + $0xb1c] sm:$0xf]
        %v912 = vld [vmem:[%s176 + $0xb20] sm:$0xf]
        %v913 = vld [vmem:[%s176 + $0xb24] sm:$0xf]
        %v914 = vld [vmem:[%s176 + $0xb28] sm:$0xf]
        %v915 = vld [vmem:[%s176 + $0xb2c] sm:$0xf]
        %v916 = vld [vmem:[%s176 + $0xb30] sm:$0xf]
        %v917 = vld [vmem:[%s176 + $0xb34] sm:$0xf]
        %v918 = vld [vmem:[%s176 + $0xb38] sm:$0xf]
        %v919 = vld [vmem:[%s176 + $0xb3c] sm:$0xf]
        %v920 = vld [vmem:[%s176 + $0xb40] sm:$0xf]
        %v921 = vld [vmem:[%s176 + $0xb44] sm:$0xf]
        %v922 = vld [vmem:[%s176 + $0xb48] sm:$0xf]
        %v923 = vld [vmem:[%s176 + $0xb4c] sm:$0xf]
        %v924 = vld [vmem:[%s176 + $0xb50] sm:$0xf]
        %v925 = vld [vmem:[%s176 + $0xb54] sm:$0xf]
        %v926 = vld [vmem:[%s176 + $0xb58] sm:$0xf]
        %v927 = vld [vmem:[%s176 + $0xb5c] sm:$0xf]
        %v928 = vld [vmem:[%s176 + $0xb60] sm:$0xf]
        %v929 = vld [vmem:[%s176 + $0xb64] sm:$0xf]
        %v930 = vld [vmem:[%s176 + $0xb68] sm:$0xf]
        %v931 = vld [vmem:[%s176 + $0xb6c] sm:$0xf]
        %v932 = vld [vmem:[%s176 + $0xb70] sm:$0xf]
        %v933 = vld [vmem:[%s176 + $0xb74] sm:$0xf]
        %v934 = vld [vmem:[%s176 + $0xb78] sm:$0xf]
        %v935 = vld [vmem:[%s176 + $0xb7c] sm:$0xf]
        %v936 = vld [vmem:[%s176 + $0xb80] sm:$0xf]
        %v937 = vld [vmem:[%s176 + $0xb84] sm:$0xf]
        %v938 = vld [vmem:[%s176 + $0xb88] sm:$0xf]
        %v939 = vld [vmem:[%s176 + $0xb8c] sm:$0xf]
        %v940 = vld [vmem:[%s176 + $0xb90] sm:$0xf]
        %v941 = vld [vmem:[%s176 + $0xb94] sm:$0xf]
        %v942 = vld [vmem:[%s176 + $0xb98] sm:$0xf]
        %v943 = vld [vmem:[%s176 + $0xb9c] sm:$0xf]
        %v944 = vld [vmem:[%s176 + $0xba0] sm:$0xf]
        %v945 = vld [vmem:[%s176 + $0xba4] sm:$0xf]
        %v946 = vld [vmem:[%s176 + $0xba8] sm:$0xf]
        %v947 = vld [vmem:[%s176 + $0xbac] sm:$0xf]
        %v948 = vld [vmem:[%s176 + $0xbb0] sm:$0xf]
        %v949 = vld [vmem:[%s176 + $0xbb4] sm:$0xf]
        %v950 = vld [vmem:[%s176 + $0xbb8] sm:$0xf]
        %v951 = vld [vmem:[%s176 + $0xbbc] sm:$0xf]
        %v952 = vld [vmem:[%s176 + $0xbc0] sm:$0xf]
        %v953 = vld [vmem:[%s176 + $0xbc4] sm:$0xf]
        %v954 = vld [vmem:[%s176 + $0xbc8] sm:$0xf]
        %v955 = vld [vmem:[%s176 + $0xbcc] sm:$0xf]
        %v956 = vld [vmem:[%s176 + $0xbd0] sm:$0xf]
        %v957 = vld [vmem:[%s176 + $0xbd4] sm:$0xf]
        %v958 = vld [vmem:[%s176 + $0xbd8] sm:$0xf]
        %v959 = vld [vmem:[%s176 + $0xbdc] sm:$0xf]
        %v960 = vld [vmem:[%s176 + $0xbe0] sm:$0xf]
        %v961 = vld [vmem:[%s176 + $0xbe4] sm:$0xf]
        %v962 = vld [vmem:[%s176 + $0xbe8] sm:$0xf]
        %v963 = vld [vmem:[%s176 + $0xbec] sm:$0xf]
        %v964 = vld [vmem:[%s176 + $0xbf0] sm:$0xf]
        %v965 = vld [vmem:[%s176 + $0xbf4] sm:$0xf]
        %v966 = vld [vmem:[%s176 + $0xbf8] sm:$0xf]
        %v967 = vld [vmem:[%s176 + $0xbfc] sm:$0xf]
        %v968 = vld [vmem:[%s176 + $0xc00] sm:$0xf]
        %v969 = vld [vmem:[%s176 + $0xc04] sm:$0xf]
        %v970 = vld [vmem:[%s176 + $0xc08] sm:$0xf]
        %v971 = vld [vmem:[%s176 + $0xc0c] sm:$0xf]
        %v972 = vld [vmem:[%s176 + $0xc10] sm:$0xf]
        %v973 = vld [vmem:[%s176 + $0xc14] sm:$0xf]
        %v974 = vld [vmem:[%s176 + $0xc18] sm:$0xf]
        %v975 = vld [vmem:[%s176 + $0xc1c] sm:$0xf]
        %v976 = vld [vmem:[%s176 + $0xc20] sm:$0xf]
        %v977 = vld [vmem:[%s176 + $0xc24] sm:$0xf]
        %v978 = vld [vmem:[%s176 + $0xc28] sm:$0xf]
        %v979 = vld [vmem:[%s176 + $0xc2c] sm:$0xf]
        %v980 = vld [vmem:[%s176 + $0xc30] sm:$0xf]
        %v981 = vld [vmem:[%s176 + $0xc34] sm:$0xf]
        %v982 = vld [vmem:[%s176 + $0xc38] sm:$0xf]
        %v983 = vld [vmem:[%s176 + $0xc3c] sm:$0xf]
        %v984 = vld [vmem:[%s176 + $0xc40] sm:$0xf]
        %v985 = vld [vmem:[%s176 + $0xc44] sm:$0xf]
        %v986 = vld [vmem:[%s176 + $0xc48] sm:$0xf]
        %v987 = vld [vmem:[%s176 + $0xc4c] sm:$0xf]
        %v988 = vld [vmem:[%s176 + $0xc50] sm:$0xf]
        %v989 = vld [vmem:[%s176 + $0xc54] sm:$0xf]
        %v990 = vld [vmem:[%s176 + $0xc58] sm:$0xf]
        %v991 = vld [vmem:[%s176 + $0xc5c] sm:$0xf]
        %v992 = vld [vmem:[%s176 + $0xc60] sm:$0xf]
        %v993 = vld [vmem:[%s176 + $0xc64] sm:$0xf]
        %v994 = vld [vmem:[%s176 + $0xc68] sm:$0xf]
        %v995 = vld [vmem:[%s176 + $0xc6c] sm:$0xf]
        %v996 = vld [vmem:[%s176 + $0xc70] sm:$0xf]
        %v997 = vld [vmem:[%s176 + $0xc74] sm:$0xf]
        %v998 = vld [vmem:[%s176 + $0xc78] sm:$0xf]
        %v999 = vld [vmem:[%s176 + $0xc7c] sm:$0xf]
        %v1000 = vld [vmem:[%s176 + $0xc80] sm:$0xf]
        %v1001 = vld [vmem:[%s176 + $0xc84] sm:$0xf]
        %v1002 = vld [vmem:[%s176 + $0xc88] sm:$0xf]
        %v1003 = vld [vmem:[%s176 + $0xc8c] sm:$0xf]
        %v1004 = vld [vmem:[%s176 + $0xc90] sm:$0xf]
        %v1005 = vld [vmem:[%s176 + $0xc94] sm:$0xf]
        %v1006 = vld [vmem:[%s176 + $0xc98] sm:$0xf]
        %v1007 = vld [vmem:[%s176 + $0xc9c] sm:$0xf]
        %v1008 = vld [vmem:[%s176 + $0xca0] sm:$0xf]
        %v1009 = vld [vmem:[%s176 + $0xca4] sm:$0xf]
        %v1010 = vld [vmem:[%s176 + $0xca8] sm:$0xf]
        %v1011 = vld [vmem:[%s176 + $0xcac] sm:$0xf]
        %v1012 = vld [vmem:[%s176 + $0xcb0] sm:$0xf]
        %v1013 = vld [vmem:[%s176 + $0xcb4] sm:$0xf]
        %v1014 = vld [vmem:[%s176 + $0xcb8] sm:$0xf]
        %v1015 = vld [vmem:[%s176 + $0xcbc] sm:$0xf]
        %v1016 = vld [vmem:[%s176 + $0xcc0] sm:$0xf]
        %v1017 = vld [vmem:[%s176 + $0xcc4] sm:$0xf]
        %v1018 = vld [vmem:[%s176 + $0xcc8] sm:$0xf]
        %v1019 = vld [vmem:[%s176 + $0xccc] sm:$0xf]
        %v1020 = vld [vmem:[%s176 + $0xcd0] sm:$0xf]
        %v1021 = vld [vmem:[%s176 + $0xcd4] sm:$0xf]
        %v1022 = vld [vmem:[%s176 + $0xcd8] sm:$0xf]
        %v1023 = vld [vmem:[%s176 + $0xcdc] sm:$0xf]
        %v1024 = vld [vmem:[%s176 + $0xce0] sm:$0xf]
        %v1025 = vld [vmem:[%s176 + $0xce4] sm:$0xf]
        %v1026 = vld [vmem:[%s176 + $0xce8] sm:$0xf]
        %v1027 = vld [vmem:[%s176 + $0xcec] sm:$0xf]
        %v1028 = vld [vmem:[%s176 + $0xcf0] sm:$0xf]
        %v1029 = vld [vmem:[%s176 + $0xcf4] sm:$0xf]
        %v1030 = vld [vmem:[%s176 + $0xcf8] sm:$0xf]
        %v1031 = vld [vmem:[%s176 + $0xcfc] sm:$0xf]
        %v1032 = vld [vmem:[%s176 + $0xd00] sm:$0xf]
        %v1033 = vld [vmem:[%s176 + $0xd04] sm:$0xf]
        %v1034 = vld [vmem:[%s176 + $0xd08] sm:$0xf]
        %v1035 = vld [vmem:[%s176 + $0xd0c] sm:$0xf]
        %v1036 = vld [vmem:[%s176 + $0xd10] sm:$0xf]
        %v1037 = vld [vmem:[%s176 + $0xd14] sm:$0xf]
        %v1038 = vld [vmem:[%s176 + $0xd18] sm:$0xf]
        %v1039 = vld [vmem:[%s176 + $0xd1c] sm:$0xf]
        %v1040 = vld [vmem:[%s176 + $0xd20] sm:$0xf]
        %v1041 = vld [vmem:[%s176 + $0xd24] sm:$0xf]
        %v1042 = vld [vmem:[%s176 + $0xd28] sm:$0xf]
        %v1043 = vld [vmem:[%s176 + $0xd2c] sm:$0xf]
        %v1044 = vld [vmem:[%s176 + $0xd30] sm:$0xf]
        %v1045 = vld [vmem:[%s176 + $0xd34] sm:$0xf]
        %v1046 = vld [vmem:[%s176 + $0xd38] sm:$0xf]
        %v1047 = vld [vmem:[%s176 + $0xd3c] sm:$0xf]
        %v1055 = vcombine.high %v193, %v193
        %v1057 = vunpack.c.l.s4 1966171168
        %v1058 = vunpack.c.0.s8 %v1057
        %v1059 = vlaneseq
        %v1060 = vshrl.u32 %v1059, 7
        %v1061 = vsub.s32 %v1058, %v1060
        %v1062 = vrot.slane %v193, %v1061
        %v1064 = vunpack.c.l.s4 1966171168
        %v1065 = vunpack.c.0.s8 %v1064
        %v1066 = vlaneseq
        %v1067 = vshrl.u32 %v1066, 7
        %v1068 = vsub.s32 %v1065, %v1067
        %v1069 = vrot.slane %v1055, %v1068
        %v1070 = vcombine.high %v1062, %v1062
        %v1071 = vcombine.high %v1069, %v1069
        %v1073 = vunpack.c.l.s4 1966171168
        %v1074 = vunpack.c.0.s8 %v1073
        %v1075 = vlaneseq
        %v1076 = vshrl.u32 %v1075, 7
        %v1077 = vsub.s32 %v1074, %v1076
        %v1078 = vrot.slane %v1062, %v1077
        %v1080 = vunpack.c.l.s4 1966171168
        %v1081 = vunpack.c.0.s8 %v1080
        %v1082 = vlaneseq
        %v1083 = vshrl.u32 %v1082, 7
        %v1084 = vsub.s32 %v1081, %v1083
        %v1085 = vrot.slane %v1069, %v1084
        %v1087 = vunpack.c.l.s4 1966171168
        %v1088 = vunpack.c.0.s8 %v1087
        %v1089 = vlaneseq
        %v1090 = vshrl.u32 %v1089, 7
        %v1091 = vsub.s32 %v1088, %v1090
        %v1092 = vrot.slane %v1070, %v1091
        %v1094 = vunpack.c.l.s4 1966171168
        %v1095 = vunpack.c.0.s8 %v1094
        %v1096 = vlaneseq
        %v1097 = vshrl.u32 %v1096, 7
        %v1098 = vsub.s32 %v1095, %v1097
        %v1099 = vrot.slane %v1071, %v1098
        %v1100 = vcombine.high %v1078, %v1078
        %v1101 = vcombine.high %v1085, %v1085
        %v1102 = vcombine.high %v1092, %v1092
        %v1103 = vcombine.high %v1099, %v1099
        %v1104 = vcombine.high %v194, %v194
        %v1106 = vunpack.c.l.s4 1966171168
        %v1107 = vunpack.c.0.s8 %v1106
        %v1108 = vlaneseq
        %v1109 = vshrl.u32 %v1108, 7
        %v1110 = vsub.s32 %v1107, %v1109
        %v1111 = vrot.slane %v194, %v1110
        %v1113 = vunpack.c.l.s4 1966171168
        %v1114 = vunpack.c.0.s8 %v1113
        %v1115 = vlaneseq
        %v1116 = vshrl.u32 %v1115, 7
        %v1117 = vsub.s32 %v1114, %v1116
        %v1118 = vrot.slane %v1104, %v1117
        %v1119 = vcombine.high %v1111, %v1111
        %v1120 = vcombine.high %v1118, %v1118
        %v1122 = vunpack.c.l.s4 1966171168
        %v1123 = vunpack.c.0.s8 %v1122
        %v1124 = vlaneseq
        %v1125 = vshrl.u32 %v1124, 7
        %v1126 = vsub.s32 %v1123, %v1125
        %v1127 = vrot.slane %v1111, %v1126
        %v1129 = vunpack.c.l.s4 1966171168
        %v1130 = vunpack.c.0.s8 %v1129
        %v1131 = vlaneseq
        %v1132 = vshrl.u32 %v1131, 7
        %v1133 = vsub.s32 %v1130, %v1132
        %v1134 = vrot.slane %v1118, %v1133
        %v1136 = vunpack.c.l.s4 1966171168
        %v1137 = vunpack.c.0.s8 %v1136
        %v1138 = vlaneseq
        %v1139 = vshrl.u32 %v1138, 7
        %v1140 = vsub.s32 %v1137, %v1139
        %v1141 = vrot.slane %v1119, %v1140
        %v1143 = vunpack.c.l.s4 1966171168
        %v1144 = vunpack.c.0.s8 %v1143
        %v1145 = vlaneseq
        %v1146 = vshrl.u32 %v1145, 7
        %v1147 = vsub.s32 %v1144, %v1146
        %v1148 = vrot.slane %v1120, %v1147
        %v1149 = vcombine.high %v1127, %v1127
        %v1150 = vcombine.high %v1134, %v1134
        %v1151 = vcombine.high %v1141, %v1141
        %v1152 = vcombine.high %v1148, %v1148
        %v1153 = vcombine.high %v195, %v195
        %v1155 = vunpack.c.l.s4 1966171168
        %v1156 = vunpack.c.0.s8 %v1155
        %v1157 = vlaneseq
        %v1158 = vshrl.u32 %v1157, 7
        %v1159 = vsub.s32 %v1156, %v1158
        %v1160 = vrot.slane %v195, %v1159
        %v1162 = vunpack.c.l.s4 1966171168
        %v1163 = vunpack.c.0.s8 %v1162
        %v1164 = vlaneseq
        %v1165 = vshrl.u32 %v1164, 7
        %v1166 = vsub.s32 %v1163, %v1165
        %v1167 = vrot.slane %v1153, %v1166
        %v1168 = vcombine.high %v1160, %v1160
        %v1169 = vcombine.high %v1167, %v1167
        %v1171 = vunpack.c.l.s4 1966171168
        %v1172 = vunpack.c.0.s8 %v1171
        %v1173 = vlaneseq
        %v1174 = vshrl.u32 %v1173, 7
        %v1175 = vsub.s32 %v1172, %v1174
        %v1176 = vrot.slane %v1160, %v1175
        %v1178 = vunpack.c.l.s4 1966171168
        %v1179 = vunpack.c.0.s8 %v1178
        %v1180 = vlaneseq
        %v1181 = vshrl.u32 %v1180, 7
        %v1182 = vsub.s32 %v1179, %v1181
        %v1183 = vrot.slane %v1167, %v1182
        %v1185 = vunpack.c.l.s4 1966171168
        %v1186 = vunpack.c.0.s8 %v1185
        %v1187 = vlaneseq
        %v1188 = vshrl.u32 %v1187, 7
        %v1189 = vsub.s32 %v1186, %v1188
        %v1190 = vrot.slane %v1168, %v1189
        %v1192 = vunpack.c.l.s4 1966171168
        %v1193 = vunpack.c.0.s8 %v1192
        %v1194 = vlaneseq
        %v1195 = vshrl.u32 %v1194, 7
        %v1196 = vsub.s32 %v1193, %v1195
        %v1197 = vrot.slane %v1169, %v1196
        %v1198 = vcombine.high %v1176, %v1176
        %v1199 = vcombine.high %v1183, %v1183
        %v1200 = vcombine.high %v1190, %v1190
        %v1201 = vcombine.high %v1197, %v1197
        %v1202 = vcombine.high %v196, %v196
        %v1204 = vunpack.c.l.s4 1966171168
        %v1205 = vunpack.c.0.s8 %v1204
        %v1206 = vlaneseq
        %v1207 = vshrl.u32 %v1206, 7
        %v1208 = vsub.s32 %v1205, %v1207
        %v1209 = vrot.slane %v196, %v1208
        %v1211 = vunpack.c.l.s4 1966171168
        %v1212 = vunpack.c.0.s8 %v1211
        %v1213 = vlaneseq
        %v1214 = vshrl.u32 %v1213, 7
        %v1215 = vsub.s32 %v1212, %v1214
        %v1216 = vrot.slane %v1202, %v1215
        %v1217 = vcombine.high %v1209, %v1209
        %v1218 = vcombine.high %v1216, %v1216
        %v1220 = vunpack.c.l.s4 1966171168
        %v1221 = vunpack.c.0.s8 %v1220
        %v1222 = vlaneseq
        %v1223 = vshrl.u32 %v1222, 7
        %v1224 = vsub.s32 %v1221, %v1223
        %v1225 = vrot.slane %v1209, %v1224
        %v1227 = vunpack.c.l.s4 1966171168
        %v1228 = vunpack.c.0.s8 %v1227
        %v1229 = vlaneseq
        %v1230 = vshrl.u32 %v1229, 7
        %v1231 = vsub.s32 %v1228, %v1230
        %v1232 = vrot.slane %v1216, %v1231
        %v1234 = vunpack.c.l.s4 1966171168
        %v1235 = vunpack.c.0.s8 %v1234
        %v1236 = vlaneseq
        %v1237 = vshrl.u32 %v1236, 7
        %v1238 = vsub.s32 %v1235, %v1237
        %v1239 = vrot.slane %v1217, %v1238
        %v1241 = vunpack.c.l.s4 1966171168
        %v1242 = vunpack.c.0.s8 %v1241
        %v1243 = vlaneseq
        %v1244 = vshrl.u32 %v1243, 7
        %v1245 = vsub.s32 %v1242, %v1244
        %v1246 = vrot.slane %v1218, %v1245
        %v1247 = vcombine.high %v1225, %v1225
        %v1248 = vcombine.high %v1232, %v1232
        %v1249 = vcombine.high %v1239, %v1239
        %v1250 = vcombine.high %v1246, %v1246
        %v1251 = vcombine.high %v197, %v197
        %v1253 = vunpack.c.l.s4 1966171168
        %v1254 = vunpack.c.0.s8 %v1253
        %v1255 = vlaneseq
        %v1256 = vshrl.u32 %v1255, 7
        %v1257 = vsub.s32 %v1254, %v1256
        %v1258 = vrot.slane %v197, %v1257
        %v1260 = vunpack.c.l.s4 1966171168
        %v1261 = vunpack.c.0.s8 %v1260
        %v1262 = vlaneseq
        %v1263 = vshrl.u32 %v1262, 7
        %v1264 = vsub.s32 %v1261, %v1263
        %v1265 = vrot.slane %v1251, %v1264
        %v1266 = vcombine.high %v1258, %v1258
        %v1267 = vcombine.high %v1265, %v1265
        %v1269 = vunpack.c.l.s4 1966171168
        %v1270 = vunpack.c.0.s8 %v1269
        %v1271 = vlaneseq
        %v1272 = vshrl.u32 %v1271, 7
        %v1273 = vsub.s32 %v1270, %v1272
        %v1274 = vrot.slane %v1258, %v1273
        %v1276 = vunpack.c.l.s4 1966171168
        %v1277 = vunpack.c.0.s8 %v1276
        %v1278 = vlaneseq
        %v1279 = vshrl.u32 %v1278, 7
        %v1280 = vsub.s32 %v1277, %v1279
        %v1281 = vrot.slane %v1265, %v1280
        %v1283 = vunpack.c.l.s4 1966171168
        %v1284 = vunpack.c.0.s8 %v1283
        %v1285 = vlaneseq
        %v1286 = vshrl.u32 %v1285, 7
        %v1287 = vsub.s32 %v1284, %v1286
        %v1288 = vrot.slane %v1266, %v1287
        %v1290 = vunpack.c.l.s4 1966171168
        %v1291 = vunpack.c.0.s8 %v1290
        %v1292 = vlaneseq
        %v1293 = vshrl.u32 %v1292, 7
        %v1294 = vsub.s32 %v1291, %v1293
        %v1295 = vrot.slane %v1267, %v1294
        %v1296 = vcombine.high %v1274, %v1274
        %v1297 = vcombine.high %v1281, %v1281
        %v1298 = vcombine.high %v1288, %v1288
        %v1299 = vcombine.high %v1295, %v1295
        %v1300 = vcombine.high %v198, %v198
        %v1302 = vunpack.c.l.s4 1966171168
        %v1303 = vunpack.c.0.s8 %v1302
        %v1304 = vlaneseq
        %v1305 = vshrl.u32 %v1304, 7
        %v1306 = vsub.s32 %v1303, %v1305
        %v1307 = vrot.slane %v198, %v1306
        %v1309 = vunpack.c.l.s4 1966171168
        %v1310 = vunpack.c.0.s8 %v1309
        %v1311 = vlaneseq
        %v1312 = vshrl.u32 %v1311, 7
        %v1313 = vsub.s32 %v1310, %v1312
        %v1314 = vrot.slane %v1300, %v1313
        %v1315 = vcombine.high %v1307, %v1307
        %v1316 = vcombine.high %v1314, %v1314
        %v1318 = vunpack.c.l.s4 1966171168
        %v1319 = vunpack.c.0.s8 %v1318
        %v1320 = vlaneseq
        %v1321 = vshrl.u32 %v1320, 7
        %v1322 = vsub.s32 %v1319, %v1321
        %v1323 = vrot.slane %v1307, %v1322
        %v1325 = vunpack.c.l.s4 1966171168
        %v1326 = vunpack.c.0.s8 %v1325
        %v1327 = vlaneseq
        %v1328 = vshrl.u32 %v1327, 7
        %v1329 = vsub.s32 %v1326, %v1328
        %v1330 = vrot.slane %v1314, %v1329
        %v1332 = vunpack.c.l.s4 1966171168
        %v1333 = vunpack.c.0.s8 %v1332
        %v1334 = vlaneseq
        %v1335 = vshrl.u32 %v1334, 7
        %v1336 = vsub.s32 %v1333, %v1335
        %v1337 = vrot.slane %v1315, %v1336
        %v1339 = vunpack.c.l.s4 1966171168
        %v1340 = vunpack.c.0.s8 %v1339
        %v1341 = vlaneseq
        %v1342 = vshrl.u32 %v1341, 7
        %v1343 = vsub.s32 %v1340, %v1342
        %v1344 = vrot.slane %v1316, %v1343
        %v1345 = vcombine.high %v1323, %v1323
        %v1346 = vcombine.high %v1330, %v1330
        %v1347 = vcombine.high %v1337, %v1337
        %v1348 = vcombine.high %v1344, %v1344
        %v1349 = vcombine.high %v199, %v199
        %v1351 = vunpack.c.l.s4 1966171168
        %v1352 = vunpack.c.0.s8 %v1351
        %v1353 = vlaneseq
        %v1354 = vshrl.u32 %v1353, 7
        %v1355 = vsub.s32 %v1352, %v1354
        %v1356 = vrot.slane %v199, %v1355
        %v1358 = vunpack.c.l.s4 1966171168
        %v1359 = vunpack.c.0.s8 %v1358
        %v1360 = vlaneseq
        %v1361 = vshrl.u32 %v1360, 7
        %v1362 = vsub.s32 %v1359, %v1361
        %v1363 = vrot.slane %v1349, %v1362
        %v1364 = vcombine.high %v1356, %v1356
        %v1366 = vunpack.c.l.s4 1966171168
        %v1367 = vunpack.c.0.s8 %v1366
        %v1368 = vlaneseq
        %v1369 = vshrl.u32 %v1368, 7
        %v1370 = vsub.s32 %v1367, %v1369
        %v1371 = vrot.slane %v1356, %v1370
        %v1373 = vunpack.c.l.s4 1966171168
        %v1374 = vunpack.c.0.s8 %v1373
        %v1375 = vlaneseq
        %v1376 = vshrl.u32 %v1375, 7
        %v1377 = vsub.s32 %v1374, %v1376
        %v1378 = vrot.slane %v1363, %v1377
        %v1380 = vunpack.c.l.s4 1966171168
        %v1381 = vunpack.c.0.s8 %v1380
        %v1382 = vlaneseq
        %v1383 = vshrl.u32 %v1382, 7
        %v1384 = vsub.s32 %v1381, %v1383
        %v1385 = vrot.slane %v1364, %v1384
        %v1386 = vcombine.high %v1371, %v1371
        %v1387 = vcombine.high %v1385, %v1385
        %v2289 = vunpack.c.l.b16 %v200
        %v2290 = vunpack.c.l.b16 %v201
        %v2291 = vunpack.c.l.b16 %v202
        %v2292 = vunpack.c.l.b16 %v203
        %v2293 = vunpack.c.l.b16 %v204
        %v2294 = vunpack.c.l.b16 %v205
        %v2295 = vunpack.c.l.b16 %v206
        %v2296 = vunpack.c.l.b16 %v207
        %v2297 = vunpack.c.l.b16 %v208
        %v2298 = vunpack.c.l.b16 %v209
        %v2299 = vunpack.c.l.b16 %v210
        %v2300 = vunpack.c.l.b16 %v211
        %v2301 = vunpack.c.l.b16 %v212
        %v2302 = vunpack.c.l.b16 %v213
        %v2303 = vunpack.c.l.b16 %v214
        %v2304 = vunpack.c.l.b16 %v215
        %v2305 = vunpack.c.l.b16 %v216
        %v2306 = vunpack.c.l.b16 %v217
        %v2307 = vunpack.c.l.b16 %v218
        %v2308 = vunpack.c.l.b16 %v219
        %v2309 = vunpack.c.l.b16 %v220
        %v2310 = vunpack.c.l.b16 %v221
        %v2311 = vunpack.c.l.b16 %v222
        %v2312 = vunpack.c.l.b16 %v223
        %v2313 = vunpack.c.l.b16 %v224
        %v2314 = vunpack.c.l.b16 %v225
        %v2315 = vunpack.c.l.b16 %v226
        %v2316 = vunpack.c.l.b16 %v227
        %v2317 = vunpack.c.l.b16 %v228
        %v2318 = vunpack.c.l.b16 %v229
        %v2319 = vunpack.c.l.b16 %v230
        %v2320 = vunpack.c.l.b16 %v231
        %v2321 = vunpack.c.l.b16 %v232
        %v2322 = vunpack.c.l.b16 %v233
        %v2323 = vunpack.c.l.b16 %v234
        %v2324 = vunpack.c.l.b16 %v235
        %v2325 = vunpack.c.l.b16 %v236
        %v2326 = vunpack.c.l.b16 %v237
        %v2327 = vunpack.c.l.b16 %v238
        %v2328 = vunpack.c.l.b16 %v239
        %v2329 = vunpack.c.l.b16 %v240
        %v2330 = vunpack.c.l.b16 %v241
        %v2331 = vunpack.c.l.b16 %v242
        %v2332 = vunpack.c.l.b16 %v243
        %v2333 = vunpack.c.l.b16 %v244
        %v2334 = vunpack.c.l.b16 %v245
        %v2335 = vunpack.c.l.b16 %v246
        %v2336 = vunpack.c.l.b16 %v247
        %v2337 = vunpack.c.l.b16 %v248
        %v2338 = vunpack.c.l.b16 %v249
        %v2339 = vunpack.c.l.b16 %v250
        %v2340 = vunpack.c.l.b16 %v251
        %v2341 = vunpack.c.l.b16 %v252
        %v2342 = vunpack.c.l.b16 %v253
        %v2343 = vunpack.c.l.b16 %v254
        %v2344 = vunpack.c.l.b16 %v255
        %v2345 = vunpack.c.l.b16 %v256
        %v2346 = vunpack.c.l.b16 %v257
        %v2347 = vunpack.c.l.b16 %v258
        %v2348 = vunpack.c.l.b16 %v259
        %v2349 = vunpack.c.l.b16 %v260
        %v2350 = vunpack.c.l.b16 %v261
        %v2351 = vunpack.c.l.b16 %v262
        %v2352 = vunpack.c.l.b16 %v263
        %v2353 = vunpack.c.l.b16 %v264
        %v2354 = vunpack.c.l.b16 %v265
        %v2355 = vunpack.c.l.b16 %v266
        %v2356 = vunpack.c.l.b16 %v267
        %v2357 = vunpack.c.l.b16 %v268
        %v2358 = vunpack.c.l.b16 %v269
        %v2359 = vunpack.c.l.b16 %v270
        %v2360 = vunpack.c.l.b16 %v271
        %v2361 = vunpack.c.l.b16 %v272
        %v2362 = vunpack.c.l.b16 %v273
        %v2363 = vunpack.c.l.b16 %v274
        %v2364 = vunpack.c.l.b16 %v275
        %v2365 = vunpack.c.l.b16 %v276
        %v2366 = vunpack.c.l.b16 %v277
        %v2367 = vunpack.c.l.b16 %v278
        %v2368 = vunpack.c.l.b16 %v279
        %v2369 = vunpack.c.l.b16 %v280
        %v2370 = vunpack.c.l.b16 %v281
        %v2371 = vunpack.c.l.b16 %v282
        %v2372 = vunpack.c.l.b16 %v283
        %v2373 = vunpack.c.l.b16 %v284
        %v2374 = vunpack.c.l.b16 %v285
        %v2375 = vunpack.c.l.b16 %v286
        %v2376 = vunpack.c.l.b16 %v287
        %v2377 = vunpack.c.l.b16 %v288
        %v2378 = vunpack.c.l.b16 %v289
        %v2379 = vunpack.c.l.b16 %v290
        %v2380 = vunpack.c.l.b16 %v291
        %v2381 = vunpack.c.l.b16 %v292
        %v2382 = vunpack.c.l.b16 %v293
        %v2383 = vunpack.c.l.b16 %v294
        %v2384 = vunpack.c.l.b16 %v295
        %v2385 = vunpack.c.l.b16 %v296
        %v2386 = vunpack.c.l.b16 %v297
        %v2387 = vunpack.c.l.b16 %v298
        %v2388 = vunpack.c.l.b16 %v299
        %v2389 = vunpack.c.l.b16 %v300
        %v2390 = vunpack.c.l.b16 %v301
        %v2391 = vunpack.c.l.b16 %v302
        %v2392 = vunpack.c.l.b16 %v303
        %v2393 = vunpack.c.l.b16 %v304
        %v2394 = vunpack.c.l.b16 %v305
        %v2395 = vunpack.c.l.b16 %v306
        %v2396 = vunpack.c.l.b16 %v307
        %v2397 = vunpack.c.l.b16 %v308
        %v2398 = vunpack.c.l.b16 %v309
        %v2399 = vunpack.c.l.b16 %v310
        %v2400 = vunpack.c.l.b16 %v311
        %v2401 = vunpack.c.l.b16 %v312
        %v2402 = vunpack.c.l.b16 %v313
        %v2403 = vunpack.c.l.b16 %v314
        %v2404 = vunpack.c.l.b16 %v315
        %v2405 = vunpack.c.l.b16 %v316
        %v2406 = vunpack.c.l.b16 %v317
        %v2407 = vunpack.c.l.b16 %v318
        %v2408 = vunpack.c.l.b16 %v319
        %v2409 = vunpack.c.l.b16 %v320
        %v2410 = vunpack.c.l.b16 %v321
        %v2411 = vunpack.c.l.b16 %v322
        %v2412 = vunpack.c.l.b16 %v323
        %v2413 = vunpack.c.l.b16 %v324
        %v2414 = vunpack.c.l.b16 %v325
        %v2415 = vunpack.c.l.b16 %v326
        %v2416 = vunpack.c.l.b16 %v327
        %v2417 = vunpack.c.l.b16 %v328
        %v2418 = vunpack.c.l.b16 %v329
        %v2419 = vunpack.c.l.b16 %v330
        %v2420 = vunpack.c.l.b16 %v331
        %v2421 = vunpack.c.l.b16 %v332
        %v2422 = vunpack.c.l.b16 %v333
        %v2423 = vunpack.c.l.b16 %v334
        %v2424 = vunpack.c.l.b16 %v335
        %v2425 = vunpack.c.l.b16 %v336
        %v2426 = vunpack.c.l.b16 %v337
        %v2427 = vunpack.c.l.b16 %v338
        %v2428 = vunpack.c.l.b16 %v339
        %v2429 = vunpack.c.l.b16 %v340
        %v2430 = vunpack.c.l.b16 %v341
        %v2431 = vunpack.c.l.b16 %v342
        %v2432 = vunpack.c.l.b16 %v343
        %v2433 = vunpack.c.l.b16 %v344
        %v2434 = vunpack.c.l.b16 %v345
        %v2435 = vunpack.c.l.b16 %v346
        %v2436 = vunpack.c.l.b16 %v347
        %v2437 = vunpack.c.l.b16 %v348
        %v2438 = vunpack.c.l.b16 %v349
        %v2439 = vunpack.c.l.b16 %v350
        %v2440 = vunpack.c.l.b16 %v351
        %v2441 = vunpack.c.l.b16 %v352
        %v2442 = vunpack.c.l.b16 %v353
        %v2443 = vunpack.c.l.b16 %v354
        %v2444 = vunpack.c.l.b16 %v355
        %v2445 = vunpack.c.l.b16 %v356
        %v2446 = vunpack.c.l.b16 %v357
        %v2447 = vunpack.c.l.b16 %v358
        %v2448 = vunpack.c.l.b16 %v359
        %v2449 = vunpack.c.l.b16 %v360
        %v2450 = vunpack.c.l.b16 %v361
        %v2451 = vunpack.c.l.b16 %v362
        %v2452 = vunpack.c.l.b16 %v363
        %v2453 = vunpack.c.l.b16 %v364
        %v2454 = vunpack.c.l.b16 %v365
        %v2455 = vunpack.c.l.b16 %v366
        %v2456 = vunpack.c.l.b16 %v367
        %v2457 = vunpack.c.l.b16 %v368
        %v2458 = vunpack.c.l.b16 %v369
        %v2459 = vunpack.c.l.b16 %v370
        %v2460 = vunpack.c.l.b16 %v371
        %v2461 = vunpack.c.l.b16 %v372
        %v2462 = vunpack.c.l.b16 %v373
        %v2463 = vunpack.c.l.b16 %v374
        %v2464 = vunpack.c.l.b16 %v375
        %v2465 = vunpack.c.l.b16 %v376
        %v2466 = vunpack.c.l.b16 %v377
        %v2467 = vunpack.c.l.b16 %v378
        %v2468 = vunpack.c.l.b16 %v379
        %v2469 = vunpack.c.l.b16 %v380
        %v2470 = vunpack.c.l.b16 %v381
        %v2471 = vunpack.c.l.b16 %v382
        %v2472 = vunpack.c.l.b16 %v383
        %v2473 = vunpack.c.l.b16 %v384
        %v2474 = vunpack.c.l.b16 %v385
        %v2475 = vunpack.c.l.b16 %v386
        %v2476 = vunpack.c.l.b16 %v387
        %v2477 = vunpack.c.l.b16 %v388
        %v2478 = vunpack.c.l.b16 %v389
        %v2479 = vunpack.c.l.b16 %v390
        %v2480 = vunpack.c.l.b16 %v391
        %v2481 = vunpack.c.l.b16 %v392
        %v2482 = vunpack.c.l.b16 %v393
        %v2483 = vunpack.c.l.b16 %v394
        %v2484 = vunpack.c.l.b16 %v395
        %v2485 = vunpack.c.l.b16 %v396
        %v2486 = vunpack.c.l.b16 %v397
        %v2487 = vunpack.c.l.b16 %v398
        %v2488 = vunpack.c.l.b16 %v399
        %v2489 = vunpack.c.l.b16 %v400
        %v2490 = vunpack.c.l.b16 %v401
        %v2491 = vunpack.c.l.b16 %v402
        %v2492 = vunpack.c.l.b16 %v403
        %v2493 = vunpack.c.l.b16 %v404
        %v2494 = vunpack.c.l.b16 %v405
        %v2495 = vunpack.c.l.b16 %v406
        %v2496 = vunpack.c.l.b16 %v407
        %v2497 = vunpack.c.l.b16 %v408
        %v2498 = vunpack.c.l.b16 %v409
        %v2499 = vunpack.c.l.b16 %v410
        %v2500 = vunpack.c.l.b16 %v411
        %v2501 = vunpack.c.l.b16 %v412
        %v2502 = vunpack.c.l.b16 %v413
        %v2503 = vunpack.c.l.b16 %v414
        %v2504 = vunpack.c.l.b16 %v415
        %v2505 = vunpack.c.l.b16 %v416
        %v2506 = vunpack.c.l.b16 %v417
        %v2507 = vunpack.c.l.b16 %v418
        %v2508 = vunpack.c.l.b16 %v419
        %v2509 = vunpack.c.l.b16 %v420
        %v2510 = vunpack.c.l.b16 %v421
        %v2511 = vunpack.c.l.b16 %v422
        %v2512 = vunpack.c.l.b16 %v423
        %v2513 = vunpack.c.l.b16 %v424
        %v2514 = vunpack.c.l.b16 %v425
        %v2515 = vunpack.c.l.b16 %v426
        %v2516 = vunpack.c.l.b16 %v427
        %v2517 = vunpack.c.l.b16 %v428
        %v2518 = vunpack.c.l.b16 %v429
        %v2519 = vunpack.c.l.b16 %v430
        %v2520 = vunpack.c.l.b16 %v431
        %v2521 = vunpack.c.l.b16 %v432
        %v2522 = vunpack.c.l.b16 %v433
        %v2523 = vunpack.c.l.b16 %v434
        %v2524 = vunpack.c.l.b16 %v435
        %v2525 = vunpack.c.l.b16 %v436
        %v2526 = vunpack.c.l.b16 %v437
        %v2527 = vunpack.c.l.b16 %v438
        %v2528 = vunpack.c.l.b16 %v439
        %v2529 = vunpack.c.l.b16 %v440
        %v2530 = vunpack.c.l.b16 %v441
        %v2531 = vunpack.c.l.b16 %v442
        %v2532 = vunpack.c.l.b16 %v443
        %v2533 = vunpack.c.l.b16 %v444
        %v2534 = vunpack.c.l.b16 %v445
        %v2535 = vunpack.c.l.b16 %v446
        %v2536 = vunpack.c.l.b16 %v447
        %v2537 = vunpack.c.l.b16 %v448
        %v2538 = vunpack.c.l.b16 %v449
        %v2539 = vunpack.c.l.b16 %v450
        %v2540 = vunpack.c.l.b16 %v451
        %v2541 = vunpack.c.l.b16 %v452
        %v2542 = vunpack.c.l.b16 %v453
        %v2543 = vunpack.c.l.b16 %v454
        %v2544 = vunpack.c.l.b16 %v455
        %v2545 = vunpack.c.l.b16 %v456
        %v2546 = vunpack.c.l.b16 %v457
        %v2547 = vunpack.c.l.b16 %v458
        %v2548 = vunpack.c.l.b16 %v459
        %v2549 = vunpack.c.l.b16 %v460
        %v2550 = vunpack.c.l.b16 %v461
        %v2551 = vunpack.c.l.b16 %v462
        %v2552 = vunpack.c.l.b16 %v463
        %v2553 = vunpack.c.l.b16 %v464
        %v2554 = vunpack.c.l.b16 %v465
        %v2555 = vunpack.c.l.b16 %v466
        %v2556 = vunpack.c.l.b16 %v467
        %v2557 = vunpack.c.l.b16 %v468
        %v2558 = vunpack.c.l.b16 %v469
        %v2559 = vunpack.c.l.b16 %v470
        %v2560 = vunpack.c.l.b16 %v471
        %v2561 = vunpack.c.l.b16 %v472
        %v2562 = vunpack.c.l.b16 %v473
        %v2563 = vunpack.c.l.b16 %v474
        %v2564 = vunpack.c.l.b16 %v475
        %v2565 = vunpack.c.l.b16 %v476
        %v2566 = vunpack.c.l.b16 %v477
        %v2567 = vunpack.c.l.b16 %v478
        %v2568 = vunpack.c.l.b16 %v479
        %v2569 = vunpack.c.l.b16 %v480
        %v2570 = vunpack.c.l.b16 %v481
        %v2571 = vunpack.c.l.b16 %v482
        %v2572 = vunpack.c.l.b16 %v483
        %v2573 = vunpack.c.l.b16 %v484
        %v2574 = vunpack.c.l.b16 %v485
        %v2575 = vunpack.c.l.b16 %v486
        %v2576 = vunpack.c.l.b16 %v487
        %v2577 = vunpack.c.l.b16 %v488
        %v2578 = vunpack.c.l.b16 %v489
        %v2579 = vunpack.c.l.b16 %v490
        %v2580 = vunpack.c.l.b16 %v491
        %v2581 = vunpack.c.l.b16 %v492
        %v2582 = vunpack.c.l.b16 %v493
        %v2583 = vunpack.c.l.b16 %v494
        %v2584 = vunpack.c.l.b16 %v495
        %v2585 = vunpack.c.l.b16 %v496
        %v2586 = vunpack.c.l.b16 %v497
        %v2587 = vunpack.c.l.b16 %v498
        %v2588 = vunpack.c.l.b16 %v499
        %v2589 = vunpack.c.l.b16 %v500
        %v2590 = vunpack.c.l.b16 %v501
        %v2591 = vunpack.c.l.b16 %v502
        %v2592 = vunpack.c.l.b16 %v503
        %v2593 = vunpack.c.l.b16 %v504
        %v2594 = vunpack.c.l.b16 %v505
        %v2595 = vunpack.c.l.b16 %v506
        %v2596 = vunpack.c.l.b16 %v507
        %v2597 = vunpack.c.l.b16 %v508
        %v2598 = vunpack.c.l.b16 %v509
        %v2599 = vunpack.c.l.b16 %v510
        %v2600 = vunpack.c.l.b16 %v511
        %v2601 = vunpack.c.l.b16 %v512
        %v2602 = vunpack.c.l.b16 %v513
        %v2603 = vunpack.c.l.b16 %v514
        %v2604 = vunpack.c.l.b16 %v515
        %v2605 = vunpack.c.l.b16 %v516
        %v2606 = vunpack.c.l.b16 %v517
        %v2607 = vunpack.c.l.b16 %v518
        %v2608 = vunpack.c.l.b16 %v519
        %v2609 = vunpack.c.l.b16 %v520
        %v2610 = vunpack.c.l.b16 %v521
        %v2611 = vunpack.c.l.b16 %v522
        %v2612 = vunpack.c.l.b16 %v523
        %v2613 = vunpack.c.l.b16 %v524
        %v2614 = vunpack.c.l.b16 %v525
        %v2615 = vunpack.c.l.b16 %v526
        %v2616 = vunpack.c.l.b16 %v527
        %v2617 = vunpack.c.l.b16 %v528
        %v2618 = vunpack.c.l.b16 %v529
        %v2619 = vunpack.c.l.b16 %v530
        %v2620 = vunpack.c.l.b16 %v531
        %v2621 = vunpack.c.l.b16 %v532
        %v2622 = vunpack.c.l.b16 %v533
        %v2623 = vunpack.c.l.b16 %v534
        %v2624 = vunpack.c.l.b16 %v535
        %v2625 = vunpack.c.l.b16 %v536
        %v2626 = vunpack.c.l.b16 %v537
        %v2627 = vunpack.c.l.b16 %v538
        %v2628 = vunpack.c.l.b16 %v539
        %v2629 = vunpack.c.l.b16 %v540
        %v2630 = vunpack.c.l.b16 %v541
        %v2631 = vunpack.c.l.b16 %v542
        %v2632 = vunpack.c.l.b16 %v543
        %v2633 = vunpack.c.l.b16 %v544
        %v2634 = vunpack.c.l.b16 %v545
        %v2635 = vunpack.c.l.b16 %v546
        %v2636 = vunpack.c.l.b16 %v547
        %v2637 = vunpack.c.l.b16 %v548
        %v2638 = vunpack.c.l.b16 %v549
        %v2639 = vunpack.c.l.b16 %v550
        %v2640 = vunpack.c.l.b16 %v551
        %v2641 = vunpack.c.l.b16 %v552
        %v2642 = vunpack.c.l.b16 %v553
        %v2643 = vunpack.c.l.b16 %v554
        %v2644 = vunpack.c.l.b16 %v555
        %v2645 = vunpack.c.l.b16 %v556
        %v2646 = vunpack.c.l.b16 %v557
        %v2647 = vunpack.c.l.b16 %v558
        %v2648 = vunpack.c.l.b16 %v559
        %v2649 = vunpack.c.l.b16 %v560
        %v2650 = vunpack.c.l.b16 %v561
        %v2651 = vunpack.c.l.b16 %v562
        %v2652 = vunpack.c.l.b16 %v563
        %v2653 = vunpack.c.l.b16 %v564
        %v2654 = vunpack.c.l.b16 %v565
        %v2655 = vunpack.c.l.b16 %v566
        %v2656 = vunpack.c.l.b16 %v567
        %v2657 = vunpack.c.l.b16 %v568
        %v2658 = vunpack.c.l.b16 %v569
        %v2659 = vunpack.c.l.b16 %v570
        %v2660 = vunpack.c.l.b16 %v571
        %v2661 = vunpack.c.l.b16 %v572
        %v2662 = vunpack.c.l.b16 %v573
        %v2663 = vunpack.c.l.b16 %v574
        %v2664 = vunpack.c.l.b16 %v575
        %v2665 = vunpack.c.l.b16 %v576
        %v2666 = vunpack.c.l.b16 %v577
        %v2667 = vunpack.c.l.b16 %v578
        %v2668 = vunpack.c.l.b16 %v579
        %v2669 = vunpack.c.l.b16 %v580
        %v2670 = vunpack.c.l.b16 %v581
        %v2671 = vunpack.c.l.b16 %v582
        %v2672 = vunpack.c.l.b16 %v583
        %v2673 = vunpack.c.l.b16 %v584
        %v2674 = vunpack.c.l.b16 %v585
        %v2675 = vunpack.c.l.b16 %v586
        %v2676 = vunpack.c.l.b16 %v587
        %v2677 = vunpack.c.l.b16 %v588
        %v2678 = vunpack.c.l.b16 %v589
        %v2679 = vunpack.c.l.b16 %v590
        %v2680 = vunpack.c.l.b16 %v591
        %v2681 = vunpack.c.l.b16 %v592
        %v2682 = vunpack.c.l.b16 %v593
        %v2683 = vunpack.c.l.b16 %v594
        %v2684 = vunpack.c.l.b16 %v595
        %v2685 = vunpack.c.l.b16 %v596
        %v2686 = vunpack.c.l.b16 %v597
        %v2687 = vunpack.c.l.b16 %v598
        %v2688 = vunpack.c.l.b16 %v599
        %v2689 = vunpack.c.l.b16 %v600
        %v2690 = vunpack.c.l.b16 %v601
        %v2691 = vunpack.c.l.b16 %v602
        %v2692 = vunpack.c.l.b16 %v603
        %v2693 = vunpack.c.l.b16 %v604
        %v2694 = vunpack.c.l.b16 %v605
        %v2695 = vunpack.c.l.b16 %v606
        %v2696 = vunpack.c.l.b16 %v607
        %v2697 = vunpack.c.l.b16 %v608
        %v2698 = vunpack.c.l.b16 %v609
        %v2699 = vunpack.c.l.b16 %v610
        %v2700 = vunpack.c.l.b16 %v611
        %v2701 = vunpack.c.l.b16 %v612
        %v2702 = vunpack.c.l.b16 %v613
        %v2703 = vunpack.c.l.b16 %v614
        %v2704 = vunpack.c.l.b16 %v615
        %v2705 = vunpack.c.l.b16 %v616
        %v2706 = vunpack.c.l.b16 %v617
        %v2707 = vunpack.c.l.b16 %v618
        %v2708 = vunpack.c.l.b16 %v619
        %v2709 = vunpack.c.l.b16 %v620
        %v2710 = vunpack.c.l.b16 %v621
        %v2711 = vunpack.c.l.b16 %v622
        %v2712 = vunpack.c.l.b16 %v623
        %v2713 = vunpack.c.l.b16 %v624
        %v2714 = vunpack.c.l.b16 %v625
        %v2715 = vunpack.c.l.b16 %v626
        %v2716 = vunpack.c.l.b16 %v627
        %v2717 = vunpack.c.l.b16 %v628
        %v2718 = vunpack.c.l.b16 %v629
        %v2719 = vunpack.c.l.b16 %v630
        %v2720 = vunpack.c.l.b16 %v631
        %v2721 = vunpack.c.l.b16 %v632
        %v2722 = vunpack.c.l.b16 %v633
        %v2723 = vunpack.c.l.b16 %v634
        %v2724 = vunpack.c.l.b16 %v635
        %v2725 = vunpack.c.l.b16 %v636
        %v2726 = vunpack.c.l.b16 %v637
        %v2727 = vunpack.c.l.b16 %v638
        %v2728 = vunpack.c.l.b16 %v639
        %v2729 = vunpack.c.l.b16 %v640
        %v2730 = vunpack.c.l.b16 %v641
        %v2731 = vunpack.c.l.b16 %v642
        %v2732 = vunpack.c.l.b16 %v643
        %v2733 = vunpack.c.l.b16 %v644
        %v2734 = vunpack.c.l.b16 %v645
        %v2735 = vunpack.c.l.b16 %v646
        %v2736 = vunpack.c.l.b16 %v647
        %v2737 = vunpack.c.l.b16 %v648
        %v2738 = vunpack.c.l.b16 %v649
        %v2739 = vunpack.c.l.b16 %v650
        %v2740 = vunpack.c.l.b16 %v651
        %v2741 = vunpack.c.l.b16 %v652
        %v2742 = vunpack.c.l.b16 %v653
        %v2743 = vunpack.c.l.b16 %v654
        %v2744 = vunpack.c.l.b16 %v655
        %v2745 = vunpack.c.l.b16 %v656
        %v2746 = vunpack.c.l.b16 %v657
        %v2747 = vunpack.c.l.b16 %v658
        %v2748 = vunpack.c.l.b16 %v659
        %v2749 = vunpack.c.l.b16 %v660
        %v2750 = vunpack.c.l.b16 %v661
        %v2751 = vunpack.c.l.b16 %v662
        %v2752 = vunpack.c.l.b16 %v663
        %v2753 = vunpack.c.l.b16 %v664
        %v2754 = vunpack.c.l.b16 %v665
        %v2755 = vunpack.c.l.b16 %v666
        %v2756 = vunpack.c.l.b16 %v667
        %v2757 = vunpack.c.l.b16 %v668
        %v2758 = vunpack.c.l.b16 %v669
        %v2759 = vunpack.c.l.b16 %v670
        %v2760 = vunpack.c.l.b16 %v671
        %v2761 = vunpack.c.l.b16 %v672
        %v2762 = vunpack.c.l.b16 %v673
        %v2763 = vunpack.c.l.b16 %v674
        %v2764 = vunpack.c.l.b16 %v675
        %v2765 = vunpack.c.l.b16 %v676
        %v2766 = vunpack.c.l.b16 %v677
        %v2767 = vunpack.c.l.b16 %v678
        %v2768 = vunpack.c.l.b16 %v679
        %v2769 = vunpack.c.l.b16 %v680
        %v2770 = vunpack.c.l.b16 %v681
        %v2771 = vunpack.c.l.b16 %v682
        %v2772 = vunpack.c.l.b16 %v683
        %v2773 = vunpack.c.l.b16 %v684
        %v2774 = vunpack.c.l.b16 %v685
        %v2775 = vunpack.c.l.b16 %v686
        %v2776 = vunpack.c.l.b16 %v687
        %v2777 = vunpack.c.l.b16 %v688
        %v2778 = vunpack.c.l.b16 %v689
        %v2779 = vunpack.c.l.b16 %v690
        %v2780 = vunpack.c.l.b16 %v691
        %v2781 = vunpack.c.l.b16 %v692
        %v2782 = vunpack.c.l.b16 %v693
        %v2783 = vunpack.c.l.b16 %v694
        %v2784 = vunpack.c.l.b16 %v695
        %v2785 = vunpack.c.l.b16 %v696
        %v2786 = vunpack.c.l.b16 %v697
        %v2787 = vunpack.c.l.b16 %v698
        %v2788 = vunpack.c.l.b16 %v699
        %v2789 = vunpack.c.l.b16 %v700
        %v2790 = vunpack.c.l.b16 %v701
        %v2791 = vunpack.c.l.b16 %v702
        %v2792 = vunpack.c.l.b16 %v703
        %v2793 = vunpack.c.l.b16 %v704
        %v2794 = vunpack.c.l.b16 %v705
        %v2795 = vunpack.c.l.b16 %v706
        %v2796 = vunpack.c.l.b16 %v707
        %v2797 = vunpack.c.l.b16 %v708
        %v2798 = vunpack.c.l.b16 %v709
        %v2799 = vunpack.c.l.b16 %v710
        %v2800 = vunpack.c.l.b16 %v711
        %v2801 = vunpack.c.l.b16 %v712
        %v2802 = vunpack.c.l.b16 %v713
        %v2803 = vunpack.c.l.b16 %v714
        %v2804 = vunpack.c.l.b16 %v715
        %v2805 = vunpack.c.l.b16 %v716
        %v2806 = vunpack.c.l.b16 %v717
        %v2807 = vunpack.c.l.b16 %v718
        %v2808 = vunpack.c.l.b16 %v719
        %v2809 = vunpack.c.l.b16 %v720
        %v2810 = vunpack.c.l.b16 %v721
        %v2811 = vunpack.c.l.b16 %v722
        %v2812 = vunpack.c.l.b16 %v723
        %v2813 = vunpack.c.l.b16 %v724
        %v2814 = vunpack.c.l.b16 %v725
        %v2815 = vunpack.c.l.b16 %v726
        %v2816 = vunpack.c.l.b16 %v727
        %v2817 = vunpack.c.l.b16 %v728
        %v2818 = vunpack.c.l.b16 %v729
        %v2819 = vunpack.c.l.b16 %v730
        %v2820 = vunpack.c.l.b16 %v731
        %v2821 = vunpack.c.l.b16 %v732
        %v2822 = vunpack.c.l.b16 %v733
        %v2823 = vunpack.c.l.b16 %v734
        %v2824 = vunpack.c.l.b16 %v735
        %v2825 = vunpack.c.l.b16 %v736
        %v2826 = vunpack.c.l.b16 %v737
        %v2827 = vunpack.c.l.b16 %v738
        %v2828 = vunpack.c.l.b16 %v739
        %v2829 = vunpack.c.l.b16 %v740
        %v2830 = vunpack.c.l.b16 %v741
        %v2831 = vunpack.c.l.b16 %v742
        %v2832 = vunpack.c.l.b16 %v743
        %v2833 = vunpack.c.l.b16 %v744
        %v2834 = vunpack.c.l.b16 %v745
        %v2835 = vunpack.c.l.b16 %v746
        %v2836 = vunpack.c.l.b16 %v747
        %v2837 = vunpack.c.l.b16 %v748
        %v2838 = vunpack.c.l.b16 %v749
        %v2839 = vunpack.c.l.b16 %v750
        %v2840 = vunpack.c.l.b16 %v751
        %v2841 = vunpack.c.l.b16 %v752
        %v2842 = vunpack.c.l.b16 %v753
        %v2843 = vunpack.c.l.b16 %v754
        %v2844 = vunpack.c.l.b16 %v755
        %v2845 = vunpack.c.l.b16 %v756
        %v2846 = vunpack.c.l.b16 %v757
        %v2847 = vunpack.c.l.b16 %v758
        %v2848 = vunpack.c.l.b16 %v759
        %v2849 = vunpack.c.l.b16 %v760
        %v2850 = vunpack.c.l.b16 %v761
        %v2851 = vunpack.c.l.b16 %v762
        %v2852 = vunpack.c.l.b16 %v763
        %v2853 = vunpack.c.l.b16 %v764
        %v2854 = vunpack.c.l.b16 %v765
        %v2855 = vunpack.c.l.b16 %v766
        %v2856 = vunpack.c.l.b16 %v767
        %v2857 = vunpack.c.l.b16 %v768
        %v2858 = vunpack.c.l.b16 %v769
        %v2859 = vunpack.c.l.b16 %v770
        %v2860 = vunpack.c.l.b16 %v771
        %v2861 = vunpack.c.l.b16 %v772
        %v2862 = vunpack.c.l.b16 %v773
        %v2863 = vunpack.c.l.b16 %v774
        %v2864 = vunpack.c.l.b16 %v775
        %v2865 = vunpack.c.l.b16 %v776
        %v2866 = vunpack.c.l.b16 %v777
        %v2867 = vunpack.c.l.b16 %v778
        %v2868 = vunpack.c.l.b16 %v779
        %v2869 = vunpack.c.l.b16 %v780
        %v2870 = vunpack.c.l.b16 %v781
        %v2871 = vunpack.c.l.b16 %v782
        %v2872 = vunpack.c.l.b16 %v783
        %v2873 = vunpack.c.l.b16 %v784
        %v2874 = vunpack.c.l.b16 %v785
        %v2875 = vunpack.c.l.b16 %v786
        %v2876 = vunpack.c.l.b16 %v787
        %v2877 = vunpack.c.l.b16 %v788
        %v2878 = vunpack.c.l.b16 %v789
        %v2879 = vunpack.c.l.b16 %v790
        %v2880 = vunpack.c.l.b16 %v791
        %v2881 = vunpack.c.l.b16 %v792
        %v2882 = vunpack.c.l.b16 %v793
        %v2883 = vunpack.c.l.b16 %v794
        %v2884 = vunpack.c.l.b16 %v795
        %v2885 = vunpack.c.l.b16 %v796
        %v2886 = vunpack.c.l.b16 %v797
        %v2887 = vunpack.c.l.b16 %v798
        %v2888 = vunpack.c.l.b16 %v799
        %v2889 = vunpack.c.l.b16 %v800
        %v2890 = vunpack.c.l.b16 %v801
        %v2891 = vunpack.c.l.b16 %v802
        %v2892 = vunpack.c.l.b16 %v803
        %v2893 = vunpack.c.l.b16 %v804
        %v2894 = vunpack.c.l.b16 %v805
        %v2895 = vunpack.c.l.b16 %v806
        %v2896 = vunpack.c.l.b16 %v807
        %v2897 = vunpack.c.l.b16 %v808
        %v2898 = vunpack.c.l.b16 %v809
        %v2899 = vunpack.c.l.b16 %v810
        %v2900 = vunpack.c.l.b16 %v811
        %v2901 = vunpack.c.l.b16 %v812
        %v2902 = vunpack.c.l.b16 %v813
        %v2903 = vunpack.c.l.b16 %v814
        %v2904 = vunpack.c.l.b16 %v815
        %v2905 = vunpack.c.l.b16 %v816
        %v2906 = vunpack.c.l.b16 %v817
        %v2907 = vunpack.c.l.b16 %v818
        %v2908 = vunpack.c.l.b16 %v819
        %v2909 = vunpack.c.l.b16 %v820
        %v2910 = vunpack.c.l.b16 %v821
        %v2911 = vunpack.c.l.b16 %v822
        %v2912 = vunpack.c.l.b16 %v823
        %v2913 = vunpack.c.l.b16 %v824
        %v2914 = vunpack.c.l.b16 %v825
        %v2915 = vunpack.c.l.b16 %v826
        %v2916 = vunpack.c.l.b16 %v827
        %v2917 = vunpack.c.l.b16 %v828
        %v2918 = vunpack.c.l.b16 %v829
        %v2919 = vunpack.c.l.b16 %v830
        %v2920 = vunpack.c.l.b16 %v831
        %v2921 = vunpack.c.l.b16 %v832
        %v2922 = vunpack.c.l.b16 %v833
        %v2923 = vunpack.c.l.b16 %v834
        %v2924 = vunpack.c.l.b16 %v835
        %v2925 = vunpack.c.l.b16 %v836
        %v2926 = vunpack.c.l.b16 %v837
        %v2927 = vunpack.c.l.b16 %v838
        %v2928 = vunpack.c.l.b16 %v839
        %v2929 = vunpack.c.l.b16 %v840
        %v2930 = vunpack.c.l.b16 %v841
        %v2931 = vunpack.c.l.b16 %v842
        %v2932 = vunpack.c.l.b16 %v843
        %v2933 = vunpack.c.l.b16 %v844
        %v2934 = vunpack.c.l.b16 %v845
        %v2935 = vunpack.c.l.b16 %v846
        %v2936 = vunpack.c.l.b16 %v847
        %v2937 = vunpack.c.l.b16 %v848
        %v2938 = vunpack.c.l.b16 %v849
        %v2939 = vunpack.c.l.b16 %v850
        %v2940 = vunpack.c.l.b16 %v851
        %v2941 = vunpack.c.l.b16 %v852
        %v2942 = vunpack.c.l.b16 %v853
        %v2943 = vunpack.c.l.b16 %v854
        %v2944 = vunpack.c.l.b16 %v855
        %v2945 = vunpack.c.l.b16 %v856
        %v2946 = vunpack.c.l.b16 %v857
        %v2947 = vunpack.c.l.b16 %v858
        %v2948 = vunpack.c.l.b16 %v859
        %v2949 = vunpack.c.l.b16 %v860
        %v2950 = vunpack.c.l.b16 %v861
        %v2951 = vunpack.c.l.b16 %v862
        %v2952 = vunpack.c.l.b16 %v863
        %v2953 = vunpack.c.l.b16 %v864
        %v2954 = vunpack.c.l.b16 %v865
        %v2955 = vunpack.c.l.b16 %v866
        %v2956 = vunpack.c.l.b16 %v867
        %v2957 = vunpack.c.l.b16 %v868
        %v2958 = vunpack.c.l.b16 %v869
        %v2959 = vunpack.c.l.b16 %v870
        %v2960 = vunpack.c.l.b16 %v871
        %v2961 = vunpack.c.l.b16 %v872
        %v2962 = vunpack.c.l.b16 %v873
        %v2963 = vunpack.c.l.b16 %v874
        %v2964 = vunpack.c.l.b16 %v875
        %v2965 = vunpack.c.l.b16 %v876
        %v2966 = vunpack.c.l.b16 %v877
        %v2967 = vunpack.c.l.b16 %v878
        %v2968 = vunpack.c.l.b16 %v879
        %v2969 = vunpack.c.l.b16 %v880
        %v2970 = vunpack.c.l.b16 %v881
        %v2971 = vunpack.c.l.b16 %v882
        %v2972 = vunpack.c.l.b16 %v883
        %v2973 = vunpack.c.l.b16 %v884
        %v2974 = vunpack.c.l.b16 %v885
        %v2975 = vunpack.c.l.b16 %v886
        %v2976 = vunpack.c.l.b16 %v887
        %v2977 = vunpack.c.l.b16 %v888
        %v2978 = vunpack.c.l.b16 %v889
        %v2979 = vunpack.c.l.b16 %v890
        %v2980 = vunpack.c.l.b16 %v891
        %v2981 = vunpack.c.l.b16 %v892
        %v2982 = vunpack.c.l.b16 %v893
        %v2983 = vunpack.c.l.b16 %v894
        %v2984 = vunpack.c.l.b16 %v895
        %v2985 = vunpack.c.l.b16 %v896
        %v2986 = vunpack.c.l.b16 %v897
        %v2987 = vunpack.c.l.b16 %v898
        %v2988 = vunpack.c.l.b16 %v899
        %v2989 = vunpack.c.l.b16 %v900
        %v2990 = vunpack.c.l.b16 %v901
        %v2991 = vunpack.c.l.b16 %v902
        %v2992 = vunpack.c.l.b16 %v903
        %v2993 = vunpack.c.l.b16 %v904
        %v2994 = vunpack.c.l.b16 %v905
        %v2995 = vunpack.c.l.b16 %v906
        %v2996 = vunpack.c.l.b16 %v907
        %v2997 = vunpack.c.l.b16 %v908
        %v2998 = vunpack.c.l.b16 %v909
        %v2999 = vunpack.c.l.b16 %v910
        %v3000 = vunpack.c.l.b16 %v911
        %v3001 = vunpack.c.l.b16 %v912
        %v3002 = vunpack.c.l.b16 %v913
        %v3003 = vunpack.c.l.b16 %v914
        %v3004 = vunpack.c.l.b16 %v915
        %v3005 = vunpack.c.l.b16 %v916
        %v3006 = vunpack.c.l.b16 %v917
        %v3007 = vunpack.c.l.b16 %v918
        %v3008 = vunpack.c.l.b16 %v919
        %v3009 = vunpack.c.l.b16 %v920
        %v3010 = vunpack.c.l.b16 %v921
        %v3011 = vunpack.c.l.b16 %v922
        %v3012 = vunpack.c.l.b16 %v923
        %v3013 = vunpack.c.l.b16 %v924
        %v3014 = vunpack.c.l.b16 %v925
        %v3015 = vunpack.c.l.b16 %v926
        %v3016 = vunpack.c.l.b16 %v927
        %v3017 = vunpack.c.l.b16 %v928
        %v3018 = vunpack.c.l.b16 %v929
        %v3019 = vunpack.c.l.b16 %v930
        %v3020 = vunpack.c.l.b16 %v931
        %v3021 = vunpack.c.l.b16 %v932
        %v3022 = vunpack.c.l.b16 %v933
        %v3023 = vunpack.c.l.b16 %v934
        %v3024 = vunpack.c.l.b16 %v935
        %v3025 = vunpack.c.l.b16 %v936
        %v3026 = vunpack.c.l.b16 %v937
        %v3027 = vunpack.c.l.b16 %v938
        %v3028 = vunpack.c.l.b16 %v939
        %v3029 = vunpack.c.l.b16 %v940
        %v3030 = vunpack.c.l.b16 %v941
        %v3031 = vunpack.c.l.b16 %v942
        %v3032 = vunpack.c.l.b16 %v943
        %v3033 = vunpack.c.l.b16 %v944
        %v3034 = vunpack.c.l.b16 %v945
        %v3035 = vunpack.c.l.b16 %v946
        %v3036 = vunpack.c.l.b16 %v947
        %v3037 = vunpack.c.l.b16 %v948
        %v3038 = vunpack.c.l.b16 %v949
        %v3039 = vunpack.c.l.b16 %v950
        %v3040 = vunpack.c.l.b16 %v951
        %v3041 = vunpack.c.l.b16 %v952
        %v3042 = vunpack.c.l.b16 %v953
        %v3043 = vunpack.c.l.b16 %v954
        %v3044 = vunpack.c.l.b16 %v955
        %v3045 = vunpack.c.l.b16 %v956
        %v3046 = vunpack.c.l.b16 %v957
        %v3047 = vunpack.c.l.b16 %v958
        %v3048 = vunpack.c.l.b16 %v959
        %v3049 = vunpack.c.l.b16 %v960
        %v3050 = vunpack.c.l.b16 %v961
        %v3051 = vunpack.c.l.b16 %v962
        %v3052 = vunpack.c.l.b16 %v963
        %v3053 = vunpack.c.l.b16 %v964
        %v3054 = vunpack.c.l.b16 %v965
        %v3055 = vunpack.c.l.b16 %v966
        %v3056 = vunpack.c.l.b16 %v967
        %v3057 = vunpack.c.l.b16 %v968
        %v3058 = vunpack.c.l.b16 %v969
        %v3059 = vunpack.c.l.b16 %v970
        %v3060 = vunpack.c.l.b16 %v971
        %v3061 = vunpack.c.l.b16 %v972
        %v3062 = vunpack.c.l.b16 %v973
        %v3063 = vunpack.c.l.b16 %v974
        %v3064 = vunpack.c.l.b16 %v975
        %v3065 = vunpack.c.l.b16 %v976
        %v3066 = vunpack.c.l.b16 %v977
        %v3067 = vunpack.c.l.b16 %v978
        %v3068 = vunpack.c.l.b16 %v979
        %v3069 = vunpack.c.l.b16 %v980
        %v3070 = vunpack.c.l.b16 %v981
        %v3071 = vunpack.c.l.b16 %v982
        %v3072 = vunpack.c.l.b16 %v983
        %v3073 = vunpack.c.l.b16 %v984
        %v3074 = vunpack.c.l.b16 %v985
        %v3075 = vunpack.c.l.b16 %v986
        %v3076 = vunpack.c.l.b16 %v987
        %v3077 = vunpack.c.l.b16 %v988
        %v3078 = vunpack.c.l.b16 %v989
        %v3079 = vunpack.c.l.b16 %v990
        %v3080 = vunpack.c.l.b16 %v991
        %v3081 = vunpack.c.l.b16 %v992
        %v3082 = vunpack.c.l.b16 %v993
        %v3083 = vunpack.c.l.b16 %v994
        %v3084 = vunpack.c.l.b16 %v995
        %v3085 = vunpack.c.l.b16 %v996
        %v3086 = vunpack.c.l.b16 %v997
        %v3087 = vunpack.c.l.b16 %v998
        %v3088 = vunpack.c.l.b16 %v999
        %v3089 = vunpack.c.l.b16 %v1000
        %v3090 = vunpack.c.l.b16 %v1001
        %v3091 = vunpack.c.l.b16 %v1002
        %v3092 = vunpack.c.l.b16 %v1003
        %v3093 = vunpack.c.l.b16 %v1004
        %v3094 = vunpack.c.l.b16 %v1005
        %v3095 = vunpack.c.l.b16 %v1006
        %v3096 = vunpack.c.l.b16 %v1007
        %v3097 = vunpack.c.l.b16 %v1008
        %v3098 = vunpack.c.l.b16 %v1009
        %v3099 = vunpack.c.l.b16 %v1010
        %v3100 = vunpack.c.l.b16 %v1011
        %v3101 = vunpack.c.l.b16 %v1012
        %v3102 = vunpack.c.l.b16 %v1013
        %v3103 = vunpack.c.l.b16 %v1014
        %v3104 = vunpack.c.l.b16 %v1015
        %v3105 = vunpack.c.l.b16 %v1016
        %v3106 = vunpack.c.l.b16 %v1017
        %v3107 = vunpack.c.l.b16 %v1018
        %v3108 = vunpack.c.l.b16 %v1019
        %v3109 = vunpack.c.l.b16 %v1020
        %v3110 = vunpack.c.l.b16 %v1021
        %v3111 = vunpack.c.l.b16 %v1022
        %v3112 = vunpack.c.l.b16 %v1023
        %v3113 = vunpack.c.l.b16 %v1024
        %v3114 = vunpack.c.l.b16 %v1025
        %v3115 = vunpack.c.l.b16 %v1026
        %v3116 = vunpack.c.l.b16 %v1027
        %v3117 = vunpack.c.l.b16 %v1028
        %v3118 = vunpack.c.l.b16 %v1029
        %v3119 = vunpack.c.l.b16 %v1030
        %v3120 = vunpack.c.l.b16 %v1031
        %v3121 = vunpack.c.l.b16 %v1032
        %v3122 = vunpack.c.l.b16 %v1033
        %v3123 = vunpack.c.l.b16 %v1034
        %v3124 = vunpack.c.l.b16 %v1035
        %v3125 = vunpack.c.l.b16 %v1036
        %v3126 = vunpack.c.l.b16 %v1037
        %v3127 = vunpack.c.l.b16 %v1038
        %v3128 = vunpack.c.l.b16 %v1039
        %v3129 = vunpack.c.l.b16 %v1040
        %v3130 = vunpack.c.l.b16 %v1041
        %v3131 = vunpack.c.l.b16 %v1042
        %v3132 = vunpack.c.l.b16 %v1043
        %v3133 = vunpack.c.l.b16 %v1044
        %v3134 = vunpack.c.l.b16 %v1045
        %v3135 = vunpack.c.l.b16 %v1046
        %v3136 = vunpack.c.l.b16 %v1047
        %v3137 = vpack.c.b16 %v2290, %v2289
        %v3138 = vpack.c.b16 %v2292, %v2291
        %v3139 = vpack.c.b16 %v2294, %v2293
        %v3140 = vpack.c.b16 %v2296, %v2295
        %v3141 = vpack.c.b16 %v2298, %v2297
        %v3142 = vpack.c.b16 %v2300, %v2299
        %v3143 = vpack.c.b16 %v2302, %v2301
        %v3144 = vpack.c.b16 %v2304, %v2303
        %v3145 = vpack.c.b16 %v2306, %v2305
        %v3146 = vpack.c.b16 %v2308, %v2307
        %v3147 = vpack.c.b16 %v2310, %v2309
        %v3148 = vpack.c.b16 %v2312, %v2311
        %v3149 = vpack.c.b16 %v2314, %v2313
        %v3150 = vpack.c.b16 %v2316, %v2315
        %v3151 = vpack.c.b16 %v2318, %v2317
        %v3152 = vpack.c.b16 %v2320, %v2319
        %v3153 = vpack.c.b16 %v2322, %v2321
        %v3154 = vpack.c.b16 %v2324, %v2323
        %v3155 = vpack.c.b16 %v2326, %v2325
        %v3156 = vpack.c.b16 %v2328, %v2327
        %v3157 = vpack.c.b16 %v2330, %v2329
        %v3158 = vpack.c.b16 %v2332, %v2331
        %v3159 = vpack.c.b16 %v2334, %v2333
        %v3160 = vpack.c.b16 %v2336, %v2335
        %v3161 = vpack.c.b16 %v2338, %v2337
        %v3162 = vpack.c.b16 %v2340, %v2339
        %v3163 = vpack.c.b16 %v2342, %v2341
        %v3164 = vpack.c.b16 %v2344, %v2343
        %v3165 = vpack.c.b16 %v2346, %v2345
        %v3166 = vpack.c.b16 %v2348, %v2347
        %v3167 = vpack.c.b16 %v2350, %v2349
        %v3168 = vpack.c.b16 %v2352, %v2351
        %v3169 = vpack.c.b16 %v2354, %v2353
        %v3170 = vpack.c.b16 %v2356, %v2355
        %v3171 = vpack.c.b16 %v2358, %v2357
        %v3172 = vpack.c.b16 %v2360, %v2359
        %v3173 = vpack.c.b16 %v2362, %v2361
        %v3174 = vpack.c.b16 %v2364, %v2363
        %v3175 = vpack.c.b16 %v2366, %v2365
        %v3176 = vpack.c.b16 %v2368, %v2367
        %v3177 = vpack.c.b16 %v2370, %v2369
        %v3178 = vpack.c.b16 %v2372, %v2371
        %v3179 = vpack.c.b16 %v2374, %v2373
        %v3180 = vpack.c.b16 %v2376, %v2375
        %v3181 = vpack.c.b16 %v2378, %v2377
        %v3182 = vpack.c.b16 %v2380, %v2379
        %v3183 = vpack.c.b16 %v2382, %v2381
        %v3184 = vpack.c.b16 %v2384, %v2383
        %v3185 = vpack.c.b16 %v2386, %v2385
        %v3186 = vpack.c.b16 %v2388, %v2387
        %v3187 = vpack.c.b16 %v2390, %v2389
        %v3188 = vpack.c.b16 %v2392, %v2391
        %v3189 = vpack.c.b16 %v2394, %v2393
        %v3190 = vpack.c.b16 %v2396, %v2395
        %v3191 = vpack.c.b16 %v2398, %v2397
        %v3192 = vpack.c.b16 %v2400, %v2399
        %v3193 = vpack.c.b16 %v2402, %v2401
        %v3194 = vpack.c.b16 %v2404, %v2403
        %v3195 = vpack.c.b16 %v2406, %v2405
        %v3196 = vpack.c.b16 %v2408, %v2407
        %v3197 = vpack.c.b16 %v2410, %v2409
        %v3198 = vpack.c.b16 %v2412, %v2411
        %v3199 = vpack.c.b16 %v2414, %v2413
        %v3200 = vpack.c.b16 %v2416, %v2415
        %v3201 = vpack.c.b16 %v2418, %v2417
        %v3202 = vpack.c.b16 %v2420, %v2419
        %v3203 = vpack.c.b16 %v2422, %v2421
        %v3204 = vpack.c.b16 %v2424, %v2423
        %v3205 = vpack.c.b16 %v2426, %v2425
        %v3206 = vpack.c.b16 %v2428, %v2427
        %v3207 = vpack.c.b16 %v2430, %v2429
        %v3208 = vpack.c.b16 %v2432, %v2431
        %v3209 = vpack.c.b16 %v2434, %v2433
        %v3210 = vpack.c.b16 %v2436, %v2435
        %v3211 = vpack.c.b16 %v2438, %v2437
        %v3212 = vpack.c.b16 %v2440, %v2439
        %v3213 = vpack.c.b16 %v2442, %v2441
        %v3214 = vpack.c.b16 %v2444, %v2443
        %v3215 = vpack.c.b16 %v2446, %v2445
        %v3216 = vpack.c.b16 %v2448, %v2447
        %v3217 = vpack.c.b16 %v2450, %v2449
        %v3218 = vpack.c.b16 %v2452, %v2451
        %v3219 = vpack.c.b16 %v2454, %v2453
        %v3220 = vpack.c.b16 %v2456, %v2455
        %v3221 = vpack.c.b16 %v2458, %v2457
        %v3222 = vpack.c.b16 %v2460, %v2459
        %v3223 = vpack.c.b16 %v2462, %v2461
        %v3224 = vpack.c.b16 %v2464, %v2463
        %v3225 = vpack.c.b16 %v2466, %v2465
        %v3226 = vpack.c.b16 %v2468, %v2467
        %v3227 = vpack.c.b16 %v2470, %v2469
        %v3228 = vpack.c.b16 %v2472, %v2471
        %v3229 = vpack.c.b16 %v2474, %v2473
        %v3230 = vpack.c.b16 %v2476, %v2475
        %v3231 = vpack.c.b16 %v2478, %v2477
        %v3232 = vpack.c.b16 %v2480, %v2479
        %v3233 = vpack.c.b16 %v2482, %v2481
        %v3234 = vpack.c.b16 %v2484, %v2483
        %v3235 = vpack.c.b16 %v2486, %v2485
        %v3236 = vpack.c.b16 %v2488, %v2487
        %v3237 = vpack.c.b16 %v2490, %v2489
        %v3238 = vpack.c.b16 %v2492, %v2491
        %v3239 = vpack.c.b16 %v2494, %v2493
        %v3240 = vpack.c.b16 %v2496, %v2495
        %v3241 = vpack.c.b16 %v2498, %v2497
        %v3242 = vpack.c.b16 %v2500, %v2499
        %v3243 = vpack.c.b16 %v2502, %v2501
        %v3244 = vpack.c.b16 %v2504, %v2503
        %v3245 = vpack.c.b16 %v2506, %v2505
        %v3246 = vpack.c.b16 %v2508, %v2507
        %v3247 = vpack.c.b16 %v2510, %v2509
        %v3248 = vpack.c.b16 %v2512, %v2511
        %v3249 = vpack.c.b16 %v2514, %v2513
        %v3250 = vpack.c.b16 %v2516, %v2515
        %v3251 = vpack.c.b16 %v2518, %v2517
        %v3252 = vpack.c.b16 %v2520, %v2519
        %v3253 = vpack.c.b16 %v2522, %v2521
        %v3254 = vpack.c.b16 %v2524, %v2523
        %v3255 = vpack.c.b16 %v2526, %v2525
        %v3256 = vpack.c.b16 %v2528, %v2527
        %v3257 = vpack.c.b16 %v2530, %v2529
        %v3258 = vpack.c.b16 %v2532, %v2531
        %v3259 = vpack.c.b16 %v2534, %v2533
        %v3260 = vpack.c.b16 %v2536, %v2535
        %v3261 = vpack.c.b16 %v2538, %v2537
        %v3262 = vpack.c.b16 %v2540, %v2539
        %v3263 = vpack.c.b16 %v2542, %v2541
        %v3264 = vpack.c.b16 %v2544, %v2543
        %v3265 = vpack.c.b16 %v2546, %v2545
        %v3266 = vpack.c.b16 %v2548, %v2547
        %v3267 = vpack.c.b16 %v2550, %v2549
        %v3268 = vpack.c.b16 %v2552, %v2551
        %v3269 = vpack.c.b16 %v2554, %v2553
        %v3270 = vpack.c.b16 %v2556, %v2555
        %v3271 = vpack.c.b16 %v2558, %v2557
        %v3272 = vpack.c.b16 %v2560, %v2559
        %v3273 = vpack.c.b16 %v2562, %v2561
        %v3274 = vpack.c.b16 %v2564, %v2563
        %v3275 = vpack.c.b16 %v2566, %v2565
        %v3276 = vpack.c.b16 %v2568, %v2567
        %v3277 = vpack.c.b16 %v2570, %v2569
        %v3278 = vpack.c.b16 %v2572, %v2571
        %v3279 = vpack.c.b16 %v2574, %v2573
        %v3280 = vpack.c.b16 %v2576, %v2575
        %v3281 = vpack.c.b16 %v2578, %v2577
        %v3282 = vpack.c.b16 %v2580, %v2579
        %v3283 = vpack.c.b16 %v2582, %v2581
        %v3284 = vpack.c.b16 %v2584, %v2583
        %v3285 = vpack.c.b16 %v2586, %v2585
        %v3286 = vpack.c.b16 %v2588, %v2587
        %v3287 = vpack.c.b16 %v2590, %v2589
        %v3288 = vpack.c.b16 %v2592, %v2591
        %v3289 = vpack.c.b16 %v2594, %v2593
        %v3290 = vpack.c.b16 %v2596, %v2595
        %v3291 = vpack.c.b16 %v2598, %v2597
        %v3292 = vpack.c.b16 %v2600, %v2599
        %v3293 = vpack.c.b16 %v2602, %v2601
        %v3294 = vpack.c.b16 %v2604, %v2603
        %v3295 = vpack.c.b16 %v2606, %v2605
        %v3296 = vpack.c.b16 %v2608, %v2607
        %v3297 = vpack.c.b16 %v2610, %v2609
        %v3298 = vpack.c.b16 %v2612, %v2611
        %v3299 = vpack.c.b16 %v2614, %v2613
        %v3300 = vpack.c.b16 %v2616, %v2615
        %v3301 = vpack.c.b16 %v2618, %v2617
        %v3302 = vpack.c.b16 %v2620, %v2619
        %v3303 = vpack.c.b16 %v2622, %v2621
        %v3304 = vpack.c.b16 %v2624, %v2623
        %v3305 = vpack.c.b16 %v2626, %v2625
        %v3306 = vpack.c.b16 %v2628, %v2627
        %v3307 = vpack.c.b16 %v2630, %v2629
        %v3308 = vpack.c.b16 %v2632, %v2631
        %v3309 = vpack.c.b16 %v2634, %v2633
        %v3310 = vpack.c.b16 %v2636, %v2635
        %v3311 = vpack.c.b16 %v2638, %v2637
        %v3312 = vpack.c.b16 %v2640, %v2639
        %v3313 = vpack.c.b16 %v2642, %v2641
        %v3314 = vpack.c.b16 %v2644, %v2643
        %v3315 = vpack.c.b16 %v2646, %v2645
        %v3316 = vpack.c.b16 %v2648, %v2647
        %v3317 = vpack.c.b16 %v2650, %v2649
        %v3318 = vpack.c.b16 %v2652, %v2651
        %v3319 = vpack.c.b16 %v2654, %v2653
        %v3320 = vpack.c.b16 %v2656, %v2655
        %v3321 = vpack.c.b16 %v2658, %v2657
        %v3322 = vpack.c.b16 %v2660, %v2659
        %v3323 = vpack.c.b16 %v2662, %v2661
        %v3324 = vpack.c.b16 %v2664, %v2663
        %v3325 = vpack.c.b16 %v2666, %v2665
        %v3326 = vpack.c.b16 %v2668, %v2667
        %v3327 = vpack.c.b16 %v2670, %v2669
        %v3328 = vpack.c.b16 %v2672, %v2671
        %v3329 = vpack.c.b16 %v2674, %v2673
        %v3330 = vpack.c.b16 %v2676, %v2675
        %v3331 = vpack.c.b16 %v2678, %v2677
        %v3332 = vpack.c.b16 %v2680, %v2679
        %v3333 = vpack.c.b16 %v2682, %v2681
        %v3334 = vpack.c.b16 %v2684, %v2683
        %v3335 = vpack.c.b16 %v2686, %v2685
        %v3336 = vpack.c.b16 %v2688, %v2687
        %v3337 = vpack.c.b16 %v2690, %v2689
        %v3338 = vpack.c.b16 %v2692, %v2691
        %v3339 = vpack.c.b16 %v2694, %v2693
        %v3340 = vpack.c.b16 %v2696, %v2695
        %v3341 = vpack.c.b16 %v2698, %v2697
        %v3342 = vpack.c.b16 %v2700, %v2699
        %v3343 = vpack.c.b16 %v2702, %v2701
        %v3344 = vpack.c.b16 %v2704, %v2703
        %v3345 = vpack.c.b16 %v2706, %v2705
        %v3346 = vpack.c.b16 %v2708, %v2707
        %v3347 = vpack.c.b16 %v2710, %v2709
        %v3348 = vpack.c.b16 %v2712, %v2711
        %v3349 = vpack.c.b16 %v2714, %v2713
        %v3350 = vpack.c.b16 %v2716, %v2715
        %v3351 = vpack.c.b16 %v2718, %v2717
        %v3352 = vpack.c.b16 %v2720, %v2719
        %v3353 = vpack.c.b16 %v2722, %v2721
        %v3354 = vpack.c.b16 %v2724, %v2723
        %v3355 = vpack.c.b16 %v2726, %v2725
        %v3356 = vpack.c.b16 %v2728, %v2727
        %v3357 = vpack.c.b16 %v2730, %v2729
        %v3358 = vpack.c.b16 %v2732, %v2731
        %v3359 = vpack.c.b16 %v2734, %v2733
        %v3360 = vpack.c.b16 %v2736, %v2735
        %v3361 = vpack.c.b16 %v2738, %v2737
        %v3362 = vpack.c.b16 %v2740, %v2739
        %v3363 = vpack.c.b16 %v2742, %v2741
        %v3364 = vpack.c.b16 %v2744, %v2743
        %v3365 = vpack.c.b16 %v2746, %v2745
        %v3366 = vpack.c.b16 %v2748, %v2747
        %v3367 = vpack.c.b16 %v2750, %v2749
        %v3368 = vpack.c.b16 %v2752, %v2751
        %v3369 = vpack.c.b16 %v2754, %v2753
        %v3370 = vpack.c.b16 %v2756, %v2755
        %v3371 = vpack.c.b16 %v2758, %v2757
        %v3372 = vpack.c.b16 %v2760, %v2759
        %v3373 = vpack.c.b16 %v2762, %v2761
        %v3374 = vpack.c.b16 %v2764, %v2763
        %v3375 = vpack.c.b16 %v2766, %v2765
        %v3376 = vpack.c.b16 %v2768, %v2767
        %v3377 = vpack.c.b16 %v2770, %v2769
        %v3378 = vpack.c.b16 %v2772, %v2771
        %v3379 = vpack.c.b16 %v2774, %v2773
        %v3380 = vpack.c.b16 %v2776, %v2775
        %v3381 = vpack.c.b16 %v2778, %v2777
        %v3382 = vpack.c.b16 %v2780, %v2779
        %v3383 = vpack.c.b16 %v2782, %v2781
        %v3384 = vpack.c.b16 %v2784, %v2783
        %v3385 = vpack.c.b16 %v2786, %v2785
        %v3386 = vpack.c.b16 %v2788, %v2787
        %v3387 = vpack.c.b16 %v2790, %v2789
        %v3388 = vpack.c.b16 %v2792, %v2791
        %v3389 = vpack.c.b16 %v2794, %v2793
        %v3390 = vpack.c.b16 %v2796, %v2795
        %v3391 = vpack.c.b16 %v2798, %v2797
        %v3392 = vpack.c.b16 %v2800, %v2799
        %v3393 = vpack.c.b16 %v2802, %v2801
        %v3394 = vpack.c.b16 %v2804, %v2803
        %v3395 = vpack.c.b16 %v2806, %v2805
        %v3396 = vpack.c.b16 %v2808, %v2807
        %v3397 = vpack.c.b16 %v2810, %v2809
        %v3398 = vpack.c.b16 %v2812, %v2811
        %v3399 = vpack.c.b16 %v2814, %v2813
        %v3400 = vpack.c.b16 %v2816, %v2815
        %v3401 = vpack.c.b16 %v2818, %v2817
        %v3402 = vpack.c.b16 %v2820, %v2819
        %v3403 = vpack.c.b16 %v2822, %v2821
        %v3404 = vpack.c.b16 %v2824, %v2823
        %v3405 = vpack.c.b16 %v2826, %v2825
        %v3406 = vpack.c.b16 %v2828, %v2827
        %v3407 = vpack.c.b16 %v2830, %v2829
        %v3408 = vpack.c.b16 %v2832, %v2831
        %v3409 = vpack.c.b16 %v2834, %v2833
        %v3410 = vpack.c.b16 %v2836, %v2835
        %v3411 = vpack.c.b16 %v2838, %v2837
        %v3412 = vpack.c.b16 %v2840, %v2839
        %v3413 = vpack.c.b16 %v2842, %v2841
        %v3414 = vpack.c.b16 %v2844, %v2843
        %v3415 = vpack.c.b16 %v2846, %v2845
        %v3416 = vpack.c.b16 %v2848, %v2847
        %v3417 = vpack.c.b16 %v2850, %v2849
        %v3418 = vpack.c.b16 %v2852, %v2851
        %v3419 = vpack.c.b16 %v2854, %v2853
        %v3420 = vpack.c.b16 %v2856, %v2855
        %v3421 = vpack.c.b16 %v2858, %v2857
        %v3422 = vpack.c.b16 %v2860, %v2859
        %v3423 = vpack.c.b16 %v2862, %v2861
        %v3424 = vpack.c.b16 %v2864, %v2863
        %v3425 = vpack.c.b16 %v2866, %v2865
        %v3426 = vpack.c.b16 %v2868, %v2867
        %v3427 = vpack.c.b16 %v2870, %v2869
        %v3428 = vpack.c.b16 %v2872, %v2871
        %v3429 = vpack.c.b16 %v2874, %v2873
        %v3430 = vpack.c.b16 %v2876, %v2875
        %v3431 = vpack.c.b16 %v2878, %v2877
        %v3432 = vpack.c.b16 %v2880, %v2879
        %v3433 = vpack.c.b16 %v2882, %v2881
        %v3434 = vpack.c.b16 %v2884, %v2883
        %v3435 = vpack.c.b16 %v2886, %v2885
        %v3436 = vpack.c.b16 %v2888, %v2887
        %v3437 = vpack.c.b16 %v2890, %v2889
        %v3438 = vpack.c.b16 %v2892, %v2891
        %v3439 = vpack.c.b16 %v2894, %v2893
        %v3440 = vpack.c.b16 %v2896, %v2895
        %v3441 = vpack.c.b16 %v2898, %v2897
        %v3442 = vpack.c.b16 %v2900, %v2899
        %v3443 = vpack.c.b16 %v2902, %v2901
        %v3444 = vpack.c.b16 %v2904, %v2903
        %v3445 = vpack.c.b16 %v2906, %v2905
        %v3446 = vpack.c.b16 %v2908, %v2907
        %v3447 = vpack.c.b16 %v2910, %v2909
        %v3448 = vpack.c.b16 %v2912, %v2911
        %v3449 = vpack.c.b16 %v2914, %v2913
        %v3450 = vpack.c.b16 %v2916, %v2915
        %v3451 = vpack.c.b16 %v2918, %v2917
        %v3452 = vpack.c.b16 %v2920, %v2919
        %v3453 = vpack.c.b16 %v2922, %v2921
        %v3454 = vpack.c.b16 %v2924, %v2923
        %v3455 = vpack.c.b16 %v2926, %v2925
        %v3456 = vpack.c.b16 %v2928, %v2927
        %v3457 = vpack.c.b16 %v2930, %v2929
        %v3458 = vpack.c.b16 %v2932, %v2931
        %v3459 = vpack.c.b16 %v2934, %v2933
        %v3460 = vpack.c.b16 %v2936, %v2935
        %v3461 = vpack.c.b16 %v2938, %v2937
        %v3462 = vpack.c.b16 %v2940, %v2939
        %v3463 = vpack.c.b16 %v2942, %v2941
        %v3464 = vpack.c.b16 %v2944, %v2943
        %v3465 = vpack.c.b16 %v2946, %v2945
        %v3466 = vpack.c.b16 %v2948, %v2947
        %v3467 = vpack.c.b16 %v2950, %v2949
        %v3468 = vpack.c.b16 %v2952, %v2951
        %v3469 = vpack.c.b16 %v2954, %v2953
        %v3470 = vpack.c.b16 %v2956, %v2955
        %v3471 = vpack.c.b16 %v2958, %v2957
        %v3472 = vpack.c.b16 %v2960, %v2959
        %v3473 = vpack.c.b16 %v2962, %v2961
        %v3474 = vpack.c.b16 %v2964, %v2963
        %v3475 = vpack.c.b16 %v2966, %v2965
        %v3476 = vpack.c.b16 %v2968, %v2967
        %v3477 = vpack.c.b16 %v2970, %v2969
        %v3478 = vpack.c.b16 %v2972, %v2971
        %v3479 = vpack.c.b16 %v2974, %v2973
        %v3480 = vpack.c.b16 %v2976, %v2975
        %v3481 = vpack.c.b16 %v2978, %v2977
        %v3482 = vpack.c.b16 %v2980, %v2979
        %v3483 = vpack.c.b16 %v2982, %v2981
        %v3484 = vpack.c.b16 %v2984, %v2983
        %v3485 = vpack.c.b16 %v2986, %v2985
        %v3486 = vpack.c.b16 %v2988, %v2987
        %v3487 = vpack.c.b16 %v2990, %v2989
        %v3488 = vpack.c.b16 %v2992, %v2991
        %v3489 = vpack.c.b16 %v2994, %v2993
        %v3490 = vpack.c.b16 %v2996, %v2995
        %v3491 = vpack.c.b16 %v2998, %v2997
        %v3492 = vpack.c.b16 %v3000, %v2999
        %v3493 = vpack.c.b16 %v3002, %v3001
        %v3494 = vpack.c.b16 %v3004, %v3003
        %v3495 = vpack.c.b16 %v3006, %v3005
        %v3496 = vpack.c.b16 %v3008, %v3007
        %v3497 = vpack.c.b16 %v3010, %v3009
        %v3498 = vpack.c.b16 %v3012, %v3011
        %v3499 = vpack.c.b16 %v3014, %v3013
        %v3500 = vpack.c.b16 %v3016, %v3015
        %v3501 = vpack.c.b16 %v3018, %v3017
        %v3502 = vpack.c.b16 %v3020, %v3019
        %v3503 = vpack.c.b16 %v3022, %v3021
        %v3504 = vpack.c.b16 %v3024, %v3023
        %v3505 = vpack.c.b16 %v3026, %v3025
        %v3506 = vpack.c.b16 %v3028, %v3027
        %v3507 = vpack.c.b16 %v3030, %v3029
        %v3508 = vpack.c.b16 %v3032, %v3031
        %v3509 = vpack.c.b16 %v3034, %v3033
        %v3510 = vpack.c.b16 %v3036, %v3035
        %v3511 = vpack.c.b16 %v3038, %v3037
        %v3512 = vpack.c.b16 %v3040, %v3039
        %v3513 = vpack.c.b16 %v3042, %v3041
        %v3514 = vpack.c.b16 %v3044, %v3043
        %v3515 = vpack.c.b16 %v3046, %v3045
        %v3516 = vpack.c.b16 %v3048, %v3047
        %v3517 = vpack.c.b16 %v3050, %v3049
        %v3518 = vpack.c.b16 %v3052, %v3051
        %v3519 = vpack.c.b16 %v3054, %v3053
        %v3520 = vpack.c.b16 %v3056, %v3055
        %v3521 = vpack.c.b16 %v3058, %v3057
        %v3522 = vpack.c.b16 %v3060, %v3059
        %v3523 = vpack.c.b16 %v3062, %v3061
        %v3524 = vpack.c.b16 %v3064, %v3063
        %v3525 = vpack.c.b16 %v3066, %v3065
        %v3526 = vpack.c.b16 %v3068, %v3067
        %v3527 = vpack.c.b16 %v3070, %v3069
        %v3528 = vpack.c.b16 %v3072, %v3071
        %v3529 = vpack.c.b16 %v3074, %v3073
        %v3530 = vpack.c.b16 %v3076, %v3075
        %v3531 = vpack.c.b16 %v3078, %v3077
        %v3532 = vpack.c.b16 %v3080, %v3079
        %v3533 = vpack.c.b16 %v3082, %v3081
        %v3534 = vpack.c.b16 %v3084, %v3083
        %v3535 = vpack.c.b16 %v3086, %v3085
        %v3536 = vpack.c.b16 %v3088, %v3087
        %v3537 = vpack.c.b16 %v3090, %v3089
        %v3538 = vpack.c.b16 %v3092, %v3091
        %v3539 = vpack.c.b16 %v3094, %v3093
        %v3540 = vpack.c.b16 %v3096, %v3095
        %v3541 = vpack.c.b16 %v3098, %v3097
        %v3542 = vpack.c.b16 %v3100, %v3099
        %v3543 = vpack.c.b16 %v3102, %v3101
        %v3544 = vpack.c.b16 %v3104, %v3103
        %v3545 = vpack.c.b16 %v3106, %v3105
        %v3546 = vpack.c.b16 %v3108, %v3107
        %v3547 = vpack.c.b16 %v3110, %v3109
        %v3548 = vpack.c.b16 %v3112, %v3111
        %v3549 = vpack.c.b16 %v3114, %v3113
        %v3550 = vpack.c.b16 %v3116, %v3115
        %v3551 = vpack.c.b16 %v3118, %v3117
        %v3552 = vpack.c.b16 %v3120, %v3119
        %v3553 = vpack.c.b16 %v3122, %v3121
        %v3554 = vpack.c.b16 %v3124, %v3123
        %v3555 = vpack.c.b16 %v3126, %v3125
        %v3556 = vpack.c.b16 %v3128, %v3127
        %v3557 = vpack.c.b16 %v3130, %v3129
        %v3558 = vpack.c.b16 %v3132, %v3131
        %v3559 = vpack.c.b16 %v3134, %v3133
        %v3560 = vpack.c.b16 %v3136, %v3135
        %3985 = vmatprep.subr.bf16.mxu0 0
        %3986 = vmatpush1.bf16.msra.mxu0 %v3144
        %3987 = vmatprep.subr.bf16.mxu0 0
        %3988 = vmatpush1.bf16.msra.mxu0 %v3143
        %3989 = vmatprep.subr.bf16.mxu0 0
        %3990 = vmatpush1.bf16.msra.mxu0 %v3142
        %3991 = vmatprep.subr.bf16.mxu0 0
        %3992 = vmatpush1.bf16.msra.mxu0 %v3141
        %3993 = vmatprep.subr.bf16.mxu0 0
        %3994 = vmatpush1.bf16.msra.mxu0 %v3140
        %3995 = vmatprep.subr.bf16.mxu0 0
        %3996 = vmatpush1.bf16.msra.mxu0 %v3139
        %3997 = vmatprep.subr.bf16.mxu0 0
        %3998 = vmatpush1.bf16.msra.mxu0 %v3138
        %3999 = vmatprep.subr.bf16.mxu0 0
        %4000 = vmatpush1.bf16.msra.mxu0 %v3137
        %4001 = vmatprep.subr.bf16.mxu0 0
        %4002 = vmatpush2.bf16.msra.mxu0 %v3152
        %4003 = vmatprep.subr.bf16.mxu0 0
        %4004 = vmatpush2.bf16.msra.mxu0 %v3151
        %4005 = vmatprep.subr.bf16.mxu0 0
        %4006 = vmatpush2.bf16.msra.mxu0 %v3150
        %4007 = vmatprep.subr.bf16.mxu0 0
        %4008 = vmatpush2.bf16.msra.mxu0 %v3149
        %4009 = vmatprep.subr.bf16.mxu0 0
        %4010 = vmatpush2.bf16.msra.mxu0 %v3148
        %4011 = vmatprep.subr.bf16.mxu0 0
        %4012 = vmatpush2.bf16.msra.mxu0 %v3147
        %4013 = vmatprep.subr.bf16.mxu0 0
        %4014 = vmatpush2.bf16.msra.mxu0 %v3146
        %4015 = vmatprep.subr.bf16.mxu0 0
        %4016 = vmatpush2.bf16.msra.mxu0 %v3145
        %4017 = vmatprep.mubr.bf16.mxu0 %v1092
        %4018 = vmatmul.mubr.bf16.gmra.mxu0 %v1078
        %v4019 = vpop.f32.mrf.mxu0
        %v4020 = vadd.f32 0.0, %v4019
        %v4021 = vpop.f32.mrf.mxu0
        %v4022 = vpop.f32.mrf.mxu0
        %v4023 = vpop.f32.mrf.mxu0
        %4024 = vdwg.mxu0
        %4025 = vmatprep.subr.bf16.mxu0 0
        %4026 = vmatpush1.bf16.msra.mxu0 %v3160
        %4027 = vmatprep.subr.bf16.mxu0 0
        %4028 = vmatpush1.bf16.msra.mxu0 %v3159
        %4029 = vmatprep.subr.bf16.mxu0 0
        %4030 = vmatpush1.bf16.msra.mxu0 %v3158
        %4031 = vmatprep.subr.bf16.mxu0 0
        %4032 = vmatpush1.bf16.msra.mxu0 %v3157
        %4033 = vmatprep.subr.bf16.mxu0 0
        %4034 = vmatpush1.bf16.msra.mxu0 %v3156
        %4035 = vmatprep.subr.bf16.mxu0 0
        %4036 = vmatpush1.bf16.msra.mxu0 %v3155
        %4037 = vmatprep.subr.bf16.mxu0 0
        %4038 = vmatpush1.bf16.msra.mxu0 %v3154
        %4039 = vmatprep.subr.bf16.mxu0 0
        %4040 = vmatpush1.bf16.msra.mxu0 %v3153
        %4041 = vmatprep.subr.bf16.mxu0 0
        %4042 = vmatpush2.bf16.msra.mxu0 %v3168
        %4043 = vmatprep.subr.bf16.mxu0 0
        %4044 = vmatpush2.bf16.msra.mxu0 %v3167
        %4045 = vmatprep.subr.bf16.mxu0 0
        %4046 = vmatpush2.bf16.msra.mxu0 %v3166
        %4047 = vmatprep.subr.bf16.mxu0 0
        %4048 = vmatpush2.bf16.msra.mxu0 %v3165
        %4049 = vmatprep.subr.bf16.mxu0 0
        %4050 = vmatpush2.bf16.msra.mxu0 %v3164
        %4051 = vmatprep.subr.bf16.mxu0 0
        %4052 = vmatpush2.bf16.msra.mxu0 %v3163
        %4053 = vmatprep.subr.bf16.mxu0 0
        %4054 = vmatpush2.bf16.msra.mxu0 %v3162
        %4055 = vmatprep.subr.bf16.mxu0 0
        %4056 = vmatpush2.bf16.msra.mxu0 %v3161
        %4057 = vmatprep.mubr.bf16.mxu0 %v1102
        %4058 = vmatmul.mubr.bf16.gmra.mxu0 %v1100
        %v4059 = vpop.f32.mrf.mxu0
        %v4060 = vadd.f32 %v4020, %v4059
        %v4061 = vpop.f32.mrf.mxu0
        %v4062 = vpop.f32.mrf.mxu0
        %v4063 = vpop.f32.mrf.mxu0
        %4064 = vdwg.mxu0
        %4065 = vmatprep.subr.bf16.mxu0 0
        %4066 = vmatpush1.bf16.msra.mxu0 %v3176
        %4067 = vmatprep.subr.bf16.mxu0 0
        %4068 = vmatpush1.bf16.msra.mxu0 %v3175
        %4069 = vmatprep.subr.bf16.mxu0 0
        %4070 = vmatpush1.bf16.msra.mxu0 %v3174
        %4071 = vmatprep.subr.bf16.mxu0 0
        %4072 = vmatpush1.bf16.msra.mxu0 %v3173
        %4073 = vmatprep.subr.bf16.mxu0 0
        %4074 = vmatpush1.bf16.msra.mxu0 %v3172
        %4075 = vmatprep.subr.bf16.mxu0 0
        %4076 = vmatpush1.bf16.msra.mxu0 %v3171
        %4077 = vmatprep.subr.bf16.mxu0 0
        %4078 = vmatpush1.bf16.msra.mxu0 %v3170
        %4079 = vmatprep.subr.bf16.mxu0 0
        %4080 = vmatpush1.bf16.msra.mxu0 %v3169
        %4081 = vmatprep.subr.bf16.mxu0 0
        %4082 = vmatpush2.bf16.msra.mxu0 %v3184
        %4083 = vmatprep.subr.bf16.mxu0 0
        %4084 = vmatpush2.bf16.msra.mxu0 %v3183
        %4085 = vmatprep.subr.bf16.mxu0 0
        %4086 = vmatpush2.bf16.msra.mxu0 %v3182
        %4087 = vmatprep.subr.bf16.mxu0 0
        %4088 = vmatpush2.bf16.msra.mxu0 %v3181
        %4089 = vmatprep.subr.bf16.mxu0 0
        %4090 = vmatpush2.bf16.msra.mxu0 %v3180
        %4091 = vmatprep.subr.bf16.mxu0 0
        %4092 = vmatpush2.bf16.msra.mxu0 %v3179
        %4093 = vmatprep.subr.bf16.mxu0 0
        %4094 = vmatpush2.bf16.msra.mxu0 %v3178
        %4095 = vmatprep.subr.bf16.mxu0 0
        %4096 = vmatpush2.bf16.msra.mxu0 %v3177
        %4097 = vmatprep.mubr.bf16.mxu0 %v1099
        %4098 = vmatmul.mubr.bf16.gmra.mxu0 %v1085
        %v4099 = vpop.f32.mrf.mxu0
        %v4100 = vadd.f32 %v4060, %v4099
        %v4101 = vpop.f32.mrf.mxu0
        %v4102 = vpop.f32.mrf.mxu0
        %v4103 = vpop.f32.mrf.mxu0
        %4104 = vdwg.mxu0
        %4105 = vmatprep.subr.bf16.mxu0 0
        %4106 = vmatpush1.bf16.msra.mxu0 %v3192
        %4107 = vmatprep.subr.bf16.mxu0 0
        %4108 = vmatpush1.bf16.msra.mxu0 %v3191
        %4109 = vmatprep.subr.bf16.mxu0 0
        %4110 = vmatpush1.bf16.msra.mxu0 %v3190
        %4111 = vmatprep.subr.bf16.mxu0 0
        %4112 = vmatpush1.bf16.msra.mxu0 %v3189
        %4113 = vmatprep.subr.bf16.mxu0 0
        %4114 = vmatpush1.bf16.msra.mxu0 %v3188
        %4115 = vmatprep.subr.bf16.mxu0 0
        %4116 = vmatpush1.bf16.msra.mxu0 %v3187
        %4117 = vmatprep.subr.bf16.mxu0 0
        %4118 = vmatpush1.bf16.msra.mxu0 %v3186
        %4119 = vmatprep.subr.bf16.mxu0 0
        %4120 = vmatpush1.bf16.msra.mxu0 %v3185
        %4121 = vmatprep.subr.bf16.mxu0 0
        %4122 = vmatpush2.bf16.msra.mxu0 %v3200
        %4123 = vmatprep.subr.bf16.mxu0 0
        %4124 = vmatpush2.bf16.msra.mxu0 %v3199
        %4125 = vmatprep.subr.bf16.mxu0 0
        %4126 = vmatpush2.bf16.msra.mxu0 %v3198
        %4127 = vmatprep.subr.bf16.mxu0 0
        %4128 = vmatpush2.bf16.msra.mxu0 %v3197
        %4129 = vmatprep.subr.bf16.mxu0 0
        %4130 = vmatpush2.bf16.msra.mxu0 %v3196
        %4131 = vmatprep.subr.bf16.mxu0 0
        %4132 = vmatpush2.bf16.msra.mxu0 %v3195
        %4133 = vmatprep.subr.bf16.mxu0 0
        %4134 = vmatpush2.bf16.msra.mxu0 %v3194
        %4135 = vmatprep.subr.bf16.mxu0 0
        %4136 = vmatpush2.bf16.msra.mxu0 %v3193
        %4137 = vmatprep.mubr.bf16.mxu0 %v1103
        %4138 = vmatmul.mubr.bf16.gmra.mxu0 %v1101
        %v4139 = vpop.f32.mrf.mxu0
        %v4140 = vadd.f32 %v4100, %v4139
        %v4141 = vpop.f32.mrf.mxu0
        %v4142 = vpop.f32.mrf.mxu0
        %v4143 = vpop.f32.mrf.mxu0
        %4144 = vdwg.mxu0
        %4145 = vmatprep.subr.bf16.mxu0 0
        %4146 = vmatpush1.bf16.msra.mxu0 %v3208
        %4147 = vmatprep.subr.bf16.mxu0 0
        %4148 = vmatpush1.bf16.msra.mxu0 %v3207
        %4149 = vmatprep.subr.bf16.mxu0 0
        %4150 = vmatpush1.bf16.msra.mxu0 %v3206
        %4151 = vmatprep.subr.bf16.mxu0 0
        %4152 = vmatpush1.bf16.msra.mxu0 %v3205
        %4153 = vmatprep.subr.bf16.mxu0 0
        %4154 = vmatpush1.bf16.msra.mxu0 %v3204
        %4155 = vmatprep.subr.bf16.mxu0 0
        %4156 = vmatpush1.bf16.msra.mxu0 %v3203
        %4157 = vmatprep.subr.bf16.mxu0 0
        %4158 = vmatpush1.bf16.msra.mxu0 %v3202
        %4159 = vmatprep.subr.bf16.mxu0 0
        %4160 = vmatpush1.bf16.msra.mxu0 %v3201
        %4161 = vmatprep.subr.bf16.mxu0 0
        %4162 = vmatpush2.bf16.msra.mxu0 %v3216
        %4163 = vmatprep.subr.bf16.mxu0 0
        %4164 = vmatpush2.bf16.msra.mxu0 %v3215
        %4165 = vmatprep.subr.bf16.mxu0 0
        %4166 = vmatpush2.bf16.msra.mxu0 %v3214
        %4167 = vmatprep.subr.bf16.mxu0 0
        %4168 = vmatpush2.bf16.msra.mxu0 %v3213
        %4169 = vmatprep.subr.bf16.mxu0 0
        %4170 = vmatpush2.bf16.msra.mxu0 %v3212
        %4171 = vmatprep.subr.bf16.mxu0 0
        %4172 = vmatpush2.bf16.msra.mxu0 %v3211
        %4173 = vmatprep.subr.bf16.mxu0 0
        %4174 = vmatpush2.bf16.msra.mxu0 %v3210
        %4175 = vmatprep.subr.bf16.mxu0 0
        %4176 = vmatpush2.bf16.msra.mxu0 %v3209
        %4177 = vmatprep.mubr.bf16.mxu0 %v1141
        %4178 = vmatmul.mubr.bf16.gmra.mxu0 %v1127
        %v4179 = vpop.f32.mrf.mxu0
        %v4180 = vadd.f32 %v4140, %v4179
        %v4181 = vpop.f32.mrf.mxu0
        %v4182 = vpop.f32.mrf.mxu0
        %v4183 = vpop.f32.mrf.mxu0
        %4184 = vdwg.mxu0
        %4185 = vmatprep.subr.bf16.mxu0 0
        %4186 = vmatpush1.bf16.msra.mxu0 %v3224
        %4187 = vmatprep.subr.bf16.mxu0 0
        %4188 = vmatpush1.bf16.msra.mxu0 %v3223
        %4189 = vmatprep.subr.bf16.mxu0 0
        %4190 = vmatpush1.bf16.msra.mxu0 %v3222
        %4191 = vmatprep.subr.bf16.mxu0 0
        %4192 = vmatpush1.bf16.msra.mxu0 %v3221
        %4193 = vmatprep.subr.bf16.mxu0 0
        %4194 = vmatpush1.bf16.msra.mxu0 %v3220
        %4195 = vmatprep.subr.bf16.mxu0 0
        %4196 = vmatpush1.bf16.msra.mxu0 %v3219
        %4197 = vmatprep.subr.bf16.mxu0 0
        %4198 = vmatpush1.bf16.msra.mxu0 %v3218
        %4199 = vmatprep.subr.bf16.mxu0 0
        %4200 = vmatpush1.bf16.msra.mxu0 %v3217
        %4201 = vmatprep.subr.bf16.mxu0 0
        %4202 = vmatpush2.bf16.msra.mxu0 %v3232
        %4203 = vmatprep.subr.bf16.mxu0 0
        %4204 = vmatpush2.bf16.msra.mxu0 %v3231
        %4205 = vmatprep.subr.bf16.mxu0 0
        %4206 = vmatpush2.bf16.msra.mxu0 %v3230
        %4207 = vmatprep.subr.bf16.mxu0 0
        %4208 = vmatpush2.bf16.msra.mxu0 %v3229
        %4209 = vmatprep.subr.bf16.mxu0 0
        %4210 = vmatpush2.bf16.msra.mxu0 %v3228
        %4211 = vmatprep.subr.bf16.mxu0 0
        %4212 = vmatpush2.bf16.msra.mxu0 %v3227
        %4213 = vmatprep.subr.bf16.mxu0 0
        %4214 = vmatpush2.bf16.msra.mxu0 %v3226
        %4215 = vmatprep.subr.bf16.mxu0 0
        %4216 = vmatpush2.bf16.msra.mxu0 %v3225
        %4217 = vmatprep.mubr.bf16.mxu0 %v1151
        %4218 = vmatmul.mubr.bf16.gmra.mxu0 %v1149
        %v4219 = vpop.f32.mrf.mxu0
        %v4220 = vadd.f32 %v4180, %v4219
        %v4221 = vpop.f32.mrf.mxu0
        %v4222 = vpop.f32.mrf.mxu0
        %v4223 = vpop.f32.mrf.mxu0
        %4224 = vdwg.mxu0
        %4225 = vmatprep.subr.bf16.mxu0 0
        %4226 = vmatpush1.bf16.msra.mxu0 %v3240
        %4227 = vmatprep.subr.bf16.mxu0 0
        %4228 = vmatpush1.bf16.msra.mxu0 %v3239
        %4229 = vmatprep.subr.bf16.mxu0 0
        %4230 = vmatpush1.bf16.msra.mxu0 %v3238
        %4231 = vmatprep.subr.bf16.mxu0 0
        %4232 = vmatpush1.bf16.msra.mxu0 %v3237
        %4233 = vmatprep.subr.bf16.mxu0 0
        %4234 = vmatpush1.bf16.msra.mxu0 %v3236
        %4235 = vmatprep.subr.bf16.mxu0 0
        %4236 = vmatpush1.bf16.msra.mxu0 %v3235
        %4237 = vmatprep.subr.bf16.mxu0 0
        %4238 = vmatpush1.bf16.msra.mxu0 %v3234
        %4239 = vmatprep.subr.bf16.mxu0 0
        %4240 = vmatpush1.bf16.msra.mxu0 %v3233
        %4241 = vmatprep.subr.bf16.mxu0 0
        %4242 = vmatpush2.bf16.msra.mxu0 %v3248
        %4243 = vmatprep.subr.bf16.mxu0 0
        %4244 = vmatpush2.bf16.msra.mxu0 %v3247
        %4245 = vmatprep.subr.bf16.mxu0 0
        %4246 = vmatpush2.bf16.msra.mxu0 %v3246
        %4247 = vmatprep.subr.bf16.mxu0 0
        %4248 = vmatpush2.bf16.msra.mxu0 %v3245
        %4249 = vmatprep.subr.bf16.mxu0 0
        %4250 = vmatpush2.bf16.msra.mxu0 %v3244
        %4251 = vmatprep.subr.bf16.mxu0 0
        %4252 = vmatpush2.bf16.msra.mxu0 %v3243
        %4253 = vmatprep.subr.bf16.mxu0 0
        %4254 = vmatpush2.bf16.msra.mxu0 %v3242
        %4255 = vmatprep.subr.bf16.mxu0 0
        %4256 = vmatpush2.bf16.msra.mxu0 %v3241
        %4257 = vmatprep.mubr.bf16.mxu0 %v1148
        %4258 = vmatmul.mubr.bf16.gmra.mxu0 %v1134
        %v4259 = vpop.f32.mrf.mxu0
        %v4260 = vadd.f32 %v4220, %v4259
        %v4261 = vpop.f32.mrf.mxu0
        %v4262 = vpop.f32.mrf.mxu0
        %v4263 = vpop.f32.mrf.mxu0
        %4264 = vdwg.mxu0
        %4265 = vmatprep.subr.bf16.mxu0 0
        %4266 = vmatpush1.bf16.msra.mxu0 %v3256
        %4267 = vmatprep.subr.bf16.mxu0 0
        %4268 = vmatpush1.bf16.msra.mxu0 %v3255
        %4269 = vmatprep.subr.bf16.mxu0 0
        %4270 = vmatpush1.bf16.msra.mxu0 %v3254
        %4271 = vmatprep.subr.bf16.mxu0 0
        %4272 = vmatpush1.bf16.msra.mxu0 %v3253
        %4273 = vmatprep.subr.bf16.mxu0 0
        %4274 = vmatpush1.bf16.msra.mxu0 %v3252
        %4275 = vmatprep.subr.bf16.mxu0 0
        %4276 = vmatpush1.bf16.msra.mxu0 %v3251
        %4277 = vmatprep.subr.bf16.mxu0 0
        %4278 = vmatpush1.bf16.msra.mxu0 %v3250
        %4279 = vmatprep.subr.bf16.mxu0 0
        %4280 = vmatpush1.bf16.msra.mxu0 %v3249
        %4281 = vmatprep.subr.bf16.mxu0 0
        %4282 = vmatpush2.bf16.msra.mxu0 %v3264
        %4283 = vmatprep.subr.bf16.mxu0 0
        %4284 = vmatpush2.bf16.msra.mxu0 %v3263
        %4285 = vmatprep.subr.bf16.mxu0 0
        %4286 = vmatpush2.bf16.msra.mxu0 %v3262
        %4287 = vmatprep.subr.bf16.mxu0 0
        %4288 = vmatpush2.bf16.msra.mxu0 %v3261
        %4289 = vmatprep.subr.bf16.mxu0 0
        %4290 = vmatpush2.bf16.msra.mxu0 %v3260
        %4291 = vmatprep.subr.bf16.mxu0 0
        %4292 = vmatpush2.bf16.msra.mxu0 %v3259
        %4293 = vmatprep.subr.bf16.mxu0 0
        %4294 = vmatpush2.bf16.msra.mxu0 %v3258
        %4295 = vmatprep.subr.bf16.mxu0 0
        %4296 = vmatpush2.bf16.msra.mxu0 %v3257
        %4297 = vmatprep.mubr.bf16.mxu0 %v1152
        %4298 = vmatmul.mubr.bf16.gmra.mxu0 %v1150
        %v4299 = vpop.f32.mrf.mxu0
        %v4300 = vadd.f32 %v4260, %v4299
        %v4301 = vpop.f32.mrf.mxu0
        %v4302 = vpop.f32.mrf.mxu0
        %v4303 = vpop.f32.mrf.mxu0
        %4304 = vdwg.mxu0
        %4305 = vmatprep.subr.bf16.mxu0 0
        %4306 = vmatpush1.bf16.msra.mxu0 %v3272
        %4307 = vmatprep.subr.bf16.mxu0 0
        %4308 = vmatpush1.bf16.msra.mxu0 %v3271
        %4309 = vmatprep.subr.bf16.mxu0 0
        %4310 = vmatpush1.bf16.msra.mxu0 %v3270
        %4311 = vmatprep.subr.bf16.mxu0 0
        %4312 = vmatpush1.bf16.msra.mxu0 %v3269
        %4313 = vmatprep.subr.bf16.mxu0 0
        %4314 = vmatpush1.bf16.msra.mxu0 %v3268
        %4315 = vmatprep.subr.bf16.mxu0 0
        %4316 = vmatpush1.bf16.msra.mxu0 %v3267
        %4317 = vmatprep.subr.bf16.mxu0 0
        %4318 = vmatpush1.bf16.msra.mxu0 %v3266
        %4319 = vmatprep.subr.bf16.mxu0 0
        %4320 = vmatpush1.bf16.msra.mxu0 %v3265
        %4321 = vmatprep.subr.bf16.mxu0 0
        %4322 = vmatpush2.bf16.msra.mxu0 %v3280
        %4323 = vmatprep.subr.bf16.mxu0 0
        %4324 = vmatpush2.bf16.msra.mxu0 %v3279
        %4325 = vmatprep.subr.bf16.mxu0 0
        %4326 = vmatpush2.bf16.msra.mxu0 %v3278
        %4327 = vmatprep.subr.bf16.mxu0 0
        %4328 = vmatpush2.bf16.msra.mxu0 %v3277
        %4329 = vmatprep.subr.bf16.mxu0 0
        %4330 = vmatpush2.bf16.msra.mxu0 %v3276
        %4331 = vmatprep.subr.bf16.mxu0 0
        %4332 = vmatpush2.bf16.msra.mxu0 %v3275
        %4333 = vmatprep.subr.bf16.mxu0 0
        %4334 = vmatpush2.bf16.msra.mxu0 %v3274
        %4335 = vmatprep.subr.bf16.mxu0 0
        %4336 = vmatpush2.bf16.msra.mxu0 %v3273
        %4337 = vmatprep.mubr.bf16.mxu0 %v1190
        %4338 = vmatmul.mubr.bf16.gmra.mxu0 %v1176
        %v4339 = vpop.f32.mrf.mxu0
        %v4340 = vadd.f32 %v4300, %v4339
        %v4341 = vpop.f32.mrf.mxu0
        %v4342 = vpop.f32.mrf.mxu0
        %v4343 = vpop.f32.mrf.mxu0
        %4344 = vdwg.mxu0
        %4345 = vmatprep.subr.bf16.mxu0 0
        %4346 = vmatpush1.bf16.msra.mxu0 %v3288
        %4347 = vmatprep.subr.bf16.mxu0 0
        %4348 = vmatpush1.bf16.msra.mxu0 %v3287
        %4349 = vmatprep.subr.bf16.mxu0 0
        %4350 = vmatpush1.bf16.msra.mxu0 %v3286
        %4351 = vmatprep.subr.bf16.mxu0 0
        %4352 = vmatpush1.bf16.msra.mxu0 %v3285
        %4353 = vmatprep.subr.bf16.mxu0 0
        %4354 = vmatpush1.bf16.msra.mxu0 %v3284
        %4355 = vmatprep.subr.bf16.mxu0 0
        %4356 = vmatpush1.bf16.msra.mxu0 %v3283
        %4357 = vmatprep.subr.bf16.mxu0 0
        %4358 = vmatpush1.bf16.msra.mxu0 %v3282
        %4359 = vmatprep.subr.bf16.mxu0 0
        %4360 = vmatpush1.bf16.msra.mxu0 %v3281
        %4361 = vmatprep.subr.bf16.mxu0 0
        %4362 = vmatpush2.bf16.msra.mxu0 %v3296
        %4363 = vmatprep.subr.bf16.mxu0 0
        %4364 = vmatpush2.bf16.msra.mxu0 %v3295
        %4365 = vmatprep.subr.bf16.mxu0 0
        %4366 = vmatpush2.bf16.msra.mxu0 %v3294
        %4367 = vmatprep.subr.bf16.mxu0 0
        %4368 = vmatpush2.bf16.msra.mxu0 %v3293
        %4369 = vmatprep.subr.bf16.mxu0 0
        %4370 = vmatpush2.bf16.msra.mxu0 %v3292
        %4371 = vmatprep.subr.bf16.mxu0 0
        %4372 = vmatpush2.bf16.msra.mxu0 %v3291
        %4373 = vmatprep.subr.bf16.mxu0 0
        %4374 = vmatpush2.bf16.msra.mxu0 %v3290
        %4375 = vmatprep.subr.bf16.mxu0 0
        %4376 = vmatpush2.bf16.msra.mxu0 %v3289
        %4377 = vmatprep.mubr.bf16.mxu0 %v1200
        %4378 = vmatmul.mubr.bf16.gmra.mxu0 %v1198
        %v4379 = vpop.f32.mrf.mxu0
        %v4380 = vadd.f32 %v4340, %v4379
        %v4381 = vpop.f32.mrf.mxu0
        %v4382 = vpop.f32.mrf.mxu0
        %v4383 = vpop.f32.mrf.mxu0
        %4384 = vdwg.mxu0
        %4385 = vmatprep.subr.bf16.mxu0 0
        %4386 = vmatpush1.bf16.msra.mxu0 %v3304
        %4387 = vmatprep.subr.bf16.mxu0 0
        %4388 = vmatpush1.bf16.msra.mxu0 %v3303
        %4389 = vmatprep.subr.bf16.mxu0 0
        %4390 = vmatpush1.bf16.msra.mxu0 %v3302
        %4391 = vmatprep.subr.bf16.mxu0 0
        %4392 = vmatpush1.bf16.msra.mxu0 %v3301
        %4393 = vmatprep.subr.bf16.mxu0 0
        %4394 = vmatpush1.bf16.msra.mxu0 %v3300
        %4395 = vmatprep.subr.bf16.mxu0 0
        %4396 = vmatpush1.bf16.msra.mxu0 %v3299
        %4397 = vmatprep.subr.bf16.mxu0 0
        %4398 = vmatpush1.bf16.msra.mxu0 %v3298
        %4399 = vmatprep.subr.bf16.mxu0 0
        %4400 = vmatpush1.bf16.msra.mxu0 %v3297
        %4401 = vmatprep.subr.bf16.mxu0 0
        %4402 = vmatpush2.bf16.msra.mxu0 %v3312
        %4403 = vmatprep.subr.bf16.mxu0 0
        %4404 = vmatpush2.bf16.msra.mxu0 %v3311
        %4405 = vmatprep.subr.bf16.mxu0 0
        %4406 = vmatpush2.bf16.msra.mxu0 %v3310
        %4407 = vmatprep.subr.bf16.mxu0 0
        %4408 = vmatpush2.bf16.msra.mxu0 %v3309
        %4409 = vmatprep.subr.bf16.mxu0 0
        %4410 = vmatpush2.bf16.msra.mxu0 %v3308
        %4411 = vmatprep.subr.bf16.mxu0 0
        %4412 = vmatpush2.bf16.msra.mxu0 %v3307
        %4413 = vmatprep.subr.bf16.mxu0 0
        %4414 = vmatpush2.bf16.msra.mxu0 %v3306
        %4415 = vmatprep.subr.bf16.mxu0 0
        %4416 = vmatpush2.bf16.msra.mxu0 %v3305
        %4417 = vmatprep.mubr.bf16.mxu0 %v1197
        %4418 = vmatmul.mubr.bf16.gmra.mxu0 %v1183
        %v4419 = vpop.f32.mrf.mxu0
        %v4420 = vadd.f32 %v4380, %v4419
        %v4421 = vpop.f32.mrf.mxu0
        %v4422 = vpop.f32.mrf.mxu0
        %v4423 = vpop.f32.mrf.mxu0
        %4424 = vdwg.mxu0
        %4425 = vmatprep.subr.bf16.mxu0 0
        %4426 = vmatpush1.bf16.msra.mxu0 %v3320
        %4427 = vmatprep.subr.bf16.mxu0 0
        %4428 = vmatpush1.bf16.msra.mxu0 %v3319
        %4429 = vmatprep.subr.bf16.mxu0 0
        %4430 = vmatpush1.bf16.msra.mxu0 %v3318
        %4431 = vmatprep.subr.bf16.mxu0 0
        %4432 = vmatpush1.bf16.msra.mxu0 %v3317
        %4433 = vmatprep.subr.bf16.mxu0 0
        %4434 = vmatpush1.bf16.msra.mxu0 %v3316
        %4435 = vmatprep.subr.bf16.mxu0 0
        %4436 = vmatpush1.bf16.msra.mxu0 %v3315
        %4437 = vmatprep.subr.bf16.mxu0 0
        %4438 = vmatpush1.bf16.msra.mxu0 %v3314
        %4439 = vmatprep.subr.bf16.mxu0 0
        %4440 = vmatpush1.bf16.msra.mxu0 %v3313
        %4441 = vmatprep.subr.bf16.mxu0 0
        %4442 = vmatpush2.bf16.msra.mxu0 %v3328
        %4443 = vmatprep.subr.bf16.mxu0 0
        %4444 = vmatpush2.bf16.msra.mxu0 %v3327
        %4445 = vmatprep.subr.bf16.mxu0 0
        %4446 = vmatpush2.bf16.msra.mxu0 %v3326
        %4447 = vmatprep.subr.bf16.mxu0 0
        %4448 = vmatpush2.bf16.msra.mxu0 %v3325
        %4449 = vmatprep.subr.bf16.mxu0 0
        %4450 = vmatpush2.bf16.msra.mxu0 %v3324
        %4451 = vmatprep.subr.bf16.mxu0 0
        %4452 = vmatpush2.bf16.msra.mxu0 %v3323
        %4453 = vmatprep.subr.bf16.mxu0 0
        %4454 = vmatpush2.bf16.msra.mxu0 %v3322
        %4455 = vmatprep.subr.bf16.mxu0 0
        %4456 = vmatpush2.bf16.msra.mxu0 %v3321
        %4457 = vmatprep.mubr.bf16.mxu0 %v1201
        %4458 = vmatmul.mubr.bf16.gmra.mxu0 %v1199
        %v4459 = vpop.f32.mrf.mxu0
        %v4460 = vadd.f32 %v4420, %v4459
        %v4461 = vpop.f32.mrf.mxu0
        %v4462 = vpop.f32.mrf.mxu0
        %v4463 = vpop.f32.mrf.mxu0
        %4464 = vdwg.mxu0
        %4465 = vmatprep.subr.bf16.mxu0 0
        %4466 = vmatpush1.bf16.msra.mxu0 %v3336
        %4467 = vmatprep.subr.bf16.mxu0 0
        %4468 = vmatpush1.bf16.msra.mxu0 %v3335
        %4469 = vmatprep.subr.bf16.mxu0 0
        %4470 = vmatpush1.bf16.msra.mxu0 %v3334
        %4471 = vmatprep.subr.bf16.mxu0 0
        %4472 = vmatpush1.bf16.msra.mxu0 %v3333
        %4473 = vmatprep.subr.bf16.mxu0 0
        %4474 = vmatpush1.bf16.msra.mxu0 %v3332
        %4475 = vmatprep.subr.bf16.mxu0 0
        %4476 = vmatpush1.bf16.msra.mxu0 %v3331
        %4477 = vmatprep.subr.bf16.mxu0 0
        %4478 = vmatpush1.bf16.msra.mxu0 %v3330
        %4479 = vmatprep.subr.bf16.mxu0 0
        %4480 = vmatpush1.bf16.msra.mxu0 %v3329
        %4481 = vmatprep.subr.bf16.mxu0 0
        %4482 = vmatpush2.bf16.msra.mxu0 %v3344
        %4483 = vmatprep.subr.bf16.mxu0 0
        %4484 = vmatpush2.bf16.msra.mxu0 %v3343
        %4485 = vmatprep.subr.bf16.mxu0 0
        %4486 = vmatpush2.bf16.msra.mxu0 %v3342
        %4487 = vmatprep.subr.bf16.mxu0 0
        %4488 = vmatpush2.bf16.msra.mxu0 %v3341
        %4489 = vmatprep.subr.bf16.mxu0 0
        %4490 = vmatpush2.bf16.msra.mxu0 %v3340
        %4491 = vmatprep.subr.bf16.mxu0 0
        %4492 = vmatpush2.bf16.msra.mxu0 %v3339
        %4493 = vmatprep.subr.bf16.mxu0 0
        %4494 = vmatpush2.bf16.msra.mxu0 %v3338
        %4495 = vmatprep.subr.bf16.mxu0 0
        %4496 = vmatpush2.bf16.msra.mxu0 %v3337
        %4497 = vmatprep.mubr.bf16.mxu0 %v1239
        %4498 = vmatmul.mubr.bf16.gmra.mxu0 %v1225
        %v4499 = vpop.f32.mrf.mxu0
        %v4500 = vadd.f32 %v4460, %v4499
        %v4501 = vpop.f32.mrf.mxu0
        %v4502 = vpop.f32.mrf.mxu0
        %v4503 = vpop.f32.mrf.mxu0
        %4504 = vdwg.mxu0
        %4505 = vmatprep.subr.bf16.mxu0 0
        %4506 = vmatpush1.bf16.msra.mxu0 %v3352
        %4507 = vmatprep.subr.bf16.mxu0 0
        %4508 = vmatpush1.bf16.msra.mxu0 %v3351
        %4509 = vmatprep.subr.bf16.mxu0 0
        %4510 = vmatpush1.bf16.msra.mxu0 %v3350
        %4511 = vmatprep.subr.bf16.mxu0 0
        %4512 = vmatpush1.bf16.msra.mxu0 %v3349
        %4513 = vmatprep.subr.bf16.mxu0 0
        %4514 = vmatpush1.bf16.msra.mxu0 %v3348
        %4515 = vmatprep.subr.bf16.mxu0 0
        %4516 = vmatpush1.bf16.msra.mxu0 %v3347
        %4517 = vmatprep.subr.bf16.mxu0 0
        %4518 = vmatpush1.bf16.msra.mxu0 %v3346
        %4519 = vmatprep.subr.bf16.mxu0 0
        %4520 = vmatpush1.bf16.msra.mxu0 %v3345
        %4521 = vmatprep.subr.bf16.mxu0 0
        %4522 = vmatpush2.bf16.msra.mxu0 %v3360
        %4523 = vmatprep.subr.bf16.mxu0 0
        %4524 = vmatpush2.bf16.msra.mxu0 %v3359
        %4525 = vmatprep.subr.bf16.mxu0 0
        %4526 = vmatpush2.bf16.msra.mxu0 %v3358
        %4527 = vmatprep.subr.bf16.mxu0 0
        %4528 = vmatpush2.bf16.msra.mxu0 %v3357
        %4529 = vmatprep.subr.bf16.mxu0 0
        %4530 = vmatpush2.bf16.msra.mxu0 %v3356
        %4531 = vmatprep.subr.bf16.mxu0 0
        %4532 = vmatpush2.bf16.msra.mxu0 %v3355
        %4533 = vmatprep.subr.bf16.mxu0 0
        %4534 = vmatpush2.bf16.msra.mxu0 %v3354
        %4535 = vmatprep.subr.bf16.mxu0 0
        %4536 = vmatpush2.bf16.msra.mxu0 %v3353
        %4537 = vmatprep.mubr.bf16.mxu0 %v1249
        %4538 = vmatmul.mubr.bf16.gmra.mxu0 %v1247
        %v4539 = vpop.f32.mrf.mxu0
        %v4540 = vadd.f32 %v4500, %v4539
        %v4541 = vpop.f32.mrf.mxu0
        %v4542 = vpop.f32.mrf.mxu0
        %v4543 = vpop.f32.mrf.mxu0
        %4544 = vdwg.mxu0
        %4545 = vmatprep.subr.bf16.mxu0 0
        %4546 = vmatpush1.bf16.msra.mxu0 %v3368
        %4547 = vmatprep.subr.bf16.mxu0 0
        %4548 = vmatpush1.bf16.msra.mxu0 %v3367
        %4549 = vmatprep.subr.bf16.mxu0 0
        %4550 = vmatpush1.bf16.msra.mxu0 %v3366
        %4551 = vmatprep.subr.bf16.mxu0 0
        %4552 = vmatpush1.bf16.msra.mxu0 %v3365
        %4553 = vmatprep.subr.bf16.mxu0 0
        %4554 = vmatpush1.bf16.msra.mxu0 %v3364
        %4555 = vmatprep.subr.bf16.mxu0 0
        %4556 = vmatpush1.bf16.msra.mxu0 %v3363
        %4557 = vmatprep.subr.bf16.mxu0 0
        %4558 = vmatpush1.bf16.msra.mxu0 %v3362
        %4559 = vmatprep.subr.bf16.mxu0 0
        %4560 = vmatpush1.bf16.msra.mxu0 %v3361
        %4561 = vmatprep.subr.bf16.mxu0 0
        %4562 = vmatpush2.bf16.msra.mxu0 %v3376
        %4563 = vmatprep.subr.bf16.mxu0 0
        %4564 = vmatpush2.bf16.msra.mxu0 %v3375
        %4565 = vmatprep.subr.bf16.mxu0 0
        %4566 = vmatpush2.bf16.msra.mxu0 %v3374
        %4567 = vmatprep.subr.bf16.mxu0 0
        %4568 = vmatpush2.bf16.msra.mxu0 %v3373
        %4569 = vmatprep.subr.bf16.mxu0 0
        %4570 = vmatpush2.bf16.msra.mxu0 %v3372
        %4571 = vmatprep.subr.bf16.mxu0 0
        %4572 = vmatpush2.bf16.msra.mxu0 %v3371
        %4573 = vmatprep.subr.bf16.mxu0 0
        %4574 = vmatpush2.bf16.msra.mxu0 %v3370
        %4575 = vmatprep.subr.bf16.mxu0 0
        %4576 = vmatpush2.bf16.msra.mxu0 %v3369
        %4577 = vmatprep.mubr.bf16.mxu0 %v1246
        %4578 = vmatmul.mubr.bf16.gmra.mxu0 %v1232
        %v4579 = vpop.f32.mrf.mxu0
        %v4580 = vadd.f32 %v4540, %v4579
        %v4581 = vpop.f32.mrf.mxu0
        %v4582 = vpop.f32.mrf.mxu0
        %v4583 = vpop.f32.mrf.mxu0
        %4584 = vdwg.mxu0
        %4585 = vmatprep.subr.bf16.mxu0 0
        %4586 = vmatpush1.bf16.msra.mxu0 %v3384
        %4587 = vmatprep.subr.bf16.mxu0 0
        %4588 = vmatpush1.bf16.msra.mxu0 %v3383
        %4589 = vmatprep.subr.bf16.mxu0 0
        %4590 = vmatpush1.bf16.msra.mxu0 %v3382
        %4591 = vmatprep.subr.bf16.mxu0 0
        %4592 = vmatpush1.bf16.msra.mxu0 %v3381
        %4593 = vmatprep.subr.bf16.mxu0 0
        %4594 = vmatpush1.bf16.msra.mxu0 %v3380
        %4595 = vmatprep.subr.bf16.mxu0 0
        %4596 = vmatpush1.bf16.msra.mxu0 %v3379
        %4597 = vmatprep.subr.bf16.mxu0 0
        %4598 = vmatpush1.bf16.msra.mxu0 %v3378
        %4599 = vmatprep.subr.bf16.mxu0 0
        %4600 = vmatpush1.bf16.msra.mxu0 %v3377
        %4601 = vmatprep.subr.bf16.mxu0 0
        %4602 = vmatpush2.bf16.msra.mxu0 %v3392
        %4603 = vmatprep.subr.bf16.mxu0 0
        %4604 = vmatpush2.bf16.msra.mxu0 %v3391
        %4605 = vmatprep.subr.bf16.mxu0 0
        %4606 = vmatpush2.bf16.msra.mxu0 %v3390
        %4607 = vmatprep.subr.bf16.mxu0 0
        %4608 = vmatpush2.bf16.msra.mxu0 %v3389
        %4609 = vmatprep.subr.bf16.mxu0 0
        %4610 = vmatpush2.bf16.msra.mxu0 %v3388
        %4611 = vmatprep.subr.bf16.mxu0 0
        %4612 = vmatpush2.bf16.msra.mxu0 %v3387
        %4613 = vmatprep.subr.bf16.mxu0 0
        %4614 = vmatpush2.bf16.msra.mxu0 %v3386
        %4615 = vmatprep.subr.bf16.mxu0 0
        %4616 = vmatpush2.bf16.msra.mxu0 %v3385
        %4617 = vmatprep.mubr.bf16.mxu0 %v1250
        %4618 = vmatmul.mubr.bf16.gmra.mxu0 %v1248
        %v4619 = vpop.f32.mrf.mxu0
        %v4620 = vadd.f32 %v4580, %v4619
        %v4621 = vpop.f32.mrf.mxu0
        %v4622 = vpop.f32.mrf.mxu0
        %v4623 = vpop.f32.mrf.mxu0
        %4624 = vdwg.mxu0
        %4625 = vmatprep.subr.bf16.mxu0 0
        %4626 = vmatpush1.bf16.msra.mxu0 %v3400
        %4627 = vmatprep.subr.bf16.mxu0 0
        %4628 = vmatpush1.bf16.msra.mxu0 %v3399
        %4629 = vmatprep.subr.bf16.mxu0 0
        %4630 = vmatpush1.bf16.msra.mxu0 %v3398
        %4631 = vmatprep.subr.bf16.mxu0 0
        %4632 = vmatpush1.bf16.msra.mxu0 %v3397
        %4633 = vmatprep.subr.bf16.mxu0 0
        %4634 = vmatpush1.bf16.msra.mxu0 %v3396
        %4635 = vmatprep.subr.bf16.mxu0 0
        %4636 = vmatpush1.bf16.msra.mxu0 %v3395
        %4637 = vmatprep.subr.bf16.mxu0 0
        %4638 = vmatpush1.bf16.msra.mxu0 %v3394
        %4639 = vmatprep.subr.bf16.mxu0 0
        %4640 = vmatpush1.bf16.msra.mxu0 %v3393
        %4641 = vmatprep.subr.bf16.mxu0 0
        %4642 = vmatpush2.bf16.msra.mxu0 %v3408
        %4643 = vmatprep.subr.bf16.mxu0 0
        %4644 = vmatpush2.bf16.msra.mxu0 %v3407
        %4645 = vmatprep.subr.bf16.mxu0 0
        %4646 = vmatpush2.bf16.msra.mxu0 %v3406
        %4647 = vmatprep.subr.bf16.mxu0 0
        %4648 = vmatpush2.bf16.msra.mxu0 %v3405
        %4649 = vmatprep.subr.bf16.mxu0 0
        %4650 = vmatpush2.bf16.msra.mxu0 %v3404
        %4651 = vmatprep.subr.bf16.mxu0 0
        %4652 = vmatpush2.bf16.msra.mxu0 %v3403
        %4653 = vmatprep.subr.bf16.mxu0 0
        %4654 = vmatpush2.bf16.msra.mxu0 %v3402
        %4655 = vmatprep.subr.bf16.mxu0 0
        %4656 = vmatpush2.bf16.msra.mxu0 %v3401
        %4657 = vmatprep.mubr.bf16.mxu0 %v1288
        %4658 = vmatmul.mubr.bf16.gmra.mxu0 %v1274
        %v4659 = vpop.f32.mrf.mxu0
        %v4660 = vadd.f32 %v4620, %v4659
        %v4661 = vpop.f32.mrf.mxu0
        %v4662 = vpop.f32.mrf.mxu0
        %v4663 = vpop.f32.mrf.mxu0
        %4664 = vdwg.mxu0
        %4665 = vmatprep.subr.bf16.mxu0 0
        %4666 = vmatpush1.bf16.msra.mxu0 %v3416
        %4667 = vmatprep.subr.bf16.mxu0 0
        %4668 = vmatpush1.bf16.msra.mxu0 %v3415
        %4669 = vmatprep.subr.bf16.mxu0 0
        %4670 = vmatpush1.bf16.msra.mxu0 %v3414
        %4671 = vmatprep.subr.bf16.mxu0 0
        %4672 = vmatpush1.bf16.msra.mxu0 %v3413
        %4673 = vmatprep.subr.bf16.mxu0 0
        %4674 = vmatpush1.bf16.msra.mxu0 %v3412
        %4675 = vmatprep.subr.bf16.mxu0 0
        %4676 = vmatpush1.bf16.msra.mxu0 %v3411
        %4677 = vmatprep.subr.bf16.mxu0 0
        %4678 = vmatpush1.bf16.msra.mxu0 %v3410
        %4679 = vmatprep.subr.bf16.mxu0 0
        %4680 = vmatpush1.bf16.msra.mxu0 %v3409
        %4681 = vmatprep.subr.bf16.mxu0 0
        %4682 = vmatpush2.bf16.msra.mxu0 %v3424
        %4683 = vmatprep.subr.bf16.mxu0 0
        %4684 = vmatpush2.bf16.msra.mxu0 %v3423
        %4685 = vmatprep.subr.bf16.mxu0 0
        %4686 = vmatpush2.bf16.msra.mxu0 %v3422
        %4687 = vmatprep.subr.bf16.mxu0 0
        %4688 = vmatpush2.bf16.msra.mxu0 %v3421
        %4689 = vmatprep.subr.bf16.mxu0 0
        %4690 = vmatpush2.bf16.msra.mxu0 %v3420
        %4691 = vmatprep.subr.bf16.mxu0 0
        %4692 = vmatpush2.bf16.msra.mxu0 %v3419
        %4693 = vmatprep.subr.bf16.mxu0 0
        %4694 = vmatpush2.bf16.msra.mxu0 %v3418
        %4695 = vmatprep.subr.bf16.mxu0 0
        %4696 = vmatpush2.bf16.msra.mxu0 %v3417
        %4697 = vmatprep.mubr.bf16.mxu0 %v1298
        %4698 = vmatmul.mubr.bf16.gmra.mxu0 %v1296
        %v4699 = vpop.f32.mrf.mxu0
        %v4700 = vadd.f32 %v4660, %v4699
        %v4701 = vpop.f32.mrf.mxu0
        %v4702 = vpop.f32.mrf.mxu0
        %v4703 = vpop.f32.mrf.mxu0
        %4704 = vdwg.mxu0
        %4705 = vmatprep.subr.bf16.mxu0 0
        %4706 = vmatpush1.bf16.msra.mxu0 %v3432
        %4707 = vmatprep.subr.bf16.mxu0 0
        %4708 = vmatpush1.bf16.msra.mxu0 %v3431
        %4709 = vmatprep.subr.bf16.mxu0 0
        %4710 = vmatpush1.bf16.msra.mxu0 %v3430
        %4711 = vmatprep.subr.bf16.mxu0 0
        %4712 = vmatpush1.bf16.msra.mxu0 %v3429
        %4713 = vmatprep.subr.bf16.mxu0 0
        %4714 = vmatpush1.bf16.msra.mxu0 %v3428
        %4715 = vmatprep.subr.bf16.mxu0 0
        %4716 = vmatpush1.bf16.msra.mxu0 %v3427
        %4717 = vmatprep.subr.bf16.mxu0 0
        %4718 = vmatpush1.bf16.msra.mxu0 %v3426
        %4719 = vmatprep.subr.bf16.mxu0 0
        %4720 = vmatpush1.bf16.msra.mxu0 %v3425
        %4721 = vmatprep.subr.bf16.mxu0 0
        %4722 = vmatpush2.bf16.msra.mxu0 %v3440
        %4723 = vmatprep.subr.bf16.mxu0 0
        %4724 = vmatpush2.bf16.msra.mxu0 %v3439
        %4725 = vmatprep.subr.bf16.mxu0 0
        %4726 = vmatpush2.bf16.msra.mxu0 %v3438
        %4727 = vmatprep.subr.bf16.mxu0 0
        %4728 = vmatpush2.bf16.msra.mxu0 %v3437
        %4729 = vmatprep.subr.bf16.mxu0 0
        %4730 = vmatpush2.bf16.msra.mxu0 %v3436
        %4731 = vmatprep.subr.bf16.mxu0 0
        %4732 = vmatpush2.bf16.msra.mxu0 %v3435
        %4733 = vmatprep.subr.bf16.mxu0 0
        %4734 = vmatpush2.bf16.msra.mxu0 %v3434
        %4735 = vmatprep.subr.bf16.mxu0 0
        %4736 = vmatpush2.bf16.msra.mxu0 %v3433
        %4737 = vmatprep.mubr.bf16.mxu0 %v1295
        %4738 = vmatmul.mubr.bf16.gmra.mxu0 %v1281
        %v4739 = vpop.f32.mrf.mxu0
        %v4740 = vadd.f32 %v4700, %v4739
        %v4741 = vpop.f32.mrf.mxu0
        %v4742 = vpop.f32.mrf.mxu0
        %v4743 = vpop.f32.mrf.mxu0
        %4744 = vdwg.mxu0
        %4745 = vmatprep.subr.bf16.mxu0 0
        %4746 = vmatpush1.bf16.msra.mxu0 %v3448
        %4747 = vmatprep.subr.bf16.mxu0 0
        %4748 = vmatpush1.bf16.msra.mxu0 %v3447
        %4749 = vmatprep.subr.bf16.mxu0 0
        %4750 = vmatpush1.bf16.msra.mxu0 %v3446
        %4751 = vmatprep.subr.bf16.mxu0 0
        %4752 = vmatpush1.bf16.msra.mxu0 %v3445
        %4753 = vmatprep.subr.bf16.mxu0 0
        %4754 = vmatpush1.bf16.msra.mxu0 %v3444
        %4755 = vmatprep.subr.bf16.mxu0 0
        %4756 = vmatpush1.bf16.msra.mxu0 %v3443
        %4757 = vmatprep.subr.bf16.mxu0 0
        %4758 = vmatpush1.bf16.msra.mxu0 %v3442
        %4759 = vmatprep.subr.bf16.mxu0 0
        %4760 = vmatpush1.bf16.msra.mxu0 %v3441
        %4761 = vmatprep.subr.bf16.mxu0 0
        %4762 = vmatpush2.bf16.msra.mxu0 %v3456
        %4763 = vmatprep.subr.bf16.mxu0 0
        %4764 = vmatpush2.bf16.msra.mxu0 %v3455
        %4765 = vmatprep.subr.bf16.mxu0 0
        %4766 = vmatpush2.bf16.msra.mxu0 %v3454
        %4767 = vmatprep.subr.bf16.mxu0 0
        %4768 = vmatpush2.bf16.msra.mxu0 %v3453
        %4769 = vmatprep.subr.bf16.mxu0 0
        %4770 = vmatpush2.bf16.msra.mxu0 %v3452
        %4771 = vmatprep.subr.bf16.mxu0 0
        %4772 = vmatpush2.bf16.msra.mxu0 %v3451
        %4773 = vmatprep.subr.bf16.mxu0 0
        %4774 = vmatpush2.bf16.msra.mxu0 %v3450
        %4775 = vmatprep.subr.bf16.mxu0 0
        %4776 = vmatpush2.bf16.msra.mxu0 %v3449
        %4777 = vmatprep.mubr.bf16.mxu0 %v1299
        %4778 = vmatmul.mubr.bf16.gmra.mxu0 %v1297
        %v4779 = vpop.f32.mrf.mxu0
        %v4780 = vadd.f32 %v4740, %v4779
        %v4781 = vpop.f32.mrf.mxu0
        %v4782 = vpop.f32.mrf.mxu0
        %v4783 = vpop.f32.mrf.mxu0
        %4784 = vdwg.mxu0
        %4785 = vmatprep.subr.bf16.mxu0 0
        %4786 = vmatpush1.bf16.msra.mxu0 %v3464
        %4787 = vmatprep.subr.bf16.mxu0 0
        %4788 = vmatpush1.bf16.msra.mxu0 %v3463
        %4789 = vmatprep.subr.bf16.mxu0 0
        %4790 = vmatpush1.bf16.msra.mxu0 %v3462
        %4791 = vmatprep.subr.bf16.mxu0 0
        %4792 = vmatpush1.bf16.msra.mxu0 %v3461
        %4793 = vmatprep.subr.bf16.mxu0 0
        %4794 = vmatpush1.bf16.msra.mxu0 %v3460
        %4795 = vmatprep.subr.bf16.mxu0 0
        %4796 = vmatpush1.bf16.msra.mxu0 %v3459
        %4797 = vmatprep.subr.bf16.mxu0 0
        %4798 = vmatpush1.bf16.msra.mxu0 %v3458
        %4799 = vmatprep.subr.bf16.mxu0 0
        %4800 = vmatpush1.bf16.msra.mxu0 %v3457
        %4801 = vmatprep.subr.bf16.mxu0 0
        %4802 = vmatpush2.bf16.msra.mxu0 %v3472
        %4803 = vmatprep.subr.bf16.mxu0 0
        %4804 = vmatpush2.bf16.msra.mxu0 %v3471
        %4805 = vmatprep.subr.bf16.mxu0 0
        %4806 = vmatpush2.bf16.msra.mxu0 %v3470
        %4807 = vmatprep.subr.bf16.mxu0 0
        %4808 = vmatpush2.bf16.msra.mxu0 %v3469
        %4809 = vmatprep.subr.bf16.mxu0 0
        %4810 = vmatpush2.bf16.msra.mxu0 %v3468
        %4811 = vmatprep.subr.bf16.mxu0 0
        %4812 = vmatpush2.bf16.msra.mxu0 %v3467
        %4813 = vmatprep.subr.bf16.mxu0 0
        %4814 = vmatpush2.bf16.msra.mxu0 %v3466
        %4815 = vmatprep.subr.bf16.mxu0 0
        %4816 = vmatpush2.bf16.msra.mxu0 %v3465
        %4817 = vmatprep.mubr.bf16.mxu0 %v1337
        %4818 = vmatmul.mubr.bf16.gmra.mxu0 %v1323
        %v4819 = vpop.f32.mrf.mxu0
        %v4820 = vadd.f32 %v4780, %v4819
        %v4821 = vpop.f32.mrf.mxu0
        %v4822 = vpop.f32.mrf.mxu0
        %v4823 = vpop.f32.mrf.mxu0
        %4824 = vdwg.mxu0
        %4825 = vmatprep.subr.bf16.mxu0 0
        %4826 = vmatpush1.bf16.msra.mxu0 %v3480
        %4827 = vmatprep.subr.bf16.mxu0 0
        %4828 = vmatpush1.bf16.msra.mxu0 %v3479
        %4829 = vmatprep.subr.bf16.mxu0 0
        %4830 = vmatpush1.bf16.msra.mxu0 %v3478
        %4831 = vmatprep.subr.bf16.mxu0 0
        %4832 = vmatpush1.bf16.msra.mxu0 %v3477
        %4833 = vmatprep.subr.bf16.mxu0 0
        %4834 = vmatpush1.bf16.msra.mxu0 %v3476
        %4835 = vmatprep.subr.bf16.mxu0 0
        %4836 = vmatpush1.bf16.msra.mxu0 %v3475
        %4837 = vmatprep.subr.bf16.mxu0 0
        %4838 = vmatpush1.bf16.msra.mxu0 %v3474
        %4839 = vmatprep.subr.bf16.mxu0 0
        %4840 = vmatpush1.bf16.msra.mxu0 %v3473
        %4841 = vmatprep.subr.bf16.mxu0 0
        %4842 = vmatpush2.bf16.msra.mxu0 %v3488
        %4843 = vmatprep.subr.bf16.mxu0 0
        %4844 = vmatpush2.bf16.msra.mxu0 %v3487
        %4845 = vmatprep.subr.bf16.mxu0 0
        %4846 = vmatpush2.bf16.msra.mxu0 %v3486
        %4847 = vmatprep.subr.bf16.mxu0 0
        %4848 = vmatpush2.bf16.msra.mxu0 %v3485
        %4849 = vmatprep.subr.bf16.mxu0 0
        %4850 = vmatpush2.bf16.msra.mxu0 %v3484
        %4851 = vmatprep.subr.bf16.mxu0 0
        %4852 = vmatpush2.bf16.msra.mxu0 %v3483
        %4853 = vmatprep.subr.bf16.mxu0 0
        %4854 = vmatpush2.bf16.msra.mxu0 %v3482
        %4855 = vmatprep.subr.bf16.mxu0 0
        %4856 = vmatpush2.bf16.msra.mxu0 %v3481
        %4857 = vmatprep.mubr.bf16.mxu0 %v1347
        %4858 = vmatmul.mubr.bf16.gmra.mxu0 %v1345
        %v4859 = vpop.f32.mrf.mxu0
        %v4860 = vadd.f32 %v4820, %v4859
        %v4861 = vpop.f32.mrf.mxu0
        %v4862 = vpop.f32.mrf.mxu0
        %v4863 = vpop.f32.mrf.mxu0
        %4864 = vdwg.mxu0
        %4865 = vmatprep.subr.bf16.mxu0 0
        %4866 = vmatpush1.bf16.msra.mxu0 %v3496
        %4867 = vmatprep.subr.bf16.mxu0 0
        %4868 = vmatpush1.bf16.msra.mxu0 %v3495
        %4869 = vmatprep.subr.bf16.mxu0 0
        %4870 = vmatpush1.bf16.msra.mxu0 %v3494
        %4871 = vmatprep.subr.bf16.mxu0 0
        %4872 = vmatpush1.bf16.msra.mxu0 %v3493
        %4873 = vmatprep.subr.bf16.mxu0 0
        %4874 = vmatpush1.bf16.msra.mxu0 %v3492
        %4875 = vmatprep.subr.bf16.mxu0 0
        %4876 = vmatpush1.bf16.msra.mxu0 %v3491
        %4877 = vmatprep.subr.bf16.mxu0 0
        %4878 = vmatpush1.bf16.msra.mxu0 %v3490
        %4879 = vmatprep.subr.bf16.mxu0 0
        %4880 = vmatpush1.bf16.msra.mxu0 %v3489
        %4881 = vmatprep.subr.bf16.mxu0 0
        %4882 = vmatpush2.bf16.msra.mxu0 %v3504
        %4883 = vmatprep.subr.bf16.mxu0 0
        %4884 = vmatpush2.bf16.msra.mxu0 %v3503
        %4885 = vmatprep.subr.bf16.mxu0 0
        %4886 = vmatpush2.bf16.msra.mxu0 %v3502
        %4887 = vmatprep.subr.bf16.mxu0 0
        %4888 = vmatpush2.bf16.msra.mxu0 %v3501
        %4889 = vmatprep.subr.bf16.mxu0 0
        %4890 = vmatpush2.bf16.msra.mxu0 %v3500
        %4891 = vmatprep.subr.bf16.mxu0 0
        %4892 = vmatpush2.bf16.msra.mxu0 %v3499
        %4893 = vmatprep.subr.bf16.mxu0 0
        %4894 = vmatpush2.bf16.msra.mxu0 %v3498
        %4895 = vmatprep.subr.bf16.mxu0 0
        %4896 = vmatpush2.bf16.msra.mxu0 %v3497
        %4897 = vmatprep.mubr.bf16.mxu0 %v1344
        %4898 = vmatmul.mubr.bf16.gmra.mxu0 %v1330
        %v4899 = vpop.f32.mrf.mxu0
        %v4900 = vadd.f32 %v4860, %v4899
        %v4901 = vpop.f32.mrf.mxu0
        %v4902 = vpop.f32.mrf.mxu0
        %v4903 = vpop.f32.mrf.mxu0
        %4904 = vdwg.mxu0
        %4905 = vmatprep.subr.bf16.mxu0 0
        %4906 = vmatpush1.bf16.msra.mxu0 %v3512
        %4907 = vmatprep.subr.bf16.mxu0 0
        %4908 = vmatpush1.bf16.msra.mxu0 %v3511
        %4909 = vmatprep.subr.bf16.mxu0 0
        %4910 = vmatpush1.bf16.msra.mxu0 %v3510
        %4911 = vmatprep.subr.bf16.mxu0 0
        %4912 = vmatpush1.bf16.msra.mxu0 %v3509
        %4913 = vmatprep.subr.bf16.mxu0 0
        %4914 = vmatpush1.bf16.msra.mxu0 %v3508
        %4915 = vmatprep.subr.bf16.mxu0 0
        %4916 = vmatpush1.bf16.msra.mxu0 %v3507
        %4917 = vmatprep.subr.bf16.mxu0 0
        %4918 = vmatpush1.bf16.msra.mxu0 %v3506
        %4919 = vmatprep.subr.bf16.mxu0 0
        %4920 = vmatpush1.bf16.msra.mxu0 %v3505
        %4921 = vmatprep.subr.bf16.mxu0 0
        %4922 = vmatpush2.bf16.msra.mxu0 %v3520
        %4923 = vmatprep.subr.bf16.mxu0 0
        %4924 = vmatpush2.bf16.msra.mxu0 %v3519
        %4925 = vmatprep.subr.bf16.mxu0 0
        %4926 = vmatpush2.bf16.msra.mxu0 %v3518
        %4927 = vmatprep.subr.bf16.mxu0 0
        %4928 = vmatpush2.bf16.msra.mxu0 %v3517
        %4929 = vmatprep.subr.bf16.mxu0 0
        %4930 = vmatpush2.bf16.msra.mxu0 %v3516
        %4931 = vmatprep.subr.bf16.mxu0 0
        %4932 = vmatpush2.bf16.msra.mxu0 %v3515
        %4933 = vmatprep.subr.bf16.mxu0 0
        %4934 = vmatpush2.bf16.msra.mxu0 %v3514
        %4935 = vmatprep.subr.bf16.mxu0 0
        %4936 = vmatpush2.bf16.msra.mxu0 %v3513
        %4937 = vmatprep.mubr.bf16.mxu0 %v1348
        %4938 = vmatmul.mubr.bf16.gmra.mxu0 %v1346
        %v4939 = vpop.f32.mrf.mxu0
        %v4940 = vadd.f32 %v4900, %v4939
        %v4941 = vpop.f32.mrf.mxu0
        %v4942 = vpop.f32.mrf.mxu0
        %v4943 = vpop.f32.mrf.mxu0
        %4944 = vdwg.mxu0
        %4945 = vmatprep.subr.bf16.mxu0 0
        %4946 = vmatpush1.bf16.msra.mxu0 %v3528
        %4947 = vmatprep.subr.bf16.mxu0 0
        %4948 = vmatpush1.bf16.msra.mxu0 %v3527
        %4949 = vmatprep.subr.bf16.mxu0 0
        %4950 = vmatpush1.bf16.msra.mxu0 %v3526
        %4951 = vmatprep.subr.bf16.mxu0 0
        %4952 = vmatpush1.bf16.msra.mxu0 %v3525
        %4953 = vmatprep.subr.bf16.mxu0 0
        %4954 = vmatpush1.bf16.msra.mxu0 %v3524
        %4955 = vmatprep.subr.bf16.mxu0 0
        %4956 = vmatpush1.bf16.msra.mxu0 %v3523
        %4957 = vmatprep.subr.bf16.mxu0 0
        %4958 = vmatpush1.bf16.msra.mxu0 %v3522
        %4959 = vmatprep.subr.bf16.mxu0 0
        %4960 = vmatpush1.bf16.msra.mxu0 %v3521
        %4961 = vmatprep.subr.bf16.mxu0 0
        %4962 = vmatpush2.bf16.msra.mxu0 %v3536
        %4963 = vmatprep.subr.bf16.mxu0 0
        %4964 = vmatpush2.bf16.msra.mxu0 %v3535
        %4965 = vmatprep.subr.bf16.mxu0 0
        %4966 = vmatpush2.bf16.msra.mxu0 %v3534
        %4967 = vmatprep.subr.bf16.mxu0 0
        %4968 = vmatpush2.bf16.msra.mxu0 %v3533
        %4969 = vmatprep.subr.bf16.mxu0 0
        %4970 = vmatpush2.bf16.msra.mxu0 %v3532
        %4971 = vmatprep.subr.bf16.mxu0 0
        %4972 = vmatpush2.bf16.msra.mxu0 %v3531
        %4973 = vmatprep.subr.bf16.mxu0 0
        %4974 = vmatpush2.bf16.msra.mxu0 %v3530
        %4975 = vmatprep.subr.bf16.mxu0 0
        %4976 = vmatpush2.bf16.msra.mxu0 %v3529
        %4977 = vmatprep.mubr.bf16.mxu0 %v1385
        %4978 = vmatmul.mubr.bf16.gmra.mxu0 %v1371
        %v4979 = vpop.f32.mrf.mxu0
        %v4980 = vadd.f32 %v4940, %v4979
        %v4981 = vpop.f32.mrf.mxu0
        %v4982 = vpop.f32.mrf.mxu0
        %v4983 = vpop.f32.mrf.mxu0
        %4984 = vdwg.mxu0
        %4985 = vmatprep.subr.bf16.mxu0 0
        %4986 = vmatpush1.bf16.msra.mxu0 %v3544
        %4987 = vmatprep.subr.bf16.mxu0 0
        %4988 = vmatpush1.bf16.msra.mxu0 %v3543
        %4989 = vmatprep.subr.bf16.mxu0 0
        %4990 = vmatpush1.bf16.msra.mxu0 %v3542
        %4991 = vmatprep.subr.bf16.mxu0 0
        %4992 = vmatpush1.bf16.msra.mxu0 %v3541
        %4993 = vmatprep.subr.bf16.mxu0 0
        %4994 = vmatpush1.bf16.msra.mxu0 %v3540
        %4995 = vmatprep.subr.bf16.mxu0 0
        %4996 = vmatpush1.bf16.msra.mxu0 %v3539
        %4997 = vmatprep.subr.bf16.mxu0 0
        %4998 = vmatpush1.bf16.msra.mxu0 %v3538
        %4999 = vmatprep.subr.bf16.mxu0 0
        %5000 = vmatpush1.bf16.msra.mxu0 %v3537
        %5001 = vmatprep.subr.bf16.mxu0 0
        %5002 = vmatpush2.bf16.msra.mxu0 %v3552
        %5003 = vmatprep.subr.bf16.mxu0 0
        %5004 = vmatpush2.bf16.msra.mxu0 %v3551
        %5005 = vmatprep.subr.bf16.mxu0 0
        %5006 = vmatpush2.bf16.msra.mxu0 %v3550
        %5007 = vmatprep.subr.bf16.mxu0 0
        %5008 = vmatpush2.bf16.msra.mxu0 %v3549
        %5009 = vmatprep.subr.bf16.mxu0 0
        %5010 = vmatpush2.bf16.msra.mxu0 %v3548
        %5011 = vmatprep.subr.bf16.mxu0 0
        %5012 = vmatpush2.bf16.msra.mxu0 %v3547
        %5013 = vmatprep.subr.bf16.mxu0 0
        %5014 = vmatpush2.bf16.msra.mxu0 %v3546
        %5015 = vmatprep.subr.bf16.mxu0 0
        %5016 = vmatpush2.bf16.msra.mxu0 %v3545
        %5017 = vmatprep.mubr.bf16.mxu0 %v1387
        %5018 = vmatmul.mubr.bf16.gmra.mxu0 %v1386
        %v5019 = vpop.f32.mrf.mxu0
        %v5020 = vadd.f32 %v4980, %v5019
        %v5021 = vpop.f32.mrf.mxu0
        %v5022 = vpop.f32.mrf.mxu0
        %v5023 = vpop.f32.mrf.mxu0
        %5024 = vdwg.mxu0
        %5025 = vmatprep.subr.bf16.mxu0 0
        %5026 = vmatpush1.bf16.msra.mxu0 %v3560
        %5027 = vmatprep.subr.bf16.mxu0 0
        %5028 = vmatpush1.bf16.msra.mxu0 %v3559
        %5029 = vmatprep.subr.bf16.mxu0 0
        %5030 = vmatpush1.bf16.msra.mxu0 %v3558
        %5031 = vmatprep.subr.bf16.mxu0 0
        %5032 = vmatpush1.bf16.msra.mxu0 %v3557
        %5033 = vmatprep.subr.bf16.mxu0 0
        %5034 = vmatpush1.bf16.msra.mxu0 %v3556
        %5035 = vmatprep.subr.bf16.mxu0 0
        %5036 = vmatpush1.bf16.msra.mxu0 %v3555
        %5037 = vmatprep.subr.bf16.mxu0 0
        %5038 = vmatpush1.bf16.msra.mxu0 %v3554
        %5039 = vmatprep.subr.bf16.mxu0 0
        %5040 = vmatpush1.bf16.msra.mxu0 %v3553
        %5041 = vmatprep.subr.bf16.mxu0 0
        %5042 = vmatpush2.bf16.msra.mxu0 0
        %5043 = vmatprep.subr.bf16.mxu0 0
        %5044 = vmatpush2.bf16.msra.mxu0 0
        %5045 = vmatprep.subr.bf16.mxu0 0
        %5046 = vmatpush2.bf16.msra.mxu0 0
        %5047 = vmatprep.subr.bf16.mxu0 0
        %5048 = vmatpush2.bf16.msra.mxu0 0
        %5049 = vmatprep.subr.bf16.mxu0 0
        %5050 = vmatpush2.bf16.msra.mxu0 0
        %5051 = vmatprep.subr.bf16.mxu0 0
        %5052 = vmatpush2.bf16.msra.mxu0 0
        %5053 = vmatprep.subr.bf16.mxu0 0
        %5054 = vmatpush2.bf16.msra.mxu0 0
        %5055 = vmatprep.subr.bf16.mxu0 0
        %5056 = vmatpush2.bf16.msra.mxu0 0
        %5057 = vmatprep.mubr.bf16.mxu0 0
        %5058 = vmatmul.mubr.bf16.gmra.mxu0 %v1378
        %v5059 = vpop.f32.mrf.mxu0
        %v5060 = vadd.f32 %v5020, %v5059
        %v5061 = vpop.f32.mrf.mxu0
        %v5062 = vpop.f32.mrf.mxu0
        %v5063 = vpop.f32.mrf.mxu0
        %5064 = vdwg.mxu0
        %v5065 = vadd.f32 %v192, %v5060
        %vm5066 = vcmask 74752
        %5067 = vst.msk [vmem:[#allocation2] sm:$0x3] %vm5066, %v5065
        // Predicated region
        $region37: #{chapter_cnn_forward.7} parent=31 // pred_check
          %p5068 = pneg %p101
        $region38: #{chapter_cnn_forward.7} parent=31 // pred_check_branch
          %5070 = sbr.rel (%p5068) target = $region40
        $region39: #{chapter_cnn_forward.7} parent=31 // pred_region
          %s5072 = ssub.s32 32, 32
          %5073 = vsyncadd [#allocation3], %s5072
          %s5075 = sshll.u32 [#allocation2], 4
          %s5076 = int_to_ptr.vmem [resolvable:$true] %s5075
          %5078 = dma.vmem_to_hbm [thread:$0]  %s5076, 32, %s3, [#allocation3]
        $region40: #{chapter_cnn_forward.7} parent=31 // pred_fallthru
          _
        // Predicated region
        $region41: #{chapter_cnn_forward.7} parent=31 // pred_check
          %p5079 = pneg %p101
        $region42: #{chapter_cnn_forward.7} parent=31 // pred_check_branch
          %5081 = sbr.rel (%p5079) target = $region44
        $region43: #{chapter_cnn_forward.7} parent=31 // pred_region
          %5082 = dma.done [#allocation3], 32
        $region44: #{chapter_cnn_forward.7} parent=31 // pred_fallthru
          _
      $region32: #{chapter_cnn_forward.7} parent=5 // pred_fallthru
        _
      %p5083 = scmp.le.s32.totalorder 2, %s10
      // Predicated region
      $region45: #{chapter_cnn_forward.7} parent=5 // pred_check
        %p5084 = pneg %p5083
      $region46: #{chapter_cnn_forward.7} parent=5 // pred_check_branch
        %5086 = sbr.rel (%p5084) target = $region48
      $region47: #{chapter_cnn_forward.7} parent=5 // pred_region
        %s5087 = ssub.s32 %s10, 2
      $region48: #{chapter_cnn_forward.7} parent=5 // pred_fallthru
        _
    $region6: #{chapter_cnn_forward.7} parent=1 // loop_footer
      %s14 = sadd.s32 1, %s10
    $region7: #{chapter_cnn_forward.7} parent=1 // loop_footer_branch
      %9 = sbr.rel target = $region3
    $region8: #{chapter_cnn_forward.7} parent=1 // loop_exit
      _
    %5088 = vsyncpa [#allocation3], 1
    %s5089 = scalar_lea.sflag [#allocation3], 1
    %5090 = vsyncpa %s5089, 1

</llo_original>
